<compile_context>
chip_gen: v7x
topology: tpu7x:2x2x1
jax: 0.10.0
libtpu: 0.0.40
codegen_flags: <defaults>
</compile_context>

<pallas_src>
import jax
import jax.numpy as jnp
from jax import lax
from jax.experimental import pallas as pl
from jax.experimental.pallas import tpu as pltpu


def _round_up(x, m):
    return ((x + m - 1) // m) * m


def _sigmoid(x):
    # tanh-based sigmoid keeps the transcendental on the EUP slot (free filler
    # relative to the MXU / vld bound recurrent loop).
    return 0.5 * (jnp.tanh(0.5 * x) + 1.0)


def _pick_time_chunk(T):
    """Pick chunk size Tt (multiple of 8, <=64) and padded length T_pad.

    Cost model: one grid step overhead ~= one wasted (masked) timestep.
    """
    best = None
    for tt in range(64, 7, -8):
        t_pad = _round_up(T, tt)
        cost = (t_pad // tt) + (t_pad - T)
        if best is None or cost < best[0]:
            best = (cost, tt, t_pad)
    _, tt, t_pad = best
    return tt, t_pad


def _make_lstm_chunk_kernel(H, Tt, T_total, T_pad):
    """Build the per-chunk kernel (shapes / chunking baked in as constants)."""
    needs_mask = (T_pad != T_total)
    unroll = min(Tt, 8)

    def kernel(gx_ref, whh_ref, bias_ref, hn_ref, c_scr):
        # gx_ref : (Tt, Bb, 4H) bf16  precomputed x_t @ W_ih (no bias)
        # whh_ref: (H, 4H)      bf16  recurrent weights
        # bias_ref:(1, 4H)      f32   b_ih + b_hh
        # hn_ref : (Bb, H)      f32   resident output block == h carry
        # c_scr  : (Bb, H)      f32   c carry
        t_chunk = pl.program_id(1)

        @pl.when(t_chunk == 0)
        def _init():
            hn_ref[...] = jnp.zeros_like(hn_ref)
            c_scr[...] = jnp.zeros_like(c_scr)

        whh = whh_ref[...]                       # loaded once per chunk
        bias = bias_ref[...]                     # (1, 4H) f32

        def step(i, carry):
            h, c = carry
            gx = gx_ref[i].astype(jnp.float32)   # (Bb, 4H)
            gates = gx + bias + jnp.dot(h.astype(jnp.bfloat16), whh,
                                        preferred_element_type=jnp.float32)
            # PyTorch gate order: i, f, g, o.
            i_g = _sigmoid(gates[:, 0 * H:1 * H])
            f_g = _sigmoid(gates[:, 1 * H:2 * H])
            g_g = jnp.tanh(gates[:, 2 * H:3 * H])
            o_g = _sigmoid(gates[:, 3 * H:4 * H])
            c_new = f_g * c + i_g * g_g
            h_new = o_g * jnp.tanh(c_new)
            if needs_mask:
                # Padded timesteps must be a no-op on the carries (zero gx is
                # NOT an identity step).
                m = (t_chunk * Tt + i < T_total).astype(jnp.float32)
                h_new = h + m * (h_new - h)
                c_new = c + m * (c_new - c)
            return h_new, c_new

        h_f, c_f = lax.fori_loop(0, Tt, step, (hn_ref[...], c_scr[...]),
                                 unroll=unroll)
        hn_ref[...] = h_f
        c_scr[...] = c_f

    return kernel


@jax.jit
def lstm_classifier_forward(sequence_output, w_ih, w_hh, b_ih, b_hh,
                            w_cls, b_cls):
    """sequence_output: [B, T, D_in] f32 (batch_first, as from BERT).

    Returns (h_n [B, H] f32, logits [B, num_labels] f32).
    """
    B, T, D = sequence_output.shape
    H = w_hh.shape[0]

    Tt, T_pad = _pick_time_chunk(T)
    B_pad = max(8, _round_up(B, 8))
    Bb = 8 if B_pad >= 16 else B_pad             # batch block (megacore shard)

    # Hoisted input projection on UNPADDED rows (no wasted MXU work), bf16
    # operands with f32 accumulation.  Bias is added in f32 inside the kernel.
    gx = jnp.dot(sequence_output.reshape(B * T, D).astype(jnp.bfloat16),
                 w_ih.astype(jnp.bfloat16),
                 preferred_element_type=jnp.float32)          # (B*T, 4H)
    gx = gx.reshape(B, T, 4 * H).transpose(1, 0, 2)           # (T, B, 4H)
    gx = jnp.pad(gx, ((0, T_pad - T), (0, B_pad - B), (0, 0)))
    gx = gx.astype(jnp.bfloat16)                              # stream in bf16

    bias = (b_ih + b_hh).astype(jnp.float32).reshape(1, 4 * H)

    kernel = _make_lstm_chunk_kernel(H=H, Tt=Tt, T_total=T, T_pad=T_pad)

    h_pad = pl.pallas_call(
        kernel,
        out_shape=jax.ShapeDtypeStruct((B_pad, H), jnp.float32),
        grid_spec=pltpu.PrefetchScalarGridSpec(
            num_scalar_prefetch=0,
            grid=(B_pad // Bb, T_pad // Tt),
            in_specs=[
                pl.BlockSpec((Tt, Bb, 4 * H), lambda b, t: (t, b, 0)),  # gx chunk
                pl.BlockSpec((H, 4 * H), lambda b, t: (0, 0)),          # W_hh bf16
                pl.BlockSpec((1, 4 * H), lambda b, t: (0, 0)),          # bias f32
            ],
            out_specs=pl.BlockSpec((Bb, H), lambda b, t: (b, 0)),       # h carry
            scratch_shapes=[
                pltpu.VMEM((Bb, H), jnp.float32),                       # c carry
            ],
        ),
        compiler_params=pltpu.CompilerParams(
            # batch axis parallel (uses 2nd TC on v7x when B_pad >= 16),
            # time axis is the recurrence -> sequential.
            dimension_semantics=("parallel", "arbitrary"),
            vmem_limit_bytes=48 << 20,
        ),
    )(gx, w_hh.astype(jnp.bfloat16), bias)

    h_n = h_pad[:B]
    # Dropout is identity at inference; classifier (num_labels << 128) in XLA.
    logits = jnp.dot(h_n, w_cls, preferred_element_type=jnp.float32) + b_cls
    return h_n, logits


def lstm_ref(sequence_output, w_ih, w_hh, b_ih, b_hh):
    """Pure-JAX f32 reference for the LSTM final hidden state."""
    B, T, D = sequence_output.shape
    H = w_hh.shape[0]

    def step(carry, x_t):
        h, c = carry
        gates = x_t @ w_ih + h @ w_hh + b_ih[0] + b_hh[0]
        i_g = jax.nn.sigmoid(gates[:, 0 * H:1 * H])
        f_g = jax.nn.sigmoid(gates[:, 1 * H:2 * H])
        g_g = jnp.tanh(gates[:, 2 * H:3 * H])
        o_g = jax.nn.sigmoid(gates[:, 3 * H:4 * H])
        c = f_g * c + i_g * g_g
        h = o_g * jnp.tanh(c)
        return (h, c), None

    init = (jnp.zeros((B, H), jnp.float32), jnp.zeros((B, H), jnp.float32))
    (h_n, _), _ = lax.scan(step, init, jnp.transpose(sequence_output, (1, 0, 2)))
    return h_n


def init_params(key, input_size=768, hidden_size=512, num_labels=4):
    """Deterministic init mimicking PyTorch's uniform(-1/sqrt(H), 1/sqrt(H)).

    Weights are stored pre-transposed ([in, 4H]) so projections are x @ W."""
    ks = jax.random.split(key, 6)
    bound = 1.0 / jnp.sqrt(jnp.float32(hidden_size))
    w_ih = jax.random.uniform(ks[0], (input_size, 4 * hidden_size),
                              jnp.float32, -bound, bound)
    w_hh = jax.random.uniform(ks[1], (hidden_size, 4 * hidden_size),
                              jnp.float32, -bound, bound)
    b_ih = jax.random.uniform(ks[2], (1, 4 * hidden_size), jnp.float32,
                              -bound, bound)
    b_hh = jax.random.uniform(ks[3], (1, 4 * hidden_size), jnp.float32,
                              -bound, bound)
    w_cls = jax.random.uniform(ks[4], (hidden_size, num_labels),
                               jnp.float32, -bound, bound)
    b_cls = jax.random.uniform(ks[5], (1, num_labels), jnp.float32,
                               -bound, bound)
    return w_ih, w_hh, b_ih, b_hh, w_cls, b_cls


if __name__ == "__main__":
    key = jax.random.PRNGKey(0)
    k_seq, k_params = jax.random.split(key)

    # Small shapes consistent with the module: BERT hidden = 768, LSTM hidden = 512.
    B, T, D_IN, HIDDEN, NUM_LABELS = 2, 8, 768, 512, 4

    # Stand-in for bert(...).last_hidden_state  (batch_first, [B, T, 768]).
    sequence_output = jax.random.normal(k_seq, (B, T, D_IN), jnp.float32)

    params = init_params(k_params, D_IN, HIDDEN, NUM_LABELS)
    w_ih, w_hh, b_ih, b_hh, w_cls, b_cls = params

    h_n, logits = lstm_classifier_forward(sequence_output, *params)
    jax.block_until_ready((h_n, logits))

    assert h_n.shape == (B, HIDDEN)
    assert logits.shape == (B, NUM_LABELS)

    # Correctness vs the pure-JAX f32 reference (bf16 MXU operands -> loose tol).
    h_ref = lstm_ref(sequence_output, w_ih, w_hh, b_ih, b_hh)
    max_err = float(jnp.max(jnp.abs(h_n - h_ref)))
    assert max_err < 5e-2, f"max |h - h_ref| = {max_err}"

    print("KERNEL_OK")
</pallas_src>

<mosaic_0001>
module attributes {stable_mosaic.version = 11 : i64} {
  func.func @kernel(%arg0: i32, %arg1: i32, %arg2: memref<8x8x2048xbf16, #tpu.memory_space<vmem>>, %arg3: memref<512x2048xbf16, #tpu.memory_space<vmem>>, %arg4: memref<1x2048xf32, #tpu.memory_space<vmem>>, %arg5: memref<8x512xf32, #tpu.memory_space<vmem>>, %arg6: memref<8x512xf32, #tpu.memory_space<vmem>>) attributes {dimension_semantics = [#tpu.dimension_semantics<parallel>, #tpu.dimension_semantics<arbitrary>], iteration_bounds = array<i64: 1, 1>, scalar_prefetch = 0 : i64, scratch_operands = 1 : i64, tpu.core_type = #tpu.core_type<tc>, window_params = [{transform_indices = @transform_0, window_bounds = array<i64: 8, 8, 2048>}, {pipeline_mode = #tpu.pipeline_mode<synchronous>, transform_indices = @transform_1, window_bounds = array<i64: 512, 2048>}, {pipeline_mode = #tpu.pipeline_mode<synchronous>, transform_indices = @transform_2, window_bounds = array<i64: 1, 2048>}, {transform_indices = @transform_3, window_bounds = array<i64: 8, 512>}]} {
    %c0_i32 = arith.constant 0 : i32
    %0 = arith.cmpi eq, %arg1, %c0_i32 : i32
    %1 = arith.extui %0 : i1 to i32
    %c0_i32_0 = arith.constant 0 : i32
    %2 = arith.cmpi ne, %1, %c0_i32_0 : i32
    scf.if %2 {
      %cst_108 = arith.constant 0.000000e+00 : f32
      %329 = vector.broadcast %cst_108 : f32 to vector<8x512xf32>
      %c0_109 = arith.constant 0 : index
      %c0_110 = arith.constant 0 : index
      %330 = vector.load %arg5[%c0_109, %c0_110] : memref<8x512xf32, #tpu.memory_space<vmem>>, vector<8x512xf32>
      tpu.vector_store %arg5[%c0_109, %c0_110], %329 {strides = array<i32>} : memref<8x512xf32, #tpu.memory_space<vmem>>, vector<8x512xf32>,
      %cst_111 = arith.constant 0.000000e+00 : f32
      %331 = vector.broadcast %cst_111 : f32 to vector<8x512xf32>
      %c0_112 = arith.constant 0 : index
      %c0_113 = arith.constant 0 : index
      %332 = vector.load %arg6[%c0_112, %c0_113] : memref<8x512xf32, #tpu.memory_space<vmem>>, vector<8x512xf32>
      tpu.vector_store %arg6[%c0_112, %c0_113], %331 {strides = array<i32>} : memref<8x512xf32, #tpu.memory_space<vmem>>, vector<8x512xf32>,
    } else {
    }
    %c0 = arith.constant 0 : index
    %c0_1 = arith.constant 0 : index
    %3 = vector.load %arg3[%c0, %c0_1] : memref<512x2048xbf16, #tpu.memory_space<vmem>>, vector<512x2048xbf16>
    %c0_2 = arith.constant 0 : index
    %c0_3 = arith.constant 0 : index
    %4 = vector.load %arg4[%c0_2, %c0_3] : memref<1x2048xf32, #tpu.memory_space<vmem>>, vector<1x2048xf32>
    %c0_4 = arith.constant 0 : index
    %c0_5 = arith.constant 0 : index
    %5 = vector.load %arg5[%c0_4, %c0_5] : memref<8x512xf32, #tpu.memory_space<vmem>>, vector<8x512xf32>
    %c0_6 = arith.constant 0 : index
    %c0_7 = arith.constant 0 : index
    %6 = vector.load %arg6[%c0_6, %c0_7] : memref<8x512xf32, #tpu.memory_space<vmem>>, vector<8x512xf32>
    %c0_i32_8 = arith.constant 0 : i32
    %7 = arith.index_cast %c0_i32_8 : i32 to index
    %c0_9 = arith.constant 0 : index
    %c0_10 = arith.constant 0 : index
    %8 = vector.load %arg2[%7, %c0_9, %c0_10] : memref<8x8x2048xbf16, #tpu.memory_space<vmem>>, vector<1x8x2048xbf16>
    %9 = vector.shape_cast %8 : vector<1x8x2048xbf16> to vector<8x2048xbf16>
    %10 = arith.extf %9 : vector<8x2048xbf16> to vector<8x2048xf32>
    %11 = vector.broadcast %4 : vector<1x2048xf32> to vector<8x2048xf32>
    %12 = arith.addf %10, %11 : vector<8x2048xf32>
    %13 = arith.truncf %5 : vector<8x512xf32> to vector<8x512xbf16>
    %cst = arith.constant dense<0.000000e+00> : vector<8x2048xf32>
    %14 = tpu.matmul %13, %3, %cst {dimension_numbers = #tpu.dot_dimension_numbers<[1], [0], [0], [1], [0, 0, 1, 1], [], []>} : vector<8x512xbf16>, vector<512x2048xbf16>, vector<8x2048xf32> -> vector<8x2048xf32>
    %15 = arith.addf %12, %14 : vector<8x2048xf32>
    %16 = vector.extract_strided_slice %15 {offsets = [0, 0], sizes = [8, 512], strides = [1, 1]} : vector<8x2048xf32> to vector<8x512xf32>
    %cst_11 = arith.constant 5.000000e-01 : f32
    %17 = vector.broadcast %cst_11 : f32 to vector<8x512xf32>
    %18 = arith.mulf %17, %16 : vector<8x512xf32>
    %19 = math.tanh %18 : vector<8x512xf32>
    %cst_12 = arith.constant 1.000000e+00 : f32
    %20 = vector.broadcast %cst_12 : f32 to vector<8x512xf32>
    %21 = arith.addf %19, %20 : vector<8x512xf32>
    %cst_13 = arith.constant 5.000000e-01 : f32
    %22 = vector.broadcast %cst_13 : f32 to vector<8x512xf32>
    %23 = arith.mulf %22, %21 : vector<8x512xf32>
    %24 = vector.extract_strided_slice %15 {offsets = [0, 512], sizes = [8, 512], strides = [1, 1]} : vector<8x2048xf32> to vector<8x512xf32>
    %cst_14 = arith.constant 5.000000e-01 : f32
    %25 = vector.broadcast %cst_14 : f32 to vector<8x512xf32>
    %26 = arith.mulf %25, %24 : vector<8x512xf32>
    %27 = math.tanh %26 : vector<8x512xf32>
    %cst_15 = arith.constant 1.000000e+00 : f32
    %28 = vector.broadcast %cst_15 : f32 to vector<8x512xf32>
    %29 = arith.addf %27, %28 : vector<8x512xf32>
    %cst_16 = arith.constant 5.000000e-01 : f32
    %30 = vector.broadcast %cst_16 : f32 to vector<8x512xf32>
    %31 = arith.mulf %30, %29 : vector<8x512xf32>
    %32 = vector.extract_strided_slice %15 {offsets = [0, 1024], sizes = [8, 512], strides = [1, 1]} : vector<8x2048xf32> to vector<8x512xf32>
    %33 = math.tanh %32 : vector<8x512xf32>
    %34 = vector.extract_strided_slice %15 {offsets = [0, 1536], sizes = [8, 512], strides = [1, 1]} : vector<8x2048xf32> to vector<8x512xf32>
    %cst_17 = arith.constant 5.000000e-01 : f32
    %35 = vector.broadcast %cst_17 : f32 to vector<8x512xf32>
    %36 = arith.mulf %35, %34 : vector<8x512xf32>
    %37 = math.tanh %36 : vector<8x512xf32>
    %cst_18 = arith.constant 1.000000e+00 : f32
    %38 = vector.broadcast %cst_18 : f32 to vector<8x512xf32>
    %39 = arith.addf %37, %38 : vector<8x512xf32>
    %cst_19 = arith.constant 5.000000e-01 : f32
    %40 = vector.broadcast %cst_19 : f32 to vector<8x512xf32>
    %41 = arith.mulf %40, %39 : vector<8x512xf32>
    %42 = arith.mulf %31, %6 : vector<8x512xf32>
    %43 = arith.mulf %23, %33 : vector<8x512xf32>
    %44 = arith.addf %42, %43 : vector<8x512xf32>
    %45 = math.tanh %44 : vector<8x512xf32>
    %46 = arith.mulf %41, %45 : vector<8x512xf32>
    %c1_i32 = arith.constant 1 : i32
    %47 = arith.index_cast %c1_i32 : i32 to index
    %c0_20 = arith.constant 0 : index
    %c0_21 = arith.constant 0 : index
    %48 = vector.load %arg2[%47, %c0_20, %c0_21] : memref<8x8x2048xbf16, #tpu.memory_space<vmem>>, vector<1x8x2048xbf16>
    %49 = vector.shape_cast %48 : vector<1x8x2048xbf16> to vector<8x2048xbf16>
    %50 = arith.extf %49 : vector<8x2048xbf16> to vector<8x2048xf32>
    %51 = vector.broadcast %4 : vector<1x2048xf32> to vector<8x2048xf32>
    %52 = arith.addf %50, %51 : vector<8x2048xf32>
    %53 = arith.truncf %46 : vector<8x512xf32> to vector<8x512xbf16>
    %cst_22 = arith.constant dense<0.000000e+00> : vector<8x2048xf32>
    %54 = tpu.matmul %53, %3, %cst_22 {dimension_numbers = #tpu.dot_dimension_numbers<[1], [0], [0], [1], [0, 0, 1, 1], [], []>} : vector<8x512xbf16>, vector<512x2048xbf16>, vector<8x2048xf32> -> vector<8x2048xf32>
    %55 = arith.addf %52, %54 : vector<8x2048xf32>
    %56 = vector.extract_strided_slice %55 {offsets = [0, 0], sizes = [8, 512], strides = [1, 1]} : vector<8x2048xf32> to vector<8x512xf32>
    %cst_23 = arith.constant 5.000000e-01 : f32
    %57 = vector.broadcast %cst_23 : f32 to vector<8x512xf32>
    %58 = arith.mulf %57, %56 : vector<8x512xf32>
    %59 = math.tanh %58 : vector<8x512xf32>
    %cst_24 = arith.constant 1.000000e+00 : f32
    %60 = vector.broadcast %cst_24 : f32 to vector<8x512xf32>
    %61 = arith.addf %59, %60 : vector<8x512xf32>
    %cst_25 = arith.constant 5.000000e-01 : f32
    %62 = vector.broadcast %cst_25 : f32 to vector<8x512xf32>
    %63 = arith.mulf %62, %61 : vector<8x512xf32>
    %64 = vector.extract_strided_slice %55 {offsets = [0, 512], sizes = [8, 512], strides = [1, 1]} : vector<8x2048xf32> to vector<8x512xf32>
    %cst_26 = arith.constant 5.000000e-01 : f32
    %65 = vector.broadcast %cst_26 : f32 to vector<8x512xf32>
    %66 = arith.mulf %65, %64 : vector<8x512xf32>
    %67 = math.tanh %66 : vector<8x512xf32>
    %cst_27 = arith.constant 1.000000e+00 : f32
    %68 = vector.broadcast %cst_27 : f32 to vector<8x512xf32>
    %69 = arith.addf %67, %68 : vector<8x512xf32>
    %cst_28 = arith.constant 5.000000e-01 : f32
    %70 = vector.broadcast %cst_28 : f32 to vector<8x512xf32>
    %71 = arith.mulf %70, %69 : vector<8x512xf32>
    %72 = vector.extract_strided_slice %55 {offsets = [0, 1024], sizes = [8, 512], strides = [1, 1]} : vector<8x2048xf32> to vector<8x512xf32>
    %73 = math.tanh %72 : vector<8x512xf32>
    %74 = vector.extract_strided_slice %55 {offsets = [0, 1536], sizes = [8, 512], strides = [1, 1]} : vector<8x2048xf32> to vector<8x512xf32>
    %cst_29 = arith.constant 5.000000e-01 : f32
    %75 = vector.broadcast %cst_29 : f32 to vector<8x512xf32>
    %76 = arith.mulf %75, %74 : vector<8x512xf32>
    %77 = math.tanh %76 : vector<8x512xf32>
    %cst_30 = arith.constant 1.000000e+00 : f32
    %78 = vector.broadcast %cst_30 : f32 to vector<8x512xf32>
    %79 = arith.addf %77, %78 : vector<8x512xf32>
    %cst_31 = arith.constant 5.000000e-01 : f32
    %80 = vector.broadcast %cst_31 : f32 to vector<8x512xf32>
    %81 = arith.mulf %80, %79 : vector<8x512xf32>
    %82 = arith.mulf %71, %44 : vector<8x512xf32>
    %83 = arith.mulf %63, %73 : vector<8x512xf32>
    %84 = arith.addf %82, %83 : vector<8x512xf32>
    %85 = math.tanh %84 : vector<8x512xf32>
    %86 = arith.mulf %81, %85 : vector<8x512xf32>
    %c2_i32 = arith.constant 2 : i32
    %87 = arith.index_cast %c2_i32 : i32 to index
    %c0_32 = arith.constant 0 : index
    %c0_33 = arith.constant 0 : index
    %88 = vector.load %arg2[%87, %c0_32, %c0_33] : memref<8x8x2048xbf16, #tpu.memory_space<vmem>>, vector<1x8x2048xbf16>
    %89 = vector.shape_cast %88 : vector<1x8x2048xbf16> to vector<8x2048xbf16>
    %90 = arith.extf %89 : vector<8x2048xbf16> to vector<8x2048xf32>
    %91 = vector.broadcast %4 : vector<1x2048xf32> to vector<8x2048xf32>
    %92 = arith.addf %90, %91 : vector<8x2048xf32>
    %93 = arith.truncf %86 : vector<8x512xf32> to vector<8x512xbf16>
    %cst_34 = arith.constant dense<0.000000e+00> : vector<8x2048xf32>
    %94 = tpu.matmul %93, %3, %cst_34 {dimension_numbers = #tpu.dot_dimension_numbers<[1], [0], [0], [1], [0, 0, 1, 1], [], []>} : vector<8x512xbf16>, vector<512x2048xbf16>, vector<8x2048xf32> -> vector<8x2048xf32>
    %95 = arith.addf %92, %94 : vector<8x2048xf32>
    %96 = vector.extract_strided_slice %95 {offsets = [0, 0], sizes = [8, 512], strides = [1, 1]} : vector<8x2048xf32> to vector<8x512xf32>
    %cst_35 = arith.constant 5.000000e-01 : f32
    %97 = vector.broadcast %cst_35 : f32 to vector<8x512xf32>
    %98 = arith.mulf %97, %96 : vector<8x512xf32>
    %99 = math.tanh %98 : vector<8x512xf32>
    %cst_36 = arith.constant 1.000000e+00 : f32
    %100 = vector.broadcast %cst_36 : f32 to vector<8x512xf32>
    %101 = arith.addf %99, %100 : vector<8x512xf32>
    %cst_37 = arith.constant 5.000000e-01 : f32
    %102 = vector.broadcast %cst_37 : f32 to vector<8x512xf32>
    %103 = arith.mulf %102, %101 : vector<8x512xf32>
    %104 = vector.extract_strided_slice %95 {offsets = [0, 512], sizes = [8, 512], strides = [1, 1]} : vector<8x2048xf32> to vector<8x512xf32>
    %cst_38 = arith.constant 5.000000e-01 : f32
    %105 = vector.broadcast %cst_38 : f32 to vector<8x512xf32>
    %106 = arith.mulf %105, %104 : vector<8x512xf32>
    %107 = math.tanh %106 : vector<8x512xf32>
    %cst_39 = arith.constant 1.000000e+00 : f32
    %108 = vector.broadcast %cst_39 : f32 to vector<8x512xf32>
    %109 = arith.addf %107, %108 : vector<8x512xf32>
    %cst_40 = arith.constant 5.000000e-01 : f32
    %110 = vector.broadcast %cst_40 : f32 to vector<8x512xf32>
    %111 = arith.mulf %110, %109 : vector<8x512xf32>
    %112 = vector.extract_strided_slice %95 {offsets = [0, 1024], sizes = [8, 512], strides = [1, 1]} : vector<8x2048xf32> to vector<8x512xf32>
    %113 = math.tanh %112 : vector<8x512xf32>
    %114 = vector.extract_strided_slice %95 {offsets = [0, 1536], sizes = [8, 512], strides = [1, 1]} : vector<8x2048xf32> to vector<8x512xf32>
    %cst_41 = arith.constant 5.000000e-01 : f32
    %115 = vector.broadcast %cst_41 : f32 to vector<8x512xf32>
    %116 = arith.mulf %115, %114 : vector<8x512xf32>
    %117 = math.tanh %116 : vector<8x512xf32>
    %cst_42 = arith.constant 1.000000e+00 : f32
    %118 = vector.broadcast %cst_42 : f32 to vector<8x512xf32>
    %119 = arith.addf %117, %118 : vector<8x512xf32>
    %cst_43 = arith.constant 5.000000e-01 : f32
    %120 = vector.broadcast %cst_43 : f32 to vector<8x512xf32>
    %121 = arith.mulf %120, %119 : vector<8x512xf32>
    %122 = arith.mulf %111, %84 : vector<8x512xf32>
    %123 = arith.mulf %103, %113 : vector<8x512xf32>
    %124 = arith.addf %122, %123 : vector<8x512xf32>
    %125 = math.tanh %124 : vector<8x512xf32>
    %126 = arith.mulf %121, %125 : vector<8x512xf32>
    %c3_i32 = arith.constant 3 : i32
    %127 = arith.index_cast %c3_i32 : i32 to index
    %c0_44 = arith.constant 0 : index
    %c0_45 = arith.constant 0 : index
    %128 = vector.load %arg2[%127, %c0_44, %c0_45] : memref<8x8x2048xbf16, #tpu.memory_space<vmem>>, vector<1x8x2048xbf16>
    %129 = vector.shape_cast %128 : vector<1x8x2048xbf16> to vector<8x2048xbf16>
    %130 = arith.extf %129 : vector<8x2048xbf16> to vector<8x2048xf32>
    %131 = vector.broadcast %4 : vector<1x2048xf32> to vector<8x2048xf32>
    %132 = arith.addf %130, %131 : vector<8x2048xf32>
    %133 = arith.truncf %126 : vector<8x512xf32> to vector<8x512xbf16>
    %cst_46 = arith.constant dense<0.000000e+00> : vector<8x2048xf32>
    %134 = tpu.matmul %133, %3, %cst_46 {dimension_numbers = #tpu.dot_dimension_numbers<[1], [0], [0], [1], [0, 0, 1, 1], [], []>} : vector<8x512xbf16>, vector<512x2048xbf16>, vector<8x2048xf32> -> vector<8x2048xf32>
    %135 = arith.addf %132, %134 : vector<8x2048xf32>
    %136 = vector.extract_strided_slice %135 {offsets = [0, 0], sizes = [8, 512], strides = [1, 1]} : vector<8x2048xf32> to vector<8x512xf32>
    %cst_47 = arith.constant 5.000000e-01 : f32
    %137 = vector.broadcast %cst_47 : f32 to vector<8x512xf32>
    %138 = arith.mulf %137, %136 : vector<8x512xf32>
    %139 = math.tanh %138 : vector<8x512xf32>
    %cst_48 = arith.constant 1.000000e+00 : f32
    %140 = vector.broadcast %cst_48 : f32 to vector<8x512xf32>
    %141 = arith.addf %139, %140 : vector<8x512xf32>
    %cst_49 = arith.constant 5.000000e-01 : f32
    %142 = vector.broadcast %cst_49 : f32 to vector<8x512xf32>
    %143 = arith.mulf %142, %141 : vector<8x512xf32>
    %144 = vector.extract_strided_slice %135 {offsets = [0, 512], sizes = [8, 512], strides = [1, 1]} : vector<8x2048xf32> to vector<8x512xf32>
    %cst_50 = arith.constant 5.000000e-01 : f32
    %145 = vector.broadcast %cst_50 : f32 to vector<8x512xf32>
    %146 = arith.mulf %145, %144 : vector<8x512xf32>
    %147 = math.tanh %146 : vector<8x512xf32>
    %cst_51 = arith.constant 1.000000e+00 : f32
    %148 = vector.broadcast %cst_51 : f32 to vector<8x512xf32>
    %149 = arith.addf %147, %148 : vector<8x512xf32>
    %cst_52 = arith.constant 5.000000e-01 : f32
    %150 = vector.broadcast %cst_52 : f32 to vector<8x512xf32>
    %151 = arith.mulf %150, %149 : vector<8x512xf32>
    %152 = vector.extract_strided_slice %135 {offsets = [0, 1024], sizes = [8, 512], strides = [1, 1]} : vector<8x2048xf32> to vector<8x512xf32>
    %153 = math.tanh %152 : vector<8x512xf32>
    %154 = vector.extract_strided_slice %135 {offsets = [0, 1536], sizes = [8, 512], strides = [1, 1]} : vector<8x2048xf32> to vector<8x512xf32>
    %cst_53 = arith.constant 5.000000e-01 : f32
    %155 = vector.broadcast %cst_53 : f32 to vector<8x512xf32>
    %156 = arith.mulf %155, %154 : vector<8x512xf32>
    %157 = math.tanh %156 : vector<8x512xf32>
    %cst_54 = arith.constant 1.000000e+00 : f32
    %158 = vector.broadcast %cst_54 : f32 to vector<8x512xf32>
    %159 = arith.addf %157, %158 : vector<8x512xf32>
    %cst_55 = arith.constant 5.000000e-01 : f32
    %160 = vector.broadcast %cst_55 : f32 to vector<8x512xf32>
    %161 = arith.mulf %160, %159 : vector<8x512xf32>
    %162 = arith.mulf %151, %124 : vector<8x512xf32>
    %163 = arith.mulf %143, %153 : vector<8x512xf32>
    %164 = arith.addf %162, %163 : vector<8x512xf32>
    %165 = math.tanh %164 : vector<8x512xf32>
    %166 = arith.mulf %161, %165 : vector<8x512xf32>
    %c4_i32 = arith.constant 4 : i32
    %167 = arith.index_cast %c4_i32 : i32 to index
    %c0_56 = arith.constant 0 : index
    %c0_57 = arith.constant 0 : index
    %168 = vector.load %arg2[%167, %c0_56, %c0_57] : memref<8x8x2048xbf16, #tpu.memory_space<vmem>>, vector<1x8x2048xbf16>
    %169 = vector.shape_cast %168 : vector<1x8x2048xbf16> to vector<8x2048xbf16>
    %170 = arith.extf %169 : vector<8x2048xbf16> to vector<8x2048xf32>
    %171 = vector.broadcast %4 : vector<1x2048xf32> to vector<8x2048xf32>
    %172 = arith.addf %170, %171 : vector<8x2048xf32>
    %173 = arith.truncf %166 : vector<8x512xf32> to vector<8x512xbf16>
    %cst_58 = arith.constant dense<0.000000e+00> : vector<8x2048xf32>
    %174 = tpu.matmul %173, %3, %cst_58 {dimension_numbers = #tpu.dot_dimension_numbers<[1], [0], [0], [1], [0, 0, 1, 1], [], []>} : vector<8x512xbf16>, vector<512x2048xbf16>, vector<8x2048xf32> -> vector<8x2048xf32>
    %175 = arith.addf %172, %174 : vector<8x2048xf32>
    %176 = vector.extract_strided_slice %175 {offsets = [0, 0], sizes = [8, 512], strides = [1, 1]} : vector<8x2048xf32> to vector<8x512xf32>
    %cst_59 = arith.constant 5.000000e-01 : f32
    %177 = vector.broadcast %cst_59 : f32 to vector<8x512xf32>
    %178 = arith.mulf %177, %176 : vector<8x512xf32>
    %179 = math.tanh %178 : vector<8x512xf32>
    %cst_60 = arith.constant 1.000000e+00 : f32
    %180 = vector.broadcast %cst_60 : f32 to vector<8x512xf32>
    %181 = arith.addf %179, %180 : vector<8x512xf32>
    %cst_61 = arith.constant 5.000000e-01 : f32
    %182 = vector.broadcast %cst_61 : f32 to vector<8x512xf32>
    %183 = arith.mulf %182, %181 : vector<8x512xf32>
    %184 = vector.extract_strided_slice %175 {offsets = [0, 512], sizes = [8, 512], strides = [1, 1]} : vector<8x2048xf32> to vector<8x512xf32>
    %cst_62 = arith.constant 5.000000e-01 : f32
    %185 = vector.broadcast %cst_62 : f32 to vector<8x512xf32>
    %186 = arith.mulf %185, %184 : vector<8x512xf32>
    %187 = math.tanh %186 : vector<8x512xf32>
    %cst_63 = arith.constant 1.000000e+00 : f32
    %188 = vector.broadcast %cst_63 : f32 to vector<8x512xf32>
    %189 = arith.addf %187, %188 : vector<8x512xf32>
    %cst_64 = arith.constant 5.000000e-01 : f32
    %190 = vector.broadcast %cst_64 : f32 to vector<8x512xf32>
    %191 = arith.mulf %190, %189 : vector<8x512xf32>
    %192 = vector.extract_strided_slice %175 {offsets = [0, 1024], sizes = [8, 512], strides = [1, 1]} : vector<8x2048xf32> to vector<8x512xf32>
    %193 = math.tanh %192 : vector<8x512xf32>
    %194 = vector.extract_strided_slice %175 {offsets = [0, 1536], sizes = [8, 512], strides = [1, 1]} : vector<8x2048xf32> to vector<8x512xf32>
    %cst_65 = arith.constant 5.000000e-01 : f32
    %195 = vector.broadcast %cst_65 : f32 to vector<8x512xf32>
    %196 = arith.mulf %195, %194 : vector<8x512xf32>
    %197 = math.tanh %196 : vector<8x512xf32>
    %cst_66 = arith.constant 1.000000e+00 : f32
    %198 = vector.broadcast %cst_66 : f32 to vector<8x512xf32>
    %199 = arith.addf %197, %198 : vector<8x512xf32>
    %cst_67 = arith.constant 5.000000e-01 : f32
    %200 = vector.broadcast %cst_67 : f32 to vector<8x512xf32>
    %201 = arith.mulf %200, %199 : vector<8x512xf32>
    %202 = arith.mulf %191, %164 : vector<8x512xf32>
    %203 = arith.mulf %183, %193 : vector<8x512xf32>
    %204 = arith.addf %202, %203 : vector<8x512xf32>
    %205 = math.tanh %204 : vector<8x512xf32>
    %206 = arith.mulf %201, %205 : vector<8x512xf32>
    %c5_i32 = arith.constant 5 : i32
    %207 = arith.index_cast %c5_i32 : i32 to index
    %c0_68 = arith.constant 0 : index
    %c0_69 = arith.constant 0 : index
    %208 = vector.load %arg2[%207, %c0_68, %c0_69] : memref<8x8x2048xbf16, #tpu.memory_space<vmem>>, vector<1x8x2048xbf16>
    %209 = vector.shape_cast %208 : vector<1x8x2048xbf16> to vector<8x2048xbf16>
    %210 = arith.extf %209 : vector<8x2048xbf16> to vector<8x2048xf32>
    %211 = vector.broadcast %4 : vector<1x2048xf32> to vector<8x2048xf32>
    %212 = arith.addf %210, %211 : vector<8x2048xf32>
    %213 = arith.truncf %206 : vector<8x512xf32> to vector<8x512xbf16>
    %cst_70 = arith.constant dense<0.000000e+00> : vector<8x2048xf32>
    %214 = tpu.matmul %213, %3, %cst_70 {dimension_numbers = #tpu.dot_dimension_numbers<[1], [0], [0], [1], [0, 0, 1, 1], [], []>} : vector<8x512xbf16>, vector<512x2048xbf16>, vector<8x2048xf32> -> vector<8x2048xf32>
    %215 = arith.addf %212, %214 : vector<8x2048xf32>
    %216 = vector.extract_strided_slice %215 {offsets = [0, 0], sizes = [8, 512], strides = [1, 1]} : vector<8x2048xf32> to vector<8x512xf32>
    %cst_71 = arith.constant 5.000000e-01 : f32
    %217 = vector.broadcast %cst_71 : f32 to vector<8x512xf32>
    %218 = arith.mulf %217, %216 : vector<8x512xf32>
    %219 = math.tanh %218 : vector<8x512xf32>
    %cst_72 = arith.constant 1.000000e+00 : f32
    %220 = vector.broadcast %cst_72 : f32 to vector<8x512xf32>
    %221 = arith.addf %219, %220 : vector<8x512xf32>
    %cst_73 = arith.constant 5.000000e-01 : f32
    %222 = vector.broadcast %cst_73 : f32 to vector<8x512xf32>
    %223 = arith.mulf %222, %221 : vector<8x512xf32>
    %224 = vector.extract_strided_slice %215 {offsets = [0, 512], sizes = [8, 512], strides = [1, 1]} : vector<8x2048xf32> to vector<8x512xf32>
    %cst_74 = arith.constant 5.000000e-01 : f32
    %225 = vector.broadcast %cst_74 : f32 to vector<8x512xf32>
    %226 = arith.mulf %225, %224 : vector<8x512xf32>
    %227 = math.tanh %226 : vector<8x512xf32>
    %cst_75 = arith.constant 1.000000e+00 : f32
    %228 = vector.broadcast %cst_75 : f32 to vector<8x512xf32>
    %229 = arith.addf %227, %228 : vector<8x512xf32>
    %cst_76 = arith.constant 5.000000e-01 : f32
    %230 = vector.broadcast %cst_76 : f32 to vector<8x512xf32>
    %231 = arith.mulf %230, %229 : vector<8x512xf32>
    %232 = vector.extract_strided_slice %215 {offsets = [0, 1024], sizes = [8, 512], strides = [1, 1]} : vector<8x2048xf32> to vector<8x512xf32>
    %233 = math.tanh %232 : vector<8x512xf32>
    %234 = vector.extract_strided_slice %215 {offsets = [0, 1536], sizes = [8, 512], strides = [1, 1]} : vector<8x2048xf32> to vector<8x512xf32>
    %cst_77 = arith.constant 5.000000e-01 : f32
    %235 = vector.broadcast %cst_77 : f32 to vector<8x512xf32>
    %236 = arith.mulf %235, %234 : vector<8x512xf32>
    %237 = math.tanh %236 : vector<8x512xf32>
    %cst_78 = arith.constant 1.000000e+00 : f32
    %238 = vector.broadcast %cst_78 : f32 to vector<8x512xf32>
    %239 = arith.addf %237, %238 : vector<8x512xf32>
    %cst_79 = arith.constant 5.000000e-01 : f32
    %240 = vector.broadcast %cst_79 : f32 to vector<8x512xf32>
    %241 = arith.mulf %240, %239 : vector<8x512xf32>
    %242 = arith.mulf %231, %204 : vector<8x512xf32>
    %243 = arith.mulf %223, %233 : vector<8x512xf32>
    %244 = arith.addf %242, %243 : vector<8x512xf32>
    %245 = math.tanh %244 : vector<8x512xf32>
    %246 = arith.mulf %241, %245 : vector<8x512xf32>
    %c6_i32 = arith.constant 6 : i32
    %247 = arith.index_cast %c6_i32 : i32 to index
    %c0_80 = arith.constant 0 : index
    %c0_81 = arith.constant 0 : index
    %248 = vector.load %arg2[%247, %c0_80, %c0_81] : memref<8x8x2048xbf16, #tpu.memory_space<vmem>>, vector<1x8x2048xbf16>
    %249 = vector.shape_cast %248 : vector<1x8x2048xbf16> to vector<8x2048xbf16>
    %250 = arith.extf %249 : vector<8x2048xbf16> to vector<8x2048xf32>
    %251 = vector.broadcast %4 : vector<1x2048xf32> to vector<8x2048xf32>
    %252 = arith.addf %250, %251 : vector<8x2048xf32>
    %253 = arith.truncf %246 : vector<8x512xf32> to vector<8x512xbf16>
    %cst_82 = arith.constant dense<0.000000e+00> : vector<8x2048xf32>
    %254 = tpu.matmul %253, %3, %cst_82 {dimension_numbers = #tpu.dot_dimension_numbers<[1], [0], [0], [1], [0, 0, 1, 1], [], []>} : vector<8x512xbf16>, vector<512x2048xbf16>, vector<8x2048xf32> -> vector<8x2048xf32>
    %255 = arith.addf %252, %254 : vector<8x2048xf32>
    %256 = vector.extract_strided_slice %255 {offsets = [0, 0], sizes = [8, 512], strides = [1, 1]} : vector<8x2048xf32> to vector<8x512xf32>
    %cst_83 = arith.constant 5.000000e-01 : f32
    %257 = vector.broadcast %cst_83 : f32 to vector<8x512xf32>
    %258 = arith.mulf %257, %256 : vector<8x512xf32>
    %259 = math.tanh %258 : vector<8x512xf32>
    %cst_84 = arith.constant 1.000000e+00 : f32
    %260 = vector.broadcast %cst_84 : f32 to vector<8x512xf32>
    %261 = arith.addf %259, %260 : vector<8x512xf32>
    %cst_85 = arith.constant 5.000000e-01 : f32
    %262 = vector.broadcast %cst_85 : f32 to vector<8x512xf32>
    %263 = arith.mulf %262, %261 : vector<8x512xf32>
    %264 = vector.extract_strided_slice %255 {offsets = [0, 512], sizes = [8, 512], strides = [1, 1]} : vector<8x2048xf32> to vector<8x512xf32>
    %cst_86 = arith.constant 5.000000e-01 : f32
    %265 = vector.broadcast %cst_86 : f32 to vector<8x512xf32>
    %266 = arith.mulf %265, %264 : vector<8x512xf32>
    %267 = math.tanh %266 : vector<8x512xf32>
    %cst_87 = arith.constant 1.000000e+00 : f32
    %268 = vector.broadcast %cst_87 : f32 to vector<8x512xf32>
    %269 = arith.addf %267, %268 : vector<8x512xf32>
    %cst_88 = arith.constant 5.000000e-01 : f32
    %270 = vector.broadcast %cst_88 : f32 to vector<8x512xf32>
    %271 = arith.mulf %270, %269 : vector<8x512xf32>
    %272 = vector.extract_strided_slice %255 {offsets = [0, 1024], sizes = [8, 512], strides = [1, 1]} : vector<8x2048xf32> to vector<8x512xf32>
    %273 = math.tanh %272 : vector<8x512xf32>
    %274 = vector.extract_strided_slice %255 {offsets = [0, 1536], sizes = [8, 512], strides = [1, 1]} : vector<8x2048xf32> to vector<8x512xf32>
    %cst_89 = arith.constant 5.000000e-01 : f32
    %275 = vector.broadcast %cst_89 : f32 to vector<8x512xf32>
    %276 = arith.mulf %275, %274 : vector<8x512xf32>
    %277 = math.tanh %276 : vector<8x512xf32>
    %cst_90 = arith.constant 1.000000e+00 : f32
    %278 = vector.broadcast %cst_90 : f32 to vector<8x512xf32>
    %279 = arith.addf %277, %278 : vector<8x512xf32>
    %cst_91 = arith.constant 5.000000e-01 : f32
    %280 = vector.broadcast %cst_91 : f32 to vector<8x512xf32>
    %281 = arith.mulf %280, %279 : vector<8x512xf32>
    %282 = arith.mulf %271, %244 : vector<8x512xf32>
    %283 = arith.mulf %263, %273 : vector<8x512xf32>
    %284 = arith.addf %282, %283 : vector<8x512xf32>
    %285 = math.tanh %284 : vector<8x512xf32>
    %286 = arith.mulf %281, %285 : vector<8x512xf32>
    %c7_i32 = arith.constant 7 : i32
    %287 = arith.index_cast %c7_i32 : i32 to index
    %c0_92 = arith.constant 0 : index
    %c0_93 = arith.constant 0 : index
    %288 = vector.load %arg2[%287, %c0_92, %c0_93] : memref<8x8x2048xbf16, #tpu.memory_space<vmem>>, vector<1x8x2048xbf16>
    %289 = vector.shape_cast %288 : vector<1x8x2048xbf16> to vector<8x2048xbf16>
    %290 = arith.extf %289 : vector<8x2048xbf16> to vector<8x2048xf32>
    %291 = vector.broadcast %4 : vector<1x2048xf32> to vector<8x2048xf32>
    %292 = arith.addf %290, %291 : vector<8x2048xf32>
    %293 = arith.truncf %286 : vector<8x512xf32> to vector<8x512xbf16>
    %cst_94 = arith.constant dense<0.000000e+00> : vector<8x2048xf32>
    %294 = tpu.matmul %293, %3, %cst_94 {dimension_numbers = #tpu.dot_dimension_numbers<[1], [0], [0], [1], [0, 0, 1, 1], [], []>} : vector<8x512xbf16>, vector<512x2048xbf16>, vector<8x2048xf32> -> vector<8x2048xf32>
    %295 = arith.addf %292, %294 : vector<8x2048xf32>
    %296 = vector.extract_strided_slice %295 {offsets = [0, 0], sizes = [8, 512], strides = [1, 1]} : vector<8x2048xf32> to vector<8x512xf32>
    %cst_95 = arith.constant 5.000000e-01 : f32
    %297 = vector.broadcast %cst_95 : f32 to vector<8x512xf32>
    %298 = arith.mulf %297, %296 : vector<8x512xf32>
    %299 = math.tanh %298 : vector<8x512xf32>
    %cst_96 = arith.constant 1.000000e+00 : f32
    %300 = vector.broadcast %cst_96 : f32 to vector<8x512xf32>
    %301 = arith.addf %299, %300 : vector<8x512xf32>
    %cst_97 = arith.constant 5.000000e-01 : f32
    %302 = vector.broadcast %cst_97 : f32 to vector<8x512xf32>
    %303 = arith.mulf %302, %301 : vector<8x512xf32>
    %304 = vector.extract_strided_slice %295 {offsets = [0, 512], sizes = [8, 512], strides = [1, 1]} : vector<8x2048xf32> to vector<8x512xf32>
    %cst_98 = arith.constant 5.000000e-01 : f32
    %305 = vector.broadcast %cst_98 : f32 to vector<8x512xf32>
    %306 = arith.mulf %305, %304 : vector<8x512xf32>
    %307 = math.tanh %306 : vector<8x512xf32>
    %cst_99 = arith.constant 1.000000e+00 : f32
    %308 = vector.broadcast %cst_99 : f32 to vector<8x512xf32>
    %309 = arith.addf %307, %308 : vector<8x512xf32>
    %cst_100 = arith.constant 5.000000e-01 : f32
    %310 = vector.broadcast %cst_100 : f32 to vector<8x512xf32>
    %311 = arith.mulf %310, %309 : vector<8x512xf32>
    %312 = vector.extract_strided_slice %295 {offsets = [0, 1024], sizes = [8, 512], strides = [1, 1]} : vector<8x2048xf32> to vector<8x512xf32>
    %313 = math.tanh %312 : vector<8x512xf32>
    %314 = vector.extract_strided_slice %295 {offsets = [0, 1536], sizes = [8, 512], strides = [1, 1]} : vector<8x2048xf32> to vector<8x512xf32>
    %cst_101 = arith.constant 5.000000e-01 : f32
    %315 = vector.broadcast %cst_101 : f32 to vector<8x512xf32>
    %316 = arith.mulf %315, %314 : vector<8x512xf32>
    %317 = math.tanh %316 : vector<8x512xf32>
    %cst_102 = arith.constant 1.000000e+00 : f32
    %318 = vector.broadcast %cst_102 : f32 to vector<8x512xf32>
    %319 = arith.addf %317, %318 : vector<8x512xf32>
    %cst_103 = arith.constant 5.000000e-01 : f32
    %320 = vector.broadcast %cst_103 : f32 to vector<8x512xf32>
    %321 = arith.mulf %320, %319 : vector<8x512xf32>
    %322 = arith.mulf %311, %284 : vector<8x512xf32>
    %323 = arith.mulf %303, %313 : vector<8x512xf32>
    %324 = arith.addf %322, %323 : vector<8x512xf32>
    %325 = math.tanh %324 : vector<8x512xf32>
    %326 = arith.mulf %321, %325 : vector<8x512xf32>
    %c8_i32 = arith.constant 8 : i32
    %c0_104 = arith.constant 0 : index
    %c0_105 = arith.constant 0 : index
    %327 = vector.load %arg5[%c0_104, %c0_105] : memref<8x512xf32, #tpu.memory_space<vmem>>, vector<8x512xf32>
    tpu.vector_store %arg5[%c0_104, %c0_105], %326 {strides = array<i32>} : memref<8x512xf32, #tpu.memory_space<vmem>>, vector<8x512xf32>,
    %c0_106 = arith.constant 0 : index
    %c0_107 = arith.constant 0 : index
    %328 = vector.load %arg6[%c0_106, %c0_107] : memref<8x512xf32, #tpu.memory_space<vmem>>, vector<8x512xf32>
    tpu.vector_store %arg6[%c0_106, %c0_107], %324 {strides = array<i32>} : memref<8x512xf32, #tpu.memory_space<vmem>>, vector<8x512xf32>,
    return
  }
  func.func @transform_0(%arg0: i32, %arg1: i32) -> (i32, i32, i32) {
    %c0_i32 = arith.constant 0 : i32
    %c0_i32_0 = arith.constant 0 : i32
    return %arg1, %arg0, %c0_i32 : i32, i32, i32
  }
  func.func @transform_1(%arg0: i32, %arg1: i32) -> (i32, i32) {
    %c0_i32 = arith.constant 0 : i32
    %c0_i32_0 = arith.constant 0 : i32
    %c0_i32_1 = arith.constant 0 : i32
    return %c0_i32, %c0_i32_0 : i32, i32
  }
  func.func @transform_2(%arg0: i32, %arg1: i32) -> (i32, i32) {
    %c0_i32 = arith.constant 0 : i32
    %c0_i32_0 = arith.constant 0 : i32
    %c0_i32_1 = arith.constant 0 : i32
    return %c0_i32, %c0_i32_0 : i32, i32
  }
  func.func @transform_3(%arg0: i32, %arg1: i32) -> (i32, i32) {
    %c0_i32 = arith.constant 0 : i32
    %c0_i32_0 = arith.constant 0 : i32
    return %arg0, %c0_i32 : i32, i32
  }
}

</mosaic_0001>

<llo_original>
// kernel: lstm_classifier_forward.1
$region0: #{lstm_classifier_forward.1}
  #allocation0 [shape = 'u32[]', space=smem, size = 0x4, offset = 0x4, fixed_abs, tag = 'smem constant byte address 0x4 - core index']
  #allocation1 [shape = 'u32[144,128]{1,0:T(1,128)}', space=vmem, size = 0x12000, scoped, tag = 'internal scratch']
  #allocation2 [shape = 'f32[8,512]{1,0:T(8,128)}', space=vmem, size = 0x4000, scoped, tag = 'scratch operand']
  %s0 = inlined_call_operand.vmem [shape: bf16[8,8,2048], index: 0, kind: input, shape index: {}]
  %s1 = inlined_call_operand.vmem [shape: bf16[512,2048], index: 1, kind: input, shape index: {}]
  %s2 = inlined_call_operand.vmem [shape: f32[1,2048], index: 2, kind: input, shape index: {}]
  %s3 = inlined_call_operand.vmem [shape: f32[8,512], index: 3, kind: output, shape index: {}]
  %s4 = sld [smem:[#allocation0]]
  $region26: #{lstm_classifier_forward.1} parent=0
    _
  %s6 = ssub.s32 1, %s4
  %s7 = scalar_select 0, %s6, %s4
  // Predicated region
  $region2: #{lstm_classifier_forward.1} parent=0 // pred_check
    _
  $region3: #{lstm_classifier_forward.1} parent=0 // pred_check_branch
    %9 = sbr.rel (0) target = $region5
  $region4: #{lstm_classifier_forward.1} parent=0 // pred_region
    _
  $region5: #{lstm_classifier_forward.1} parent=0 // pred_fallthru
    _
  // Predicated region
  $region6: #{lstm_classifier_forward.1} parent=0 // pred_check
    _
  $region7: #{lstm_classifier_forward.1} parent=0 // pred_check_branch
    %11 = sbr.rel (0) target = $region9
  $region8: #{lstm_classifier_forward.1} parent=0 // pred_region
    _
  $region9: #{lstm_classifier_forward.1} parent=0 // pred_fallthru
    _
  // Predicated region
  $region10: #{lstm_classifier_forward.1} parent=0 // pred_check
    _
  $region11: #{lstm_classifier_forward.1} parent=0 // pred_check_branch
    %13 = sbr.rel (0) target = $region13
  $region12: #{lstm_classifier_forward.1} parent=0 // pred_region
    _
  $region13: #{lstm_classifier_forward.1} parent=0 // pred_fallthru
    _
  %p14 = scmp.eq.s32.totalorder 0, 0
  // Predicated region
  $region14: #{lstm_classifier_forward.1} parent=0 // pred_check
    %p15 = pneg %p14
  $region15: #{lstm_classifier_forward.1} parent=0 // pred_check_branch
    %17 = sbr.rel (%p15) target = $region17
  $region16: #{lstm_classifier_forward.1} parent=0 // pred_region
    %18 = vst [vmem:[%s3] sm:$0xff] 0.0
    %19 = vst [vmem:[%s3 + $0x8] sm:$0xff] 0.0
    %20 = vst [vmem:[%s3 + $0x10] sm:$0xff] 0.0
    %21 = vst [vmem:[%s3 + $0x18] sm:$0xff] 0.0
    %22 = vst [vmem:[#allocation2] sm:$0xff] 0.0
    %23 = vst [vmem:[#allocation2 + $0x8] sm:$0xff] 0.0
    %24 = vst [vmem:[#allocation2 + $0x10] sm:$0xff] 0.0
    %25 = vst [vmem:[#allocation2 + $0x18] sm:$0xff] 0.0
  $region17: #{lstm_classifier_forward.1} parent=0 // pred_fallthru
    _
  %v26 = vld [vmem:[%s1] sm:$0xff]
  %v27 = vld [vmem:[%s1 + $0x8] sm:$0xff]
  %v28 = vld [vmem:[%s1 + $0x10] sm:$0xff]
  %v29 = vld [vmem:[%s1 + $0x18] sm:$0xff]
  %v30 = vld [vmem:[%s1 + $0x20] sm:$0xff]
  %v31 = vld [vmem:[%s1 + $0x28] sm:$0xff]
  %v32 = vld [vmem:[%s1 + $0x30] sm:$0xff]
  %v33 = vld [vmem:[%s1 + $0x38] sm:$0xff]
  %v34 = vld [vmem:[%s1 + $0x40] sm:$0xff]
  %v35 = vld [vmem:[%s1 + $0x48] sm:$0xff]
  %v36 = vld [vmem:[%s1 + $0x50] sm:$0xff]
  %v37 = vld [vmem:[%s1 + $0x58] sm:$0xff]
  %v38 = vld [vmem:[%s1 + $0x60] sm:$0xff]
  %v39 = vld [vmem:[%s1 + $0x68] sm:$0xff]
  %v40 = vld [vmem:[%s1 + $0x70] sm:$0xff]
  %v41 = vld [vmem:[%s1 + $0x78] sm:$0xff]
  %v42 = vld [vmem:[%s1 + $0x80] sm:$0xff]
  %v43 = vld [vmem:[%s1 + $0x88] sm:$0xff]
  %v44 = vld [vmem:[%s1 + $0x90] sm:$0xff]
  %v45 = vld [vmem:[%s1 + $0x98] sm:$0xff]
  %v46 = vld [vmem:[%s1 + $0xa0] sm:$0xff]
  %v47 = vld [vmem:[%s1 + $0xa8] sm:$0xff]
  %v48 = vld [vmem:[%s1 + $0xb0] sm:$0xff]
  %v49 = vld [vmem:[%s1 + $0xb8] sm:$0xff]
  %v50 = vld [vmem:[%s1 + $0xc0] sm:$0xff]
  %v51 = vld [vmem:[%s1 + $0xc8] sm:$0xff]
  %v52 = vld [vmem:[%s1 + $0xd0] sm:$0xff]
  %v53 = vld [vmem:[%s1 + $0xd8] sm:$0xff]
  %v54 = vld [vmem:[%s1 + $0xe0] sm:$0xff]
  %v55 = vld [vmem:[%s1 + $0xe8] sm:$0xff]
  %v56 = vld [vmem:[%s1 + $0xf0] sm:$0xff]
  %v57 = vld [vmem:[%s1 + $0xf8] sm:$0xff]
  %v58 = vld [vmem:[%s1 + $0x100] sm:$0xff]
  %v59 = vld [vmem:[%s1 + $0x108] sm:$0xff]
  %v60 = vld [vmem:[%s1 + $0x110] sm:$0xff]
  %v61 = vld [vmem:[%s1 + $0x118] sm:$0xff]
  %v62 = vld [vmem:[%s1 + $0x120] sm:$0xff]
  %v63 = vld [vmem:[%s1 + $0x128] sm:$0xff]
  %v64 = vld [vmem:[%s1 + $0x130] sm:$0xff]
  %v65 = vld [vmem:[%s1 + $0x138] sm:$0xff]
  %v66 = vld [vmem:[%s1 + $0x140] sm:$0xff]
  %v67 = vld [vmem:[%s1 + $0x148] sm:$0xff]
  %v68 = vld [vmem:[%s1 + $0x150] sm:$0xff]
  %v69 = vld [vmem:[%s1 + $0x158] sm:$0xff]
  %v70 = vld [vmem:[%s1 + $0x160] sm:$0xff]
  %v71 = vld [vmem:[%s1 + $0x168] sm:$0xff]
  %v72 = vld [vmem:[%s1 + $0x170] sm:$0xff]
  %v73 = vld [vmem:[%s1 + $0x178] sm:$0xff]
  %v74 = vld [vmem:[%s1 + $0x180] sm:$0xff]
  %v75 = vld [vmem:[%s1 + $0x188] sm:$0xff]
  %v76 = vld [vmem:[%s1 + $0x190] sm:$0xff]
  %v77 = vld [vmem:[%s1 + $0x198] sm:$0xff]
  %v78 = vld [vmem:[%s1 + $0x1a0] sm:$0xff]
  %v79 = vld [vmem:[%s1 + $0x1a8] sm:$0xff]
  %v80 = vld [vmem:[%s1 + $0x1b0] sm:$0xff]
  %v81 = vld [vmem:[%s1 + $0x1b8] sm:$0xff]
  %v82 = vld [vmem:[%s1 + $0x1c0] sm:$0xff]
  %v83 = vld [vmem:[%s1 + $0x1c8] sm:$0xff]
  %v84 = vld [vmem:[%s1 + $0x1d0] sm:$0xff]
  %v85 = vld [vmem:[%s1 + $0x1d8] sm:$0xff]
  %v86 = vld [vmem:[%s1 + $0x1e0] sm:$0xff]
  %v87 = vld [vmem:[%s1 + $0x1e8] sm:$0xff]
  %v88 = vld [vmem:[%s1 + $0x1f0] sm:$0xff]
  %v89 = vld [vmem:[%s1 + $0x1f8] sm:$0xff]
  %v90 = vld [vmem:[%s1 + $0x200] sm:$0xff]
  %v91 = vld [vmem:[%s1 + $0x208] sm:$0xff]
  %v92 = vld [vmem:[%s1 + $0x210] sm:$0xff]
  %v93 = vld [vmem:[%s1 + $0x218] sm:$0xff]
  %v94 = vld [vmem:[%s1 + $0x220] sm:$0xff]
  %v95 = vld [vmem:[%s1 + $0x228] sm:$0xff]
  %v96 = vld [vmem:[%s1 + $0x230] sm:$0xff]
  %v97 = vld [vmem:[%s1 + $0x238] sm:$0xff]
  %v98 = vld [vmem:[%s1 + $0x240] sm:$0xff]
  %v99 = vld [vmem:[%s1 + $0x248] sm:$0xff]
  %v100 = vld [vmem:[%s1 + $0x250] sm:$0xff]
  %v101 = vld [vmem:[%s1 + $0x258] sm:$0xff]
  %v102 = vld [vmem:[%s1 + $0x260] sm:$0xff]
  %v103 = vld [vmem:[%s1 + $0x268] sm:$0xff]
  %v104 = vld [vmem:[%s1 + $0x270] sm:$0xff]
  %v105 = vld [vmem:[%s1 + $0x278] sm:$0xff]
  %v106 = vld [vmem:[%s1 + $0x280] sm:$0xff]
  %v107 = vld [vmem:[%s1 + $0x288] sm:$0xff]
  %v108 = vld [vmem:[%s1 + $0x290] sm:$0xff]
  %v109 = vld [vmem:[%s1 + $0x298] sm:$0xff]
  %v110 = vld [vmem:[%s1 + $0x2a0] sm:$0xff]
  %v111 = vld [vmem:[%s1 + $0x2a8] sm:$0xff]
  %v112 = vld [vmem:[%s1 + $0x2b0] sm:$0xff]
  %v113 = vld [vmem:[%s1 + $0x2b8] sm:$0xff]
  %v114 = vld [vmem:[%s1 + $0x2c0] sm:$0xff]
  %v115 = vld [vmem:[%s1 + $0x2c8] sm:$0xff]
  %v116 = vld [vmem:[%s1 + $0x2d0] sm:$0xff]
  %v117 = vld [vmem:[%s1 + $0x2d8] sm:$0xff]
  %v118 = vld [vmem:[%s1 + $0x2e0] sm:$0xff]
  %v119 = vld [vmem:[%s1 + $0x2e8] sm:$0xff]
  %v120 = vld [vmem:[%s1 + $0x2f0] sm:$0xff]
  %v121 = vld [vmem:[%s1 + $0x2f8] sm:$0xff]
  %v122 = vld [vmem:[%s1 + $0x300] sm:$0xff]
  %v123 = vld [vmem:[%s1 + $0x308] sm:$0xff]
  %v124 = vld [vmem:[%s1 + $0x310] sm:$0xff]
  %v125 = vld [vmem:[%s1 + $0x318] sm:$0xff]
  %v126 = vld [vmem:[%s1 + $0x320] sm:$0xff]
  %v127 = vld [vmem:[%s1 + $0x328] sm:$0xff]
  %v128 = vld [vmem:[%s1 + $0x330] sm:$0xff]
  %v129 = vld [vmem:[%s1 + $0x338] sm:$0xff]
  %v130 = vld [vmem:[%s1 + $0x340] sm:$0xff]
  %v131 = vld [vmem:[%s1 + $0x348] sm:$0xff]
  %v132 = vld [vmem:[%s1 + $0x350] sm:$0xff]
  %v133 = vld [vmem:[%s1 + $0x358] sm:$0xff]
  %v134 = vld [vmem:[%s1 + $0x360] sm:$0xff]
  %v135 = vld [vmem:[%s1 + $0x368] sm:$0xff]
  %v136 = vld [vmem:[%s1 + $0x370] sm:$0xff]
  %v137 = vld [vmem:[%s1 + $0x378] sm:$0xff]
  %v138 = vld [vmem:[%s1 + $0x380] sm:$0xff]
  %v139 = vld [vmem:[%s1 + $0x388] sm:$0xff]
  %v140 = vld [vmem:[%s1 + $0x390] sm:$0xff]
  %v141 = vld [vmem:[%s1 + $0x398] sm:$0xff]
  %v142 = vld [vmem:[%s1 + $0x3a0] sm:$0xff]
  %v143 = vld [vmem:[%s1 + $0x3a8] sm:$0xff]
  %v144 = vld [vmem:[%s1 + $0x3b0] sm:$0xff]
  %v145 = vld [vmem:[%s1 + $0x3b8] sm:$0xff]
  %v146 = vld [vmem:[%s1 + $0x3c0] sm:$0xff]
  %v147 = vld [vmem:[%s1 + $0x3c8] sm:$0xff]
  %v148 = vld [vmem:[%s1 + $0x3d0] sm:$0xff]
  %v149 = vld [vmem:[%s1 + $0x3d8] sm:$0xff]
  %v150 = vld [vmem:[%s1 + $0x3e0] sm:$0xff]
  %v151 = vld [vmem:[%s1 + $0x3e8] sm:$0xff]
  %v152 = vld [vmem:[%s1 + $0x3f0] sm:$0xff]
  %v153 = vld [vmem:[%s1 + $0x3f8] sm:$0xff]
  %v154 = vld [vmem:[%s1 + $0x400] sm:$0xff]
  %v155 = vld [vmem:[%s1 + $0x408] sm:$0xff]
  %v156 = vld [vmem:[%s1 + $0x410] sm:$0xff]
  %v157 = vld [vmem:[%s1 + $0x418] sm:$0xff]
  %v158 = vld [vmem:[%s1 + $0x420] sm:$0xff]
  %v159 = vld [vmem:[%s1 + $0x428] sm:$0xff]
  %v160 = vld [vmem:[%s1 + $0x430] sm:$0xff]
  %v161 = vld [vmem:[%s1 + $0x438] sm:$0xff]
  %v162 = vld [vmem:[%s1 + $0x440] sm:$0xff]
  %v163 = vld [vmem:[%s1 + $0x448] sm:$0xff]
  %v164 = vld [vmem:[%s1 + $0x450] sm:$0xff]
  %v165 = vld [vmem:[%s1 + $0x458] sm:$0xff]
  %v166 = vld [vmem:[%s1 + $0x460] sm:$0xff]
  %v167 = vld [vmem:[%s1 + $0x468] sm:$0xff]
  %v168 = vld [vmem:[%s1 + $0x470] sm:$0xff]
  %v169 = vld [vmem:[%s1 + $0x478] sm:$0xff]
  %v170 = vld [vmem:[%s1 + $0x480] sm:$0xff]
  %v171 = vld [vmem:[%s1 + $0x488] sm:$0xff]
  %v172 = vld [vmem:[%s1 + $0x490] sm:$0xff]
  %v173 = vld [vmem:[%s1 + $0x498] sm:$0xff]
  %v174 = vld [vmem:[%s1 + $0x4a0] sm:$0xff]
  %v175 = vld [vmem:[%s1 + $0x4a8] sm:$0xff]
  %v176 = vld [vmem:[%s1 + $0x4b0] sm:$0xff]
  %v177 = vld [vmem:[%s1 + $0x4b8] sm:$0xff]
  %v178 = vld [vmem:[%s1 + $0x4c0] sm:$0xff]
  %v179 = vld [vmem:[%s1 + $0x4c8] sm:$0xff]
  %v180 = vld [vmem:[%s1 + $0x4d0] sm:$0xff]
  %v181 = vld [vmem:[%s1 + $0x4d8] sm:$0xff]
  %v182 = vld [vmem:[%s1 + $0x4e0] sm:$0xff]
  %v183 = vld [vmem:[%s1 + $0x4e8] sm:$0xff]
  %v184 = vld [vmem:[%s1 + $0x4f0] sm:$0xff]
  %v185 = vld [vmem:[%s1 + $0x4f8] sm:$0xff]
  %v186 = vld [vmem:[%s1 + $0x500] sm:$0xff]
  %v187 = vld [vmem:[%s1 + $0x508] sm:$0xff]
  %v188 = vld [vmem:[%s1 + $0x510] sm:$0xff]
  %v189 = vld [vmem:[%s1 + $0x518] sm:$0xff]
  %v190 = vld [vmem:[%s1 + $0x520] sm:$0xff]
  %v191 = vld [vmem:[%s1 + $0x528] sm:$0xff]
  %v192 = vld [vmem:[%s1 + $0x530] sm:$0xff]
  %v193 = vld [vmem:[%s1 + $0x538] sm:$0xff]
  %v194 = vld [vmem:[%s1 + $0x540] sm:$0xff]
  %v195 = vld [vmem:[%s1 + $0x548] sm:$0xff]
  %v196 = vld [vmem:[%s1 + $0x550] sm:$0xff]
  %v197 = vld [vmem:[%s1 + $0x558] sm:$0xff]
  %v198 = vld [vmem:[%s1 + $0x560] sm:$0xff]
  %v199 = vld [vmem:[%s1 + $0x568] sm:$0xff]
  %v200 = vld [vmem:[%s1 + $0x570] sm:$0xff]
  %v201 = vld [vmem:[%s1 + $0x578] sm:$0xff]
  %v202 = vld [vmem:[%s1 + $0x580] sm:$0xff]
  %v203 = vld [vmem:[%s1 + $0x588] sm:$0xff]
  %v204 = vld [vmem:[%s1 + $0x590] sm:$0xff]
  %v205 = vld [vmem:[%s1 + $0x598] sm:$0xff]
  %v206 = vld [vmem:[%s1 + $0x5a0] sm:$0xff]
  %v207 = vld [vmem:[%s1 + $0x5a8] sm:$0xff]
  %v208 = vld [vmem:[%s1 + $0x5b0] sm:$0xff]
  %v209 = vld [vmem:[%s1 + $0x5b8] sm:$0xff]
  %v210 = vld [vmem:[%s1 + $0x5c0] sm:$0xff]
  %v211 = vld [vmem:[%s1 + $0x5c8] sm:$0xff]
  %v212 = vld [vmem:[%s1 + $0x5d0] sm:$0xff]
  %v213 = vld [vmem:[%s1 + $0x5d8] sm:$0xff]
  %v214 = vld [vmem:[%s1 + $0x5e0] sm:$0xff]
  %v215 = vld [vmem:[%s1 + $0x5e8] sm:$0xff]
  %v216 = vld [vmem:[%s1 + $0x5f0] sm:$0xff]
  %v217 = vld [vmem:[%s1 + $0x5f8] sm:$0xff]
  %v218 = vld [vmem:[%s1 + $0x600] sm:$0xff]
  %v219 = vld [vmem:[%s1 + $0x608] sm:$0xff]
  %v220 = vld [vmem:[%s1 + $0x610] sm:$0xff]
  %v221 = vld [vmem:[%s1 + $0x618] sm:$0xff]
  %v222 = vld [vmem:[%s1 + $0x620] sm:$0xff]
  %v223 = vld [vmem:[%s1 + $0x628] sm:$0xff]
  %v224 = vld [vmem:[%s1 + $0x630] sm:$0xff]
  %v225 = vld [vmem:[%s1 + $0x638] sm:$0xff]
  %v226 = vld [vmem:[%s1 + $0x640] sm:$0xff]
  %v227 = vld [vmem:[%s1 + $0x648] sm:$0xff]
  %v228 = vld [vmem:[%s1 + $0x650] sm:$0xff]
  %v229 = vld [vmem:[%s1 + $0x658] sm:$0xff]
  %v230 = vld [vmem:[%s1 + $0x660] sm:$0xff]
  %v231 = vld [vmem:[%s1 + $0x668] sm:$0xff]
  %v232 = vld [vmem:[%s1 + $0x670] sm:$0xff]
  %v233 = vld [vmem:[%s1 + $0x678] sm:$0xff]
  %v234 = vld [vmem:[%s1 + $0x680] sm:$0xff]
  %v235 = vld [vmem:[%s1 + $0x688] sm:$0xff]
  %v236 = vld [vmem:[%s1 + $0x690] sm:$0xff]
  %v237 = vld [vmem:[%s1 + $0x698] sm:$0xff]
  %v238 = vld [vmem:[%s1 + $0x6a0] sm:$0xff]
  %v239 = vld [vmem:[%s1 + $0x6a8] sm:$0xff]
  %v240 = vld [vmem:[%s1 + $0x6b0] sm:$0xff]
  %v241 = vld [vmem:[%s1 + $0x6b8] sm:$0xff]
  %v242 = vld [vmem:[%s1 + $0x6c0] sm:$0xff]
  %v243 = vld [vmem:[%s1 + $0x6c8] sm:$0xff]
  %v244 = vld [vmem:[%s1 + $0x6d0] sm:$0xff]
  %v245 = vld [vmem:[%s1 + $0x6d8] sm:$0xff]
  %v246 = vld [vmem:[%s1 + $0x6e0] sm:$0xff]
  %v247 = vld [vmem:[%s1 + $0x6e8] sm:$0xff]
  %v248 = vld [vmem:[%s1 + $0x6f0] sm:$0xff]
  %v249 = vld [vmem:[%s1 + $0x6f8] sm:$0xff]
  %v250 = vld [vmem:[%s1 + $0x700] sm:$0xff]
  %v251 = vld [vmem:[%s1 + $0x708] sm:$0xff]
  %v252 = vld [vmem:[%s1 + $0x710] sm:$0xff]
  %v253 = vld [vmem:[%s1 + $0x718] sm:$0xff]
  %v254 = vld [vmem:[%s1 + $0x720] sm:$0xff]
  %v255 = vld [vmem:[%s1 + $0x728] sm:$0xff]
  %v256 = vld [vmem:[%s1 + $0x730] sm:$0xff]
  %v257 = vld [vmem:[%s1 + $0x738] sm:$0xff]
  %v258 = vld [vmem:[%s1 + $0x740] sm:$0xff]
  %v259 = vld [vmem:[%s1 + $0x748] sm:$0xff]
  %v260 = vld [vmem:[%s1 + $0x750] sm:$0xff]
  %v261 = vld [vmem:[%s1 + $0x758] sm:$0xff]
  %v262 = vld [vmem:[%s1 + $0x760] sm:$0xff]
  %v263 = vld [vmem:[%s1 + $0x768] sm:$0xff]
  %v264 = vld [vmem:[%s1 + $0x770] sm:$0xff]
  %v265 = vld [vmem:[%s1 + $0x778] sm:$0xff]
  %v266 = vld [vmem:[%s1 + $0x780] sm:$0xff]
  %v267 = vld [vmem:[%s1 + $0x788] sm:$0xff]
  %v268 = vld [vmem:[%s1 + $0x790] sm:$0xff]
  %v269 = vld [vmem:[%s1 + $0x798] sm:$0xff]
  %v270 = vld [vmem:[%s1 + $0x7a0] sm:$0xff]
  %v271 = vld [vmem:[%s1 + $0x7a8] sm:$0xff]
  %v272 = vld [vmem:[%s1 + $0x7b0] sm:$0xff]
  %v273 = vld [vmem:[%s1 + $0x7b8] sm:$0xff]
  %v274 = vld [vmem:[%s1 + $0x7c0] sm:$0xff]
  %v275 = vld [vmem:[%s1 + $0x7c8] sm:$0xff]
  %v276 = vld [vmem:[%s1 + $0x7d0] sm:$0xff]
  %v277 = vld [vmem:[%s1 + $0x7d8] sm:$0xff]
  %v278 = vld [vmem:[%s1 + $0x7e0] sm:$0xff]
  %v279 = vld [vmem:[%s1 + $0x7e8] sm:$0xff]
  %v280 = vld [vmem:[%s1 + $0x7f0] sm:$0xff]
  %v281 = vld [vmem:[%s1 + $0x7f8] sm:$0xff]
  %v282 = vld [vmem:[%s1 + $0x800] sm:$0xff]
  %v283 = vld [vmem:[%s1 + $0x808] sm:$0xff]
  %v284 = vld [vmem:[%s1 + $0x810] sm:$0xff]
  %v285 = vld [vmem:[%s1 + $0x818] sm:$0xff]
  %v286 = vld [vmem:[%s1 + $0x820] sm:$0xff]
  %v287 = vld [vmem:[%s1 + $0x828] sm:$0xff]
  %v288 = vld [vmem:[%s1 + $0x830] sm:$0xff]
  %v289 = vld [vmem:[%s1 + $0x838] sm:$0xff]
  %v290 = vld [vmem:[%s1 + $0x840] sm:$0xff]
  %v291 = vld [vmem:[%s1 + $0x848] sm:$0xff]
  %v292 = vld [vmem:[%s1 + $0x850] sm:$0xff]
  %v293 = vld [vmem:[%s1 + $0x858] sm:$0xff]
  %v294 = vld [vmem:[%s1 + $0x860] sm:$0xff]
  %v295 = vld [vmem:[%s1 + $0x868] sm:$0xff]
  %v296 = vld [vmem:[%s1 + $0x870] sm:$0xff]
  %v297 = vld [vmem:[%s1 + $0x878] sm:$0xff]
  %v298 = vld [vmem:[%s1 + $0x880] sm:$0xff]
  %v299 = vld [vmem:[%s1 + $0x888] sm:$0xff]
  %v300 = vld [vmem:[%s1 + $0x890] sm:$0xff]
  %v301 = vld [vmem:[%s1 + $0x898] sm:$0xff]
  %v302 = vld [vmem:[%s1 + $0x8a0] sm:$0xff]
  %v303 = vld [vmem:[%s1 + $0x8a8] sm:$0xff]
  %v304 = vld [vmem:[%s1 + $0x8b0] sm:$0xff]
  %v305 = vld [vmem:[%s1 + $0x8b8] sm:$0xff]
  %v306 = vld [vmem:[%s1 + $0x8c0] sm:$0xff]
  %v307 = vld [vmem:[%s1 + $0x8c8] sm:$0xff]
  %v308 = vld [vmem:[%s1 + $0x8d0] sm:$0xff]
  %v309 = vld [vmem:[%s1 + $0x8d8] sm:$0xff]
  %v310 = vld [vmem:[%s1 + $0x8e0] sm:$0xff]
  %v311 = vld [vmem:[%s1 + $0x8e8] sm:$0xff]
  %v312 = vld [vmem:[%s1 + $0x8f0] sm:$0xff]
  %v313 = vld [vmem:[%s1 + $0x8f8] sm:$0xff]
  %v314 = vld [vmem:[%s1 + $0x900] sm:$0xff]
  %v315 = vld [vmem:[%s1 + $0x908] sm:$0xff]
  %v316 = vld [vmem:[%s1 + $0x910] sm:$0xff]
  %v317 = vld [vmem:[%s1 + $0x918] sm:$0xff]
  %v318 = vld [vmem:[%s1 + $0x920] sm:$0xff]
  %v319 = vld [vmem:[%s1 + $0x928] sm:$0xff]
  %v320 = vld [vmem:[%s1 + $0x930] sm:$0xff]
  %v321 = vld [vmem:[%s1 + $0x938] sm:$0xff]
  %v322 = vld [vmem:[%s1 + $0x940] sm:$0xff]
  %v323 = vld [vmem:[%s1 + $0x948] sm:$0xff]
  %v324 = vld [vmem:[%s1 + $0x950] sm:$0xff]
  %v325 = vld [vmem:[%s1 + $0x958] sm:$0xff]
  %v326 = vld [vmem:[%s1 + $0x960] sm:$0xff]
  %v327 = vld [vmem:[%s1 + $0x968] sm:$0xff]
  %v328 = vld [vmem:[%s1 + $0x970] sm:$0xff]
  %v329 = vld [vmem:[%s1 + $0x978] sm:$0xff]
  %v330 = vld [vmem:[%s1 + $0x980] sm:$0xff]
  %v331 = vld [vmem:[%s1 + $0x988] sm:$0xff]
  %v332 = vld [vmem:[%s1 + $0x990] sm:$0xff]
  %v333 = vld [vmem:[%s1 + $0x998] sm:$0xff]
  %v334 = vld [vmem:[%s1 + $0x9a0] sm:$0xff]
  %v335 = vld [vmem:[%s1 + $0x9a8] sm:$0xff]
  %v336 = vld [vmem:[%s1 + $0x9b0] sm:$0xff]
  %v337 = vld [vmem:[%s1 + $0x9b8] sm:$0xff]
  %v338 = vld [vmem:[%s1 + $0x9c0] sm:$0xff]
  %v339 = vld [vmem:[%s1 + $0x9c8] sm:$0xff]
  %v340 = vld [vmem:[%s1 + $0x9d0] sm:$0xff]
  %v341 = vld [vmem:[%s1 + $0x9d8] sm:$0xff]
  %v342 = vld [vmem:[%s1 + $0x9e0] sm:$0xff]
  %v343 = vld [vmem:[%s1 + $0x9e8] sm:$0xff]
  %v344 = vld [vmem:[%s1 + $0x9f0] sm:$0xff]
  %v345 = vld [vmem:[%s1 + $0x9f8] sm:$0xff]
  %v346 = vld [vmem:[%s1 + $0xa00] sm:$0xff]
  %v347 = vld [vmem:[%s1 + $0xa08] sm:$0xff]
  %v348 = vld [vmem:[%s1 + $0xa10] sm:$0xff]
  %v349 = vld [vmem:[%s1 + $0xa18] sm:$0xff]
  %v350 = vld [vmem:[%s1 + $0xa20] sm:$0xff]
  %v351 = vld [vmem:[%s1 + $0xa28] sm:$0xff]
  %v352 = vld [vmem:[%s1 + $0xa30] sm:$0xff]
  %v353 = vld [vmem:[%s1 + $0xa38] sm:$0xff]
  %v354 = vld [vmem:[%s1 + $0xa40] sm:$0xff]
  %v355 = vld [vmem:[%s1 + $0xa48] sm:$0xff]
  %v356 = vld [vmem:[%s1 + $0xa50] sm:$0xff]
  %v357 = vld [vmem:[%s1 + $0xa58] sm:$0xff]
  %v358 = vld [vmem:[%s1 + $0xa60] sm:$0xff]
  %v359 = vld [vmem:[%s1 + $0xa68] sm:$0xff]
  %v360 = vld [vmem:[%s1 + $0xa70] sm:$0xff]
  %v361 = vld [vmem:[%s1 + $0xa78] sm:$0xff]
  %v362 = vld [vmem:[%s1 + $0xa80] sm:$0xff]
  %v363 = vld [vmem:[%s1 + $0xa88] sm:$0xff]
  %v364 = vld [vmem:[%s1 + $0xa90] sm:$0xff]
  %v365 = vld [vmem:[%s1 + $0xa98] sm:$0xff]
  %v366 = vld [vmem:[%s1 + $0xaa0] sm:$0xff]
  %v367 = vld [vmem:[%s1 + $0xaa8] sm:$0xff]
  %v368 = vld [vmem:[%s1 + $0xab0] sm:$0xff]
  %v369 = vld [vmem:[%s1 + $0xab8] sm:$0xff]
  %v370 = vld [vmem:[%s1 + $0xac0] sm:$0xff]
  %v371 = vld [vmem:[%s1 + $0xac8] sm:$0xff]
  %v372 = vld [vmem:[%s1 + $0xad0] sm:$0xff]
  %v373 = vld [vmem:[%s1 + $0xad8] sm:$0xff]
  %v374 = vld [vmem:[%s1 + $0xae0] sm:$0xff]
  %v375 = vld [vmem:[%s1 + $0xae8] sm:$0xff]
  %v376 = vld [vmem:[%s1 + $0xaf0] sm:$0xff]
  %v377 = vld [vmem:[%s1 + $0xaf8] sm:$0xff]
  %v378 = vld [vmem:[%s1 + $0xb00] sm:$0xff]
  %v379 = vld [vmem:[%s1 + $0xb08] sm:$0xff]
  %v380 = vld [vmem:[%s1 + $0xb10] sm:$0xff]
  %v381 = vld [vmem:[%s1 + $0xb18] sm:$0xff]
  %v382 = vld [vmem:[%s1 + $0xb20] sm:$0xff]
  %v383 = vld [vmem:[%s1 + $0xb28] sm:$0xff]
  %v384 = vld [vmem:[%s1 + $0xb30] sm:$0xff]
  %v385 = vld [vmem:[%s1 + $0xb38] sm:$0xff]
  %v386 = vld [vmem:[%s1 + $0xb40] sm:$0xff]
  %v387 = vld [vmem:[%s1 + $0xb48] sm:$0xff]
  %v388 = vld [vmem:[%s1 + $0xb50] sm:$0xff]
  %v389 = vld [vmem:[%s1 + $0xb58] sm:$0xff]
  %v390 = vld [vmem:[%s1 + $0xb60] sm:$0xff]
  %v391 = vld [vmem:[%s1 + $0xb68] sm:$0xff]
  %v392 = vld [vmem:[%s1 + $0xb70] sm:$0xff]
  %v393 = vld [vmem:[%s1 + $0xb78] sm:$0xff]
  %v394 = vld [vmem:[%s1 + $0xb80] sm:$0xff]
  %v395 = vld [vmem:[%s1 + $0xb88] sm:$0xff]
  %v396 = vld [vmem:[%s1 + $0xb90] sm:$0xff]
  %v397 = vld [vmem:[%s1 + $0xb98] sm:$0xff]
  %v398 = vld [vmem:[%s1 + $0xba0] sm:$0xff]
  %v399 = vld [vmem:[%s1 + $0xba8] sm:$0xff]
  %v400 = vld [vmem:[%s1 + $0xbb0] sm:$0xff]
  %v401 = vld [vmem:[%s1 + $0xbb8] sm:$0xff]
  %v402 = vld [vmem:[%s1 + $0xbc0] sm:$0xff]
  %v403 = vld [vmem:[%s1 + $0xbc8] sm:$0xff]
  %v404 = vld [vmem:[%s1 + $0xbd0] sm:$0xff]
  %v405 = vld [vmem:[%s1 + $0xbd8] sm:$0xff]
  %v406 = vld [vmem:[%s1 + $0xbe0] sm:$0xff]
  %v407 = vld [vmem:[%s1 + $0xbe8] sm:$0xff]
  %v408 = vld [vmem:[%s1 + $0xbf0] sm:$0xff]
  %v409 = vld [vmem:[%s1 + $0xbf8] sm:$0xff]
  %v410 = vld [vmem:[%s1 + $0xc00] sm:$0xff]
  %v411 = vld [vmem:[%s1 + $0xc08] sm:$0xff]
  %v412 = vld [vmem:[%s1 + $0xc10] sm:$0xff]
  %v413 = vld [vmem:[%s1 + $0xc18] sm:$0xff]
  %v414 = vld [vmem:[%s1 + $0xc20] sm:$0xff]
  %v415 = vld [vmem:[%s1 + $0xc28] sm:$0xff]
  %v416 = vld [vmem:[%s1 + $0xc30] sm:$0xff]
  %v417 = vld [vmem:[%s1 + $0xc38] sm:$0xff]
  %v418 = vld [vmem:[%s1 + $0xc40] sm:$0xff]
  %v419 = vld [vmem:[%s1 + $0xc48] sm:$0xff]
  %v420 = vld [vmem:[%s1 + $0xc50] sm:$0xff]
  %v421 = vld [vmem:[%s1 + $0xc58] sm:$0xff]
  %v422 = vld [vmem:[%s1 + $0xc60] sm:$0xff]
  %v423 = vld [vmem:[%s1 + $0xc68] sm:$0xff]
  %v424 = vld [vmem:[%s1 + $0xc70] sm:$0xff]
  %v425 = vld [vmem:[%s1 + $0xc78] sm:$0xff]
  %v426 = vld [vmem:[%s1 + $0xc80] sm:$0xff]
  %v427 = vld [vmem:[%s1 + $0xc88] sm:$0xff]
  %v428 = vld [vmem:[%s1 + $0xc90] sm:$0xff]
  %v429 = vld [vmem:[%s1 + $0xc98] sm:$0xff]
  %v430 = vld [vmem:[%s1 + $0xca0] sm:$0xff]
  %v431 = vld [vmem:[%s1 + $0xca8] sm:$0xff]
  %v432 = vld [vmem:[%s1 + $0xcb0] sm:$0xff]
  %v433 = vld [vmem:[%s1 + $0xcb8] sm:$0xff]
  %v434 = vld [vmem:[%s1 + $0xcc0] sm:$0xff]
  %v435 = vld [vmem:[%s1 + $0xcc8] sm:$0xff]
  %v436 = vld [vmem:[%s1 + $0xcd0] sm:$0xff]
  %v437 = vld [vmem:[%s1 + $0xcd8] sm:$0xff]
  %v438 = vld [vmem:[%s1 + $0xce0] sm:$0xff]
  %v439 = vld [vmem:[%s1 + $0xce8] sm:$0xff]
  %v440 = vld [vmem:[%s1 + $0xcf0] sm:$0xff]
  %v441 = vld [vmem:[%s1 + $0xcf8] sm:$0xff]
  %v442 = vld [vmem:[%s1 + $0xd00] sm:$0xff]
  %v443 = vld [vmem:[%s1 + $0xd08] sm:$0xff]
  %v444 = vld [vmem:[%s1 + $0xd10] sm:$0xff]
  %v445 = vld [vmem:[%s1 + $0xd18] sm:$0xff]
  %v446 = vld [vmem:[%s1 + $0xd20] sm:$0xff]
  %v447 = vld [vmem:[%s1 + $0xd28] sm:$0xff]
  %v448 = vld [vmem:[%s1 + $0xd30] sm:$0xff]
  %v449 = vld [vmem:[%s1 + $0xd38] sm:$0xff]
  %v450 = vld [vmem:[%s1 + $0xd40] sm:$0xff]
  %v451 = vld [vmem:[%s1 + $0xd48] sm:$0xff]
  %v452 = vld [vmem:[%s1 + $0xd50] sm:$0xff]
  %v453 = vld [vmem:[%s1 + $0xd58] sm:$0xff]
  %v454 = vld [vmem:[%s1 + $0xd60] sm:$0xff]
  %v455 = vld [vmem:[%s1 + $0xd68] sm:$0xff]
  %v456 = vld [vmem:[%s1 + $0xd70] sm:$0xff]
  %v457 = vld [vmem:[%s1 + $0xd78] sm:$0xff]
  %v458 = vld [vmem:[%s1 + $0xd80] sm:$0xff]
  %v459 = vld [vmem:[%s1 + $0xd88] sm:$0xff]
  %v460 = vld [vmem:[%s1 + $0xd90] sm:$0xff]
  %v461 = vld [vmem:[%s1 + $0xd98] sm:$0xff]
  %v462 = vld [vmem:[%s1 + $0xda0] sm:$0xff]
  %v463 = vld [vmem:[%s1 + $0xda8] sm:$0xff]
  %v464 = vld [vmem:[%s1 + $0xdb0] sm:$0xff]
  %v465 = vld [vmem:[%s1 + $0xdb8] sm:$0xff]
  %v466 = vld [vmem:[%s1 + $0xdc0] sm:$0xff]
  %v467 = vld [vmem:[%s1 + $0xdc8] sm:$0xff]
  %v468 = vld [vmem:[%s1 + $0xdd0] sm:$0xff]
  %v469 = vld [vmem:[%s1 + $0xdd8] sm:$0xff]
  %v470 = vld [vmem:[%s1 + $0xde0] sm:$0xff]
  %v471 = vld [vmem:[%s1 + $0xde8] sm:$0xff]
  %v472 = vld [vmem:[%s1 + $0xdf0] sm:$0xff]
  %v473 = vld [vmem:[%s1 + $0xdf8] sm:$0xff]
  %v474 = vld [vmem:[%s1 + $0xe00] sm:$0xff]
  %v475 = vld [vmem:[%s1 + $0xe08] sm:$0xff]
  %v476 = vld [vmem:[%s1 + $0xe10] sm:$0xff]
  %v477 = vld [vmem:[%s1 + $0xe18] sm:$0xff]
  %v478 = vld [vmem:[%s1 + $0xe20] sm:$0xff]
  %v479 = vld [vmem:[%s1 + $0xe28] sm:$0xff]
  %v480 = vld [vmem:[%s1 + $0xe30] sm:$0xff]
  %v481 = vld [vmem:[%s1 + $0xe38] sm:$0xff]
  %v482 = vld [vmem:[%s1 + $0xe40] sm:$0xff]
  %v483 = vld [vmem:[%s1 + $0xe48] sm:$0xff]
  %v484 = vld [vmem:[%s1 + $0xe50] sm:$0xff]
  %v485 = vld [vmem:[%s1 + $0xe58] sm:$0xff]
  %v486 = vld [vmem:[%s1 + $0xe60] sm:$0xff]
  %v487 = vld [vmem:[%s1 + $0xe68] sm:$0xff]
  %v488 = vld [vmem:[%s1 + $0xe70] sm:$0xff]
  %v489 = vld [vmem:[%s1 + $0xe78] sm:$0xff]
  %v490 = vld [vmem:[%s1 + $0xe80] sm:$0xff]
  %v491 = vld [vmem:[%s1 + $0xe88] sm:$0xff]
  %v492 = vld [vmem:[%s1 + $0xe90] sm:$0xff]
  %v493 = vld [vmem:[%s1 + $0xe98] sm:$0xff]
  %v494 = vld [vmem:[%s1 + $0xea0] sm:$0xff]
  %v495 = vld [vmem:[%s1 + $0xea8] sm:$0xff]
  %v496 = vld [vmem:[%s1 + $0xeb0] sm:$0xff]
  %v497 = vld [vmem:[%s1 + $0xeb8] sm:$0xff]
  %v498 = vld [vmem:[%s1 + $0xec0] sm:$0xff]
  %v499 = vld [vmem:[%s1 + $0xec8] sm:$0xff]
  %v500 = vld [vmem:[%s1 + $0xed0] sm:$0xff]
  %v501 = vld [vmem:[%s1 + $0xed8] sm:$0xff]
  %v502 = vld [vmem:[%s1 + $0xee0] sm:$0xff]
  %v503 = vld [vmem:[%s1 + $0xee8] sm:$0xff]
  %v504 = vld [vmem:[%s1 + $0xef0] sm:$0xff]
  %v505 = vld [vmem:[%s1 + $0xef8] sm:$0xff]
  %v506 = vld [vmem:[%s1 + $0xf00] sm:$0xff]
  %v507 = vld [vmem:[%s1 + $0xf08] sm:$0xff]
  %v508 = vld [vmem:[%s1 + $0xf10] sm:$0xff]
  %v509 = vld [vmem:[%s1 + $0xf18] sm:$0xff]
  %v510 = vld [vmem:[%s1 + $0xf20] sm:$0xff]
  %v511 = vld [vmem:[%s1 + $0xf28] sm:$0xff]
  %v512 = vld [vmem:[%s1 + $0xf30] sm:$0xff]
  %v513 = vld [vmem:[%s1 + $0xf38] sm:$0xff]
  %v514 = vld [vmem:[%s1 + $0xf40] sm:$0xff]
  %v515 = vld [vmem:[%s1 + $0xf48] sm:$0xff]
  %v516 = vld [vmem:[%s1 + $0xf50] sm:$0xff]
  %v517 = vld [vmem:[%s1 + $0xf58] sm:$0xff]
  %v518 = vld [vmem:[%s1 + $0xf60] sm:$0xff]
  %v519 = vld [vmem:[%s1 + $0xf68] sm:$0xff]
  %v520 = vld [vmem:[%s1 + $0xf70] sm:$0xff]
  %v521 = vld [vmem:[%s1 + $0xf78] sm:$0xff]
  %v522 = vld [vmem:[%s1 + $0xf80] sm:$0xff]
  %v523 = vld [vmem:[%s1 + $0xf88] sm:$0xff]
  %v524 = vld [vmem:[%s1 + $0xf90] sm:$0xff]
  %v525 = vld [vmem:[%s1 + $0xf98] sm:$0xff]
  %v526 = vld [vmem:[%s1 + $0xfa0] sm:$0xff]
  %v527 = vld [vmem:[%s1 + $0xfa8] sm:$0xff]
  %v528 = vld [vmem:[%s1 + $0xfb0] sm:$0xff]
  %v529 = vld [vmem:[%s1 + $0xfb8] sm:$0xff]
  %v530 = vld [vmem:[%s1 + $0xfc0] sm:$0xff]
  %v531 = vld [vmem:[%s1 + $0xfc8] sm:$0xff]
  %v532 = vld [vmem:[%s1 + $0xfd0] sm:$0xff]
  %v533 = vld [vmem:[%s1 + $0xfd8] sm:$0xff]
  %v534 = vld [vmem:[%s1 + $0xfe0] sm:$0xff]
  %v535 = vld [vmem:[%s1 + $0xfe8] sm:$0xff]
  %v536 = vld [vmem:[%s1 + $0xff0] sm:$0xff]
  %v537 = vld [vmem:[%s1 + $0xff8] sm:$0xff]
  %v538 = vld [vmem:[%s2] sm:$0xff]
  %v539 = vld [vmem:[%s2 + $0x8] sm:$0xff]
  %v540 = vld [vmem:[%s3] sm:$0xff]
  %v541 = vld [vmem:[%s3 + $0x8] sm:$0xff]
  %v542 = vld [vmem:[%s3 + $0x10] sm:$0xff]
  %v543 = vld [vmem:[%s3 + $0x18] sm:$0xff]
  %v544 = vld [vmem:[#allocation2] sm:$0xff]
  %v545 = vld [vmem:[#allocation2 + $0x8] sm:$0xff]
  %v546 = vld [vmem:[#allocation2 + $0x10] sm:$0xff]
  %v547 = vld [vmem:[#allocation2 + $0x18] sm:$0xff]
  %v548 = vld [vmem:[%s0] sm:$0xff]
  %v549 = vld [vmem:[%s0 + $0x8] sm:$0xff]
  %v550 = vld [vmem:[%s0 + $0x10] sm:$0xff]
  %v551 = vld [vmem:[%s0 + $0x18] sm:$0xff]
  %v552 = vld [vmem:[%s0 + $0x20] sm:$0xff]
  %v553 = vld [vmem:[%s0 + $0x28] sm:$0xff]
  %v554 = vld [vmem:[%s0 + $0x30] sm:$0xff]
  %v555 = vld [vmem:[%s0 + $0x38] sm:$0xff]
  %v556 = vunpack.c.l.bf16 %v548
  %v557 = vunpack.c.h.bf16 %v548
  %v558 = vunpack.c.l.bf16 %v549
  %v559 = vunpack.c.h.bf16 %v549
  %v560 = vunpack.c.l.bf16 %v550
  %v561 = vunpack.c.h.bf16 %v550
  %v562 = vunpack.c.l.bf16 %v551
  %v563 = vunpack.c.h.bf16 %v551
  %v564 = vunpack.c.l.bf16 %v552
  %v565 = vunpack.c.h.bf16 %v552
  %v566 = vunpack.c.l.bf16 %v553
  %v567 = vunpack.c.h.bf16 %v553
  %v568 = vunpack.c.l.bf16 %v554
  %v569 = vunpack.c.h.bf16 %v554
  %v570 = vunpack.c.l.bf16 %v555
  %v571 = vunpack.c.h.bf16 %v555
  %v574 = vlaneseq
  %v575 = vshrl.u32 %v574, 7
  %v576 = vsub.s32 0, %v575
  %v577 = vrot.slane %v538, %v576
  %v578 = vlaneseq
  %v579 = vshrl.u32 %v578, 7
  %v580 = vsub.s32 1, %v579
  %v581 = vrot.slane %v538, %v580
  %v582 = vlaneseq
  %v583 = vshrl.u32 %v582, 7
  %v584 = vsub.s32 2, %v583
  %v585 = vrot.slane %v538, %v584
  %v586 = vlaneseq
  %v587 = vshrl.u32 %v586, 7
  %v588 = vsub.s32 3, %v587
  %v589 = vrot.slane %v538, %v588
  %v590 = vlaneseq
  %v591 = vshrl.u32 %v590, 7
  %v592 = vsub.s32 4, %v591
  %v593 = vrot.slane %v538, %v592
  %v594 = vlaneseq
  %v595 = vshrl.u32 %v594, 7
  %v596 = vsub.s32 5, %v595
  %v597 = vrot.slane %v538, %v596
  %v598 = vlaneseq
  %v599 = vshrl.u32 %v598, 7
  %v600 = vsub.s32 6, %v599
  %v601 = vrot.slane %v538, %v600
  %v602 = vlaneseq
  %v603 = vshrl.u32 %v602, 7
  %v604 = vsub.s32 7, %v603
  %v605 = vrot.slane %v538, %v604
  %v606 = vlaneseq
  %v607 = vshrl.u32 %v606, 7
  %v608 = vsub.s32 0, %v607
  %v609 = vrot.slane %v539, %v608
  %v610 = vlaneseq
  %v611 = vshrl.u32 %v610, 7
  %v612 = vsub.s32 1, %v611
  %v613 = vrot.slane %v539, %v612
  %v614 = vlaneseq
  %v615 = vshrl.u32 %v614, 7
  %v616 = vsub.s32 2, %v615
  %v617 = vrot.slane %v539, %v616
  %v618 = vlaneseq
  %v619 = vshrl.u32 %v618, 7
  %v620 = vsub.s32 3, %v619
  %v621 = vrot.slane %v539, %v620
  %v622 = vlaneseq
  %v623 = vshrl.u32 %v622, 7
  %v624 = vsub.s32 4, %v623
  %v625 = vrot.slane %v539, %v624
  %v626 = vlaneseq
  %v627 = vshrl.u32 %v626, 7
  %v628 = vsub.s32 5, %v627
  %v629 = vrot.slane %v539, %v628
  %v630 = vlaneseq
  %v631 = vshrl.u32 %v630, 7
  %v632 = vsub.s32 6, %v631
  %v633 = vrot.slane %v539, %v632
  %v634 = vlaneseq
  %v635 = vshrl.u32 %v634, 7
  %v636 = vsub.s32 7, %v635
  %v637 = vrot.slane %v539, %v636
  %v654 = vadd.f32 %v556, %v577
  %v655 = vadd.f32 %v557, %v581
  %v656 = vadd.f32 %v558, %v585
  %v657 = vadd.f32 %v559, %v589
  %v658 = vadd.f32 %v560, %v593
  %v659 = vadd.f32 %v561, %v597
  %v660 = vadd.f32 %v562, %v601
  %v661 = vadd.f32 %v563, %v605
  %v662 = vadd.f32 %v564, %v609
  %v663 = vadd.f32 %v565, %v613
  %v664 = vadd.f32 %v566, %v617
  %v665 = vadd.f32 %v567, %v621
  %v666 = vadd.f32 %v568, %v625
  %v667 = vadd.f32 %v569, %v629
  %v668 = vadd.f32 %v570, %v633
  %v669 = vadd.f32 %v571, %v637
  %v670 = vpack.c.bf16 %v540, %v540
  %v671 = vpack.c.bf16 %v541, %v541
  %v672 = vpack.c.bf16 %v542, %v542
  %v673 = vpack.c.bf16 %v543, %v543
  %v1186 = vunpack.c.l.b16 %v26
  %v1187 = vunpack.c.h.b16 %v26
  %v1188 = vunpack.c.l.b16 %v27
  %v1189 = vunpack.c.h.b16 %v27
  %v1190 = vunpack.c.l.b16 %v28
  %v1191 = vunpack.c.h.b16 %v28
  %v1192 = vunpack.c.l.b16 %v29
  %v1193 = vunpack.c.h.b16 %v29
  %v1194 = vunpack.c.l.b16 %v30
  %v1195 = vunpack.c.h.b16 %v30
  %v1196 = vunpack.c.l.b16 %v31
  %v1197 = vunpack.c.h.b16 %v31
  %v1198 = vunpack.c.l.b16 %v32
  %v1199 = vunpack.c.h.b16 %v32
  %v1200 = vunpack.c.l.b16 %v33
  %v1201 = vunpack.c.h.b16 %v33
  %v1202 = vunpack.c.l.b16 %v34
  %v1203 = vunpack.c.h.b16 %v34
  %v1204 = vunpack.c.l.b16 %v35
  %v1205 = vunpack.c.h.b16 %v35
  %v1206 = vunpack.c.l.b16 %v36
  %v1207 = vunpack.c.h.b16 %v36
  %v1208 = vunpack.c.l.b16 %v37
  %v1209 = vunpack.c.h.b16 %v37
  %v1210 = vunpack.c.l.b16 %v38
  %v1211 = vunpack.c.h.b16 %v38
  %v1212 = vunpack.c.l.b16 %v39
  %v1213 = vunpack.c.h.b16 %v39
  %v1214 = vunpack.c.l.b16 %v40
  %v1215 = vunpack.c.h.b16 %v40
  %v1216 = vunpack.c.l.b16 %v41
  %v1217 = vunpack.c.h.b16 %v41
  %v1218 = vunpack.c.l.b16 %v42
  %v1219 = vunpack.c.h.b16 %v42
  %v1220 = vunpack.c.l.b16 %v43
  %v1221 = vunpack.c.h.b16 %v43
  %v1222 = vunpack.c.l.b16 %v44
  %v1223 = vunpack.c.h.b16 %v44
  %v1224 = vunpack.c.l.b16 %v45
  %v1225 = vunpack.c.h.b16 %v45
  %v1226 = vunpack.c.l.b16 %v46
  %v1227 = vunpack.c.h.b16 %v46
  %v1228 = vunpack.c.l.b16 %v47
  %v1229 = vunpack.c.h.b16 %v47
  %v1230 = vunpack.c.l.b16 %v48
  %v1231 = vunpack.c.h.b16 %v48
  %v1232 = vunpack.c.l.b16 %v49
  %v1233 = vunpack.c.h.b16 %v49
  %v1234 = vunpack.c.l.b16 %v50
  %v1235 = vunpack.c.h.b16 %v50
  %v1236 = vunpack.c.l.b16 %v51
  %v1237 = vunpack.c.h.b16 %v51
  %v1238 = vunpack.c.l.b16 %v52
  %v1239 = vunpack.c.h.b16 %v52
  %v1240 = vunpack.c.l.b16 %v53
  %v1241 = vunpack.c.h.b16 %v53
  %v1242 = vunpack.c.l.b16 %v54
  %v1243 = vunpack.c.h.b16 %v54
  %v1244 = vunpack.c.l.b16 %v55
  %v1245 = vunpack.c.h.b16 %v55
  %v1246 = vunpack.c.l.b16 %v56
  %v1247 = vunpack.c.h.b16 %v56
  %v1248 = vunpack.c.l.b16 %v57
  %v1249 = vunpack.c.h.b16 %v57
  %v1250 = vunpack.c.l.b16 %v58
  %v1251 = vunpack.c.h.b16 %v58
  %v1252 = vunpack.c.l.b16 %v59
  %v1253 = vunpack.c.h.b16 %v59
  %v1254 = vunpack.c.l.b16 %v60
  %v1255 = vunpack.c.h.b16 %v60
  %v1256 = vunpack.c.l.b16 %v61
  %v1257 = vunpack.c.h.b16 %v61
  %v1258 = vunpack.c.l.b16 %v62
  %v1259 = vunpack.c.h.b16 %v62
  %v1260 = vunpack.c.l.b16 %v63
  %v1261 = vunpack.c.h.b16 %v63
  %v1262 = vunpack.c.l.b16 %v64
  %v1263 = vunpack.c.h.b16 %v64
  %v1264 = vunpack.c.l.b16 %v65
  %v1265 = vunpack.c.h.b16 %v65
  %v1266 = vunpack.c.l.b16 %v66
  %v1267 = vunpack.c.h.b16 %v66
  %v1268 = vunpack.c.l.b16 %v67
  %v1269 = vunpack.c.h.b16 %v67
  %v1270 = vunpack.c.l.b16 %v68
  %v1271 = vunpack.c.h.b16 %v68
  %v1272 = vunpack.c.l.b16 %v69
  %v1273 = vunpack.c.h.b16 %v69
  %v1274 = vunpack.c.l.b16 %v70
  %v1275 = vunpack.c.h.b16 %v70
  %v1276 = vunpack.c.l.b16 %v71
  %v1277 = vunpack.c.h.b16 %v71
  %v1278 = vunpack.c.l.b16 %v72
  %v1279 = vunpack.c.h.b16 %v72
  %v1280 = vunpack.c.l.b16 %v73
  %v1281 = vunpack.c.h.b16 %v73
  %v1282 = vunpack.c.l.b16 %v74
  %v1283 = vunpack.c.h.b16 %v74
  %v1284 = vunpack.c.l.b16 %v75
  %v1285 = vunpack.c.h.b16 %v75
  %v1286 = vunpack.c.l.b16 %v76
  %v1287 = vunpack.c.h.b16 %v76
  %v1288 = vunpack.c.l.b16 %v77
  %v1289 = vunpack.c.h.b16 %v77
  %v1290 = vunpack.c.l.b16 %v78
  %v1291 = vunpack.c.h.b16 %v78
  %v1292 = vunpack.c.l.b16 %v79
  %v1293 = vunpack.c.h.b16 %v79
  %v1294 = vunpack.c.l.b16 %v80
  %v1295 = vunpack.c.h.b16 %v80
  %v1296 = vunpack.c.l.b16 %v81
  %v1297 = vunpack.c.h.b16 %v81
  %v1298 = vunpack.c.l.b16 %v82
  %v1299 = vunpack.c.h.b16 %v82
  %v1300 = vunpack.c.l.b16 %v83
  %v1301 = vunpack.c.h.b16 %v83
  %v1302 = vunpack.c.l.b16 %v84
  %v1303 = vunpack.c.h.b16 %v84
  %v1304 = vunpack.c.l.b16 %v85
  %v1305 = vunpack.c.h.b16 %v85
  %v1306 = vunpack.c.l.b16 %v86
  %v1307 = vunpack.c.h.b16 %v86
  %v1308 = vunpack.c.l.b16 %v87
  %v1309 = vunpack.c.h.b16 %v87
  %v1310 = vunpack.c.l.b16 %v88
  %v1311 = vunpack.c.h.b16 %v88
  %v1312 = vunpack.c.l.b16 %v89
  %v1313 = vunpack.c.h.b16 %v89
  %v1314 = vunpack.c.l.b16 %v90
  %v1315 = vunpack.c.h.b16 %v90
  %v1316 = vunpack.c.l.b16 %v91
  %v1317 = vunpack.c.h.b16 %v91
  %v1318 = vunpack.c.l.b16 %v92
  %v1319 = vunpack.c.h.b16 %v92
  %v1320 = vunpack.c.l.b16 %v93
  %v1321 = vunpack.c.h.b16 %v93
  %v1322 = vunpack.c.l.b16 %v94
  %v1323 = vunpack.c.h.b16 %v94
  %v1324 = vunpack.c.l.b16 %v95
  %v1325 = vunpack.c.h.b16 %v95
  %v1326 = vunpack.c.l.b16 %v96
  %v1327 = vunpack.c.h.b16 %v96
  %v1328 = vunpack.c.l.b16 %v97
  %v1329 = vunpack.c.h.b16 %v97
  %v1330 = vunpack.c.l.b16 %v98
  %v1331 = vunpack.c.h.b16 %v98
  %v1332 = vunpack.c.l.b16 %v99
  %v1333 = vunpack.c.h.b16 %v99
  %v1334 = vunpack.c.l.b16 %v100
  %v1335 = vunpack.c.h.b16 %v100
  %v1336 = vunpack.c.l.b16 %v101
  %v1337 = vunpack.c.h.b16 %v101
  %v1338 = vunpack.c.l.b16 %v102
  %v1339 = vunpack.c.h.b16 %v102
  %v1340 = vunpack.c.l.b16 %v103
  %v1341 = vunpack.c.h.b16 %v103
  %v1342 = vunpack.c.l.b16 %v104
  %v1343 = vunpack.c.h.b16 %v104
  %v1344 = vunpack.c.l.b16 %v105
  %v1345 = vunpack.c.h.b16 %v105
  %v1346 = vunpack.c.l.b16 %v106
  %v1347 = vunpack.c.h.b16 %v106
  %v1348 = vunpack.c.l.b16 %v107
  %v1349 = vunpack.c.h.b16 %v107
  %v1350 = vunpack.c.l.b16 %v108
  %v1351 = vunpack.c.h.b16 %v108
  %v1352 = vunpack.c.l.b16 %v109
  %v1353 = vunpack.c.h.b16 %v109
  %v1354 = vunpack.c.l.b16 %v110
  %v1355 = vunpack.c.h.b16 %v110
  %v1356 = vunpack.c.l.b16 %v111
  %v1357 = vunpack.c.h.b16 %v111
  %v1358 = vunpack.c.l.b16 %v112
  %v1359 = vunpack.c.h.b16 %v112
  %v1360 = vunpack.c.l.b16 %v113
  %v1361 = vunpack.c.h.b16 %v113
  %v1362 = vunpack.c.l.b16 %v114
  %v1363 = vunpack.c.h.b16 %v114
  %v1364 = vunpack.c.l.b16 %v115
  %v1365 = vunpack.c.h.b16 %v115
  %v1366 = vunpack.c.l.b16 %v116
  %v1367 = vunpack.c.h.b16 %v116
  %v1368 = vunpack.c.l.b16 %v117
  %v1369 = vunpack.c.h.b16 %v117
  %v1370 = vunpack.c.l.b16 %v118
  %v1371 = vunpack.c.h.b16 %v118
  %v1372 = vunpack.c.l.b16 %v119
  %v1373 = vunpack.c.h.b16 %v119
  %v1374 = vunpack.c.l.b16 %v120
  %v1375 = vunpack.c.h.b16 %v120
  %v1376 = vunpack.c.l.b16 %v121
  %v1377 = vunpack.c.h.b16 %v121
  %v1378 = vunpack.c.l.b16 %v122
  %v1379 = vunpack.c.h.b16 %v122
  %v1380 = vunpack.c.l.b16 %v123
  %v1381 = vunpack.c.h.b16 %v123
  %v1382 = vunpack.c.l.b16 %v124
  %v1383 = vunpack.c.h.b16 %v124
  %v1384 = vunpack.c.l.b16 %v125
  %v1385 = vunpack.c.h.b16 %v125
  %v1386 = vunpack.c.l.b16 %v126
  %v1387 = vunpack.c.h.b16 %v126
  %v1388 = vunpack.c.l.b16 %v127
  %v1389 = vunpack.c.h.b16 %v127
  %v1390 = vunpack.c.l.b16 %v128
  %v1391 = vunpack.c.h.b16 %v128
  %v1392 = vunpack.c.l.b16 %v129
  %v1393 = vunpack.c.h.b16 %v129
  %v1394 = vunpack.c.l.b16 %v130
  %v1395 = vunpack.c.h.b16 %v130
  %v1396 = vunpack.c.l.b16 %v131
  %v1397 = vunpack.c.h.b16 %v131
  %v1398 = vunpack.c.l.b16 %v132
  %v1399 = vunpack.c.h.b16 %v132
  %v1400 = vunpack.c.l.b16 %v133
  %v1401 = vunpack.c.h.b16 %v133
  %v1402 = vunpack.c.l.b16 %v134
  %v1403 = vunpack.c.h.b16 %v134
  %v1404 = vunpack.c.l.b16 %v135
  %v1405 = vunpack.c.h.b16 %v135
  %v1406 = vunpack.c.l.b16 %v136
  %v1407 = vunpack.c.h.b16 %v136
  %v1408 = vunpack.c.l.b16 %v137
  %v1409 = vunpack.c.h.b16 %v137
  %v1410 = vunpack.c.l.b16 %v138
  %v1411 = vunpack.c.h.b16 %v138
  %v1412 = vunpack.c.l.b16 %v139
  %v1413 = vunpack.c.h.b16 %v139
  %v1414 = vunpack.c.l.b16 %v140
  %v1415 = vunpack.c.h.b16 %v140
  %v1416 = vunpack.c.l.b16 %v141
  %v1417 = vunpack.c.h.b16 %v141
  %v1418 = vunpack.c.l.b16 %v142
  %v1419 = vunpack.c.h.b16 %v142
  %v1420 = vunpack.c.l.b16 %v143
  %v1421 = vunpack.c.h.b16 %v143
  %v1422 = vunpack.c.l.b16 %v144
  %v1423 = vunpack.c.h.b16 %v144
  %v1424 = vunpack.c.l.b16 %v145
  %v1425 = vunpack.c.h.b16 %v145
  %v1426 = vunpack.c.l.b16 %v146
  %v1427 = vunpack.c.h.b16 %v146
  %v1428 = vunpack.c.l.b16 %v147
  %v1429 = vunpack.c.h.b16 %v147
  %v1430 = vunpack.c.l.b16 %v148
  %v1431 = vunpack.c.h.b16 %v148
  %v1432 = vunpack.c.l.b16 %v149
  %v1433 = vunpack.c.h.b16 %v149
  %v1434 = vunpack.c.l.b16 %v150
  %v1435 = vunpack.c.h.b16 %v150
  %v1436 = vunpack.c.l.b16 %v151
  %v1437 = vunpack.c.h.b16 %v151
  %v1438 = vunpack.c.l.b16 %v152
  %v1439 = vunpack.c.h.b16 %v152
  %v1440 = vunpack.c.l.b16 %v153
  %v1441 = vunpack.c.h.b16 %v153
  %v1442 = vunpack.c.l.b16 %v154
  %v1443 = vunpack.c.h.b16 %v154
  %v1444 = vunpack.c.l.b16 %v155
  %v1445 = vunpack.c.h.b16 %v155
  %v1446 = vunpack.c.l.b16 %v156
  %v1447 = vunpack.c.h.b16 %v156
  %v1448 = vunpack.c.l.b16 %v157
  %v1449 = vunpack.c.h.b16 %v157
  %v1450 = vunpack.c.l.b16 %v158
  %v1451 = vunpack.c.h.b16 %v158
  %v1452 = vunpack.c.l.b16 %v159
  %v1453 = vunpack.c.h.b16 %v159
  %v1454 = vunpack.c.l.b16 %v160
  %v1455 = vunpack.c.h.b16 %v160
  %v1456 = vunpack.c.l.b16 %v161
  %v1457 = vunpack.c.h.b16 %v161
  %v1458 = vunpack.c.l.b16 %v162
  %v1459 = vunpack.c.h.b16 %v162
  %v1460 = vunpack.c.l.b16 %v163
  %v1461 = vunpack.c.h.b16 %v163
  %v1462 = vunpack.c.l.b16 %v164
  %v1463 = vunpack.c.h.b16 %v164
  %v1464 = vunpack.c.l.b16 %v165
  %v1465 = vunpack.c.h.b16 %v165
  %v1466 = vunpack.c.l.b16 %v166
  %v1467 = vunpack.c.h.b16 %v166
  %v1468 = vunpack.c.l.b16 %v167
  %v1469 = vunpack.c.h.b16 %v167
  %v1470 = vunpack.c.l.b16 %v168
  %v1471 = vunpack.c.h.b16 %v168
  %v1472 = vunpack.c.l.b16 %v169
  %v1473 = vunpack.c.h.b16 %v169
  %v1474 = vunpack.c.l.b16 %v170
  %v1475 = vunpack.c.h.b16 %v170
  %v1476 = vunpack.c.l.b16 %v171
  %v1477 = vunpack.c.h.b16 %v171
  %v1478 = vunpack.c.l.b16 %v172
  %v1479 = vunpack.c.h.b16 %v172
  %v1480 = vunpack.c.l.b16 %v173
  %v1481 = vunpack.c.h.b16 %v173
  %v1482 = vunpack.c.l.b16 %v174
  %v1483 = vunpack.c.h.b16 %v174
  %v1484 = vunpack.c.l.b16 %v175
  %v1485 = vunpack.c.h.b16 %v175
  %v1486 = vunpack.c.l.b16 %v176
  %v1487 = vunpack.c.h.b16 %v176
  %v1488 = vunpack.c.l.b16 %v177
  %v1489 = vunpack.c.h.b16 %v177
  %v1490 = vunpack.c.l.b16 %v178
  %v1491 = vunpack.c.h.b16 %v178
  %v1492 = vunpack.c.l.b16 %v179
  %v1493 = vunpack.c.h.b16 %v179
  %v1494 = vunpack.c.l.b16 %v180
  %v1495 = vunpack.c.h.b16 %v180
  %v1496 = vunpack.c.l.b16 %v181
  %v1497 = vunpack.c.h.b16 %v181
  %v1498 = vunpack.c.l.b16 %v182
  %v1499 = vunpack.c.h.b16 %v182
  %v1500 = vunpack.c.l.b16 %v183
  %v1501 = vunpack.c.h.b16 %v183
  %v1502 = vunpack.c.l.b16 %v184
  %v1503 = vunpack.c.h.b16 %v184
  %v1504 = vunpack.c.l.b16 %v185
  %v1505 = vunpack.c.h.b16 %v185
  %v1506 = vunpack.c.l.b16 %v186
  %v1507 = vunpack.c.h.b16 %v186
  %v1508 = vunpack.c.l.b16 %v187
  %v1509 = vunpack.c.h.b16 %v187
  %v1510 = vunpack.c.l.b16 %v188
  %v1511 = vunpack.c.h.b16 %v188
  %v1512 = vunpack.c.l.b16 %v189
  %v1513 = vunpack.c.h.b16 %v189
  %v1514 = vunpack.c.l.b16 %v190
  %v1515 = vunpack.c.h.b16 %v190
  %v1516 = vunpack.c.l.b16 %v191
  %v1517 = vunpack.c.h.b16 %v191
  %v1518 = vunpack.c.l.b16 %v192
  %v1519 = vunpack.c.h.b16 %v192
  %v1520 = vunpack.c.l.b16 %v193
  %v1521 = vunpack.c.h.b16 %v193
  %v1522 = vunpack.c.l.b16 %v194
  %v1523 = vunpack.c.h.b16 %v194
  %v1524 = vunpack.c.l.b16 %v195
  %v1525 = vunpack.c.h.b16 %v195
  %v1526 = vunpack.c.l.b16 %v196
  %v1527 = vunpack.c.h.b16 %v196
  %v1528 = vunpack.c.l.b16 %v197
  %v1529 = vunpack.c.h.b16 %v197
  %v1530 = vunpack.c.l.b16 %v198
  %v1531 = vunpack.c.h.b16 %v198
  %v1532 = vunpack.c.l.b16 %v199
  %v1533 = vunpack.c.h.b16 %v199
  %v1534 = vunpack.c.l.b16 %v200
  %v1535 = vunpack.c.h.b16 %v200
  %v1536 = vunpack.c.l.b16 %v201
  %v1537 = vunpack.c.h.b16 %v201
  %v1538 = vunpack.c.l.b16 %v202
  %v1539 = vunpack.c.h.b16 %v202
  %v1540 = vunpack.c.l.b16 %v203
  %v1541 = vunpack.c.h.b16 %v203
  %v1542 = vunpack.c.l.b16 %v204
  %v1543 = vunpack.c.h.b16 %v204
  %v1544 = vunpack.c.l.b16 %v205
  %v1545 = vunpack.c.h.b16 %v205
  %v1546 = vunpack.c.l.b16 %v206
  %v1547 = vunpack.c.h.b16 %v206
  %v1548 = vunpack.c.l.b16 %v207
  %v1549 = vunpack.c.h.b16 %v207
  %v1550 = vunpack.c.l.b16 %v208
  %v1551 = vunpack.c.h.b16 %v208
  %v1552 = vunpack.c.l.b16 %v209
  %v1553 = vunpack.c.h.b16 %v209
  %v1554 = vunpack.c.l.b16 %v210
  %v1555 = vunpack.c.h.b16 %v210
  %v1556 = vunpack.c.l.b16 %v211
  %v1557 = vunpack.c.h.b16 %v211
  %v1558 = vunpack.c.l.b16 %v212
  %v1559 = vunpack.c.h.b16 %v212
  %v1560 = vunpack.c.l.b16 %v213
  %v1561 = vunpack.c.h.b16 %v213
  %v1562 = vunpack.c.l.b16 %v214
  %v1563 = vunpack.c.h.b16 %v214
  %v1564 = vunpack.c.l.b16 %v215
  %v1565 = vunpack.c.h.b16 %v215
  %v1566 = vunpack.c.l.b16 %v216
  %v1567 = vunpack.c.h.b16 %v216
  %v1568 = vunpack.c.l.b16 %v217
  %v1569 = vunpack.c.h.b16 %v217
  %v1570 = vunpack.c.l.b16 %v218
  %v1571 = vunpack.c.h.b16 %v218
  %v1572 = vunpack.c.l.b16 %v219
  %v1573 = vunpack.c.h.b16 %v219
  %v1574 = vunpack.c.l.b16 %v220
  %v1575 = vunpack.c.h.b16 %v220
  %v1576 = vunpack.c.l.b16 %v221
  %v1577 = vunpack.c.h.b16 %v221
  %v1578 = vunpack.c.l.b16 %v222
  %v1579 = vunpack.c.h.b16 %v222
  %v1580 = vunpack.c.l.b16 %v223
  %v1581 = vunpack.c.h.b16 %v223
  %v1582 = vunpack.c.l.b16 %v224
  %v1583 = vunpack.c.h.b16 %v224
  %v1584 = vunpack.c.l.b16 %v225
  %v1585 = vunpack.c.h.b16 %v225
  %v1586 = vunpack.c.l.b16 %v226
  %v1587 = vunpack.c.h.b16 %v226
  %v1588 = vunpack.c.l.b16 %v227
  %v1589 = vunpack.c.h.b16 %v227
  %v1590 = vunpack.c.l.b16 %v228
  %v1591 = vunpack.c.h.b16 %v228
  %v1592 = vunpack.c.l.b16 %v229
  %v1593 = vunpack.c.h.b16 %v229
  %v1594 = vunpack.c.l.b16 %v230
  %v1595 = vunpack.c.h.b16 %v230
  %v1596 = vunpack.c.l.b16 %v231
  %v1597 = vunpack.c.h.b16 %v231
  %v1598 = vunpack.c.l.b16 %v232
  %v1599 = vunpack.c.h.b16 %v232
  %v1600 = vunpack.c.l.b16 %v233
  %v1601 = vunpack.c.h.b16 %v233
  %v1602 = vunpack.c.l.b16 %v234
  %v1603 = vunpack.c.h.b16 %v234
  %v1604 = vunpack.c.l.b16 %v235
  %v1605 = vunpack.c.h.b16 %v235
  %v1606 = vunpack.c.l.b16 %v236
  %v1607 = vunpack.c.h.b16 %v236
  %v1608 = vunpack.c.l.b16 %v237
  %v1609 = vunpack.c.h.b16 %v237
  %v1610 = vunpack.c.l.b16 %v238
  %v1611 = vunpack.c.h.b16 %v238
  %v1612 = vunpack.c.l.b16 %v239
  %v1613 = vunpack.c.h.b16 %v239
  %v1614 = vunpack.c.l.b16 %v240
  %v1615 = vunpack.c.h.b16 %v240
  %v1616 = vunpack.c.l.b16 %v241
  %v1617 = vunpack.c.h.b16 %v241
  %v1618 = vunpack.c.l.b16 %v242
  %v1619 = vunpack.c.h.b16 %v242
  %v1620 = vunpack.c.l.b16 %v243
  %v1621 = vunpack.c.h.b16 %v243
  %v1622 = vunpack.c.l.b16 %v244
  %v1623 = vunpack.c.h.b16 %v244
  %v1624 = vunpack.c.l.b16 %v245
  %v1625 = vunpack.c.h.b16 %v245
  %v1626 = vunpack.c.l.b16 %v246
  %v1627 = vunpack.c.h.b16 %v246
  %v1628 = vunpack.c.l.b16 %v247
  %v1629 = vunpack.c.h.b16 %v247
  %v1630 = vunpack.c.l.b16 %v248
  %v1631 = vunpack.c.h.b16 %v248
  %v1632 = vunpack.c.l.b16 %v249
  %v1633 = vunpack.c.h.b16 %v249
  %v1634 = vunpack.c.l.b16 %v250
  %v1635 = vunpack.c.h.b16 %v250
  %v1636 = vunpack.c.l.b16 %v251
  %v1637 = vunpack.c.h.b16 %v251
  %v1638 = vunpack.c.l.b16 %v252
  %v1639 = vunpack.c.h.b16 %v252
  %v1640 = vunpack.c.l.b16 %v253
  %v1641 = vunpack.c.h.b16 %v253
  %v1642 = vunpack.c.l.b16 %v254
  %v1643 = vunpack.c.h.b16 %v254
  %v1644 = vunpack.c.l.b16 %v255
  %v1645 = vunpack.c.h.b16 %v255
  %v1646 = vunpack.c.l.b16 %v256
  %v1647 = vunpack.c.h.b16 %v256
  %v1648 = vunpack.c.l.b16 %v257
  %v1649 = vunpack.c.h.b16 %v257
  %v1650 = vunpack.c.l.b16 %v258
  %v1651 = vunpack.c.h.b16 %v258
  %v1652 = vunpack.c.l.b16 %v259
  %v1653 = vunpack.c.h.b16 %v259
  %v1654 = vunpack.c.l.b16 %v260
  %v1655 = vunpack.c.h.b16 %v260
  %v1656 = vunpack.c.l.b16 %v261
  %v1657 = vunpack.c.h.b16 %v261
  %v1658 = vunpack.c.l.b16 %v262
  %v1659 = vunpack.c.h.b16 %v262
  %v1660 = vunpack.c.l.b16 %v263
  %v1661 = vunpack.c.h.b16 %v263
  %v1662 = vunpack.c.l.b16 %v264
  %v1663 = vunpack.c.h.b16 %v264
  %v1664 = vunpack.c.l.b16 %v265
  %v1665 = vunpack.c.h.b16 %v265
  %v1666 = vunpack.c.l.b16 %v266
  %v1667 = vunpack.c.h.b16 %v266
  %v1668 = vunpack.c.l.b16 %v267
  %v1669 = vunpack.c.h.b16 %v267
  %v1670 = vunpack.c.l.b16 %v268
  %v1671 = vunpack.c.h.b16 %v268
  %v1672 = vunpack.c.l.b16 %v269
  %v1673 = vunpack.c.h.b16 %v269
  %v1674 = vunpack.c.l.b16 %v270
  %v1675 = vunpack.c.h.b16 %v270
  %v1676 = vunpack.c.l.b16 %v271
  %v1677 = vunpack.c.h.b16 %v271
  %v1678 = vunpack.c.l.b16 %v272
  %v1679 = vunpack.c.h.b16 %v272
  %v1680 = vunpack.c.l.b16 %v273
  %v1681 = vunpack.c.h.b16 %v273
  %v1682 = vunpack.c.l.b16 %v274
  %v1683 = vunpack.c.h.b16 %v274
  %v1684 = vunpack.c.l.b16 %v275
  %v1685 = vunpack.c.h.b16 %v275
  %v1686 = vunpack.c.l.b16 %v276
  %v1687 = vunpack.c.h.b16 %v276
  %v1688 = vunpack.c.l.b16 %v277
  %v1689 = vunpack.c.h.b16 %v277
  %v1690 = vunpack.c.l.b16 %v278
  %v1691 = vunpack.c.h.b16 %v278
  %v1692 = vunpack.c.l.b16 %v279
  %v1693 = vunpack.c.h.b16 %v279
  %v1694 = vunpack.c.l.b16 %v280
  %v1695 = vunpack.c.h.b16 %v280
  %v1696 = vunpack.c.l.b16 %v281
  %v1697 = vunpack.c.h.b16 %v281
  %v1698 = vunpack.c.l.b16 %v282
  %v1699 = vunpack.c.h.b16 %v282
  %v1700 = vunpack.c.l.b16 %v283
  %v1701 = vunpack.c.h.b16 %v283
  %v1702 = vunpack.c.l.b16 %v284
  %v1703 = vunpack.c.h.b16 %v284
  %v1704 = vunpack.c.l.b16 %v285
  %v1705 = vunpack.c.h.b16 %v285
  %v1706 = vunpack.c.l.b16 %v286
  %v1707 = vunpack.c.h.b16 %v286
  %v1708 = vunpack.c.l.b16 %v287
  %v1709 = vunpack.c.h.b16 %v287
  %v1710 = vunpack.c.l.b16 %v288
  %v1711 = vunpack.c.h.b16 %v288
  %v1712 = vunpack.c.l.b16 %v289
  %v1713 = vunpack.c.h.b16 %v289
  %v1714 = vunpack.c.l.b16 %v290
  %v1715 = vunpack.c.h.b16 %v290
  %v1716 = vunpack.c.l.b16 %v291
  %v1717 = vunpack.c.h.b16 %v291
  %v1718 = vunpack.c.l.b16 %v292
  %v1719 = vunpack.c.h.b16 %v292
  %v1720 = vunpack.c.l.b16 %v293
  %v1721 = vunpack.c.h.b16 %v293
  %v1722 = vunpack.c.l.b16 %v294
  %v1723 = vunpack.c.h.b16 %v294
  %v1724 = vunpack.c.l.b16 %v295
  %v1725 = vunpack.c.h.b16 %v295
  %v1726 = vunpack.c.l.b16 %v296
  %v1727 = vunpack.c.h.b16 %v296
  %v1728 = vunpack.c.l.b16 %v297
  %v1729 = vunpack.c.h.b16 %v297
  %v1730 = vunpack.c.l.b16 %v298
  %v1731 = vunpack.c.h.b16 %v298
  %v1732 = vunpack.c.l.b16 %v299
  %v1733 = vunpack.c.h.b16 %v299
  %v1734 = vunpack.c.l.b16 %v300
  %v1735 = vunpack.c.h.b16 %v300
  %v1736 = vunpack.c.l.b16 %v301
  %v1737 = vunpack.c.h.b16 %v301
  %v1738 = vunpack.c.l.b16 %v302
  %v1739 = vunpack.c.h.b16 %v302
  %v1740 = vunpack.c.l.b16 %v303
  %v1741 = vunpack.c.h.b16 %v303
  %v1742 = vunpack.c.l.b16 %v304
  %v1743 = vunpack.c.h.b16 %v304
  %v1744 = vunpack.c.l.b16 %v305
  %v1745 = vunpack.c.h.b16 %v305
  %v1746 = vunpack.c.l.b16 %v306
  %v1747 = vunpack.c.h.b16 %v306
  %v1748 = vunpack.c.l.b16 %v307
  %v1749 = vunpack.c.h.b16 %v307
  %v1750 = vunpack.c.l.b16 %v308
  %v1751 = vunpack.c.h.b16 %v308
  %v1752 = vunpack.c.l.b16 %v309
  %v1753 = vunpack.c.h.b16 %v309
  %v1754 = vunpack.c.l.b16 %v310
  %v1755 = vunpack.c.h.b16 %v310
  %v1756 = vunpack.c.l.b16 %v311
  %v1757 = vunpack.c.h.b16 %v311
  %v1758 = vunpack.c.l.b16 %v312
  %v1759 = vunpack.c.h.b16 %v312
  %v1760 = vunpack.c.l.b16 %v313
  %v1761 = vunpack.c.h.b16 %v313
  %v1762 = vunpack.c.l.b16 %v314
  %v1763 = vunpack.c.h.b16 %v314
  %v1764 = vunpack.c.l.b16 %v315
  %v1765 = vunpack.c.h.b16 %v315
  %v1766 = vunpack.c.l.b16 %v316
  %v1767 = vunpack.c.h.b16 %v316
  %v1768 = vunpack.c.l.b16 %v317
  %v1769 = vunpack.c.h.b16 %v317
  %v1770 = vunpack.c.l.b16 %v318
  %v1771 = vunpack.c.h.b16 %v318
  %v1772 = vunpack.c.l.b16 %v319
  %v1773 = vunpack.c.h.b16 %v319
  %v1774 = vunpack.c.l.b16 %v320
  %v1775 = vunpack.c.h.b16 %v320
  %v1776 = vunpack.c.l.b16 %v321
  %v1777 = vunpack.c.h.b16 %v321
  %v1778 = vunpack.c.l.b16 %v322
  %v1779 = vunpack.c.h.b16 %v322
  %v1780 = vunpack.c.l.b16 %v323
  %v1781 = vunpack.c.h.b16 %v323
  %v1782 = vunpack.c.l.b16 %v324
  %v1783 = vunpack.c.h.b16 %v324
  %v1784 = vunpack.c.l.b16 %v325
  %v1785 = vunpack.c.h.b16 %v325
  %v1786 = vunpack.c.l.b16 %v326
  %v1787 = vunpack.c.h.b16 %v326
  %v1788 = vunpack.c.l.b16 %v327
  %v1789 = vunpack.c.h.b16 %v327
  %v1790 = vunpack.c.l.b16 %v328
  %v1791 = vunpack.c.h.b16 %v328
  %v1792 = vunpack.c.l.b16 %v329
  %v1793 = vunpack.c.h.b16 %v329
  %v1794 = vunpack.c.l.b16 %v330
  %v1795 = vunpack.c.h.b16 %v330
  %v1796 = vunpack.c.l.b16 %v331
  %v1797 = vunpack.c.h.b16 %v331
  %v1798 = vunpack.c.l.b16 %v332
  %v1799 = vunpack.c.h.b16 %v332
  %v1800 = vunpack.c.l.b16 %v333
  %v1801 = vunpack.c.h.b16 %v333
  %v1802 = vunpack.c.l.b16 %v334
  %v1803 = vunpack.c.h.b16 %v334
  %v1804 = vunpack.c.l.b16 %v335
  %v1805 = vunpack.c.h.b16 %v335
  %v1806 = vunpack.c.l.b16 %v336
  %v1807 = vunpack.c.h.b16 %v336
  %v1808 = vunpack.c.l.b16 %v337
  %v1809 = vunpack.c.h.b16 %v337
  %v1810 = vunpack.c.l.b16 %v338
  %v1811 = vunpack.c.h.b16 %v338
  %v1812 = vunpack.c.l.b16 %v339
  %v1813 = vunpack.c.h.b16 %v339
  %v1814 = vunpack.c.l.b16 %v340
  %v1815 = vunpack.c.h.b16 %v340
  %v1816 = vunpack.c.l.b16 %v341
  %v1817 = vunpack.c.h.b16 %v341
  %v1818 = vunpack.c.l.b16 %v342
  %v1819 = vunpack.c.h.b16 %v342
  %v1820 = vunpack.c.l.b16 %v343
  %v1821 = vunpack.c.h.b16 %v343
  %v1822 = vunpack.c.l.b16 %v344
  %v1823 = vunpack.c.h.b16 %v344
  %v1824 = vunpack.c.l.b16 %v345
  %v1825 = vunpack.c.h.b16 %v345
  %v1826 = vunpack.c.l.b16 %v346
  %v1827 = vunpack.c.h.b16 %v346
  %v1828 = vunpack.c.l.b16 %v347
  %v1829 = vunpack.c.h.b16 %v347
  %v1830 = vunpack.c.l.b16 %v348
  %v1831 = vunpack.c.h.b16 %v348
  %v1832 = vunpack.c.l.b16 %v349
  %v1833 = vunpack.c.h.b16 %v349
  %v1834 = vunpack.c.l.b16 %v350
  %v1835 = vunpack.c.h.b16 %v350
  %v1836 = vunpack.c.l.b16 %v351
  %v1837 = vunpack.c.h.b16 %v351
  %v1838 = vunpack.c.l.b16 %v352
  %v1839 = vunpack.c.h.b16 %v352
  %v1840 = vunpack.c.l.b16 %v353
  %v1841 = vunpack.c.h.b16 %v353
  %v1842 = vunpack.c.l.b16 %v354
  %v1843 = vunpack.c.h.b16 %v354
  %v1844 = vunpack.c.l.b16 %v355
  %v1845 = vunpack.c.h.b16 %v355
  %v1846 = vunpack.c.l.b16 %v356
  %v1847 = vunpack.c.h.b16 %v356
  %v1848 = vunpack.c.l.b16 %v357
  %v1849 = vunpack.c.h.b16 %v357
  %v1850 = vunpack.c.l.b16 %v358
  %v1851 = vunpack.c.h.b16 %v358
  %v1852 = vunpack.c.l.b16 %v359
  %v1853 = vunpack.c.h.b16 %v359
  %v1854 = vunpack.c.l.b16 %v360
  %v1855 = vunpack.c.h.b16 %v360
  %v1856 = vunpack.c.l.b16 %v361
  %v1857 = vunpack.c.h.b16 %v361
  %v1858 = vunpack.c.l.b16 %v362
  %v1859 = vunpack.c.h.b16 %v362
  %v1860 = vunpack.c.l.b16 %v363
  %v1861 = vunpack.c.h.b16 %v363
  %v1862 = vunpack.c.l.b16 %v364
  %v1863 = vunpack.c.h.b16 %v364
  %v1864 = vunpack.c.l.b16 %v365
  %v1865 = vunpack.c.h.b16 %v365
  %v1866 = vunpack.c.l.b16 %v366
  %v1867 = vunpack.c.h.b16 %v366
  %v1868 = vunpack.c.l.b16 %v367
  %v1869 = vunpack.c.h.b16 %v367
  %v1870 = vunpack.c.l.b16 %v368
  %v1871 = vunpack.c.h.b16 %v368
  %v1872 = vunpack.c.l.b16 %v369
  %v1873 = vunpack.c.h.b16 %v369
  %v1874 = vunpack.c.l.b16 %v370
  %v1875 = vunpack.c.h.b16 %v370
  %v1876 = vunpack.c.l.b16 %v371
  %v1877 = vunpack.c.h.b16 %v371
  %v1878 = vunpack.c.l.b16 %v372
  %v1879 = vunpack.c.h.b16 %v372
  %v1880 = vunpack.c.l.b16 %v373
  %v1881 = vunpack.c.h.b16 %v373
  %v1882 = vunpack.c.l.b16 %v374
  %v1883 = vunpack.c.h.b16 %v374
  %v1884 = vunpack.c.l.b16 %v375
  %v1885 = vunpack.c.h.b16 %v375
  %v1886 = vunpack.c.l.b16 %v376
  %v1887 = vunpack.c.h.b16 %v376
  %v1888 = vunpack.c.l.b16 %v377
  %v1889 = vunpack.c.h.b16 %v377
  %v1890 = vunpack.c.l.b16 %v378
  %v1891 = vunpack.c.h.b16 %v378
  %v1892 = vunpack.c.l.b16 %v379
  %v1893 = vunpack.c.h.b16 %v379
  %v1894 = vunpack.c.l.b16 %v380
  %v1895 = vunpack.c.h.b16 %v380
  %v1896 = vunpack.c.l.b16 %v381
  %v1897 = vunpack.c.h.b16 %v381
  %v1898 = vunpack.c.l.b16 %v382
  %v1899 = vunpack.c.h.b16 %v382
  %v1900 = vunpack.c.l.b16 %v383
  %v1901 = vunpack.c.h.b16 %v383
  %v1902 = vunpack.c.l.b16 %v384
  %v1903 = vunpack.c.h.b16 %v384
  %v1904 = vunpack.c.l.b16 %v385
  %v1905 = vunpack.c.h.b16 %v385
  %v1906 = vunpack.c.l.b16 %v386
  %v1907 = vunpack.c.h.b16 %v386
  %v1908 = vunpack.c.l.b16 %v387
  %v1909 = vunpack.c.h.b16 %v387
  %v1910 = vunpack.c.l.b16 %v388
  %v1911 = vunpack.c.h.b16 %v388
  %v1912 = vunpack.c.l.b16 %v389
  %v1913 = vunpack.c.h.b16 %v389
  %v1914 = vunpack.c.l.b16 %v390
  %v1915 = vunpack.c.h.b16 %v390
  %v1916 = vunpack.c.l.b16 %v391
  %v1917 = vunpack.c.h.b16 %v391
  %v1918 = vunpack.c.l.b16 %v392
  %v1919 = vunpack.c.h.b16 %v392
  %v1920 = vunpack.c.l.b16 %v393
  %v1921 = vunpack.c.h.b16 %v393
  %v1922 = vunpack.c.l.b16 %v394
  %v1923 = vunpack.c.h.b16 %v394
  %v1924 = vunpack.c.l.b16 %v395
  %v1925 = vunpack.c.h.b16 %v395
  %v1926 = vunpack.c.l.b16 %v396
  %v1927 = vunpack.c.h.b16 %v396
  %v1928 = vunpack.c.l.b16 %v397
  %v1929 = vunpack.c.h.b16 %v397
  %v1930 = vunpack.c.l.b16 %v398
  %v1931 = vunpack.c.h.b16 %v398
  %v1932 = vunpack.c.l.b16 %v399
  %v1933 = vunpack.c.h.b16 %v399
  %v1934 = vunpack.c.l.b16 %v400
  %v1935 = vunpack.c.h.b16 %v400
  %v1936 = vunpack.c.l.b16 %v401
  %v1937 = vunpack.c.h.b16 %v401
  %v1938 = vunpack.c.l.b16 %v402
  %v1939 = vunpack.c.h.b16 %v402
  %v1940 = vunpack.c.l.b16 %v403
  %v1941 = vunpack.c.h.b16 %v403
  %v1942 = vunpack.c.l.b16 %v404
  %v1943 = vunpack.c.h.b16 %v404
  %v1944 = vunpack.c.l.b16 %v405
  %v1945 = vunpack.c.h.b16 %v405
  %v1946 = vunpack.c.l.b16 %v406
  %v1947 = vunpack.c.h.b16 %v406
  %v1948 = vunpack.c.l.b16 %v407
  %v1949 = vunpack.c.h.b16 %v407
  %v1950 = vunpack.c.l.b16 %v408
  %v1951 = vunpack.c.h.b16 %v408
  %v1952 = vunpack.c.l.b16 %v409
  %v1953 = vunpack.c.h.b16 %v409
  %v1954 = vunpack.c.l.b16 %v410
  %v1955 = vunpack.c.h.b16 %v410
  %v1956 = vunpack.c.l.b16 %v411
  %v1957 = vunpack.c.h.b16 %v411
  %v1958 = vunpack.c.l.b16 %v412
  %v1959 = vunpack.c.h.b16 %v412
  %v1960 = vunpack.c.l.b16 %v413
  %v1961 = vunpack.c.h.b16 %v413
  %v1962 = vunpack.c.l.b16 %v414
  %v1963 = vunpack.c.h.b16 %v414
  %v1964 = vunpack.c.l.b16 %v415
  %v1965 = vunpack.c.h.b16 %v415
  %v1966 = vunpack.c.l.b16 %v416
  %v1967 = vunpack.c.h.b16 %v416
  %v1968 = vunpack.c.l.b16 %v417
  %v1969 = vunpack.c.h.b16 %v417
  %v1970 = vunpack.c.l.b16 %v418
  %v1971 = vunpack.c.h.b16 %v418
  %v1972 = vunpack.c.l.b16 %v419
  %v1973 = vunpack.c.h.b16 %v419
  %v1974 = vunpack.c.l.b16 %v420
  %v1975 = vunpack.c.h.b16 %v420
  %v1976 = vunpack.c.l.b16 %v421
  %v1977 = vunpack.c.h.b16 %v421
  %v1978 = vunpack.c.l.b16 %v422
  %v1979 = vunpack.c.h.b16 %v422
  %v1980 = vunpack.c.l.b16 %v423
  %v1981 = vunpack.c.h.b16 %v423
  %v1982 = vunpack.c.l.b16 %v424
  %v1983 = vunpack.c.h.b16 %v424
  %v1984 = vunpack.c.l.b16 %v425
  %v1985 = vunpack.c.h.b16 %v425
  %v1986 = vunpack.c.l.b16 %v426
  %v1987 = vunpack.c.h.b16 %v426
  %v1988 = vunpack.c.l.b16 %v427
  %v1989 = vunpack.c.h.b16 %v427
  %v1990 = vunpack.c.l.b16 %v428
  %v1991 = vunpack.c.h.b16 %v428
  %v1992 = vunpack.c.l.b16 %v429
  %v1993 = vunpack.c.h.b16 %v429
  %v1994 = vunpack.c.l.b16 %v430
  %v1995 = vunpack.c.h.b16 %v430
  %v1996 = vunpack.c.l.b16 %v431
  %v1997 = vunpack.c.h.b16 %v431
  %v1998 = vunpack.c.l.b16 %v432
  %v1999 = vunpack.c.h.b16 %v432
  %v2000 = vunpack.c.l.b16 %v433
  %v2001 = vunpack.c.h.b16 %v433
  %v2002 = vunpack.c.l.b16 %v434
  %v2003 = vunpack.c.h.b16 %v434
  %v2004 = vunpack.c.l.b16 %v435
  %v2005 = vunpack.c.h.b16 %v435
  %v2006 = vunpack.c.l.b16 %v436
  %v2007 = vunpack.c.h.b16 %v436
  %v2008 = vunpack.c.l.b16 %v437
  %v2009 = vunpack.c.h.b16 %v437
  %v2010 = vunpack.c.l.b16 %v438
  %v2011 = vunpack.c.h.b16 %v438
  %v2012 = vunpack.c.l.b16 %v439
  %v2013 = vunpack.c.h.b16 %v439
  %v2014 = vunpack.c.l.b16 %v440
  %v2015 = vunpack.c.h.b16 %v440
  %v2016 = vunpack.c.l.b16 %v441
  %v2017 = vunpack.c.h.b16 %v441
  %v2018 = vunpack.c.l.b16 %v442
  %v2019 = vunpack.c.h.b16 %v442
  %v2020 = vunpack.c.l.b16 %v443
  %v2021 = vunpack.c.h.b16 %v443
  %v2022 = vunpack.c.l.b16 %v444
  %v2023 = vunpack.c.h.b16 %v444
  %v2024 = vunpack.c.l.b16 %v445
  %v2025 = vunpack.c.h.b16 %v445
  %v2026 = vunpack.c.l.b16 %v446
  %v2027 = vunpack.c.h.b16 %v446
  %v2028 = vunpack.c.l.b16 %v447
  %v2029 = vunpack.c.h.b16 %v447
  %v2030 = vunpack.c.l.b16 %v448
  %v2031 = vunpack.c.h.b16 %v448
  %v2032 = vunpack.c.l.b16 %v449
  %v2033 = vunpack.c.h.b16 %v449
  %v2034 = vunpack.c.l.b16 %v450
  %v2035 = vunpack.c.h.b16 %v450
  %v2036 = vunpack.c.l.b16 %v451
  %v2037 = vunpack.c.h.b16 %v451
  %v2038 = vunpack.c.l.b16 %v452
  %v2039 = vunpack.c.h.b16 %v452
  %v2040 = vunpack.c.l.b16 %v453
  %v2041 = vunpack.c.h.b16 %v453
  %v2042 = vunpack.c.l.b16 %v454
  %v2043 = vunpack.c.h.b16 %v454
  %v2044 = vunpack.c.l.b16 %v455
  %v2045 = vunpack.c.h.b16 %v455
  %v2046 = vunpack.c.l.b16 %v456
  %v2047 = vunpack.c.h.b16 %v456
  %v2048 = vunpack.c.l.b16 %v457
  %v2049 = vunpack.c.h.b16 %v457
  %v2050 = vunpack.c.l.b16 %v458
  %v2051 = vunpack.c.h.b16 %v458
  %v2052 = vunpack.c.l.b16 %v459
  %v2053 = vunpack.c.h.b16 %v459
  %v2054 = vunpack.c.l.b16 %v460
  %v2055 = vunpack.c.h.b16 %v460
  %v2056 = vunpack.c.l.b16 %v461
  %v2057 = vunpack.c.h.b16 %v461
  %v2058 = vunpack.c.l.b16 %v462
  %v2059 = vunpack.c.h.b16 %v462
  %v2060 = vunpack.c.l.b16 %v463
  %v2061 = vunpack.c.h.b16 %v463
  %v2062 = vunpack.c.l.b16 %v464
  %v2063 = vunpack.c.h.b16 %v464
  %v2064 = vunpack.c.l.b16 %v465
  %v2065 = vunpack.c.h.b16 %v465
  %v2066 = vunpack.c.l.b16 %v466
  %v2067 = vunpack.c.h.b16 %v466
  %v2068 = vunpack.c.l.b16 %v467
  %v2069 = vunpack.c.h.b16 %v467
  %v2070 = vunpack.c.l.b16 %v468
  %v2071 = vunpack.c.h.b16 %v468
  %v2072 = vunpack.c.l.b16 %v469
  %v2073 = vunpack.c.h.b16 %v469
  %v2074 = vunpack.c.l.b16 %v470
  %v2075 = vunpack.c.h.b16 %v470
  %v2076 = vunpack.c.l.b16 %v471
  %v2077 = vunpack.c.h.b16 %v471
  %v2078 = vunpack.c.l.b16 %v472
  %v2079 = vunpack.c.h.b16 %v472
  %v2080 = vunpack.c.l.b16 %v473
  %v2081 = vunpack.c.h.b16 %v473
  %v2082 = vunpack.c.l.b16 %v474
  %v2083 = vunpack.c.h.b16 %v474
  %v2084 = vunpack.c.l.b16 %v475
  %v2085 = vunpack.c.h.b16 %v475
  %v2086 = vunpack.c.l.b16 %v476
  %v2087 = vunpack.c.h.b16 %v476
  %v2088 = vunpack.c.l.b16 %v477
  %v2089 = vunpack.c.h.b16 %v477
  %v2090 = vunpack.c.l.b16 %v478
  %v2091 = vunpack.c.h.b16 %v478
  %v2092 = vunpack.c.l.b16 %v479
  %v2093 = vunpack.c.h.b16 %v479
  %v2094 = vunpack.c.l.b16 %v480
  %v2095 = vunpack.c.h.b16 %v480
  %v2096 = vunpack.c.l.b16 %v481
  %v2097 = vunpack.c.h.b16 %v481
  %v2098 = vunpack.c.l.b16 %v482
  %v2099 = vunpack.c.h.b16 %v482
  %v2100 = vunpack.c.l.b16 %v483
  %v2101 = vunpack.c.h.b16 %v483
  %v2102 = vunpack.c.l.b16 %v484
  %v2103 = vunpack.c.h.b16 %v484
  %v2104 = vunpack.c.l.b16 %v485
  %v2105 = vunpack.c.h.b16 %v485
  %v2106 = vunpack.c.l.b16 %v486
  %v2107 = vunpack.c.h.b16 %v486
  %v2108 = vunpack.c.l.b16 %v487
  %v2109 = vunpack.c.h.b16 %v487
  %v2110 = vunpack.c.l.b16 %v488
  %v2111 = vunpack.c.h.b16 %v488
  %v2112 = vunpack.c.l.b16 %v489
  %v2113 = vunpack.c.h.b16 %v489
  %v2114 = vunpack.c.l.b16 %v490
  %v2115 = vunpack.c.h.b16 %v490
  %v2116 = vunpack.c.l.b16 %v491
  %v2117 = vunpack.c.h.b16 %v491
  %v2118 = vunpack.c.l.b16 %v492
  %v2119 = vunpack.c.h.b16 %v492
  %v2120 = vunpack.c.l.b16 %v493
  %v2121 = vunpack.c.h.b16 %v493
  %v2122 = vunpack.c.l.b16 %v494
  %v2123 = vunpack.c.h.b16 %v494
  %v2124 = vunpack.c.l.b16 %v495
  %v2125 = vunpack.c.h.b16 %v495
  %v2126 = vunpack.c.l.b16 %v496
  %v2127 = vunpack.c.h.b16 %v496
  %v2128 = vunpack.c.l.b16 %v497
  %v2129 = vunpack.c.h.b16 %v497
  %v2130 = vunpack.c.l.b16 %v498
  %v2131 = vunpack.c.h.b16 %v498
  %v2132 = vunpack.c.l.b16 %v499
  %v2133 = vunpack.c.h.b16 %v499
  %v2134 = vunpack.c.l.b16 %v500
  %v2135 = vunpack.c.h.b16 %v500
  %v2136 = vunpack.c.l.b16 %v501
  %v2137 = vunpack.c.h.b16 %v501
  %v2138 = vunpack.c.l.b16 %v502
  %v2139 = vunpack.c.h.b16 %v502
  %v2140 = vunpack.c.l.b16 %v503
  %v2141 = vunpack.c.h.b16 %v503
  %v2142 = vunpack.c.l.b16 %v504
  %v2143 = vunpack.c.h.b16 %v504
  %v2144 = vunpack.c.l.b16 %v505
  %v2145 = vunpack.c.h.b16 %v505
  %v2146 = vunpack.c.l.b16 %v506
  %v2147 = vunpack.c.h.b16 %v506
  %v2148 = vunpack.c.l.b16 %v507
  %v2149 = vunpack.c.h.b16 %v507
  %v2150 = vunpack.c.l.b16 %v508
  %v2151 = vunpack.c.h.b16 %v508
  %v2152 = vunpack.c.l.b16 %v509
  %v2153 = vunpack.c.h.b16 %v509
  %v2154 = vunpack.c.l.b16 %v510
  %v2155 = vunpack.c.h.b16 %v510
  %v2156 = vunpack.c.l.b16 %v511
  %v2157 = vunpack.c.h.b16 %v511
  %v2158 = vunpack.c.l.b16 %v512
  %v2159 = vunpack.c.h.b16 %v512
  %v2160 = vunpack.c.l.b16 %v513
  %v2161 = vunpack.c.h.b16 %v513
  %v2162 = vunpack.c.l.b16 %v514
  %v2163 = vunpack.c.h.b16 %v514
  %v2164 = vunpack.c.l.b16 %v515
  %v2165 = vunpack.c.h.b16 %v515
  %v2166 = vunpack.c.l.b16 %v516
  %v2167 = vunpack.c.h.b16 %v516
  %v2168 = vunpack.c.l.b16 %v517
  %v2169 = vunpack.c.h.b16 %v517
  %v2170 = vunpack.c.l.b16 %v518
  %v2171 = vunpack.c.h.b16 %v518
  %v2172 = vunpack.c.l.b16 %v519
  %v2173 = vunpack.c.h.b16 %v519
  %v2174 = vunpack.c.l.b16 %v520
  %v2175 = vunpack.c.h.b16 %v520
  %v2176 = vunpack.c.l.b16 %v521
  %v2177 = vunpack.c.h.b16 %v521
  %v2178 = vunpack.c.l.b16 %v522
  %v2179 = vunpack.c.h.b16 %v522
  %v2180 = vunpack.c.l.b16 %v523
  %v2181 = vunpack.c.h.b16 %v523
  %v2182 = vunpack.c.l.b16 %v524
  %v2183 = vunpack.c.h.b16 %v524
  %v2184 = vunpack.c.l.b16 %v525
  %v2185 = vunpack.c.h.b16 %v525
  %v2186 = vunpack.c.l.b16 %v526
  %v2187 = vunpack.c.h.b16 %v526
  %v2188 = vunpack.c.l.b16 %v527
  %v2189 = vunpack.c.h.b16 %v527
  %v2190 = vunpack.c.l.b16 %v528
  %v2191 = vunpack.c.h.b16 %v528
  %v2192 = vunpack.c.l.b16 %v529
  %v2193 = vunpack.c.h.b16 %v529
  %v2194 = vunpack.c.l.b16 %v530
  %v2195 = vunpack.c.h.b16 %v530
  %v2196 = vunpack.c.l.b16 %v531
  %v2197 = vunpack.c.h.b16 %v531
  %v2198 = vunpack.c.l.b16 %v532
  %v2199 = vunpack.c.h.b16 %v532
  %v2200 = vunpack.c.l.b16 %v533
  %v2201 = vunpack.c.h.b16 %v533
  %v2202 = vunpack.c.l.b16 %v534
  %v2203 = vunpack.c.h.b16 %v534
  %v2204 = vunpack.c.l.b16 %v535
  %v2205 = vunpack.c.h.b16 %v535
  %v2206 = vunpack.c.l.b16 %v536
  %v2207 = vunpack.c.h.b16 %v536
  %v2208 = vunpack.c.l.b16 %v537
  %v2209 = vunpack.c.h.b16 %v537
  %v2210 = vpack.c.b16 %v1202, %v1186
  %v2211 = vpack.c.b16 %v1203, %v1187
  %v2212 = vpack.c.b16 %v1204, %v1188
  %v2213 = vpack.c.b16 %v1205, %v1189
  %v2214 = vpack.c.b16 %v1206, %v1190
  %v2215 = vpack.c.b16 %v1207, %v1191
  %v2216 = vpack.c.b16 %v1208, %v1192
  %v2217 = vpack.c.b16 %v1209, %v1193
  %v2218 = vpack.c.b16 %v1210, %v1194
  %v2219 = vpack.c.b16 %v1211, %v1195
  %v2220 = vpack.c.b16 %v1212, %v1196
  %v2221 = vpack.c.b16 %v1213, %v1197
  %v2222 = vpack.c.b16 %v1214, %v1198
  %v2223 = vpack.c.b16 %v1215, %v1199
  %v2224 = vpack.c.b16 %v1216, %v1200
  %v2225 = vpack.c.b16 %v1217, %v1201
  %v2226 = vpack.c.b16 %v1234, %v1218
  %v2227 = vpack.c.b16 %v1235, %v1219
  %v2228 = vpack.c.b16 %v1236, %v1220
  %v2229 = vpack.c.b16 %v1237, %v1221
  %v2230 = vpack.c.b16 %v1238, %v1222
  %v2231 = vpack.c.b16 %v1239, %v1223
  %v2232 = vpack.c.b16 %v1240, %v1224
  %v2233 = vpack.c.b16 %v1241, %v1225
  %v2234 = vpack.c.b16 %v1242, %v1226
  %v2235 = vpack.c.b16 %v1243, %v1227
  %v2236 = vpack.c.b16 %v1244, %v1228
  %v2237 = vpack.c.b16 %v1245, %v1229
  %v2238 = vpack.c.b16 %v1246, %v1230
  %v2239 = vpack.c.b16 %v1247, %v1231
  %v2240 = vpack.c.b16 %v1248, %v1232
  %v2241 = vpack.c.b16 %v1249, %v1233
  %v2242 = vpack.c.b16 %v1266, %v1250
  %v2243 = vpack.c.b16 %v1267, %v1251
  %v2244 = vpack.c.b16 %v1268, %v1252
  %v2245 = vpack.c.b16 %v1269, %v1253
  %v2246 = vpack.c.b16 %v1270, %v1254
  %v2247 = vpack.c.b16 %v1271, %v1255
  %v2248 = vpack.c.b16 %v1272, %v1256
  %v2249 = vpack.c.b16 %v1273, %v1257
  %v2250 = vpack.c.b16 %v1274, %v1258
  %v2251 = vpack.c.b16 %v1275, %v1259
  %v2252 = vpack.c.b16 %v1276, %v1260
  %v2253 = vpack.c.b16 %v1277, %v1261
  %v2254 = vpack.c.b16 %v1278, %v1262
  %v2255 = vpack.c.b16 %v1279, %v1263
  %v2256 = vpack.c.b16 %v1280, %v1264
  %v2257 = vpack.c.b16 %v1281, %v1265
  %v2258 = vpack.c.b16 %v1298, %v1282
  %v2259 = vpack.c.b16 %v1299, %v1283
  %v2260 = vpack.c.b16 %v1300, %v1284
  %v2261 = vpack.c.b16 %v1301, %v1285
  %v2262 = vpack.c.b16 %v1302, %v1286
  %v2263 = vpack.c.b16 %v1303, %v1287
  %v2264 = vpack.c.b16 %v1304, %v1288
  %v2265 = vpack.c.b16 %v1305, %v1289
  %v2266 = vpack.c.b16 %v1306, %v1290
  %v2267 = vpack.c.b16 %v1307, %v1291
  %v2268 = vpack.c.b16 %v1308, %v1292
  %v2269 = vpack.c.b16 %v1309, %v1293
  %v2270 = vpack.c.b16 %v1310, %v1294
  %v2271 = vpack.c.b16 %v1311, %v1295
  %v2272 = vpack.c.b16 %v1312, %v1296
  %v2273 = vpack.c.b16 %v1313, %v1297
  %v2274 = vpack.c.b16 %v1330, %v1314
  %v2275 = vpack.c.b16 %v1331, %v1315
  %v2276 = vpack.c.b16 %v1332, %v1316
  %v2277 = vpack.c.b16 %v1333, %v1317
  %v2278 = vpack.c.b16 %v1334, %v1318
  %v2279 = vpack.c.b16 %v1335, %v1319
  %v2280 = vpack.c.b16 %v1336, %v1320
  %v2281 = vpack.c.b16 %v1337, %v1321
  %v2282 = vpack.c.b16 %v1338, %v1322
  %v2283 = vpack.c.b16 %v1339, %v1323
  %v2284 = vpack.c.b16 %v1340, %v1324
  %v2285 = vpack.c.b16 %v1341, %v1325
  %v2286 = vpack.c.b16 %v1342, %v1326
  %v2287 = vpack.c.b16 %v1343, %v1327
  %v2288 = vpack.c.b16 %v1344, %v1328
  %v2289 = vpack.c.b16 %v1345, %v1329
  %v2290 = vpack.c.b16 %v1362, %v1346
  %v2291 = vpack.c.b16 %v1363, %v1347
  %v2292 = vpack.c.b16 %v1364, %v1348
  %v2293 = vpack.c.b16 %v1365, %v1349
  %v2294 = vpack.c.b16 %v1366, %v1350
  %v2295 = vpack.c.b16 %v1367, %v1351
  %v2296 = vpack.c.b16 %v1368, %v1352
  %v2297 = vpack.c.b16 %v1369, %v1353
  %v2298 = vpack.c.b16 %v1370, %v1354
  %v2299 = vpack.c.b16 %v1371, %v1355
  %v2300 = vpack.c.b16 %v1372, %v1356
  %v2301 = vpack.c.b16 %v1373, %v1357
  %v2302 = vpack.c.b16 %v1374, %v1358
  %v2303 = vpack.c.b16 %v1375, %v1359
  %v2304 = vpack.c.b16 %v1376, %v1360
  %v2305 = vpack.c.b16 %v1377, %v1361
  %v2306 = vpack.c.b16 %v1394, %v1378
  %v2307 = vpack.c.b16 %v1395, %v1379
  %v2308 = vpack.c.b16 %v1396, %v1380
  %v2309 = vpack.c.b16 %v1397, %v1381
  %v2310 = vpack.c.b16 %v1398, %v1382
  %v2311 = vpack.c.b16 %v1399, %v1383
  %v2312 = vpack.c.b16 %v1400, %v1384
  %v2313 = vpack.c.b16 %v1401, %v1385
  %v2314 = vpack.c.b16 %v1402, %v1386
  %v2315 = vpack.c.b16 %v1403, %v1387
  %v2316 = vpack.c.b16 %v1404, %v1388
  %v2317 = vpack.c.b16 %v1405, %v1389
  %v2318 = vpack.c.b16 %v1406, %v1390
  %v2319 = vpack.c.b16 %v1407, %v1391
  %v2320 = vpack.c.b16 %v1408, %v1392
  %v2321 = vpack.c.b16 %v1409, %v1393
  %v2322 = vpack.c.b16 %v1426, %v1410
  %v2323 = vpack.c.b16 %v1427, %v1411
  %v2324 = vpack.c.b16 %v1428, %v1412
  %v2325 = vpack.c.b16 %v1429, %v1413
  %v2326 = vpack.c.b16 %v1430, %v1414
  %v2327 = vpack.c.b16 %v1431, %v1415
  %v2328 = vpack.c.b16 %v1432, %v1416
  %v2329 = vpack.c.b16 %v1433, %v1417
  %v2330 = vpack.c.b16 %v1434, %v1418
  %v2331 = vpack.c.b16 %v1435, %v1419
  %v2332 = vpack.c.b16 %v1436, %v1420
  %v2333 = vpack.c.b16 %v1437, %v1421
  %v2334 = vpack.c.b16 %v1438, %v1422
  %v2335 = vpack.c.b16 %v1439, %v1423
  %v2336 = vpack.c.b16 %v1440, %v1424
  %v2337 = vpack.c.b16 %v1441, %v1425
  %v2338 = vpack.c.b16 %v1458, %v1442
  %v2339 = vpack.c.b16 %v1459, %v1443
  %v2340 = vpack.c.b16 %v1460, %v1444
  %v2341 = vpack.c.b16 %v1461, %v1445
  %v2342 = vpack.c.b16 %v1462, %v1446
  %v2343 = vpack.c.b16 %v1463, %v1447
  %v2344 = vpack.c.b16 %v1464, %v1448
  %v2345 = vpack.c.b16 %v1465, %v1449
  %v2346 = vpack.c.b16 %v1466, %v1450
  %v2347 = vpack.c.b16 %v1467, %v1451
  %v2348 = vpack.c.b16 %v1468, %v1452
  %v2349 = vpack.c.b16 %v1469, %v1453
  %v2350 = vpack.c.b16 %v1470, %v1454
  %v2351 = vpack.c.b16 %v1471, %v1455
  %v2352 = vpack.c.b16 %v1472, %v1456
  %v2353 = vpack.c.b16 %v1473, %v1457
  %v2354 = vpack.c.b16 %v1490, %v1474
  %v2355 = vpack.c.b16 %v1491, %v1475
  %v2356 = vpack.c.b16 %v1492, %v1476
  %v2357 = vpack.c.b16 %v1493, %v1477
  %v2358 = vpack.c.b16 %v1494, %v1478
  %v2359 = vpack.c.b16 %v1495, %v1479
  %v2360 = vpack.c.b16 %v1496, %v1480
  %v2361 = vpack.c.b16 %v1497, %v1481
  %v2362 = vpack.c.b16 %v1498, %v1482
  %v2363 = vpack.c.b16 %v1499, %v1483
  %v2364 = vpack.c.b16 %v1500, %v1484
  %v2365 = vpack.c.b16 %v1501, %v1485
  %v2366 = vpack.c.b16 %v1502, %v1486
  %v2367 = vpack.c.b16 %v1503, %v1487
  %v2368 = vpack.c.b16 %v1504, %v1488
  %v2369 = vpack.c.b16 %v1505, %v1489
  %v2370 = vpack.c.b16 %v1522, %v1506
  %v2371 = vpack.c.b16 %v1523, %v1507
  %v2372 = vpack.c.b16 %v1524, %v1508
  %v2373 = vpack.c.b16 %v1525, %v1509
  %v2374 = vpack.c.b16 %v1526, %v1510
  %v2375 = vpack.c.b16 %v1527, %v1511
  %v2376 = vpack.c.b16 %v1528, %v1512
  %v2377 = vpack.c.b16 %v1529, %v1513
  %v2378 = vpack.c.b16 %v1530, %v1514
  %v2379 = vpack.c.b16 %v1531, %v1515
  %v2380 = vpack.c.b16 %v1532, %v1516
  %v2381 = vpack.c.b16 %v1533, %v1517
  %v2382 = vpack.c.b16 %v1534, %v1518
  %v2383 = vpack.c.b16 %v1535, %v1519
  %v2384 = vpack.c.b16 %v1536, %v1520
  %v2385 = vpack.c.b16 %v1537, %v1521
  %v2386 = vpack.c.b16 %v1554, %v1538
  %v2387 = vpack.c.b16 %v1555, %v1539
  %v2388 = vpack.c.b16 %v1556, %v1540
  %v2389 = vpack.c.b16 %v1557, %v1541
  %v2390 = vpack.c.b16 %v1558, %v1542
  %v2391 = vpack.c.b16 %v1559, %v1543
  %v2392 = vpack.c.b16 %v1560, %v1544
  %v2393 = vpack.c.b16 %v1561, %v1545
  %v2394 = vpack.c.b16 %v1562, %v1546
  %v2395 = vpack.c.b16 %v1563, %v1547
  %v2396 = vpack.c.b16 %v1564, %v1548
  %v2397 = vpack.c.b16 %v1565, %v1549
  %v2398 = vpack.c.b16 %v1566, %v1550
  %v2399 = vpack.c.b16 %v1567, %v1551
  %v2400 = vpack.c.b16 %v1568, %v1552
  %v2401 = vpack.c.b16 %v1569, %v1553
  %v2402 = vpack.c.b16 %v1586, %v1570
  %v2403 = vpack.c.b16 %v1587, %v1571
  %v2404 = vpack.c.b16 %v1588, %v1572
  %v2405 = vpack.c.b16 %v1589, %v1573
  %v2406 = vpack.c.b16 %v1590, %v1574
  %v2407 = vpack.c.b16 %v1591, %v1575
  %v2408 = vpack.c.b16 %v1592, %v1576
  %v2409 = vpack.c.b16 %v1593, %v1577
  %v2410 = vpack.c.b16 %v1594, %v1578
  %v2411 = vpack.c.b16 %v1595, %v1579
  %v2412 = vpack.c.b16 %v1596, %v1580
  %v2413 = vpack.c.b16 %v1597, %v1581
  %v2414 = vpack.c.b16 %v1598, %v1582
  %v2415 = vpack.c.b16 %v1599, %v1583
  %v2416 = vpack.c.b16 %v1600, %v1584
  %v2417 = vpack.c.b16 %v1601, %v1585
  %v2418 = vpack.c.b16 %v1618, %v1602
  %v2419 = vpack.c.b16 %v1619, %v1603
  %v2420 = vpack.c.b16 %v1620, %v1604
  %v2421 = vpack.c.b16 %v1621, %v1605
  %v2422 = vpack.c.b16 %v1622, %v1606
  %v2423 = vpack.c.b16 %v1623, %v1607
  %v2424 = vpack.c.b16 %v1624, %v1608
  %v2425 = vpack.c.b16 %v1625, %v1609
  %v2426 = vpack.c.b16 %v1626, %v1610
  %v2427 = vpack.c.b16 %v1627, %v1611
  %v2428 = vpack.c.b16 %v1628, %v1612
  %v2429 = vpack.c.b16 %v1629, %v1613
  %v2430 = vpack.c.b16 %v1630, %v1614
  %v2431 = vpack.c.b16 %v1631, %v1615
  %v2432 = vpack.c.b16 %v1632, %v1616
  %v2433 = vpack.c.b16 %v1633, %v1617
  %v2434 = vpack.c.b16 %v1650, %v1634
  %v2435 = vpack.c.b16 %v1651, %v1635
  %v2436 = vpack.c.b16 %v1652, %v1636
  %v2437 = vpack.c.b16 %v1653, %v1637
  %v2438 = vpack.c.b16 %v1654, %v1638
  %v2439 = vpack.c.b16 %v1655, %v1639
  %v2440 = vpack.c.b16 %v1656, %v1640
  %v2441 = vpack.c.b16 %v1657, %v1641
  %v2442 = vpack.c.b16 %v1658, %v1642
  %v2443 = vpack.c.b16 %v1659, %v1643
  %v2444 = vpack.c.b16 %v1660, %v1644
  %v2445 = vpack.c.b16 %v1661, %v1645
  %v2446 = vpack.c.b16 %v1662, %v1646
  %v2447 = vpack.c.b16 %v1663, %v1647
  %v2448 = vpack.c.b16 %v1664, %v1648
  %v2449 = vpack.c.b16 %v1665, %v1649
  %v2450 = vpack.c.b16 %v1682, %v1666
  %v2451 = vpack.c.b16 %v1683, %v1667
  %v2452 = vpack.c.b16 %v1684, %v1668
  %v2453 = vpack.c.b16 %v1685, %v1669
  %v2454 = vpack.c.b16 %v1686, %v1670
  %v2455 = vpack.c.b16 %v1687, %v1671
  %v2456 = vpack.c.b16 %v1688, %v1672
  %v2457 = vpack.c.b16 %v1689, %v1673
  %v2458 = vpack.c.b16 %v1690, %v1674
  %v2459 = vpack.c.b16 %v1691, %v1675
  %v2460 = vpack.c.b16 %v1692, %v1676
  %v2461 = vpack.c.b16 %v1693, %v1677
  %v2462 = vpack.c.b16 %v1694, %v1678
  %v2463 = vpack.c.b16 %v1695, %v1679
  %v2464 = vpack.c.b16 %v1696, %v1680
  %v2465 = vpack.c.b16 %v1697, %v1681
  %v2466 = vpack.c.b16 %v1714, %v1698
  %v2467 = vpack.c.b16 %v1715, %v1699
  %v2468 = vpack.c.b16 %v1716, %v1700
  %v2469 = vpack.c.b16 %v1717, %v1701
  %v2470 = vpack.c.b16 %v1718, %v1702
  %v2471 = vpack.c.b16 %v1719, %v1703
  %v2472 = vpack.c.b16 %v1720, %v1704
  %v2473 = vpack.c.b16 %v1721, %v1705
  %v2474 = vpack.c.b16 %v1722, %v1706
  %v2475 = vpack.c.b16 %v1723, %v1707
  %v2476 = vpack.c.b16 %v1724, %v1708
  %v2477 = vpack.c.b16 %v1725, %v1709
  %v2478 = vpack.c.b16 %v1726, %v1710
  %v2479 = vpack.c.b16 %v1727, %v1711
  %v2480 = vpack.c.b16 %v1728, %v1712
  %v2481 = vpack.c.b16 %v1729, %v1713
  %v2482 = vpack.c.b16 %v1746, %v1730
  %v2483 = vpack.c.b16 %v1747, %v1731
  %v2484 = vpack.c.b16 %v1748, %v1732
  %v2485 = vpack.c.b16 %v1749, %v1733
  %v2486 = vpack.c.b16 %v1750, %v1734
  %v2487 = vpack.c.b16 %v1751, %v1735
  %v2488 = vpack.c.b16 %v1752, %v1736
  %v2489 = vpack.c.b16 %v1753, %v1737
  %v2490 = vpack.c.b16 %v1754, %v1738
  %v2491 = vpack.c.b16 %v1755, %v1739
  %v2492 = vpack.c.b16 %v1756, %v1740
  %v2493 = vpack.c.b16 %v1757, %v1741
  %v2494 = vpack.c.b16 %v1758, %v1742
  %v2495 = vpack.c.b16 %v1759, %v1743
  %v2496 = vpack.c.b16 %v1760, %v1744
  %v2497 = vpack.c.b16 %v1761, %v1745
  %v2498 = vpack.c.b16 %v1778, %v1762
  %v2499 = vpack.c.b16 %v1779, %v1763
  %v2500 = vpack.c.b16 %v1780, %v1764
  %v2501 = vpack.c.b16 %v1781, %v1765
  %v2502 = vpack.c.b16 %v1782, %v1766
  %v2503 = vpack.c.b16 %v1783, %v1767
  %v2504 = vpack.c.b16 %v1784, %v1768
  %v2505 = vpack.c.b16 %v1785, %v1769
  %v2506 = vpack.c.b16 %v1786, %v1770
  %v2507 = vpack.c.b16 %v1787, %v1771
  %v2508 = vpack.c.b16 %v1788, %v1772
  %v2509 = vpack.c.b16 %v1789, %v1773
  %v2510 = vpack.c.b16 %v1790, %v1774
  %v2511 = vpack.c.b16 %v1791, %v1775
  %v2512 = vpack.c.b16 %v1792, %v1776
  %v2513 = vpack.c.b16 %v1793, %v1777
  %v2514 = vpack.c.b16 %v1810, %v1794
  %v2515 = vpack.c.b16 %v1811, %v1795
  %v2516 = vpack.c.b16 %v1812, %v1796
  %v2517 = vpack.c.b16 %v1813, %v1797
  %v2518 = vpack.c.b16 %v1814, %v1798
  %v2519 = vpack.c.b16 %v1815, %v1799
  %v2520 = vpack.c.b16 %v1816, %v1800
  %v2521 = vpack.c.b16 %v1817, %v1801
  %v2522 = vpack.c.b16 %v1818, %v1802
  %v2523 = vpack.c.b16 %v1819, %v1803
  %v2524 = vpack.c.b16 %v1820, %v1804
  %v2525 = vpack.c.b16 %v1821, %v1805
  %v2526 = vpack.c.b16 %v1822, %v1806
  %v2527 = vpack.c.b16 %v1823, %v1807
  %v2528 = vpack.c.b16 %v1824, %v1808
  %v2529 = vpack.c.b16 %v1825, %v1809
  %v2530 = vpack.c.b16 %v1842, %v1826
  %v2531 = vpack.c.b16 %v1843, %v1827
  %v2532 = vpack.c.b16 %v1844, %v1828
  %v2533 = vpack.c.b16 %v1845, %v1829
  %v2534 = vpack.c.b16 %v1846, %v1830
  %v2535 = vpack.c.b16 %v1847, %v1831
  %v2536 = vpack.c.b16 %v1848, %v1832
  %v2537 = vpack.c.b16 %v1849, %v1833
  %v2538 = vpack.c.b16 %v1850, %v1834
  %v2539 = vpack.c.b16 %v1851, %v1835
  %v2540 = vpack.c.b16 %v1852, %v1836
  %v2541 = vpack.c.b16 %v1853, %v1837
  %v2542 = vpack.c.b16 %v1854, %v1838
  %v2543 = vpack.c.b16 %v1855, %v1839
  %v2544 = vpack.c.b16 %v1856, %v1840
  %v2545 = vpack.c.b16 %v1857, %v1841
  %v2546 = vpack.c.b16 %v1874, %v1858
  %v2547 = vpack.c.b16 %v1875, %v1859
  %v2548 = vpack.c.b16 %v1876, %v1860
  %v2549 = vpack.c.b16 %v1877, %v1861
  %v2550 = vpack.c.b16 %v1878, %v1862
  %v2551 = vpack.c.b16 %v1879, %v1863
  %v2552 = vpack.c.b16 %v1880, %v1864
  %v2553 = vpack.c.b16 %v1881, %v1865
  %v2554 = vpack.c.b16 %v1882, %v1866
  %v2555 = vpack.c.b16 %v1883, %v1867
  %v2556 = vpack.c.b16 %v1884, %v1868
  %v2557 = vpack.c.b16 %v1885, %v1869
  %v2558 = vpack.c.b16 %v1886, %v1870
  %v2559 = vpack.c.b16 %v1887, %v1871
  %v2560 = vpack.c.b16 %v1888, %v1872
  %v2561 = vpack.c.b16 %v1889, %v1873
  %v2562 = vpack.c.b16 %v1906, %v1890
  %v2563 = vpack.c.b16 %v1907, %v1891
  %v2564 = vpack.c.b16 %v1908, %v1892
  %v2565 = vpack.c.b16 %v1909, %v1893
  %v2566 = vpack.c.b16 %v1910, %v1894
  %v2567 = vpack.c.b16 %v1911, %v1895
  %v2568 = vpack.c.b16 %v1912, %v1896
  %v2569 = vpack.c.b16 %v1913, %v1897
  %v2570 = vpack.c.b16 %v1914, %v1898
  %v2571 = vpack.c.b16 %v1915, %v1899
  %v2572 = vpack.c.b16 %v1916, %v1900
  %v2573 = vpack.c.b16 %v1917, %v1901
  %v2574 = vpack.c.b16 %v1918, %v1902
  %v2575 = vpack.c.b16 %v1919, %v1903
  %v2576 = vpack.c.b16 %v1920, %v1904
  %v2577 = vpack.c.b16 %v1921, %v1905
  %v2578 = vpack.c.b16 %v1938, %v1922
  %v2579 = vpack.c.b16 %v1939, %v1923
  %v2580 = vpack.c.b16 %v1940, %v1924
  %v2581 = vpack.c.b16 %v1941, %v1925
  %v2582 = vpack.c.b16 %v1942, %v1926
  %v2583 = vpack.c.b16 %v1943, %v1927
  %v2584 = vpack.c.b16 %v1944, %v1928
  %v2585 = vpack.c.b16 %v1945, %v1929
  %v2586 = vpack.c.b16 %v1946, %v1930
  %v2587 = vpack.c.b16 %v1947, %v1931
  %v2588 = vpack.c.b16 %v1948, %v1932
  %v2589 = vpack.c.b16 %v1949, %v1933
  %v2590 = vpack.c.b16 %v1950, %v1934
  %v2591 = vpack.c.b16 %v1951, %v1935
  %v2592 = vpack.c.b16 %v1952, %v1936
  %v2593 = vpack.c.b16 %v1953, %v1937
  %v2594 = vpack.c.b16 %v1970, %v1954
  %v2595 = vpack.c.b16 %v1971, %v1955
  %v2596 = vpack.c.b16 %v1972, %v1956
  %v2597 = vpack.c.b16 %v1973, %v1957
  %v2598 = vpack.c.b16 %v1974, %v1958
  %v2599 = vpack.c.b16 %v1975, %v1959
  %v2600 = vpack.c.b16 %v1976, %v1960
  %v2601 = vpack.c.b16 %v1977, %v1961
  %v2602 = vpack.c.b16 %v1978, %v1962
  %v2603 = vpack.c.b16 %v1979, %v1963
  %v2604 = vpack.c.b16 %v1980, %v1964
  %v2605 = vpack.c.b16 %v1981, %v1965
  %v2606 = vpack.c.b16 %v1982, %v1966
  %v2607 = vpack.c.b16 %v1983, %v1967
  %v2608 = vpack.c.b16 %v1984, %v1968
  %v2609 = vpack.c.b16 %v1985, %v1969
  %v2610 = vpack.c.b16 %v2002, %v1986
  %v2611 = vpack.c.b16 %v2003, %v1987
  %v2612 = vpack.c.b16 %v2004, %v1988
  %v2613 = vpack.c.b16 %v2005, %v1989
  %v2614 = vpack.c.b16 %v2006, %v1990
  %v2615 = vpack.c.b16 %v2007, %v1991
  %v2616 = vpack.c.b16 %v2008, %v1992
  %v2617 = vpack.c.b16 %v2009, %v1993
  %v2618 = vpack.c.b16 %v2010, %v1994
  %v2619 = vpack.c.b16 %v2011, %v1995
  %v2620 = vpack.c.b16 %v2012, %v1996
  %v2621 = vpack.c.b16 %v2013, %v1997
  %v2622 = vpack.c.b16 %v2014, %v1998
  %v2623 = vpack.c.b16 %v2015, %v1999
  %v2624 = vpack.c.b16 %v2016, %v2000
  %v2625 = vpack.c.b16 %v2017, %v2001
  %v2626 = vpack.c.b16 %v2034, %v2018
  %v2627 = vpack.c.b16 %v2035, %v2019
  %v2628 = vpack.c.b16 %v2036, %v2020
  %v2629 = vpack.c.b16 %v2037, %v2021
  %v2630 = vpack.c.b16 %v2038, %v2022
  %v2631 = vpack.c.b16 %v2039, %v2023
  %v2632 = vpack.c.b16 %v2040, %v2024
  %v2633 = vpack.c.b16 %v2041, %v2025
  %v2634 = vpack.c.b16 %v2042, %v2026
  %v2635 = vpack.c.b16 %v2043, %v2027
  %v2636 = vpack.c.b16 %v2044, %v2028
  %v2637 = vpack.c.b16 %v2045, %v2029
  %v2638 = vpack.c.b16 %v2046, %v2030
  %v2639 = vpack.c.b16 %v2047, %v2031
  %v2640 = vpack.c.b16 %v2048, %v2032
  %v2641 = vpack.c.b16 %v2049, %v2033
  %v2642 = vpack.c.b16 %v2066, %v2050
  %v2643 = vpack.c.b16 %v2067, %v2051
  %v2644 = vpack.c.b16 %v2068, %v2052
  %v2645 = vpack.c.b16 %v2069, %v2053
  %v2646 = vpack.c.b16 %v2070, %v2054
  %v2647 = vpack.c.b16 %v2071, %v2055
  %v2648 = vpack.c.b16 %v2072, %v2056
  %v2649 = vpack.c.b16 %v2073, %v2057
  %v2650 = vpack.c.b16 %v2074, %v2058
  %v2651 = vpack.c.b16 %v2075, %v2059
  %v2652 = vpack.c.b16 %v2076, %v2060
  %v2653 = vpack.c.b16 %v2077, %v2061
  %v2654 = vpack.c.b16 %v2078, %v2062
  %v2655 = vpack.c.b16 %v2079, %v2063
  %v2656 = vpack.c.b16 %v2080, %v2064
  %v2657 = vpack.c.b16 %v2081, %v2065
  %v2658 = vpack.c.b16 %v2098, %v2082
  %v2659 = vpack.c.b16 %v2099, %v2083
  %v2660 = vpack.c.b16 %v2100, %v2084
  %v2661 = vpack.c.b16 %v2101, %v2085
  %v2662 = vpack.c.b16 %v2102, %v2086
  %v2663 = vpack.c.b16 %v2103, %v2087
  %v2664 = vpack.c.b16 %v2104, %v2088
  %v2665 = vpack.c.b16 %v2105, %v2089
  %v2666 = vpack.c.b16 %v2106, %v2090
  %v2667 = vpack.c.b16 %v2107, %v2091
  %v2668 = vpack.c.b16 %v2108, %v2092
  %v2669 = vpack.c.b16 %v2109, %v2093
  %v2670 = vpack.c.b16 %v2110, %v2094
  %v2671 = vpack.c.b16 %v2111, %v2095
  %v2672 = vpack.c.b16 %v2112, %v2096
  %v2673 = vpack.c.b16 %v2113, %v2097
  %v2674 = vpack.c.b16 %v2130, %v2114
  %v2675 = vpack.c.b16 %v2131, %v2115
  %v2676 = vpack.c.b16 %v2132, %v2116
  %v2677 = vpack.c.b16 %v2133, %v2117
  %v2678 = vpack.c.b16 %v2134, %v2118
  %v2679 = vpack.c.b16 %v2135, %v2119
  %v2680 = vpack.c.b16 %v2136, %v2120
  %v2681 = vpack.c.b16 %v2137, %v2121
  %v2682 = vpack.c.b16 %v2138, %v2122
  %v2683 = vpack.c.b16 %v2139, %v2123
  %v2684 = vpack.c.b16 %v2140, %v2124
  %v2685 = vpack.c.b16 %v2141, %v2125
  %v2686 = vpack.c.b16 %v2142, %v2126
  %v2687 = vpack.c.b16 %v2143, %v2127
  %v2688 = vpack.c.b16 %v2144, %v2128
  %v2689 = vpack.c.b16 %v2145, %v2129
  %v2690 = vpack.c.b16 %v2162, %v2146
  %v2691 = vpack.c.b16 %v2163, %v2147
  %v2692 = vpack.c.b16 %v2164, %v2148
  %v2693 = vpack.c.b16 %v2165, %v2149
  %v2694 = vpack.c.b16 %v2166, %v2150
  %v2695 = vpack.c.b16 %v2167, %v2151
  %v2696 = vpack.c.b16 %v2168, %v2152
  %v2697 = vpack.c.b16 %v2169, %v2153
  %v2698 = vpack.c.b16 %v2170, %v2154
  %v2699 = vpack.c.b16 %v2171, %v2155
  %v2700 = vpack.c.b16 %v2172, %v2156
  %v2701 = vpack.c.b16 %v2173, %v2157
  %v2702 = vpack.c.b16 %v2174, %v2158
  %v2703 = vpack.c.b16 %v2175, %v2159
  %v2704 = vpack.c.b16 %v2176, %v2160
  %v2705 = vpack.c.b16 %v2177, %v2161
  %v2706 = vpack.c.b16 %v2194, %v2178
  %v2707 = vpack.c.b16 %v2195, %v2179
  %v2708 = vpack.c.b16 %v2196, %v2180
  %v2709 = vpack.c.b16 %v2197, %v2181
  %v2710 = vpack.c.b16 %v2198, %v2182
  %v2711 = vpack.c.b16 %v2199, %v2183
  %v2712 = vpack.c.b16 %v2200, %v2184
  %v2713 = vpack.c.b16 %v2201, %v2185
  %v2714 = vpack.c.b16 %v2202, %v2186
  %v2715 = vpack.c.b16 %v2203, %v2187
  %v2716 = vpack.c.b16 %v2204, %v2188
  %v2717 = vpack.c.b16 %v2205, %v2189
  %v2718 = vpack.c.b16 %v2206, %v2190
  %v2719 = vpack.c.b16 %v2207, %v2191
  %v2720 = vpack.c.b16 %v2208, %v2192
  %v2721 = vpack.c.b16 %v2209, %v2193
  %3234 = vmatprep.subr.bf16.mxu0 %v2211
  %3235 = vmatpush1.bf16.msra.mxu0 %v2210
  %3236 = vmatprep.subr.bf16.mxu0 %v2227
  %3237 = vmatpush1.bf16.msra.mxu0 %v2226
  %3238 = vmatprep.subr.bf16.mxu0 %v2243
  %3239 = vmatpush1.bf16.msra.mxu0 %v2242
  %3240 = vmatprep.subr.bf16.mxu0 %v2259
  %3241 = vmatpush1.bf16.msra.mxu0 %v2258
  %3242 = vmatprep.subr.bf16.mxu0 %v2275
  %3243 = vmatpush1.bf16.msra.mxu0 %v2274
  %3244 = vmatprep.subr.bf16.mxu0 %v2291
  %3245 = vmatpush1.bf16.msra.mxu0 %v2290
  %3246 = vmatprep.subr.bf16.mxu0 %v2307
  %3247 = vmatpush1.bf16.msra.mxu0 %v2306
  %3248 = vmatprep.subr.bf16.mxu0 %v2323
  %3249 = vmatpush1.bf16.msra.mxu0 %v2322
  %3250 = vmatprep.subr.bf16.mxu0 %v2339
  %3251 = vmatpush1.bf16.msra.mxu0 %v2338
  %3252 = vmatprep.subr.bf16.mxu0 %v2355
  %3253 = vmatpush1.bf16.msra.mxu0 %v2354
  %3254 = vmatprep.subr.bf16.mxu0 %v2371
  %3255 = vmatpush1.bf16.msra.mxu0 %v2370
  %3256 = vmatprep.subr.bf16.mxu0 %v2387
  %3257 = vmatpush1.bf16.msra.mxu0 %v2386
  %3258 = vmatprep.subr.bf16.mxu0 %v2403
  %3259 = vmatpush1.bf16.msra.mxu0 %v2402
  %3260 = vmatprep.subr.bf16.mxu0 %v2419
  %3261 = vmatpush1.bf16.msra.mxu0 %v2418
  %3262 = vmatprep.subr.bf16.mxu0 %v2435
  %3263 = vmatpush1.bf16.msra.mxu0 %v2434
  %3264 = vmatprep.subr.bf16.mxu0 %v2451
  %3265 = vmatpush1.bf16.msra.mxu0 %v2450
  %3266 = vmatprep.mubr.bf16.mxu0 %v671
  %3267 = vmatmul.mubr.bf16.gmra.mrb[0].mxu0 %v670
  %v3268 = vpop.f32.mrb[0].mxu0
  %v3269 = vadd.f32 0.0, %v3268
  %v3270 = vpop.f32.mrb[0].mxu0
  %v3271 = vadd.f32 0.0, %v3270
  %v3272 = vpop.f32.mrb[0].mxu0
  %v3273 = vpop.f32.mrb[0].mxu0
  %3274 = vdwg.mxu0
  %3275 = vmatprep.subr.bf16.mxu0 %v2467
  %3276 = vmatpush1.bf16.msra.mxu0 %v2466
  %3277 = vmatprep.subr.bf16.mxu0 %v2483
  %3278 = vmatpush1.bf16.msra.mxu0 %v2482
  %3279 = vmatprep.subr.bf16.mxu0 %v2499
  %3280 = vmatpush1.bf16.msra.mxu0 %v2498
  %3281 = vmatprep.subr.bf16.mxu0 %v2515
  %3282 = vmatpush1.bf16.msra.mxu0 %v2514
  %3283 = vmatprep.subr.bf16.mxu0 %v2531
  %3284 = vmatpush1.bf16.msra.mxu0 %v2530
  %3285 = vmatprep.subr.bf16.mxu0 %v2547
  %3286 = vmatpush1.bf16.msra.mxu0 %v2546
  %3287 = vmatprep.subr.bf16.mxu0 %v2563
  %3288 = vmatpush1.bf16.msra.mxu0 %v2562
  %3289 = vmatprep.subr.bf16.mxu0 %v2579
  %3290 = vmatpush1.bf16.msra.mxu0 %v2578
  %3291 = vmatprep.subr.bf16.mxu0 %v2595
  %3292 = vmatpush1.bf16.msra.mxu0 %v2594
  %3293 = vmatprep.subr.bf16.mxu0 %v2611
  %3294 = vmatpush1.bf16.msra.mxu0 %v2610
  %3295 = vmatprep.subr.bf16.mxu0 %v2627
  %3296 = vmatpush1.bf16.msra.mxu0 %v2626
  %3297 = vmatprep.subr.bf16.mxu0 %v2643
  %3298 = vmatpush1.bf16.msra.mxu0 %v2642
  %3299 = vmatprep.subr.bf16.mxu0 %v2659
  %3300 = vmatpush1.bf16.msra.mxu0 %v2658
  %3301 = vmatprep.subr.bf16.mxu0 %v2675
  %3302 = vmatpush1.bf16.msra.mxu0 %v2674
  %3303 = vmatprep.subr.bf16.mxu0 %v2691
  %3304 = vmatpush1.bf16.msra.mxu0 %v2690
  %3305 = vmatprep.subr.bf16.mxu0 %v2707
  %3306 = vmatpush1.bf16.msra.mxu0 %v2706
  %3307 = vmatprep.mubr.bf16.mxu0 %v673
  %3308 = vmatmul.mubr.bf16.gmra.mrb[0].mxu0 %v672
  %v3309 = vpop.f32.mrb[0].mxu0
  %v3310 = vadd.f32 %v3269, %v3309
  %v3311 = vpop.f32.mrb[0].mxu0
  %v3312 = vadd.f32 %v3271, %v3311
  %v3313 = vpop.f32.mrb[0].mxu0
  %v3314 = vpop.f32.mrb[0].mxu0
  %3315 = vdwg.mxu0
  %3316 = vmatprep.subr.bf16.mxu0 %v2213
  %3317 = vmatpush1.bf16.msra.mxu0 %v2212
  %3318 = vmatprep.subr.bf16.mxu0 %v2229
  %3319 = vmatpush1.bf16.msra.mxu0 %v2228
  %3320 = vmatprep.subr.bf16.mxu0 %v2245
  %3321 = vmatpush1.bf16.msra.mxu0 %v2244
  %3322 = vmatprep.subr.bf16.mxu0 %v2261
  %3323 = vmatpush1.bf16.msra.mxu0 %v2260
  %3324 = vmatprep.subr.bf16.mxu0 %v2277
  %3325 = vmatpush1.bf16.msra.mxu0 %v2276
  %3326 = vmatprep.subr.bf16.mxu0 %v2293
  %3327 = vmatpush1.bf16.msra.mxu0 %v2292
  %3328 = vmatprep.subr.bf16.mxu0 %v2309
  %3329 = vmatpush1.bf16.msra.mxu0 %v2308
  %3330 = vmatprep.subr.bf16.mxu0 %v2325
  %3331 = vmatpush1.bf16.msra.mxu0 %v2324
  %3332 = vmatprep.subr.bf16.mxu0 %v2341
  %3333 = vmatpush1.bf16.msra.mxu0 %v2340
  %3334 = vmatprep.subr.bf16.mxu0 %v2357
  %3335 = vmatpush1.bf16.msra.mxu0 %v2356
  %3336 = vmatprep.subr.bf16.mxu0 %v2373
  %3337 = vmatpush1.bf16.msra.mxu0 %v2372
  %3338 = vmatprep.subr.bf16.mxu0 %v2389
  %3339 = vmatpush1.bf16.msra.mxu0 %v2388
  %3340 = vmatprep.subr.bf16.mxu0 %v2405
  %3341 = vmatpush1.bf16.msra.mxu0 %v2404
  %3342 = vmatprep.subr.bf16.mxu0 %v2421
  %3343 = vmatpush1.bf16.msra.mxu0 %v2420
  %3344 = vmatprep.subr.bf16.mxu0 %v2437
  %3345 = vmatpush1.bf16.msra.mxu0 %v2436
  %3346 = vmatprep.subr.bf16.mxu0 %v2453
  %3347 = vmatpush1.bf16.msra.mxu0 %v2452
  %3348 = vmatprep.mubr.bf16.mxu0 %v671
  %3349 = vmatmul.mubr.bf16.gmra.mrb[0].mxu0 %v670
  %v3350 = vpop.f32.mrb[0].mxu0
  %v3351 = vadd.f32 0.0, %v3350
  %v3352 = vpop.f32.mrb[0].mxu0
  %v3353 = vadd.f32 0.0, %v3352
  %v3354 = vpop.f32.mrb[0].mxu0
  %v3355 = vpop.f32.mrb[0].mxu0
  %3356 = vdwg.mxu0
  %3357 = vmatprep.subr.bf16.mxu0 %v2469
  %3358 = vmatpush1.bf16.msra.mxu0 %v2468
  %3359 = vmatprep.subr.bf16.mxu0 %v2485
  %3360 = vmatpush1.bf16.msra.mxu0 %v2484
  %3361 = vmatprep.subr.bf16.mxu0 %v2501
  %3362 = vmatpush1.bf16.msra.mxu0 %v2500
  %3363 = vmatprep.subr.bf16.mxu0 %v2517
  %3364 = vmatpush1.bf16.msra.mxu0 %v2516
  %3365 = vmatprep.subr.bf16.mxu0 %v2533
  %3366 = vmatpush1.bf16.msra.mxu0 %v2532
  %3367 = vmatprep.subr.bf16.mxu0 %v2549
  %3368 = vmatpush1.bf16.msra.mxu0 %v2548
  %3369 = vmatprep.subr.bf16.mxu0 %v2565
  %3370 = vmatpush1.bf16.msra.mxu0 %v2564
  %3371 = vmatprep.subr.bf16.mxu0 %v2581
  %3372 = vmatpush1.bf16.msra.mxu0 %v2580
  %3373 = vmatprep.subr.bf16.mxu0 %v2597
  %3374 = vmatpush1.bf16.msra.mxu0 %v2596
  %3375 = vmatprep.subr.bf16.mxu0 %v2613
  %3376 = vmatpush1.bf16.msra.mxu0 %v2612
  %3377 = vmatprep.subr.bf16.mxu0 %v2629
  %3378 = vmatpush1.bf16.msra.mxu0 %v2628
  %3379 = vmatprep.subr.bf16.mxu0 %v2645
  %3380 = vmatpush1.bf16.msra.mxu0 %v2644
  %3381 = vmatprep.subr.bf16.mxu0 %v2661
  %3382 = vmatpush1.bf16.msra.mxu0 %v2660
  %3383 = vmatprep.subr.bf16.mxu0 %v2677
  %3384 = vmatpush1.bf16.msra.mxu0 %v2676
  %3385 = vmatprep.subr.bf16.mxu0 %v2693
  %3386 = vmatpush1.bf16.msra.mxu0 %v2692
  %3387 = vmatprep.subr.bf16.mxu0 %v2709
  %3388 = vmatpush1.bf16.msra.mxu0 %v2708
  %3389 = vmatprep.mubr.bf16.mxu0 %v673
  %3390 = vmatmul.mubr.bf16.gmra.mrb[0].mxu0 %v672
  %v3391 = vpop.f32.mrb[0].mxu0
  %v3392 = vadd.f32 %v3351, %v3391
  %v3393 = vpop.f32.mrb[0].mxu0
  %v3394 = vadd.f32 %v3353, %v3393
  %v3395 = vpop.f32.mrb[0].mxu0
  %v3396 = vpop.f32.mrb[0].mxu0
  %3397 = vdwg.mxu0
  %3398 = vmatprep.subr.bf16.mxu0 %v2215
  %3399 = vmatpush1.bf16.msra.mxu0 %v2214
  %3400 = vmatprep.subr.bf16.mxu0 %v2231
  %3401 = vmatpush1.bf16.msra.mxu0 %v2230
  %3402 = vmatprep.subr.bf16.mxu0 %v2247
  %3403 = vmatpush1.bf16.msra.mxu0 %v2246
  %3404 = vmatprep.subr.bf16.mxu0 %v2263
  %3405 = vmatpush1.bf16.msra.mxu0 %v2262
  %3406 = vmatprep.subr.bf16.mxu0 %v2279
  %3407 = vmatpush1.bf16.msra.mxu0 %v2278
  %3408 = vmatprep.subr.bf16.mxu0 %v2295
  %3409 = vmatpush1.bf16.msra.mxu0 %v2294
  %3410 = vmatprep.subr.bf16.mxu0 %v2311
  %3411 = vmatpush1.bf16.msra.mxu0 %v2310
  %3412 = vmatprep.subr.bf16.mxu0 %v2327
  %3413 = vmatpush1.bf16.msra.mxu0 %v2326
  %3414 = vmatprep.subr.bf16.mxu0 %v2343
  %3415 = vmatpush1.bf16.msra.mxu0 %v2342
  %3416 = vmatprep.subr.bf16.mxu0 %v2359
  %3417 = vmatpush1.bf16.msra.mxu0 %v2358
  %3418 = vmatprep.subr.bf16.mxu0 %v2375
  %3419 = vmatpush1.bf16.msra.mxu0 %v2374
  %3420 = vmatprep.subr.bf16.mxu0 %v2391
  %3421 = vmatpush1.bf16.msra.mxu0 %v2390
  %3422 = vmatprep.subr.bf16.mxu0 %v2407
  %3423 = vmatpush1.bf16.msra.mxu0 %v2406
  %3424 = vmatprep.subr.bf16.mxu0 %v2423
  %3425 = vmatpush1.bf16.msra.mxu0 %v2422
  %3426 = vmatprep.subr.bf16.mxu0 %v2439
  %3427 = vmatpush1.bf16.msra.mxu0 %v2438
  %3428 = vmatprep.subr.bf16.mxu0 %v2455
  %3429 = vmatpush1.bf16.msra.mxu0 %v2454
  %3430 = vmatprep.mubr.bf16.mxu0 %v671
  %3431 = vmatmul.mubr.bf16.gmra.mrb[0].mxu0 %v670
  %v3432 = vpop.f32.mrb[0].mxu0
  %v3433 = vadd.f32 0.0, %v3432
  %v3434 = vpop.f32.mrb[0].mxu0
  %v3435 = vadd.f32 0.0, %v3434
  %v3436 = vpop.f32.mrb[0].mxu0
  %v3437 = vpop.f32.mrb[0].mxu0
  %3438 = vdwg.mxu0
  %3439 = vmatprep.subr.bf16.mxu0 %v2471
  %3440 = vmatpush1.bf16.msra.mxu0 %v2470
  %3441 = vmatprep.subr.bf16.mxu0 %v2487
  %3442 = vmatpush1.bf16.msra.mxu0 %v2486
  %3443 = vmatprep.subr.bf16.mxu0 %v2503
  %3444 = vmatpush1.bf16.msra.mxu0 %v2502
  %3445 = vmatprep.subr.bf16.mxu0 %v2519
  %3446 = vmatpush1.bf16.msra.mxu0 %v2518
  %3447 = vmatprep.subr.bf16.mxu0 %v2535
  %3448 = vmatpush1.bf16.msra.mxu0 %v2534
  %3449 = vmatprep.subr.bf16.mxu0 %v2551
  %3450 = vmatpush1.bf16.msra.mxu0 %v2550
  %3451 = vmatprep.subr.bf16.mxu0 %v2567
  %3452 = vmatpush1.bf16.msra.mxu0 %v2566
  %3453 = vmatprep.subr.bf16.mxu0 %v2583
  %3454 = vmatpush1.bf16.msra.mxu0 %v2582
  %3455 = vmatprep.subr.bf16.mxu0 %v2599
  %3456 = vmatpush1.bf16.msra.mxu0 %v2598
  %3457 = vmatprep.subr.bf16.mxu0 %v2615
  %3458 = vmatpush1.bf16.msra.mxu0 %v2614
  %3459 = vmatprep.subr.bf16.mxu0 %v2631
  %3460 = vmatpush1.bf16.msra.mxu0 %v2630
  %3461 = vmatprep.subr.bf16.mxu0 %v2647
  %3462 = vmatpush1.bf16.msra.mxu0 %v2646
  %3463 = vmatprep.subr.bf16.mxu0 %v2663
  %3464 = vmatpush1.bf16.msra.mxu0 %v2662
  %3465 = vmatprep.subr.bf16.mxu0 %v2679
  %3466 = vmatpush1.bf16.msra.mxu0 %v2678
  %3467 = vmatprep.subr.bf16.mxu0 %v2695
  %3468 = vmatpush1.bf16.msra.mxu0 %v2694
  %3469 = vmatprep.subr.bf16.mxu0 %v2711
  %3470 = vmatpush1.bf16.msra.mxu0 %v2710
  %3471 = vmatprep.mubr.bf16.mxu0 %v673
  %3472 = vmatmul.mubr.bf16.gmra.mrb[0].mxu0 %v672
  %v3473 = vpop.f32.mrb[0].mxu0
  %v3474 = vadd.f32 %v3433, %v3473
  %v3475 = vpop.f32.mrb[0].mxu0
  %v3476 = vadd.f32 %v3435, %v3475
  %v3477 = vpop.f32.mrb[0].mxu0
  %v3478 = vpop.f32.mrb[0].mxu0
  %3479 = vdwg.mxu0
  %3480 = vmatprep.subr.bf16.mxu0 %v2217
  %3481 = vmatpush1.bf16.msra.mxu0 %v2216
  %3482 = vmatprep.subr.bf16.mxu0 %v2233
  %3483 = vmatpush1.bf16.msra.mxu0 %v2232
  %3484 = vmatprep.subr.bf16.mxu0 %v2249
  %3485 = vmatpush1.bf16.msra.mxu0 %v2248
  %3486 = vmatprep.subr.bf16.mxu0 %v2265
  %3487 = vmatpush1.bf16.msra.mxu0 %v2264
  %3488 = vmatprep.subr.bf16.mxu0 %v2281
  %3489 = vmatpush1.bf16.msra.mxu0 %v2280
  %3490 = vmatprep.subr.bf16.mxu0 %v2297
  %3491 = vmatpush1.bf16.msra.mxu0 %v2296
  %3492 = vmatprep.subr.bf16.mxu0 %v2313
  %3493 = vmatpush1.bf16.msra.mxu0 %v2312
  %3494 = vmatprep.subr.bf16.mxu0 %v2329
  %3495 = vmatpush1.bf16.msra.mxu0 %v2328
  %3496 = vmatprep.subr.bf16.mxu0 %v2345
  %3497 = vmatpush1.bf16.msra.mxu0 %v2344
  %3498 = vmatprep.subr.bf16.mxu0 %v2361
  %3499 = vmatpush1.bf16.msra.mxu0 %v2360
  %3500 = vmatprep.subr.bf16.mxu0 %v2377
  %3501 = vmatpush1.bf16.msra.mxu0 %v2376
  %3502 = vmatprep.subr.bf16.mxu0 %v2393
  %3503 = vmatpush1.bf16.msra.mxu0 %v2392
  %3504 = vmatprep.subr.bf16.mxu0 %v2409
  %3505 = vmatpush1.bf16.msra.mxu0 %v2408
  %3506 = vmatprep.subr.bf16.mxu0 %v2425
  %3507 = vmatpush1.bf16.msra.mxu0 %v2424
  %3508 = vmatprep.subr.bf16.mxu0 %v2441
  %3509 = vmatpush1.bf16.msra.mxu0 %v2440
  %3510 = vmatprep.subr.bf16.mxu0 %v2457
  %3511 = vmatpush1.bf16.msra.mxu0 %v2456
  %3512 = vmatprep.mubr.bf16.mxu0 %v671
  %3513 = vmatmul.mubr.bf16.gmra.mrb[0].mxu0 %v670
  %v3514 = vpop.f32.mrb[0].mxu0
  %v3515 = vadd.f32 0.0, %v3514
  %v3516 = vpop.f32.mrb[0].mxu0
  %v3517 = vadd.f32 0.0, %v3516
  %v3518 = vpop.f32.mrb[0].mxu0
  %v3519 = vpop.f32.mrb[0].mxu0
  %3520 = vdwg.mxu0
  %3521 = vmatprep.subr.bf16.mxu0 %v2473
  %3522 = vmatpush1.bf16.msra.mxu0 %v2472
  %3523 = vmatprep.subr.bf16.mxu0 %v2489
  %3524 = vmatpush1.bf16.msra.mxu0 %v2488
  %3525 = vmatprep.subr.bf16.mxu0 %v2505
  %3526 = vmatpush1.bf16.msra.mxu0 %v2504
  %3527 = vmatprep.subr.bf16.mxu0 %v2521
  %3528 = vmatpush1.bf16.msra.mxu0 %v2520
  %3529 = vmatprep.subr.bf16.mxu0 %v2537
  %3530 = vmatpush1.bf16.msra.mxu0 %v2536
  %3531 = vmatprep.subr.bf16.mxu0 %v2553
  %3532 = vmatpush1.bf16.msra.mxu0 %v2552
  %3533 = vmatprep.subr.bf16.mxu0 %v2569
  %3534 = vmatpush1.bf16.msra.mxu0 %v2568
  %3535 = vmatprep.subr.bf16.mxu0 %v2585
  %3536 = vmatpush1.bf16.msra.mxu0 %v2584
  %3537 = vmatprep.subr.bf16.mxu0 %v2601
  %3538 = vmatpush1.bf16.msra.mxu0 %v2600
  %3539 = vmatprep.subr.bf16.mxu0 %v2617
  %3540 = vmatpush1.bf16.msra.mxu0 %v2616
  %3541 = vmatprep.subr.bf16.mxu0 %v2633
  %3542 = vmatpush1.bf16.msra.mxu0 %v2632
  %3543 = vmatprep.subr.bf16.mxu0 %v2649
  %3544 = vmatpush1.bf16.msra.mxu0 %v2648
  %3545 = vmatprep.subr.bf16.mxu0 %v2665
  %3546 = vmatpush1.bf16.msra.mxu0 %v2664
  %3547 = vmatprep.subr.bf16.mxu0 %v2681
  %3548 = vmatpush1.bf16.msra.mxu0 %v2680
  %3549 = vmatprep.subr.bf16.mxu0 %v2697
  %3550 = vmatpush1.bf16.msra.mxu0 %v2696
  %3551 = vmatprep.subr.bf16.mxu0 %v2713
  %3552 = vmatpush1.bf16.msra.mxu0 %v2712
  %3553 = vmatprep.mubr.bf16.mxu0 %v673
  %3554 = vmatmul.mubr.bf16.gmra.mrb[0].mxu0 %v672
  %v3555 = vpop.f32.mrb[0].mxu0
  %v3556 = vadd.f32 %v3515, %v3555
  %v3557 = vpop.f32.mrb[0].mxu0
  %v3558 = vadd.f32 %v3517, %v3557
  %v3559 = vpop.f32.mrb[0].mxu0
  %v3560 = vpop.f32.mrb[0].mxu0
  %3561 = vdwg.mxu0
  %3562 = vmatprep.subr.bf16.mxu0 %v2219
  %3563 = vmatpush1.bf16.msra.mxu0 %v2218
  %3564 = vmatprep.subr.bf16.mxu0 %v2235
  %3565 = vmatpush1.bf16.msra.mxu0 %v2234
  %3566 = vmatprep.subr.bf16.mxu0 %v2251
  %3567 = vmatpush1.bf16.msra.mxu0 %v2250
  %3568 = vmatprep.subr.bf16.mxu0 %v2267
  %3569 = vmatpush1.bf16.msra.mxu0 %v2266
  %3570 = vmatprep.subr.bf16.mxu0 %v2283
  %3571 = vmatpush1.bf16.msra.mxu0 %v2282
  %3572 = vmatprep.subr.bf16.mxu0 %v2299
  %3573 = vmatpush1.bf16.msra.mxu0 %v2298
  %3574 = vmatprep.subr.bf16.mxu0 %v2315
  %3575 = vmatpush1.bf16.msra.mxu0 %v2314
  %3576 = vmatprep.subr.bf16.mxu0 %v2331
  %3577 = vmatpush1.bf16.msra.mxu0 %v2330
  %3578 = vmatprep.subr.bf16.mxu0 %v2347
  %3579 = vmatpush1.bf16.msra.mxu0 %v2346
  %3580 = vmatprep.subr.bf16.mxu0 %v2363
  %3581 = vmatpush1.bf16.msra.mxu0 %v2362
  %3582 = vmatprep.subr.bf16.mxu0 %v2379
  %3583 = vmatpush1.bf16.msra.mxu0 %v2378
  %3584 = vmatprep.subr.bf16.mxu0 %v2395
  %3585 = vmatpush1.bf16.msra.mxu0 %v2394
  %3586 = vmatprep.subr.bf16.mxu0 %v2411
  %3587 = vmatpush1.bf16.msra.mxu0 %v2410
  %3588 = vmatprep.subr.bf16.mxu0 %v2427
  %3589 = vmatpush1.bf16.msra.mxu0 %v2426
  %3590 = vmatprep.subr.bf16.mxu0 %v2443
  %3591 = vmatpush1.bf16.msra.mxu0 %v2442
  %3592 = vmatprep.subr.bf16.mxu0 %v2459
  %3593 = vmatpush1.bf16.msra.mxu0 %v2458
  %3594 = vmatprep.mubr.bf16.mxu0 %v671
  %3595 = vmatmul.mubr.bf16.gmra.mrb[0].mxu0 %v670
  %v3596 = vpop.f32.mrb[0].mxu0
  %v3597 = vadd.f32 0.0, %v3596
  %v3598 = vpop.f32.mrb[0].mxu0
  %v3599 = vadd.f32 0.0, %v3598
  %v3600 = vpop.f32.mrb[0].mxu0
  %v3601 = vpop.f32.mrb[0].mxu0
  %3602 = vdwg.mxu0
  %3603 = vmatprep.subr.bf16.mxu0 %v2475
  %3604 = vmatpush1.bf16.msra.mxu0 %v2474
  %3605 = vmatprep.subr.bf16.mxu0 %v2491
  %3606 = vmatpush1.bf16.msra.mxu0 %v2490
  %3607 = vmatprep.subr.bf16.mxu0 %v2507
  %3608 = vmatpush1.bf16.msra.mxu0 %v2506
  %3609 = vmatprep.subr.bf16.mxu0 %v2523
  %3610 = vmatpush1.bf16.msra.mxu0 %v2522
  %3611 = vmatprep.subr.bf16.mxu0 %v2539
  %3612 = vmatpush1.bf16.msra.mxu0 %v2538
  %3613 = vmatprep.subr.bf16.mxu0 %v2555
  %3614 = vmatpush1.bf16.msra.mxu0 %v2554
  %3615 = vmatprep.subr.bf16.mxu0 %v2571
  %3616 = vmatpush1.bf16.msra.mxu0 %v2570
  %3617 = vmatprep.subr.bf16.mxu0 %v2587
  %3618 = vmatpush1.bf16.msra.mxu0 %v2586
  %3619 = vmatprep.subr.bf16.mxu0 %v2603
  %3620 = vmatpush1.bf16.msra.mxu0 %v2602
  %3621 = vmatprep.subr.bf16.mxu0 %v2619
  %3622 = vmatpush1.bf16.msra.mxu0 %v2618
  %3623 = vmatprep.subr.bf16.mxu0 %v2635
  %3624 = vmatpush1.bf16.msra.mxu0 %v2634
  %3625 = vmatprep.subr.bf16.mxu0 %v2651
  %3626 = vmatpush1.bf16.msra.mxu0 %v2650
  %3627 = vmatprep.subr.bf16.mxu0 %v2667
  %3628 = vmatpush1.bf16.msra.mxu0 %v2666
  %3629 = vmatprep.subr.bf16.mxu0 %v2683
  %3630 = vmatpush1.bf16.msra.mxu0 %v2682
  %3631 = vmatprep.subr.bf16.mxu0 %v2699
  %3632 = vmatpush1.bf16.msra.mxu0 %v2698
  %3633 = vmatprep.subr.bf16.mxu0 %v2715
  %3634 = vmatpush1.bf16.msra.mxu0 %v2714
  %3635 = vmatprep.mubr.bf16.mxu0 %v673
  %3636 = vmatmul.mubr.bf16.gmra.mrb[0].mxu0 %v672
  %v3637 = vpop.f32.mrb[0].mxu0
  %v3638 = vadd.f32 %v3597, %v3637
  %v3639 = vpop.f32.mrb[0].mxu0
  %v3640 = vadd.f32 %v3599, %v3639
  %v3641 = vpop.f32.mrb[0].mxu0
  %v3642 = vpop.f32.mrb[0].mxu0
  %3643 = vdwg.mxu0
  %3644 = vmatprep.subr.bf16.mxu0 %v2221
  %3645 = vmatpush1.bf16.msra.mxu0 %v2220
  %3646 = vmatprep.subr.bf16.mxu0 %v2237
  %3647 = vmatpush1.bf16.msra.mxu0 %v2236
  %3648 = vmatprep.subr.bf16.mxu0 %v2253
  %3649 = vmatpush1.bf16.msra.mxu0 %v2252
  %3650 = vmatprep.subr.bf16.mxu0 %v2269
  %3651 = vmatpush1.bf16.msra.mxu0 %v2268
  %3652 = vmatprep.subr.bf16.mxu0 %v2285
  %3653 = vmatpush1.bf16.msra.mxu0 %v2284
  %3654 = vmatprep.subr.bf16.mxu0 %v2301
  %3655 = vmatpush1.bf16.msra.mxu0 %v2300
  %3656 = vmatprep.subr.bf16.mxu0 %v2317
  %3657 = vmatpush1.bf16.msra.mxu0 %v2316
  %3658 = vmatprep.subr.bf16.mxu0 %v2333
  %3659 = vmatpush1.bf16.msra.mxu0 %v2332
  %3660 = vmatprep.subr.bf16.mxu0 %v2349
  %3661 = vmatpush1.bf16.msra.mxu0 %v2348
  %3662 = vmatprep.subr.bf16.mxu0 %v2365
  %3663 = vmatpush1.bf16.msra.mxu0 %v2364
  %3664 = vmatprep.subr.bf16.mxu0 %v2381
  %3665 = vmatpush1.bf16.msra.mxu0 %v2380
  %3666 = vmatprep.subr.bf16.mxu0 %v2397
  %3667 = vmatpush1.bf16.msra.mxu0 %v2396
  %3668 = vmatprep.subr.bf16.mxu0 %v2413
  %3669 = vmatpush1.bf16.msra.mxu0 %v2412
  %3670 = vmatprep.subr.bf16.mxu0 %v2429
  %3671 = vmatpush1.bf16.msra.mxu0 %v2428
  %3672 = vmatprep.subr.bf16.mxu0 %v2445
  %3673 = vmatpush1.bf16.msra.mxu0 %v2444
  %3674 = vmatprep.subr.bf16.mxu0 %v2461
  %3675 = vmatpush1.bf16.msra.mxu0 %v2460
  %3676 = vmatprep.mubr.bf16.mxu0 %v671
  %3677 = vmatmul.mubr.bf16.gmra.mrb[0].mxu0 %v670
  %v3678 = vpop.f32.mrb[0].mxu0
  %v3679 = vadd.f32 0.0, %v3678
  %v3680 = vpop.f32.mrb[0].mxu0
  %v3681 = vadd.f32 0.0, %v3680
  %v3682 = vpop.f32.mrb[0].mxu0
  %v3683 = vpop.f32.mrb[0].mxu0
  %3684 = vdwg.mxu0
  %3685 = vmatprep.subr.bf16.mxu0 %v2477
  %3686 = vmatpush1.bf16.msra.mxu0 %v2476
  %3687 = vmatprep.subr.bf16.mxu0 %v2493
  %3688 = vmatpush1.bf16.msra.mxu0 %v2492
  %3689 = vmatprep.subr.bf16.mxu0 %v2509
  %3690 = vmatpush1.bf16.msra.mxu0 %v2508
  %3691 = vmatprep.subr.bf16.mxu0 %v2525
  %3692 = vmatpush1.bf16.msra.mxu0 %v2524
  %3693 = vmatprep.subr.bf16.mxu0 %v2541
  %3694 = vmatpush1.bf16.msra.mxu0 %v2540
  %3695 = vmatprep.subr.bf16.mxu0 %v2557
  %3696 = vmatpush1.bf16.msra.mxu0 %v2556
  %3697 = vmatprep.subr.bf16.mxu0 %v2573
  %3698 = vmatpush1.bf16.msra.mxu0 %v2572
  %3699 = vmatprep.subr.bf16.mxu0 %v2589
  %3700 = vmatpush1.bf16.msra.mxu0 %v2588
  %3701 = vmatprep.subr.bf16.mxu0 %v2605
  %3702 = vmatpush1.bf16.msra.mxu0 %v2604
  %3703 = vmatprep.subr.bf16.mxu0 %v2621
  %3704 = vmatpush1.bf16.msra.mxu0 %v2620
  %3705 = vmatprep.subr.bf16.mxu0 %v2637
  %3706 = vmatpush1.bf16.msra.mxu0 %v2636
  %3707 = vmatprep.subr.bf16.mxu0 %v2653
  %3708 = vmatpush1.bf16.msra.mxu0 %v2652
  %3709 = vmatprep.subr.bf16.mxu0 %v2669
  %3710 = vmatpush1.bf16.msra.mxu0 %v2668
  %3711 = vmatprep.subr.bf16.mxu0 %v2685
  %3712 = vmatpush1.bf16.msra.mxu0 %v2684
  %3713 = vmatprep.subr.bf16.mxu0 %v2701
  %3714 = vmatpush1.bf16.msra.mxu0 %v2700
  %3715 = vmatprep.subr.bf16.mxu0 %v2717
  %3716 = vmatpush1.bf16.msra.mxu0 %v2716
  %3717 = vmatprep.mubr.bf16.mxu0 %v673
  %3718 = vmatmul.mubr.bf16.gmra.mrb[0].mxu0 %v672
  %v3719 = vpop.f32.mrb[0].mxu0
  %v3720 = vadd.f32 %v3679, %v3719
  %v3721 = vpop.f32.mrb[0].mxu0
  %v3722 = vadd.f32 %v3681, %v3721
  %v3723 = vpop.f32.mrb[0].mxu0
  %v3724 = vpop.f32.mrb[0].mxu0
  %3725 = vdwg.mxu0
  %3726 = vmatprep.subr.bf16.mxu0 %v2223
  %3727 = vmatpush1.bf16.msra.mxu0 %v2222
  %3728 = vmatprep.subr.bf16.mxu0 %v2239
  %3729 = vmatpush1.bf16.msra.mxu0 %v2238
  %3730 = vmatprep.subr.bf16.mxu0 %v2255
  %3731 = vmatpush1.bf16.msra.mxu0 %v2254
  %3732 = vmatprep.subr.bf16.mxu0 %v2271
  %3733 = vmatpush1.bf16.msra.mxu0 %v2270
  %3734 = vmatprep.subr.bf16.mxu0 %v2287
  %3735 = vmatpush1.bf16.msra.mxu0 %v2286
  %3736 = vmatprep.subr.bf16.mxu0 %v2303
  %3737 = vmatpush1.bf16.msra.mxu0 %v2302
  %3738 = vmatprep.subr.bf16.mxu0 %v2319
  %3739 = vmatpush1.bf16.msra.mxu0 %v2318
  %3740 = vmatprep.subr.bf16.mxu0 %v2335
  %3741 = vmatpush1.bf16.msra.mxu0 %v2334
  %3742 = vmatprep.subr.bf16.mxu0 %v2351
  %3743 = vmatpush1.bf16.msra.mxu0 %v2350
  %3744 = vmatprep.subr.bf16.mxu0 %v2367
  %3745 = vmatpush1.bf16.msra.mxu0 %v2366
  %3746 = vmatprep.subr.bf16.mxu0 %v2383
  %3747 = vmatpush1.bf16.msra.mxu0 %v2382
  %3748 = vmatprep.subr.bf16.mxu0 %v2399
  %3749 = vmatpush1.bf16.msra.mxu0 %v2398
  %3750 = vmatprep.subr.bf16.mxu0 %v2415
  %3751 = vmatpush1.bf16.msra.mxu0 %v2414
  %3752 = vmatprep.subr.bf16.mxu0 %v2431
  %3753 = vmatpush1.bf16.msra.mxu0 %v2430
  %3754 = vmatprep.subr.bf16.mxu0 %v2447
  %3755 = vmatpush1.bf16.msra.mxu0 %v2446
  %3756 = vmatprep.subr.bf16.mxu0 %v2463
  %3757 = vmatpush1.bf16.msra.mxu0 %v2462
  %3758 = vmatprep.mubr.bf16.mxu0 %v671
  %3759 = vmatmul.mubr.bf16.gmra.mrb[0].mxu0 %v670
  %v3760 = vpop.f32.mrb[0].mxu0
  %v3761 = vadd.f32 0.0, %v3760
  %v3762 = vpop.f32.mrb[0].mxu0
  %v3763 = vadd.f32 0.0, %v3762
  %v3764 = vpop.f32.mrb[0].mxu0
  %v3765 = vpop.f32.mrb[0].mxu0
  %3766 = vdwg.mxu0
  %3767 = vmatprep.subr.bf16.mxu0 %v2479
  %3768 = vmatpush1.bf16.msra.mxu0 %v2478
  %3769 = vmatprep.subr.bf16.mxu0 %v2495
  %3770 = vmatpush1.bf16.msra.mxu0 %v2494
  %3771 = vmatprep.subr.bf16.mxu0 %v2511
  %3772 = vmatpush1.bf16.msra.mxu0 %v2510
  %3773 = vmatprep.subr.bf16.mxu0 %v2527
  %3774 = vmatpush1.bf16.msra.mxu0 %v2526
  %3775 = vmatprep.subr.bf16.mxu0 %v2543
  %3776 = vmatpush1.bf16.msra.mxu0 %v2542
  %3777 = vmatprep.subr.bf16.mxu0 %v2559
  %3778 = vmatpush1.bf16.msra.mxu0 %v2558
  %3779 = vmatprep.subr.bf16.mxu0 %v2575
  %3780 = vmatpush1.bf16.msra.mxu0 %v2574
  %3781 = vmatprep.subr.bf16.mxu0 %v2591
  %3782 = vmatpush1.bf16.msra.mxu0 %v2590
  %3783 = vmatprep.subr.bf16.mxu0 %v2607
  %3784 = vmatpush1.bf16.msra.mxu0 %v2606
  %3785 = vmatprep.subr.bf16.mxu0 %v2623
  %3786 = vmatpush1.bf16.msra.mxu0 %v2622
  %3787 = vmatprep.subr.bf16.mxu0 %v2639
  %3788 = vmatpush1.bf16.msra.mxu0 %v2638
  %3789 = vmatprep.subr.bf16.mxu0 %v2655
  %3790 = vmatpush1.bf16.msra.mxu0 %v2654
  %3791 = vmatprep.subr.bf16.mxu0 %v2671
  %3792 = vmatpush1.bf16.msra.mxu0 %v2670
  %3793 = vmatprep.subr.bf16.mxu0 %v2687
  %3794 = vmatpush1.bf16.msra.mxu0 %v2686
  %3795 = vmatprep.subr.bf16.mxu0 %v2703
  %3796 = vmatpush1.bf16.msra.mxu0 %v2702
  %3797 = vmatprep.subr.bf16.mxu0 %v2719
  %3798 = vmatpush1.bf16.msra.mxu0 %v2718
  %3799 = vmatprep.mubr.bf16.mxu0 %v673
  %3800 = vmatmul.mubr.bf16.gmra.mrb[0].mxu0 %v672
  %v3801 = vpop.f32.mrb[0].mxu0
  %v3802 = vadd.f32 %v3761, %v3801
  %v3803 = vpop.f32.mrb[0].mxu0
  %v3804 = vadd.f32 %v3763, %v3803
  %v3805 = vpop.f32.mrb[0].mxu0
  %v3806 = vpop.f32.mrb[0].mxu0
  %3807 = vdwg.mxu0
  %3808 = vmatprep.subr.bf16.mxu0 %v2225
  %3809 = vmatpush1.bf16.msra.mxu0 %v2224
  %3810 = vmatprep.subr.bf16.mxu0 %v2241
  %3811 = vmatpush1.bf16.msra.mxu0 %v2240
  %3812 = vmatprep.subr.bf16.mxu0 %v2257
  %3813 = vmatpush1.bf16.msra.mxu0 %v2256
  %3814 = vmatprep.subr.bf16.mxu0 %v2273
  %3815 = vmatpush1.bf16.msra.mxu0 %v2272
  %3816 = vmatprep.subr.bf16.mxu0 %v2289
  %3817 = vmatpush1.bf16.msra.mxu0 %v2288
  %3818 = vmatprep.subr.bf16.mxu0 %v2305
  %3819 = vmatpush1.bf16.msra.mxu0 %v2304
  %3820 = vmatprep.subr.bf16.mxu0 %v2321
  %3821 = vmatpush1.bf16.msra.mxu0 %v2320
  %3822 = vmatprep.subr.bf16.mxu0 %v2337
  %3823 = vmatpush1.bf16.msra.mxu0 %v2336
  %3824 = vmatprep.subr.bf16.mxu0 %v2353
  %3825 = vmatpush1.bf16.msra.mxu0 %v2352
  %3826 = vmatprep.subr.bf16.mxu0 %v2369
  %3827 = vmatpush1.bf16.msra.mxu0 %v2368
  %3828 = vmatprep.subr.bf16.mxu0 %v2385
  %3829 = vmatpush1.bf16.msra.mxu0 %v2384
  %3830 = vmatprep.subr.bf16.mxu0 %v2401
  %3831 = vmatpush1.bf16.msra.mxu0 %v2400
  %3832 = vmatprep.subr.bf16.mxu0 %v2417
  %3833 = vmatpush1.bf16.msra.mxu0 %v2416
  %3834 = vmatprep.subr.bf16.mxu0 %v2433
  %3835 = vmatpush1.bf16.msra.mxu0 %v2432
  %3836 = vmatprep.subr.bf16.mxu0 %v2449
  %3837 = vmatpush1.bf16.msra.mxu0 %v2448
  %3838 = vmatprep.subr.bf16.mxu0 %v2465
  %3839 = vmatpush1.bf16.msra.mxu0 %v2464
  %3840 = vmatprep.mubr.bf16.mxu0 %v671
  %3841 = vmatmul.mubr.bf16.gmra.mrb[0].mxu0 %v670
  %v3842 = vpop.f32.mrb[0].mxu0
  %v3843 = vadd.f32 0.0, %v3842
  %v3844 = vpop.f32.mrb[0].mxu0
  %v3845 = vadd.f32 0.0, %v3844
  %v3846 = vpop.f32.mrb[0].mxu0
  %v3847 = vpop.f32.mrb[0].mxu0
  %3848 = vdwg.mxu0
  %3849 = vmatprep.subr.bf16.mxu0 %v2481
  %3850 = vmatpush1.bf16.msra.mxu0 %v2480
  %3851 = vmatprep.subr.bf16.mxu0 %v2497
  %3852 = vmatpush1.bf16.msra.mxu0 %v2496
  %3853 = vmatprep.subr.bf16.mxu0 %v2513
  %3854 = vmatpush1.bf16.msra.mxu0 %v2512
  %3855 = vmatprep.subr.bf16.mxu0 %v2529
  %3856 = vmatpush1.bf16.msra.mxu0 %v2528
  %3857 = vmatprep.subr.bf16.mxu0 %v2545
  %3858 = vmatpush1.bf16.msra.mxu0 %v2544
  %3859 = vmatprep.subr.bf16.mxu0 %v2561
  %3860 = vmatpush1.bf16.msra.mxu0 %v2560
  %3861 = vmatprep.subr.bf16.mxu0 %v2577
  %3862 = vmatpush1.bf16.msra.mxu0 %v2576
  %3863 = vmatprep.subr.bf16.mxu0 %v2593
  %3864 = vmatpush1.bf16.msra.mxu0 %v2592
  %3865 = vmatprep.subr.bf16.mxu0 %v2609
  %3866 = vmatpush1.bf16.msra.mxu0 %v2608
  %3867 = vmatprep.subr.bf16.mxu0 %v2625
  %3868 = vmatpush1.bf16.msra.mxu0 %v2624
  %3869 = vmatprep.subr.bf16.mxu0 %v2641
  %3870 = vmatpush1.bf16.msra.mxu0 %v2640
  %3871 = vmatprep.subr.bf16.mxu0 %v2657
  %3872 = vmatpush1.bf16.msra.mxu0 %v2656
  %3873 = vmatprep.subr.bf16.mxu0 %v2673
  %3874 = vmatpush1.bf16.msra.mxu0 %v2672
  %3875 = vmatprep.subr.bf16.mxu0 %v2689
  %3876 = vmatpush1.bf16.msra.mxu0 %v2688
  %3877 = vmatprep.subr.bf16.mxu0 %v2705
  %3878 = vmatpush1.bf16.msra.mxu0 %v2704
  %3879 = vmatprep.subr.bf16.mxu0 %v2721
  %3880 = vmatpush1.bf16.msra.mxu0 %v2720
  %3881 = vmatprep.mubr.bf16.mxu0 %v673
  %3882 = vmatmul.mubr.bf16.gmra.mrb[0].mxu0 %v672
  %v3883 = vpop.f32.mrb[0].mxu0
  %v3884 = vadd.f32 %v3843, %v3883
  %v3885 = vpop.f32.mrb[0].mxu0
  %v3886 = vadd.f32 %v3845, %v3885
  %v3887 = vpop.f32.mrb[0].mxu0
  %v3888 = vpop.f32.mrb[0].mxu0
  %3889 = vdwg.mxu0
  %v3890 = vadd.f32 %v654, %v3310
  %v3891 = vadd.f32 %v655, %v3312
  %v3892 = vadd.f32 %v656, %v3392
  %v3893 = vadd.f32 %v657, %v3394
  %v3894 = vadd.f32 %v658, %v3474
  %v3895 = vadd.f32 %v659, %v3476
  %v3896 = vadd.f32 %v660, %v3556
  %v3897 = vadd.f32 %v661, %v3558
  %v3898 = vadd.f32 %v662, %v3638
  %v3899 = vadd.f32 %v663, %v3640
  %v3900 = vadd.f32 %v664, %v3720
  %v3901 = vadd.f32 %v665, %v3722
  %v3902 = vadd.f32 %v666, %v3802
  %v3903 = vadd.f32 %v667, %v3804
  %v3904 = vadd.f32 %v668, %v3884
  %v3905 = vadd.f32 %v669, %v3886
  %v3906 = vmul.f32 %v3890, 0.5
  %v3907 = vmul.f32 %v3891, 0.5
  %v3908 = vmul.f32 %v3892, 0.5
  %v3909 = vmul.f32 %v3893, 0.5
  %v3910 = vtanh.pop %v3906
  %v3911 = vtanh.pop %v3907
  %v3912 = vtanh.pop %v3908
  %v3913 = vtanh.pop %v3909
  %v3914 = vadd.f32 %v3910, 1.0
  %v3915 = vadd.f32 %v3911, 1.0
  %v3916 = vadd.f32 %v3912, 1.0
  %v3917 = vadd.f32 %v3913, 1.0
  %v3918 = vmul.f32 %v3914, 0.5
  %v3919 = vmul.f32 %v3915, 0.5
  %v3920 = vmul.f32 %v3916, 0.5
  %v3921 = vmul.f32 %v3917, 0.5
  %v3922 = vmul.f32 %v3894, 0.5
  %v3923 = vmul.f32 %v3895, 0.5
  %v3924 = vmul.f32 %v3896, 0.5
  %v3925 = vmul.f32 %v3897, 0.5
  %v3926 = vtanh.pop %v3922
  %v3927 = vtanh.pop %v3923
  %v3928 = vtanh.pop %v3924
  %v3929 = vtanh.pop %v3925
  %v3930 = vadd.f32 %v3926, 1.0
  %v3931 = vadd.f32 %v3927, 1.0
  %v3932 = vadd.f32 %v3928, 1.0
  %v3933 = vadd.f32 %v3929, 1.0
  %v3934 = vmul.f32 %v3930, 0.5
  %v3935 = vmul.f32 %v3931, 0.5
  %v3936 = vmul.f32 %v3932, 0.5
  %v3937 = vmul.f32 %v3933, 0.5
  %v3938 = vtanh.pop %v3898
  %v3939 = vtanh.pop %v3899
  %v3940 = vtanh.pop %v3900
  %v3941 = vtanh.pop %v3901
  %v3942 = vmul.f32 %v3902, 0.5
  %v3943 = vmul.f32 %v3903, 0.5
  %v3944 = vmul.f32 %v3904, 0.5
  %v3945 = vmul.f32 %v3905, 0.5
  %v3946 = vtanh.pop %v3942
  %v3947 = vtanh.pop %v3943
  %v3948 = vtanh.pop %v3944
  %v3949 = vtanh.pop %v3945
  %v3950 = vadd.f32 %v3946, 1.0
  %v3951 = vadd.f32 %v3947, 1.0
  %v3952 = vadd.f32 %v3948, 1.0
  %v3953 = vadd.f32 %v3949, 1.0
  %v3954 = vmul.f32 %v3950, 0.5
  %v3955 = vmul.f32 %v3951, 0.5
  %v3956 = vmul.f32 %v3952, 0.5
  %v3957 = vmul.f32 %v3953, 0.5
  %v3958 = vmul.f32 %v3934, %v544
  %v3959 = vmul.f32 %v3935, %v545
  %v3960 = vmul.f32 %v3936, %v546
  %v3961 = vmul.f32 %v3937, %v547
  %v3962 = vmul.f32 %v3918, %v3938
  %v3963 = vmul.f32 %v3919, %v3939
  %v3964 = vmul.f32 %v3920, %v3940
  %v3965 = vmul.f32 %v3921, %v3941
  %v3966 = vadd.f32 %v3958, %v3962
  %v3967 = vadd.f32 %v3959, %v3963
  %v3968 = vadd.f32 %v3960, %v3964
  %v3969 = vadd.f32 %v3961, %v3965
  %v3970 = vtanh.pop %v3966
  %v3971 = vtanh.pop %v3967
  %v3972 = vtanh.pop %v3968
  %v3973 = vtanh.pop %v3969
  %v3974 = vmul.f32 %v3954, %v3970
  %v3975 = vmul.f32 %v3955, %v3971
  %v3976 = vmul.f32 %v3956, %v3972
  %v3977 = vmul.f32 %v3957, %v3973
  %s3978 = scalar_lea.vmem %s0, 64
  %v3979 = vld [vmem:[%s3978] sm:$0xff]
  %v3980 = vld [vmem:[%s3978 + $0x8] sm:$0xff]
  %v3981 = vld [vmem:[%s3978 + $0x10] sm:$0xff]
  %v3982 = vld [vmem:[%s3978 + $0x18] sm:$0xff]
  %v3983 = vld [vmem:[%s3978 + $0x20] sm:$0xff]
  %v3984 = vld [vmem:[%s3978 + $0x28] sm:$0xff]
  %v3985 = vld [vmem:[%s3978 + $0x30] sm:$0xff]
  %v3986 = vld [vmem:[%s3978 + $0x38] sm:$0xff]
  %v3987 = vunpack.c.l.bf16 %v3979
  %v3988 = vunpack.c.h.bf16 %v3979
  %v3989 = vunpack.c.l.bf16 %v3980
  %v3990 = vunpack.c.h.bf16 %v3980
  %v3991 = vunpack.c.l.bf16 %v3981
  %v3992 = vunpack.c.h.bf16 %v3981
  %v3993 = vunpack.c.l.bf16 %v3982
  %v3994 = vunpack.c.h.bf16 %v3982
  %v3995 = vunpack.c.l.bf16 %v3983
  %v3996 = vunpack.c.h.bf16 %v3983
  %v3997 = vunpack.c.l.bf16 %v3984
  %v3998 = vunpack.c.h.bf16 %v3984
  %v3999 = vunpack.c.l.bf16 %v3985
  %v4000 = vunpack.c.h.bf16 %v3985
  %v4001 = vunpack.c.l.bf16 %v3986
  %v4002 = vunpack.c.h.bf16 %v3986
  %v4003 = vadd.f32 %v3987, %v577
  %v4004 = vadd.f32 %v3988, %v581
  %v4005 = vadd.f32 %v3989, %v585
  %v4006 = vadd.f32 %v3990, %v589
  %v4007 = vadd.f32 %v3991, %v593
  %v4008 = vadd.f32 %v3992, %v597
  %v4009 = vadd.f32 %v3993, %v601
  %v4010 = vadd.f32 %v3994, %v605
  %v4011 = vadd.f32 %v3995, %v609
  %v4012 = vadd.f32 %v3996, %v613
  %v4013 = vadd.f32 %v3997, %v617
  %v4014 = vadd.f32 %v3998, %v621
  %v4015 = vadd.f32 %v3999, %v625
  %v4016 = vadd.f32 %v4000, %v629
  %v4017 = vadd.f32 %v4001, %v633
  %v4018 = vadd.f32 %v4002, %v637
  %v4019 = vpack.c.bf16 %v3974, %v3974
  %v4020 = vpack.c.bf16 %v3975, %v3975
  %v4021 = vpack.c.bf16 %v3976, %v3976
  %v4022 = vpack.c.bf16 %v3977, %v3977
  %4023 = vmatprep.subr.bf16.mxu0 %v2211
  %4024 = vmatpush1.bf16.msra.mxu0 %v2210
  %4025 = vmatprep.subr.bf16.mxu0 %v2227
  %4026 = vmatpush1.bf16.msra.mxu0 %v2226
  %4027 = vmatprep.subr.bf16.mxu0 %v2243
  %4028 = vmatpush1.bf16.msra.mxu0 %v2242
  %4029 = vmatprep.subr.bf16.mxu0 %v2259
  %4030 = vmatpush1.bf16.msra.mxu0 %v2258
  %4031 = vmatprep.subr.bf16.mxu0 %v2275
  %4032 = vmatpush1.bf16.msra.mxu0 %v2274
  %4033 = vmatprep.subr.bf16.mxu0 %v2291
  %4034 = vmatpush1.bf16.msra.mxu0 %v2290
  %4035 = vmatprep.subr.bf16.mxu0 %v2307
  %4036 = vmatpush1.bf16.msra.mxu0 %v2306
  %4037 = vmatprep.subr.bf16.mxu0 %v2323
  %4038 = vmatpush1.bf16.msra.mxu0 %v2322
  %4039 = vmatprep.subr.bf16.mxu0 %v2339
  %4040 = vmatpush1.bf16.msra.mxu0 %v2338
  %4041 = vmatprep.subr.bf16.mxu0 %v2355
  %4042 = vmatpush1.bf16.msra.mxu0 %v2354
  %4043 = vmatprep.subr.bf16.mxu0 %v2371
  %4044 = vmatpush1.bf16.msra.mxu0 %v2370
  %4045 = vmatprep.subr.bf16.mxu0 %v2387
  %4046 = vmatpush1.bf16.msra.mxu0 %v2386
  %4047 = vmatprep.subr.bf16.mxu0 %v2403
  %4048 = vmatpush1.bf16.msra.mxu0 %v2402
  %4049 = vmatprep.subr.bf16.mxu0 %v2419
  %4050 = vmatpush1.bf16.msra.mxu0 %v2418
  %4051 = vmatprep.subr.bf16.mxu0 %v2435
  %4052 = vmatpush1.bf16.msra.mxu0 %v2434
  %4053 = vmatprep.subr.bf16.mxu0 %v2451
  %4054 = vmatpush1.bf16.msra.mxu0 %v2450
  %4055 = vmatprep.mubr.bf16.mxu0 %v4020
  %4056 = vmatmul.mubr.bf16.gmra.mrb[0].mxu0 %v4019
  %v4057 = vpop.f32.mrb[0].mxu0
  %v4058 = vadd.f32 0.0, %v4057
  %v4059 = vpop.f32.mrb[0].mxu0
  %v4060 = vadd.f32 0.0, %v4059
  %v4061 = vpop.f32.mrb[0].mxu0
  %v4062 = vpop.f32.mrb[0].mxu0
  %4063 = vdwg.mxu0
  %4064 = vmatprep.subr.bf16.mxu0 %v2467
  %4065 = vmatpush1.bf16.msra.mxu0 %v2466
  %4066 = vmatprep.subr.bf16.mxu0 %v2483
  %4067 = vmatpush1.bf16.msra.mxu0 %v2482
  %4068 = vmatprep.subr.bf16.mxu0 %v2499
  %4069 = vmatpush1.bf16.msra.mxu0 %v2498
  %4070 = vmatprep.subr.bf16.mxu0 %v2515
  %4071 = vmatpush1.bf16.msra.mxu0 %v2514
  %4072 = vmatprep.subr.bf16.mxu0 %v2531
  %4073 = vmatpush1.bf16.msra.mxu0 %v2530
  %4074 = vmatprep.subr.bf16.mxu0 %v2547
  %4075 = vmatpush1.bf16.msra.mxu0 %v2546
  %4076 = vmatprep.subr.bf16.mxu0 %v2563
  %4077 = vmatpush1.bf16.msra.mxu0 %v2562
  %4078 = vmatprep.subr.bf16.mxu0 %v2579
  %4079 = vmatpush1.bf16.msra.mxu0 %v2578
  %4080 = vmatprep.subr.bf16.mxu0 %v2595
  %4081 = vmatpush1.bf16.msra.mxu0 %v2594
  %4082 = vmatprep.subr.bf16.mxu0 %v2611
  %4083 = vmatpush1.bf16.msra.mxu0 %v2610
  %4084 = vmatprep.subr.bf16.mxu0 %v2627
  %4085 = vmatpush1.bf16.msra.mxu0 %v2626
  %4086 = vmatprep.subr.bf16.mxu0 %v2643
  %4087 = vmatpush1.bf16.msra.mxu0 %v2642
  %4088 = vmatprep.subr.bf16.mxu0 %v2659
  %4089 = vmatpush1.bf16.msra.mxu0 %v2658
  %4090 = vmatprep.subr.bf16.mxu0 %v2675
  %4091 = vmatpush1.bf16.msra.mxu0 %v2674
  %4092 = vmatprep.subr.bf16.mxu0 %v2691
  %4093 = vmatpush1.bf16.msra.mxu0 %v2690
  %4094 = vmatprep.subr.bf16.mxu0 %v2707
  %4095 = vmatpush1.bf16.msra.mxu0 %v2706
  %4096 = vmatprep.mubr.bf16.mxu0 %v4022
  %4097 = vmatmul.mubr.bf16.gmra.mrb[0].mxu0 %v4021
  %v4098 = vpop.f32.mrb[0].mxu0
  %v4099 = vadd.f32 %v4058, %v4098
  %v4100 = vpop.f32.mrb[0].mxu0
  %v4101 = vadd.f32 %v4060, %v4100
  %v4102 = vpop.f32.mrb[0].mxu0
  %v4103 = vpop.f32.mrb[0].mxu0
  %4104 = vdwg.mxu0
  %4105 = vmatprep.subr.bf16.mxu0 %v2213
  %4106 = vmatpush1.bf16.msra.mxu0 %v2212
  %4107 = vmatprep.subr.bf16.mxu0 %v2229
  %4108 = vmatpush1.bf16.msra.mxu0 %v2228
  %4109 = vmatprep.subr.bf16.mxu0 %v2245
  %4110 = vmatpush1.bf16.msra.mxu0 %v2244
  %4111 = vmatprep.subr.bf16.mxu0 %v2261
  %4112 = vmatpush1.bf16.msra.mxu0 %v2260
  %4113 = vmatprep.subr.bf16.mxu0 %v2277
  %4114 = vmatpush1.bf16.msra.mxu0 %v2276
  %4115 = vmatprep.subr.bf16.mxu0 %v2293
  %4116 = vmatpush1.bf16.msra.mxu0 %v2292
  %4117 = vmatprep.subr.bf16.mxu0 %v2309
  %4118 = vmatpush1.bf16.msra.mxu0 %v2308
  %4119 = vmatprep.subr.bf16.mxu0 %v2325
  %4120 = vmatpush1.bf16.msra.mxu0 %v2324
  %4121 = vmatprep.subr.bf16.mxu0 %v2341
  %4122 = vmatpush1.bf16.msra.mxu0 %v2340
  %4123 = vmatprep.subr.bf16.mxu0 %v2357
  %4124 = vmatpush1.bf16.msra.mxu0 %v2356
  %4125 = vmatprep.subr.bf16.mxu0 %v2373
  %4126 = vmatpush1.bf16.msra.mxu0 %v2372
  %4127 = vmatprep.subr.bf16.mxu0 %v2389
  %4128 = vmatpush1.bf16.msra.mxu0 %v2388
  %4129 = vmatprep.subr.bf16.mxu0 %v2405
  %4130 = vmatpush1.bf16.msra.mxu0 %v2404
  %4131 = vmatprep.subr.bf16.mxu0 %v2421
  %4132 = vmatpush1.bf16.msra.mxu0 %v2420
  %4133 = vmatprep.subr.bf16.mxu0 %v2437
  %4134 = vmatpush1.bf16.msra.mxu0 %v2436
  %4135 = vmatprep.subr.bf16.mxu0 %v2453
  %4136 = vmatpush1.bf16.msra.mxu0 %v2452
  %4137 = vmatprep.mubr.bf16.mxu0 %v4020
  %4138 = vmatmul.mubr.bf16.gmra.mrb[0].mxu0 %v4019
  %v4139 = vpop.f32.mrb[0].mxu0
  %v4140 = vadd.f32 0.0, %v4139
  %v4141 = vpop.f32.mrb[0].mxu0
  %v4142 = vadd.f32 0.0, %v4141
  %v4143 = vpop.f32.mrb[0].mxu0
  %v4144 = vpop.f32.mrb[0].mxu0
  %4145 = vdwg.mxu0
  %4146 = vmatprep.subr.bf16.mxu0 %v2469
  %4147 = vmatpush1.bf16.msra.mxu0 %v2468
  %4148 = vmatprep.subr.bf16.mxu0 %v2485
  %4149 = vmatpush1.bf16.msra.mxu0 %v2484
  %4150 = vmatprep.subr.bf16.mxu0 %v2501
  %4151 = vmatpush1.bf16.msra.mxu0 %v2500
  %4152 = vmatprep.subr.bf16.mxu0 %v2517
  %4153 = vmatpush1.bf16.msra.mxu0 %v2516
  %4154 = vmatprep.subr.bf16.mxu0 %v2533
  %4155 = vmatpush1.bf16.msra.mxu0 %v2532
  %4156 = vmatprep.subr.bf16.mxu0 %v2549
  %4157 = vmatpush1.bf16.msra.mxu0 %v2548
  %4158 = vmatprep.subr.bf16.mxu0 %v2565
  %4159 = vmatpush1.bf16.msra.mxu0 %v2564
  %4160 = vmatprep.subr.bf16.mxu0 %v2581
  %4161 = vmatpush1.bf16.msra.mxu0 %v2580
  %4162 = vmatprep.subr.bf16.mxu0 %v2597
  %4163 = vmatpush1.bf16.msra.mxu0 %v2596
  %4164 = vmatprep.subr.bf16.mxu0 %v2613
  %4165 = vmatpush1.bf16.msra.mxu0 %v2612
  %4166 = vmatprep.subr.bf16.mxu0 %v2629
  %4167 = vmatpush1.bf16.msra.mxu0 %v2628
  %4168 = vmatprep.subr.bf16.mxu0 %v2645
  %4169 = vmatpush1.bf16.msra.mxu0 %v2644
  %4170 = vmatprep.subr.bf16.mxu0 %v2661
  %4171 = vmatpush1.bf16.msra.mxu0 %v2660
  %4172 = vmatprep.subr.bf16.mxu0 %v2677
  %4173 = vmatpush1.bf16.msra.mxu0 %v2676
  %4174 = vmatprep.subr.bf16.mxu0 %v2693
  %4175 = vmatpush1.bf16.msra.mxu0 %v2692
  %4176 = vmatprep.subr.bf16.mxu0 %v2709
  %4177 = vmatpush1.bf16.msra.mxu0 %v2708
  %4178 = vmatprep.mubr.bf16.mxu0 %v4022
  %4179 = vmatmul.mubr.bf16.gmra.mrb[0].mxu0 %v4021
  %v4180 = vpop.f32.mrb[0].mxu0
  %v4181 = vadd.f32 %v4140, %v4180
  %v4182 = vpop.f32.mrb[0].mxu0
  %v4183 = vadd.f32 %v4142, %v4182
  %v4184 = vpop.f32.mrb[0].mxu0
  %v4185 = vpop.f32.mrb[0].mxu0
  %4186 = vdwg.mxu0
  %4187 = vmatprep.subr.bf16.mxu0 %v2215
  %4188 = vmatpush1.bf16.msra.mxu0 %v2214
  %4189 = vmatprep.subr.bf16.mxu0 %v2231
  %4190 = vmatpush1.bf16.msra.mxu0 %v2230
  %4191 = vmatprep.subr.bf16.mxu0 %v2247
  %4192 = vmatpush1.bf16.msra.mxu0 %v2246
  %4193 = vmatprep.subr.bf16.mxu0 %v2263
  %4194 = vmatpush1.bf16.msra.mxu0 %v2262
  %4195 = vmatprep.subr.bf16.mxu0 %v2279
  %4196 = vmatpush1.bf16.msra.mxu0 %v2278
  %4197 = vmatprep.subr.bf16.mxu0 %v2295
  %4198 = vmatpush1.bf16.msra.mxu0 %v2294
  %4199 = vmatprep.subr.bf16.mxu0 %v2311
  %4200 = vmatpush1.bf16.msra.mxu0 %v2310
  %4201 = vmatprep.subr.bf16.mxu0 %v2327
  %4202 = vmatpush1.bf16.msra.mxu0 %v2326
  %4203 = vmatprep.subr.bf16.mxu0 %v2343
  %4204 = vmatpush1.bf16.msra.mxu0 %v2342
  %4205 = vmatprep.subr.bf16.mxu0 %v2359
  %4206 = vmatpush1.bf16.msra.mxu0 %v2358
  %4207 = vmatprep.subr.bf16.mxu0 %v2375
  %4208 = vmatpush1.bf16.msra.mxu0 %v2374
  %4209 = vmatprep.subr.bf16.mxu0 %v2391
  %4210 = vmatpush1.bf16.msra.mxu0 %v2390
  %4211 = vmatprep.subr.bf16.mxu0 %v2407
  %4212 = vmatpush1.bf16.msra.mxu0 %v2406
  %4213 = vmatprep.subr.bf16.mxu0 %v2423
  %4214 = vmatpush1.bf16.msra.mxu0 %v2422
  %4215 = vmatprep.subr.bf16.mxu0 %v2439
  %4216 = vmatpush1.bf16.msra.mxu0 %v2438
  %4217 = vmatprep.subr.bf16.mxu0 %v2455
  %4218 = vmatpush1.bf16.msra.mxu0 %v2454
  %4219 = vmatprep.mubr.bf16.mxu0 %v4020
  %4220 = vmatmul.mubr.bf16.gmra.mrb[0].mxu0 %v4019
  %v4221 = vpop.f32.mrb[0].mxu0
  %v4222 = vadd.f32 0.0, %v4221
  %v4223 = vpop.f32.mrb[0].mxu0
  %v4224 = vadd.f32 0.0, %v4223
  %v4225 = vpop.f32.mrb[0].mxu0
  %v4226 = vpop.f32.mrb[0].mxu0
  %4227 = vdwg.mxu0
  %4228 = vmatprep.subr.bf16.mxu0 %v2471
  %4229 = vmatpush1.bf16.msra.mxu0 %v2470
  %4230 = vmatprep.subr.bf16.mxu0 %v2487
  %4231 = vmatpush1.bf16.msra.mxu0 %v2486
  %4232 = vmatprep.subr.bf16.mxu0 %v2503
  %4233 = vmatpush1.bf16.msra.mxu0 %v2502
  %4234 = vmatprep.subr.bf16.mxu0 %v2519
  %4235 = vmatpush1.bf16.msra.mxu0 %v2518
  %4236 = vmatprep.subr.bf16.mxu0 %v2535
  %4237 = vmatpush1.bf16.msra.mxu0 %v2534
  %4238 = vmatprep.subr.bf16.mxu0 %v2551
  %4239 = vmatpush1.bf16.msra.mxu0 %v2550
  %4240 = vmatprep.subr.bf16.mxu0 %v2567
  %4241 = vmatpush1.bf16.msra.mxu0 %v2566
  %4242 = vmatprep.subr.bf16.mxu0 %v2583
  %4243 = vmatpush1.bf16.msra.mxu0 %v2582
  %4244 = vmatprep.subr.bf16.mxu0 %v2599
  %4245 = vmatpush1.bf16.msra.mxu0 %v2598
  %4246 = vmatprep.subr.bf16.mxu0 %v2615
  %4247 = vmatpush1.bf16.msra.mxu0 %v2614
  %4248 = vmatprep.subr.bf16.mxu0 %v2631
  %4249 = vmatpush1.bf16.msra.mxu0 %v2630
  %4250 = vmatprep.subr.bf16.mxu0 %v2647
  %4251 = vmatpush1.bf16.msra.mxu0 %v2646
  %4252 = vmatprep.subr.bf16.mxu0 %v2663
  %4253 = vmatpush1.bf16.msra.mxu0 %v2662
  %4254 = vmatprep.subr.bf16.mxu0 %v2679
  %4255 = vmatpush1.bf16.msra.mxu0 %v2678
  %4256 = vmatprep.subr.bf16.mxu0 %v2695
  %4257 = vmatpush1.bf16.msra.mxu0 %v2694
  %4258 = vmatprep.subr.bf16.mxu0 %v2711
  %4259 = vmatpush1.bf16.msra.mxu0 %v2710
  %4260 = vmatprep.mubr.bf16.mxu0 %v4022
  %4261 = vmatmul.mubr.bf16.gmra.mrb[0].mxu0 %v4021
  %v4262 = vpop.f32.mrb[0].mxu0
  %v4263 = vadd.f32 %v4222, %v4262
  %v4264 = vpop.f32.mrb[0].mxu0
  %v4265 = vadd.f32 %v4224, %v4264
  %v4266 = vpop.f32.mrb[0].mxu0
  %v4267 = vpop.f32.mrb[0].mxu0
  %4268 = vdwg.mxu0
  %4269 = vmatprep.subr.bf16.mxu0 %v2217
  %4270 = vmatpush1.bf16.msra.mxu0 %v2216
  %4271 = vmatprep.subr.bf16.mxu0 %v2233
  %4272 = vmatpush1.bf16.msra.mxu0 %v2232
  %4273 = vmatprep.subr.bf16.mxu0 %v2249
  %4274 = vmatpush1.bf16.msra.mxu0 %v2248
  %4275 = vmatprep.subr.bf16.mxu0 %v2265
  %4276 = vmatpush1.bf16.msra.mxu0 %v2264
  %4277 = vmatprep.subr.bf16.mxu0 %v2281
  %4278 = vmatpush1.bf16.msra.mxu0 %v2280
  %4279 = vmatprep.subr.bf16.mxu0 %v2297
  %4280 = vmatpush1.bf16.msra.mxu0 %v2296
  %4281 = vmatprep.subr.bf16.mxu0 %v2313
  %4282 = vmatpush1.bf16.msra.mxu0 %v2312
  %4283 = vmatprep.subr.bf16.mxu0 %v2329
  %4284 = vmatpush1.bf16.msra.mxu0 %v2328
  %4285 = vmatprep.subr.bf16.mxu0 %v2345
  %4286 = vmatpush1.bf16.msra.mxu0 %v2344
  %4287 = vmatprep.subr.bf16.mxu0 %v2361
  %4288 = vmatpush1.bf16.msra.mxu0 %v2360
  %4289 = vmatprep.subr.bf16.mxu0 %v2377
  %4290 = vmatpush1.bf16.msra.mxu0 %v2376
  %4291 = vmatprep.subr.bf16.mxu0 %v2393
  %4292 = vmatpush1.bf16.msra.mxu0 %v2392
  %4293 = vmatprep.subr.bf16.mxu0 %v2409
  %4294 = vmatpush1.bf16.msra.mxu0 %v2408
  %4295 = vmatprep.subr.bf16.mxu0 %v2425
  %4296 = vmatpush1.bf16.msra.mxu0 %v2424
  %4297 = vmatprep.subr.bf16.mxu0 %v2441
  %4298 = vmatpush1.bf16.msra.mxu0 %v2440
  %4299 = vmatprep.subr.bf16.mxu0 %v2457
  %4300 = vmatpush1.bf16.msra.mxu0 %v2456
  %4301 = vmatprep.mubr.bf16.mxu0 %v4020
  %4302 = vmatmul.mubr.bf16.gmra.mrb[0].mxu0 %v4019
  %v4303 = vpop.f32.mrb[0].mxu0
  %v4304 = vadd.f32 0.0, %v4303
  %v4305 = vpop.f32.mrb[0].mxu0
  %v4306 = vadd.f32 0.0, %v4305
  %v4307 = vpop.f32.mrb[0].mxu0
  %v4308 = vpop.f32.mrb[0].mxu0
  %4309 = vdwg.mxu0
  %4310 = vmatprep.subr.bf16.mxu0 %v2473
  %4311 = vmatpush1.bf16.msra.mxu0 %v2472
  %4312 = vmatprep.subr.bf16.mxu0 %v2489
  %4313 = vmatpush1.bf16.msra.mxu0 %v2488
  %4314 = vmatprep.subr.bf16.mxu0 %v2505
  %4315 = vmatpush1.bf16.msra.mxu0 %v2504
  %4316 = vmatprep.subr.bf16.mxu0 %v2521
  %4317 = vmatpush1.bf16.msra.mxu0 %v2520
  %4318 = vmatprep.subr.bf16.mxu0 %v2537
  %4319 = vmatpush1.bf16.msra.mxu0 %v2536
  %4320 = vmatprep.subr.bf16.mxu0 %v2553
  %4321 = vmatpush1.bf16.msra.mxu0 %v2552
  %4322 = vmatprep.subr.bf16.mxu0 %v2569
  %4323 = vmatpush1.bf16.msra.mxu0 %v2568
  %4324 = vmatprep.subr.bf16.mxu0 %v2585
  %4325 = vmatpush1.bf16.msra.mxu0 %v2584
  %4326 = vmatprep.subr.bf16.mxu0 %v2601
  %4327 = vmatpush1.bf16.msra.mxu0 %v2600
  %4328 = vmatprep.subr.bf16.mxu0 %v2617
  %4329 = vmatpush1.bf16.msra.mxu0 %v2616
  %4330 = vmatprep.subr.bf16.mxu0 %v2633
  %4331 = vmatpush1.bf16.msra.mxu0 %v2632
  %4332 = vmatprep.subr.bf16.mxu0 %v2649
  %4333 = vmatpush1.bf16.msra.mxu0 %v2648
  %4334 = vmatprep.subr.bf16.mxu0 %v2665
  %4335 = vmatpush1.bf16.msra.mxu0 %v2664
  %4336 = vmatprep.subr.bf16.mxu0 %v2681
  %4337 = vmatpush1.bf16.msra.mxu0 %v2680
  %4338 = vmatprep.subr.bf16.mxu0 %v2697
  %4339 = vmatpush1.bf16.msra.mxu0 %v2696
  %4340 = vmatprep.subr.bf16.mxu0 %v2713
  %4341 = vmatpush1.bf16.msra.mxu0 %v2712
  %4342 = vmatprep.mubr.bf16.mxu0 %v4022
  %4343 = vmatmul.mubr.bf16.gmra.mrb[0].mxu0 %v4021
  %v4344 = vpop.f32.mrb[0].mxu0
  %v4345 = vadd.f32 %v4304, %v4344
  %v4346 = vpop.f32.mrb[0].mxu0
  %v4347 = vadd.f32 %v4306, %v4346
  %v4348 = vpop.f32.mrb[0].mxu0
  %v4349 = vpop.f32.mrb[0].mxu0
  %4350 = vdwg.mxu0
  %4351 = vmatprep.subr.bf16.mxu0 %v2219
  %4352 = vmatpush1.bf16.msra.mxu0 %v2218
  %4353 = vmatprep.subr.bf16.mxu0 %v2235
  %4354 = vmatpush1.bf16.msra.mxu0 %v2234
  %4355 = vmatprep.subr.bf16.mxu0 %v2251
  %4356 = vmatpush1.bf16.msra.mxu0 %v2250
  %4357 = vmatprep.subr.bf16.mxu0 %v2267
  %4358 = vmatpush1.bf16.msra.mxu0 %v2266
  %4359 = vmatprep.subr.bf16.mxu0 %v2283
  %4360 = vmatpush1.bf16.msra.mxu0 %v2282
  %4361 = vmatprep.subr.bf16.mxu0 %v2299
  %4362 = vmatpush1.bf16.msra.mxu0 %v2298
  %4363 = vmatprep.subr.bf16.mxu0 %v2315
  %4364 = vmatpush1.bf16.msra.mxu0 %v2314
  %4365 = vmatprep.subr.bf16.mxu0 %v2331
  %4366 = vmatpush1.bf16.msra.mxu0 %v2330
  %4367 = vmatprep.subr.bf16.mxu0 %v2347
  %4368 = vmatpush1.bf16.msra.mxu0 %v2346
  %4369 = vmatprep.subr.bf16.mxu0 %v2363
  %4370 = vmatpush1.bf16.msra.mxu0 %v2362
  %4371 = vmatprep.subr.bf16.mxu0 %v2379
  %4372 = vmatpush1.bf16.msra.mxu0 %v2378
  %4373 = vmatprep.subr.bf16.mxu0 %v2395
  %4374 = vmatpush1.bf16.msra.mxu0 %v2394
  %4375 = vmatprep.subr.bf16.mxu0 %v2411
  %4376 = vmatpush1.bf16.msra.mxu0 %v2410
  %4377 = vmatprep.subr.bf16.mxu0 %v2427
  %4378 = vmatpush1.bf16.msra.mxu0 %v2426
  %4379 = vmatprep.subr.bf16.mxu0 %v2443
  %4380 = vmatpush1.bf16.msra.mxu0 %v2442
  %4381 = vmatprep.subr.bf16.mxu0 %v2459
  %4382 = vmatpush1.bf16.msra.mxu0 %v2458
  %4383 = vmatprep.mubr.bf16.mxu0 %v4020
  %4384 = vmatmul.mubr.bf16.gmra.mrb[0].mxu0 %v4019
  %v4385 = vpop.f32.mrb[0].mxu0
  %v4386 = vadd.f32 0.0, %v4385
  %v4387 = vpop.f32.mrb[0].mxu0
  %v4388 = vadd.f32 0.0, %v4387
  %v4389 = vpop.f32.mrb[0].mxu0
  %v4390 = vpop.f32.mrb[0].mxu0
  %4391 = vdwg.mxu0
  %4392 = vmatprep.subr.bf16.mxu0 %v2475
  %4393 = vmatpush1.bf16.msra.mxu0 %v2474
  %4394 = vmatprep.subr.bf16.mxu0 %v2491
  %4395 = vmatpush1.bf16.msra.mxu0 %v2490
  %4396 = vmatprep.subr.bf16.mxu0 %v2507
  %4397 = vmatpush1.bf16.msra.mxu0 %v2506
  %4398 = vmatprep.subr.bf16.mxu0 %v2523
  %4399 = vmatpush1.bf16.msra.mxu0 %v2522
  %4400 = vmatprep.subr.bf16.mxu0 %v2539
  %4401 = vmatpush1.bf16.msra.mxu0 %v2538
  %4402 = vmatprep.subr.bf16.mxu0 %v2555
  %4403 = vmatpush1.bf16.msra.mxu0 %v2554
  %4404 = vmatprep.subr.bf16.mxu0 %v2571
  %4405 = vmatpush1.bf16.msra.mxu0 %v2570
  %4406 = vmatprep.subr.bf16.mxu0 %v2587
  %4407 = vmatpush1.bf16.msra.mxu0 %v2586
  %4408 = vmatprep.subr.bf16.mxu0 %v2603
  %4409 = vmatpush1.bf16.msra.mxu0 %v2602
  %4410 = vmatprep.subr.bf16.mxu0 %v2619
  %4411 = vmatpush1.bf16.msra.mxu0 %v2618
  %4412 = vmatprep.subr.bf16.mxu0 %v2635
  %4413 = vmatpush1.bf16.msra.mxu0 %v2634
  %4414 = vmatprep.subr.bf16.mxu0 %v2651
  %4415 = vmatpush1.bf16.msra.mxu0 %v2650
  %4416 = vmatprep.subr.bf16.mxu0 %v2667
  %4417 = vmatpush1.bf16.msra.mxu0 %v2666
  %4418 = vmatprep.subr.bf16.mxu0 %v2683
  %4419 = vmatpush1.bf16.msra.mxu0 %v2682
  %4420 = vmatprep.subr.bf16.mxu0 %v2699
  %4421 = vmatpush1.bf16.msra.mxu0 %v2698
  %4422 = vmatprep.subr.bf16.mxu0 %v2715
  %4423 = vmatpush1.bf16.msra.mxu0 %v2714
  %4424 = vmatprep.mubr.bf16.mxu0 %v4022
  %4425 = vmatmul.mubr.bf16.gmra.mrb[0].mxu0 %v4021
  %v4426 = vpop.f32.mrb[0].mxu0
  %v4427 = vadd.f32 %v4386, %v4426
  %v4428 = vpop.f32.mrb[0].mxu0
  %v4429 = vadd.f32 %v4388, %v4428
  %v4430 = vpop.f32.mrb[0].mxu0
  %v4431 = vpop.f32.mrb[0].mxu0
  %4432 = vdwg.mxu0
  %4433 = vmatprep.subr.bf16.mxu0 %v2221
  %4434 = vmatpush1.bf16.msra.mxu0 %v2220
  %4435 = vmatprep.subr.bf16.mxu0 %v2237
  %4436 = vmatpush1.bf16.msra.mxu0 %v2236
  %4437 = vmatprep.subr.bf16.mxu0 %v2253
  %4438 = vmatpush1.bf16.msra.mxu0 %v2252
  %4439 = vmatprep.subr.bf16.mxu0 %v2269
  %4440 = vmatpush1.bf16.msra.mxu0 %v2268
  %4441 = vmatprep.subr.bf16.mxu0 %v2285
  %4442 = vmatpush1.bf16.msra.mxu0 %v2284
  %4443 = vmatprep.subr.bf16.mxu0 %v2301
  %4444 = vmatpush1.bf16.msra.mxu0 %v2300
  %4445 = vmatprep.subr.bf16.mxu0 %v2317
  %4446 = vmatpush1.bf16.msra.mxu0 %v2316
  %4447 = vmatprep.subr.bf16.mxu0 %v2333
  %4448 = vmatpush1.bf16.msra.mxu0 %v2332
  %4449 = vmatprep.subr.bf16.mxu0 %v2349
  %4450 = vmatpush1.bf16.msra.mxu0 %v2348
  %4451 = vmatprep.subr.bf16.mxu0 %v2365
  %4452 = vmatpush1.bf16.msra.mxu0 %v2364
  %4453 = vmatprep.subr.bf16.mxu0 %v2381
  %4454 = vmatpush1.bf16.msra.mxu0 %v2380
  %4455 = vmatprep.subr.bf16.mxu0 %v2397
  %4456 = vmatpush1.bf16.msra.mxu0 %v2396
  %4457 = vmatprep.subr.bf16.mxu0 %v2413
  %4458 = vmatpush1.bf16.msra.mxu0 %v2412
  %4459 = vmatprep.subr.bf16.mxu0 %v2429
  %4460 = vmatpush1.bf16.msra.mxu0 %v2428
  %4461 = vmatprep.subr.bf16.mxu0 %v2445
  %4462 = vmatpush1.bf16.msra.mxu0 %v2444
  %4463 = vmatprep.subr.bf16.mxu0 %v2461
  %4464 = vmatpush1.bf16.msra.mxu0 %v2460
  %4465 = vmatprep.mubr.bf16.mxu0 %v4020
  %4466 = vmatmul.mubr.bf16.gmra.mrb[0].mxu0 %v4019
  %v4467 = vpop.f32.mrb[0].mxu0
  %v4468 = vadd.f32 0.0, %v4467
  %v4469 = vpop.f32.mrb[0].mxu0
  %v4470 = vadd.f32 0.0, %v4469
  %v4471 = vpop.f32.mrb[0].mxu0
  %v4472 = vpop.f32.mrb[0].mxu0
  %4473 = vdwg.mxu0
  %4474 = vmatprep.subr.bf16.mxu0 %v2477
  %4475 = vmatpush1.bf16.msra.mxu0 %v2476
  %4476 = vmatprep.subr.bf16.mxu0 %v2493
  %4477 = vmatpush1.bf16.msra.mxu0 %v2492
  %4478 = vmatprep.subr.bf16.mxu0 %v2509
  %4479 = vmatpush1.bf16.msra.mxu0 %v2508
  %4480 = vmatprep.subr.bf16.mxu0 %v2525
  %4481 = vmatpush1.bf16.msra.mxu0 %v2524
  %4482 = vmatprep.subr.bf16.mxu0 %v2541
  %4483 = vmatpush1.bf16.msra.mxu0 %v2540
  %4484 = vmatprep.subr.bf16.mxu0 %v2557
  %4485 = vmatpush1.bf16.msra.mxu0 %v2556
  %4486 = vmatprep.subr.bf16.mxu0 %v2573
  %4487 = vmatpush1.bf16.msra.mxu0 %v2572
  %4488 = vmatprep.subr.bf16.mxu0 %v2589
  %4489 = vmatpush1.bf16.msra.mxu0 %v2588
  %4490 = vmatprep.subr.bf16.mxu0 %v2605
  %4491 = vmatpush1.bf16.msra.mxu0 %v2604
  %4492 = vmatprep.subr.bf16.mxu0 %v2621
  %4493 = vmatpush1.bf16.msra.mxu0 %v2620
  %4494 = vmatprep.subr.bf16.mxu0 %v2637
  %4495 = vmatpush1.bf16.msra.mxu0 %v2636
  %4496 = vmatprep.subr.bf16.mxu0 %v2653
  %4497 = vmatpush1.bf16.msra.mxu0 %v2652
  %4498 = vmatprep.subr.bf16.mxu0 %v2669
  %4499 = vmatpush1.bf16.msra.mxu0 %v2668
  %4500 = vmatprep.subr.bf16.mxu0 %v2685
  %4501 = vmatpush1.bf16.msra.mxu0 %v2684
  %4502 = vmatprep.subr.bf16.mxu0 %v2701
  %4503 = vmatpush1.bf16.msra.mxu0 %v2700
  %4504 = vmatprep.subr.bf16.mxu0 %v2717
  %4505 = vmatpush1.bf16.msra.mxu0 %v2716
  %4506 = vmatprep.mubr.bf16.mxu0 %v4022
  %4507 = vmatmul.mubr.bf16.gmra.mrb[0].mxu0 %v4021
  %v4508 = vpop.f32.mrb[0].mxu0
  %v4509 = vadd.f32 %v4468, %v4508
  %v4510 = vpop.f32.mrb[0].mxu0
  %v4511 = vadd.f32 %v4470, %v4510
  %v4512 = vpop.f32.mrb[0].mxu0
  %v4513 = vpop.f32.mrb[0].mxu0
  %4514 = vdwg.mxu0
  %4515 = vmatprep.subr.bf16.mxu0 %v2223
  %4516 = vmatpush1.bf16.msra.mxu0 %v2222
  %4517 = vmatprep.subr.bf16.mxu0 %v2239
  %4518 = vmatpush1.bf16.msra.mxu0 %v2238
  %4519 = vmatprep.subr.bf16.mxu0 %v2255
  %4520 = vmatpush1.bf16.msra.mxu0 %v2254
  %4521 = vmatprep.subr.bf16.mxu0 %v2271
  %4522 = vmatpush1.bf16.msra.mxu0 %v2270
  %4523 = vmatprep.subr.bf16.mxu0 %v2287
  %4524 = vmatpush1.bf16.msra.mxu0 %v2286
  %4525 = vmatprep.subr.bf16.mxu0 %v2303
  %4526 = vmatpush1.bf16.msra.mxu0 %v2302
  %4527 = vmatprep.subr.bf16.mxu0 %v2319
  %4528 = vmatpush1.bf16.msra.mxu0 %v2318
  %4529 = vmatprep.subr.bf16.mxu0 %v2335
  %4530 = vmatpush1.bf16.msra.mxu0 %v2334
  %4531 = vmatprep.subr.bf16.mxu0 %v2351
  %4532 = vmatpush1.bf16.msra.mxu0 %v2350
  %4533 = vmatprep.subr.bf16.mxu0 %v2367
  %4534 = vmatpush1.bf16.msra.mxu0 %v2366
  %4535 = vmatprep.subr.bf16.mxu0 %v2383
  %4536 = vmatpush1.bf16.msra.mxu0 %v2382
  %4537 = vmatprep.subr.bf16.mxu0 %v2399
  %4538 = vmatpush1.bf16.msra.mxu0 %v2398
  %4539 = vmatprep.subr.bf16.mxu0 %v2415
  %4540 = vmatpush1.bf16.msra.mxu0 %v2414
  %4541 = vmatprep.subr.bf16.mxu0 %v2431
  %4542 = vmatpush1.bf16.msra.mxu0 %v2430
  %4543 = vmatprep.subr.bf16.mxu0 %v2447
  %4544 = vmatpush1.bf16.msra.mxu0 %v2446
  %4545 = vmatprep.subr.bf16.mxu0 %v2463
  %4546 = vmatpush1.bf16.msra.mxu0 %v2462
  %4547 = vmatprep.mubr.bf16.mxu0 %v4020
  %4548 = vmatmul.mubr.bf16.gmra.mrb[0].mxu0 %v4019
  %v4549 = vpop.f32.mrb[0].mxu0
  %v4550 = vadd.f32 0.0, %v4549
  %v4551 = vpop.f32.mrb[0].mxu0
  %v4552 = vadd.f32 0.0, %v4551
  %v4553 = vpop.f32.mrb[0].mxu0
  %v4554 = vpop.f32.mrb[0].mxu0
  %4555 = vdwg.mxu0
  %4556 = vmatprep.subr.bf16.mxu0 %v2479
  %4557 = vmatpush1.bf16.msra.mxu0 %v2478
  %4558 = vmatprep.subr.bf16.mxu0 %v2495
  %4559 = vmatpush1.bf16.msra.mxu0 %v2494
  %4560 = vmatprep.subr.bf16.mxu0 %v2511
  %4561 = vmatpush1.bf16.msra.mxu0 %v2510
  %4562 = vmatprep.subr.bf16.mxu0 %v2527
  %4563 = vmatpush1.bf16.msra.mxu0 %v2526
  %4564 = vmatprep.subr.bf16.mxu0 %v2543
  %4565 = vmatpush1.bf16.msra.mxu0 %v2542
  %4566 = vmatprep.subr.bf16.mxu0 %v2559
  %4567 = vmatpush1.bf16.msra.mxu0 %v2558
  %4568 = vmatprep.subr.bf16.mxu0 %v2575
  %4569 = vmatpush1.bf16.msra.mxu0 %v2574
  %4570 = vmatprep.subr.bf16.mxu0 %v2591
  %4571 = vmatpush1.bf16.msra.mxu0 %v2590
  %4572 = vmatprep.subr.bf16.mxu0 %v2607
  %4573 = vmatpush1.bf16.msra.mxu0 %v2606
  %4574 = vmatprep.subr.bf16.mxu0 %v2623
  %4575 = vmatpush1.bf16.msra.mxu0 %v2622
  %4576 = vmatprep.subr.bf16.mxu0 %v2639
  %4577 = vmatpush1.bf16.msra.mxu0 %v2638
  %4578 = vmatprep.subr.bf16.mxu0 %v2655
  %4579 = vmatpush1.bf16.msra.mxu0 %v2654
  %4580 = vmatprep.subr.bf16.mxu0 %v2671
  %4581 = vmatpush1.bf16.msra.mxu0 %v2670
  %4582 = vmatprep.subr.bf16.mxu0 %v2687
  %4583 = vmatpush1.bf16.msra.mxu0 %v2686
  %4584 = vmatprep.subr.bf16.mxu0 %v2703
  %4585 = vmatpush1.bf16.msra.mxu0 %v2702
  %4586 = vmatprep.subr.bf16.mxu0 %v2719
  %4587 = vmatpush1.bf16.msra.mxu0 %v2718
  %4588 = vmatprep.mubr.bf16.mxu0 %v4022
  %4589 = vmatmul.mubr.bf16.gmra.mrb[0].mxu0 %v4021
  %v4590 = vpop.f32.mrb[0].mxu0
  %v4591 = vadd.f32 %v4550, %v4590
  %v4592 = vpop.f32.mrb[0].mxu0
  %v4593 = vadd.f32 %v4552, %v4592
  %v4594 = vpop.f32.mrb[0].mxu0
  %v4595 = vpop.f32.mrb[0].mxu0
  %4596 = vdwg.mxu0
  %4597 = vmatprep.subr.bf16.mxu0 %v2225
  %4598 = vmatpush1.bf16.msra.mxu0 %v2224
  %4599 = vmatprep.subr.bf16.mxu0 %v2241
  %4600 = vmatpush1.bf16.msra.mxu0 %v2240
  %4601 = vmatprep.subr.bf16.mxu0 %v2257
  %4602 = vmatpush1.bf16.msra.mxu0 %v2256
  %4603 = vmatprep.subr.bf16.mxu0 %v2273
  %4604 = vmatpush1.bf16.msra.mxu0 %v2272
  %4605 = vmatprep.subr.bf16.mxu0 %v2289
  %4606 = vmatpush1.bf16.msra.mxu0 %v2288
  %4607 = vmatprep.subr.bf16.mxu0 %v2305
  %4608 = vmatpush1.bf16.msra.mxu0 %v2304
  %4609 = vmatprep.subr.bf16.mxu0 %v2321
  %4610 = vmatpush1.bf16.msra.mxu0 %v2320
  %4611 = vmatprep.subr.bf16.mxu0 %v2337
  %4612 = vmatpush1.bf16.msra.mxu0 %v2336
  %4613 = vmatprep.subr.bf16.mxu0 %v2353
  %4614 = vmatpush1.bf16.msra.mxu0 %v2352
  %4615 = vmatprep.subr.bf16.mxu0 %v2369
  %4616 = vmatpush1.bf16.msra.mxu0 %v2368
  %4617 = vmatprep.subr.bf16.mxu0 %v2385
  %4618 = vmatpush1.bf16.msra.mxu0 %v2384
  %4619 = vmatprep.subr.bf16.mxu0 %v2401
  %4620 = vmatpush1.bf16.msra.mxu0 %v2400
  %4621 = vmatprep.subr.bf16.mxu0 %v2417
  %4622 = vmatpush1.bf16.msra.mxu0 %v2416
  %4623 = vmatprep.subr.bf16.mxu0 %v2433
  %4624 = vmatpush1.bf16.msra.mxu0 %v2432
  %4625 = vmatprep.subr.bf16.mxu0 %v2449
  %4626 = vmatpush1.bf16.msra.mxu0 %v2448
  %4627 = vmatprep.subr.bf16.mxu0 %v2465
  %4628 = vmatpush1.bf16.msra.mxu0 %v2464
  %4629 = vmatprep.mubr.bf16.mxu0 %v4020
  %4630 = vmatmul.mubr.bf16.gmra.mrb[0].mxu0 %v4019
  %v4631 = vpop.f32.mrb[0].mxu0
  %v4632 = vadd.f32 0.0, %v4631
  %v4633 = vpop.f32.mrb[0].mxu0
  %v4634 = vadd.f32 0.0, %v4633
  %v4635 = vpop.f32.mrb[0].mxu0
  %v4636 = vpop.f32.mrb[0].mxu0
  %4637 = vdwg.mxu0
  %4638 = vmatprep.subr.bf16.mxu0 %v2481
  %4639 = vmatpush1.bf16.msra.mxu0 %v2480
  %4640 = vmatprep.subr.bf16.mxu0 %v2497
  %4641 = vmatpush1.bf16.msra.mxu0 %v2496
  %4642 = vmatprep.subr.bf16.mxu0 %v2513
  %4643 = vmatpush1.bf16.msra.mxu0 %v2512
  %4644 = vmatprep.subr.bf16.mxu0 %v2529
  %4645 = vmatpush1.bf16.msra.mxu0 %v2528
  %4646 = vmatprep.subr.bf16.mxu0 %v2545
  %4647 = vmatpush1.bf16.msra.mxu0 %v2544
  %4648 = vmatprep.subr.bf16.mxu0 %v2561
  %4649 = vmatpush1.bf16.msra.mxu0 %v2560
  %4650 = vmatprep.subr.bf16.mxu0 %v2577
  %4651 = vmatpush1.bf16.msra.mxu0 %v2576
  %4652 = vmatprep.subr.bf16.mxu0 %v2593
  %4653 = vmatpush1.bf16.msra.mxu0 %v2592
  %4654 = vmatprep.subr.bf16.mxu0 %v2609
  %4655 = vmatpush1.bf16.msra.mxu0 %v2608
  %4656 = vmatprep.subr.bf16.mxu0 %v2625
  %4657 = vmatpush1.bf16.msra.mxu0 %v2624
  %4658 = vmatprep.subr.bf16.mxu0 %v2641
  %4659 = vmatpush1.bf16.msra.mxu0 %v2640
  %4660 = vmatprep.subr.bf16.mxu0 %v2657
  %4661 = vmatpush1.bf16.msra.mxu0 %v2656
  %4662 = vmatprep.subr.bf16.mxu0 %v2673
  %4663 = vmatpush1.bf16.msra.mxu0 %v2672
  %4664 = vmatprep.subr.bf16.mxu0 %v2689
  %4665 = vmatpush1.bf16.msra.mxu0 %v2688
  %4666 = vmatprep.subr.bf16.mxu0 %v2705
  %4667 = vmatpush1.bf16.msra.mxu0 %v2704
  %4668 = vmatprep.subr.bf16.mxu0 %v2721
  %4669 = vmatpush1.bf16.msra.mxu0 %v2720
  %4670 = vmatprep.mubr.bf16.mxu0 %v4022
  %4671 = vmatmul.mubr.bf16.gmra.mrb[0].mxu0 %v4021
  %v4672 = vpop.f32.mrb[0].mxu0
  %v4673 = vadd.f32 %v4632, %v4672
  %v4674 = vpop.f32.mrb[0].mxu0
  %v4675 = vadd.f32 %v4634, %v4674
  %v4676 = vpop.f32.mrb[0].mxu0
  %v4677 = vpop.f32.mrb[0].mxu0
  %4678 = vdwg.mxu0
  %v4679 = vadd.f32 %v4003, %v4099
  %v4680 = vadd.f32 %v4004, %v4101
  %v4681 = vadd.f32 %v4005, %v4181
  %v4682 = vadd.f32 %v4006, %v4183
  %v4683 = vadd.f32 %v4007, %v4263
  %v4684 = vadd.f32 %v4008, %v4265
  %v4685 = vadd.f32 %v4009, %v4345
  %v4686 = vadd.f32 %v4010, %v4347
  %v4687 = vadd.f32 %v4011, %v4427
  %v4688 = vadd.f32 %v4012, %v4429
  %v4689 = vadd.f32 %v4013, %v4509
  %v4690 = vadd.f32 %v4014, %v4511
  %v4691 = vadd.f32 %v4015, %v4591
  %v4692 = vadd.f32 %v4016, %v4593
  %v4693 = vadd.f32 %v4017, %v4673
  %v4694 = vadd.f32 %v4018, %v4675
  %v4695 = vmul.f32 %v4679, 0.5
  %v4696 = vmul.f32 %v4680, 0.5
  %v4697 = vmul.f32 %v4681, 0.5
  %v4698 = vmul.f32 %v4682, 0.5
  %v4699 = vtanh.pop %v4695
  %v4700 = vtanh.pop %v4696
  %v4701 = vtanh.pop %v4697
  %v4702 = vtanh.pop %v4698
  %v4703 = vadd.f32 %v4699, 1.0
  %v4704 = vadd.f32 %v4700, 1.0
  %v4705 = vadd.f32 %v4701, 1.0
  %v4706 = vadd.f32 %v4702, 1.0
  %v4707 = vmul.f32 %v4703, 0.5
  %v4708 = vmul.f32 %v4704, 0.5
  %v4709 = vmul.f32 %v4705, 0.5
  %v4710 = vmul.f32 %v4706, 0.5
  %v4711 = vmul.f32 %v4683, 0.5
  %v4712 = vmul.f32 %v4684, 0.5
  %v4713 = vmul.f32 %v4685, 0.5
  %v4714 = vmul.f32 %v4686, 0.5
  %v4715 = vtanh.pop %v4711
  %v4716 = vtanh.pop %v4712
  %v4717 = vtanh.pop %v4713
  %v4718 = vtanh.pop %v4714
  %v4719 = vadd.f32 %v4715, 1.0
  %v4720 = vadd.f32 %v4716, 1.0
  %v4721 = vadd.f32 %v4717, 1.0
  %v4722 = vadd.f32 %v4718, 1.0
  %v4723 = vmul.f32 %v4719, 0.5
  %v4724 = vmul.f32 %v4720, 0.5
  %v4725 = vmul.f32 %v4721, 0.5
  %v4726 = vmul.f32 %v4722, 0.5
  %v4727 = vtanh.pop %v4687
  %v4728 = vtanh.pop %v4688
  %v4729 = vtanh.pop %v4689
  %v4730 = vtanh.pop %v4690
  %v4731 = vmul.f32 %v4691, 0.5
  %v4732 = vmul.f32 %v4692, 0.5
  %v4733 = vmul.f32 %v4693, 0.5
  %v4734 = vmul.f32 %v4694, 0.5
  %v4735 = vtanh.pop %v4731
  %v4736 = vtanh.pop %v4732
  %v4737 = vtanh.pop %v4733
  %v4738 = vtanh.pop %v4734
  %v4739 = vadd.f32 %v4735, 1.0
  %v4740 = vadd.f32 %v4736, 1.0
  %v4741 = vadd.f32 %v4737, 1.0
  %v4742 = vadd.f32 %v4738, 1.0
  %v4743 = vmul.f32 %v4739, 0.5
  %v4744 = vmul.f32 %v4740, 0.5
  %v4745 = vmul.f32 %v4741, 0.5
  %v4746 = vmul.f32 %v4742, 0.5
  %v4747 = vmul.f32 %v4723, %v3966
  %v4748 = vmul.f32 %v4724, %v3967
  %v4749 = vmul.f32 %v4725, %v3968
  %v4750 = vmul.f32 %v4726, %v3969
  %v4751 = vmul.f32 %v4707, %v4727
  %v4752 = vmul.f32 %v4708, %v4728
  %v4753 = vmul.f32 %v4709, %v4729
  %v4754 = vmul.f32 %v4710, %v4730
  %v4755 = vadd.f32 %v4747, %v4751
  %v4756 = vadd.f32 %v4748, %v4752
  %v4757 = vadd.f32 %v4749, %v4753
  %v4758 = vadd.f32 %v4750, %v4754
  %v4759 = vtanh.pop %v4755
  %v4760 = vtanh.pop %v4756
  %v4761 = vtanh.pop %v4757
  %v4762 = vtanh.pop %v4758
  %v4763 = vmul.f32 %v4743, %v4759
  %v4764 = vmul.f32 %v4744, %v4760
  %v4765 = vmul.f32 %v4745, %v4761
  %v4766 = vmul.f32 %v4746, %v4762
  %s4767 = scalar_lea.vmem %s0, 128
  %v4768 = vld [vmem:[%s4767] sm:$0xff]
  %v4769 = vld [vmem:[%s4767 + $0x8] sm:$0xff]
  %v4770 = vld [vmem:[%s4767 + $0x10] sm:$0xff]
  %v4771 = vld [vmem:[%s4767 + $0x18] sm:$0xff]
  %v4772 = vld [vmem:[%s4767 + $0x20] sm:$0xff]
  %v4773 = vld [vmem:[%s4767 + $0x28] sm:$0xff]
  %v4774 = vld [vmem:[%s4767 + $0x30] sm:$0xff]
  %v4775 = vld [vmem:[%s4767 + $0x38] sm:$0xff]
  %v4776 = vunpack.c.l.bf16 %v4768
  %v4777 = vunpack.c.h.bf16 %v4768
  %v4778 = vunpack.c.l.bf16 %v4769
  %v4779 = vunpack.c.h.bf16 %v4769
  %v4780 = vunpack.c.l.bf16 %v4770
  %v4781 = vunpack.c.h.bf16 %v4770
  %v4782 = vunpack.c.l.bf16 %v4771
  %v4783 = vunpack.c.h.bf16 %v4771
  %v4784 = vunpack.c.l.bf16 %v4772
  %v4785 = vunpack.c.h.bf16 %v4772
  %v4786 = vunpack.c.l.bf16 %v4773
  %v4787 = vunpack.c.h.bf16 %v4773
  %v4788 = vunpack.c.l.bf16 %v4774
  %v4789 = vunpack.c.h.bf16 %v4774
  %v4790 = vunpack.c.l.bf16 %v4775
  %v4791 = vunpack.c.h.bf16 %v4775
  %v4792 = vadd.f32 %v4776, %v577
  %v4793 = vadd.f32 %v4777, %v581
  %v4794 = vadd.f32 %v4778, %v585
  %v4795 = vadd.f32 %v4779, %v589
  %v4796 = vadd.f32 %v4780, %v593
  %v4797 = vadd.f32 %v4781, %v597
  %v4798 = vadd.f32 %v4782, %v601
  %v4799 = vadd.f32 %v4783, %v605
  %v4800 = vadd.f32 %v4784, %v609
  %v4801 = vadd.f32 %v4785, %v613
  %v4802 = vadd.f32 %v4786, %v617
  %v4803 = vadd.f32 %v4787, %v621
  %v4804 = vadd.f32 %v4788, %v625
  %v4805 = vadd.f32 %v4789, %v629
  %v4806 = vadd.f32 %v4790, %v633
  %v4807 = vadd.f32 %v4791, %v637
  %v4808 = vpack.c.bf16 %v4763, %v4763
  %v4809 = vpack.c.bf16 %v4764, %v4764
  %v4810 = vpack.c.bf16 %v4765, %v4765
  %v4811 = vpack.c.bf16 %v4766, %v4766
  %4812 = vmatprep.subr.bf16.mxu0 %v2211
  %4813 = vmatpush1.bf16.msra.mxu0 %v2210
  %4814 = vmatprep.subr.bf16.mxu0 %v2227
  %4815 = vmatpush1.bf16.msra.mxu0 %v2226
  %4816 = vmatprep.subr.bf16.mxu0 %v2243
  %4817 = vmatpush1.bf16.msra.mxu0 %v2242
  %4818 = vmatprep.subr.bf16.mxu0 %v2259
  %4819 = vmatpush1.bf16.msra.mxu0 %v2258
  %4820 = vmatprep.subr.bf16.mxu0 %v2275
  %4821 = vmatpush1.bf16.msra.mxu0 %v2274
  %4822 = vmatprep.subr.bf16.mxu0 %v2291
  %4823 = vmatpush1.bf16.msra.mxu0 %v2290
  %4824 = vmatprep.subr.bf16.mxu0 %v2307
  %4825 = vmatpush1.bf16.msra.mxu0 %v2306
  %4826 = vmatprep.subr.bf16.mxu0 %v2323
  %4827 = vmatpush1.bf16.msra.mxu0 %v2322
  %4828 = vmatprep.subr.bf16.mxu0 %v2339
  %4829 = vmatpush1.bf16.msra.mxu0 %v2338
  %4830 = vmatprep.subr.bf16.mxu0 %v2355
  %4831 = vmatpush1.bf16.msra.mxu0 %v2354
  %4832 = vmatprep.subr.bf16.mxu0 %v2371
  %4833 = vmatpush1.bf16.msra.mxu0 %v2370
  %4834 = vmatprep.subr.bf16.mxu0 %v2387
  %4835 = vmatpush1.bf16.msra.mxu0 %v2386
  %4836 = vmatprep.subr.bf16.mxu0 %v2403
  %4837 = vmatpush1.bf16.msra.mxu0 %v2402
  %4838 = vmatprep.subr.bf16.mxu0 %v2419
  %4839 = vmatpush1.bf16.msra.mxu0 %v2418
  %4840 = vmatprep.subr.bf16.mxu0 %v2435
  %4841 = vmatpush1.bf16.msra.mxu0 %v2434
  %4842 = vmatprep.subr.bf16.mxu0 %v2451
  %4843 = vmatpush1.bf16.msra.mxu0 %v2450
  %4844 = vmatprep.mubr.bf16.mxu0 %v4809
  %4845 = vmatmul.mubr.bf16.gmra.mrb[0].mxu0 %v4808
  %v4846 = vpop.f32.mrb[0].mxu0
  %v4847 = vadd.f32 0.0, %v4846
  %v4848 = vpop.f32.mrb[0].mxu0
  %v4849 = vadd.f32 0.0, %v4848
  %v4850 = vpop.f32.mrb[0].mxu0
  %v4851 = vpop.f32.mrb[0].mxu0
  %4852 = vdwg.mxu0
  %4853 = vmatprep.subr.bf16.mxu0 %v2467
  %4854 = vmatpush1.bf16.msra.mxu0 %v2466
  %4855 = vmatprep.subr.bf16.mxu0 %v2483
  %4856 = vmatpush1.bf16.msra.mxu0 %v2482
  %4857 = vmatprep.subr.bf16.mxu0 %v2499
  %4858 = vmatpush1.bf16.msra.mxu0 %v2498
  %4859 = vmatprep.subr.bf16.mxu0 %v2515
  %4860 = vmatpush1.bf16.msra.mxu0 %v2514
  %4861 = vmatprep.subr.bf16.mxu0 %v2531
  %4862 = vmatpush1.bf16.msra.mxu0 %v2530
  %4863 = vmatprep.subr.bf16.mxu0 %v2547
  %4864 = vmatpush1.bf16.msra.mxu0 %v2546
  %4865 = vmatprep.subr.bf16.mxu0 %v2563
  %4866 = vmatpush1.bf16.msra.mxu0 %v2562
  %4867 = vmatprep.subr.bf16.mxu0 %v2579
  %4868 = vmatpush1.bf16.msra.mxu0 %v2578
  %4869 = vmatprep.subr.bf16.mxu0 %v2595
  %4870 = vmatpush1.bf16.msra.mxu0 %v2594
  %4871 = vmatprep.subr.bf16.mxu0 %v2611
  %4872 = vmatpush1.bf16.msra.mxu0 %v2610
  %4873 = vmatprep.subr.bf16.mxu0 %v2627
  %4874 = vmatpush1.bf16.msra.mxu0 %v2626
  %4875 = vmatprep.subr.bf16.mxu0 %v2643
  %4876 = vmatpush1.bf16.msra.mxu0 %v2642
  %4877 = vmatprep.subr.bf16.mxu0 %v2659
  %4878 = vmatpush1.bf16.msra.mxu0 %v2658
  %4879 = vmatprep.subr.bf16.mxu0 %v2675
  %4880 = vmatpush1.bf16.msra.mxu0 %v2674
  %4881 = vmatprep.subr.bf16.mxu0 %v2691
  %4882 = vmatpush1.bf16.msra.mxu0 %v2690
  %4883 = vmatprep.subr.bf16.mxu0 %v2707
  %4884 = vmatpush1.bf16.msra.mxu0 %v2706
  %4885 = vmatprep.mubr.bf16.mxu0 %v4811
  %4886 = vmatmul.mubr.bf16.gmra.mrb[0].mxu0 %v4810
  %v4887 = vpop.f32.mrb[0].mxu0
  %v4888 = vadd.f32 %v4847, %v4887
  %v4889 = vpop.f32.mrb[0].mxu0
  %v4890 = vadd.f32 %v4849, %v4889
  %v4891 = vpop.f32.mrb[0].mxu0
  %v4892 = vpop.f32.mrb[0].mxu0
  %4893 = vdwg.mxu0
  %4894 = vmatprep.subr.bf16.mxu0 %v2213
  %4895 = vmatpush1.bf16.msra.mxu0 %v2212
  %4896 = vmatprep.subr.bf16.mxu0 %v2229
  %4897 = vmatpush1.bf16.msra.mxu0 %v2228
  %4898 = vmatprep.subr.bf16.mxu0 %v2245
  %4899 = vmatpush1.bf16.msra.mxu0 %v2244
  %4900 = vmatprep.subr.bf16.mxu0 %v2261
  %4901 = vmatpush1.bf16.msra.mxu0 %v2260
  %4902 = vmatprep.subr.bf16.mxu0 %v2277
  %4903 = vmatpush1.bf16.msra.mxu0 %v2276
  %4904 = vmatprep.subr.bf16.mxu0 %v2293
  %4905 = vmatpush1.bf16.msra.mxu0 %v2292
  %4906 = vmatprep.subr.bf16.mxu0 %v2309
  %4907 = vmatpush1.bf16.msra.mxu0 %v2308
  %4908 = vmatprep.subr.bf16.mxu0 %v2325
  %4909 = vmatpush1.bf16.msra.mxu0 %v2324
  %4910 = vmatprep.subr.bf16.mxu0 %v2341
  %4911 = vmatpush1.bf16.msra.mxu0 %v2340
  %4912 = vmatprep.subr.bf16.mxu0 %v2357
  %4913 = vmatpush1.bf16.msra.mxu0 %v2356
  %4914 = vmatprep.subr.bf16.mxu0 %v2373
  %4915 = vmatpush1.bf16.msra.mxu0 %v2372
  %4916 = vmatprep.subr.bf16.mxu0 %v2389
  %4917 = vmatpush1.bf16.msra.mxu0 %v2388
  %4918 = vmatprep.subr.bf16.mxu0 %v2405
  %4919 = vmatpush1.bf16.msra.mxu0 %v2404
  %4920 = vmatprep.subr.bf16.mxu0 %v2421
  %4921 = vmatpush1.bf16.msra.mxu0 %v2420
  %4922 = vmatprep.subr.bf16.mxu0 %v2437
  %4923 = vmatpush1.bf16.msra.mxu0 %v2436
  %4924 = vmatprep.subr.bf16.mxu0 %v2453
  %4925 = vmatpush1.bf16.msra.mxu0 %v2452
  %4926 = vmatprep.mubr.bf16.mxu0 %v4809
  %4927 = vmatmul.mubr.bf16.gmra.mrb[0].mxu0 %v4808
  %v4928 = vpop.f32.mrb[0].mxu0
  %v4929 = vadd.f32 0.0, %v4928
  %v4930 = vpop.f32.mrb[0].mxu0
  %v4931 = vadd.f32 0.0, %v4930
  %v4932 = vpop.f32.mrb[0].mxu0
  %v4933 = vpop.f32.mrb[0].mxu0
  %4934 = vdwg.mxu0
  %4935 = vmatprep.subr.bf16.mxu0 %v2469
  %4936 = vmatpush1.bf16.msra.mxu0 %v2468
  %4937 = vmatprep.subr.bf16.mxu0 %v2485
  %4938 = vmatpush1.bf16.msra.mxu0 %v2484
  %4939 = vmatprep.subr.bf16.mxu0 %v2501
  %4940 = vmatpush1.bf16.msra.mxu0 %v2500
  %4941 = vmatprep.subr.bf16.mxu0 %v2517
  %4942 = vmatpush1.bf16.msra.mxu0 %v2516
  %4943 = vmatprep.subr.bf16.mxu0 %v2533
  %4944 = vmatpush1.bf16.msra.mxu0 %v2532
  %4945 = vmatprep.subr.bf16.mxu0 %v2549
  %4946 = vmatpush1.bf16.msra.mxu0 %v2548
  %4947 = vmatprep.subr.bf16.mxu0 %v2565
  %4948 = vmatpush1.bf16.msra.mxu0 %v2564
  %4949 = vmatprep.subr.bf16.mxu0 %v2581
  %4950 = vmatpush1.bf16.msra.mxu0 %v2580
  %4951 = vmatprep.subr.bf16.mxu0 %v2597
  %4952 = vmatpush1.bf16.msra.mxu0 %v2596
  %4953 = vmatprep.subr.bf16.mxu0 %v2613
  %4954 = vmatpush1.bf16.msra.mxu0 %v2612
  %4955 = vmatprep.subr.bf16.mxu0 %v2629
  %4956 = vmatpush1.bf16.msra.mxu0 %v2628
  %4957 = vmatprep.subr.bf16.mxu0 %v2645
  %4958 = vmatpush1.bf16.msra.mxu0 %v2644
  %4959 = vmatprep.subr.bf16.mxu0 %v2661
  %4960 = vmatpush1.bf16.msra.mxu0 %v2660
  %4961 = vmatprep.subr.bf16.mxu0 %v2677
  %4962 = vmatpush1.bf16.msra.mxu0 %v2676
  %4963 = vmatprep.subr.bf16.mxu0 %v2693
  %4964 = vmatpush1.bf16.msra.mxu0 %v2692
  %4965 = vmatprep.subr.bf16.mxu0 %v2709
  %4966 = vmatpush1.bf16.msra.mxu0 %v2708
  %4967 = vmatprep.mubr.bf16.mxu0 %v4811
  %4968 = vmatmul.mubr.bf16.gmra.mrb[0].mxu0 %v4810
  %v4969 = vpop.f32.mrb[0].mxu0
  %v4970 = vadd.f32 %v4929, %v4969
  %v4971 = vpop.f32.mrb[0].mxu0
  %v4972 = vadd.f32 %v4931, %v4971
  %v4973 = vpop.f32.mrb[0].mxu0
  %v4974 = vpop.f32.mrb[0].mxu0
  %4975 = vdwg.mxu0
  %4976 = vmatprep.subr.bf16.mxu0 %v2215
  %4977 = vmatpush1.bf16.msra.mxu0 %v2214
  %4978 = vmatprep.subr.bf16.mxu0 %v2231
  %4979 = vmatpush1.bf16.msra.mxu0 %v2230
  %4980 = vmatprep.subr.bf16.mxu0 %v2247
  %4981 = vmatpush1.bf16.msra.mxu0 %v2246
  %4982 = vmatprep.subr.bf16.mxu0 %v2263
  %4983 = vmatpush1.bf16.msra.mxu0 %v2262
  %4984 = vmatprep.subr.bf16.mxu0 %v2279
  %4985 = vmatpush1.bf16.msra.mxu0 %v2278
  %4986 = vmatprep.subr.bf16.mxu0 %v2295
  %4987 = vmatpush1.bf16.msra.mxu0 %v2294
  %4988 = vmatprep.subr.bf16.mxu0 %v2311
  %4989 = vmatpush1.bf16.msra.mxu0 %v2310
  %4990 = vmatprep.subr.bf16.mxu0 %v2327
  %4991 = vmatpush1.bf16.msra.mxu0 %v2326
  %4992 = vmatprep.subr.bf16.mxu0 %v2343
  %4993 = vmatpush1.bf16.msra.mxu0 %v2342
  %4994 = vmatprep.subr.bf16.mxu0 %v2359
  %4995 = vmatpush1.bf16.msra.mxu0 %v2358
  %4996 = vmatprep.subr.bf16.mxu0 %v2375
  %4997 = vmatpush1.bf16.msra.mxu0 %v2374
  %4998 = vmatprep.subr.bf16.mxu0 %v2391
  %4999 = vmatpush1.bf16.msra.mxu0 %v2390
  %5000 = vmatprep.subr.bf16.mxu0 %v2407
  %5001 = vmatpush1.bf16.msra.mxu0 %v2406
  %5002 = vmatprep.subr.bf16.mxu0 %v2423
  %5003 = vmatpush1.bf16.msra.mxu0 %v2422
  %5004 = vmatprep.subr.bf16.mxu0 %v2439
  %5005 = vmatpush1.bf16.msra.mxu0 %v2438
  %5006 = vmatprep.subr.bf16.mxu0 %v2455
  %5007 = vmatpush1.bf16.msra.mxu0 %v2454
  %5008 = vmatprep.mubr.bf16.mxu0 %v4809
  %5009 = vmatmul.mubr.bf16.gmra.mrb[0].mxu0 %v4808
  %v5010 = vpop.f32.mrb[0].mxu0
  %v5011 = vadd.f32 0.0, %v5010
  %v5012 = vpop.f32.mrb[0].mxu0
  %v5013 = vadd.f32 0.0, %v5012
  %v5014 = vpop.f32.mrb[0].mxu0
  %v5015 = vpop.f32.mrb[0].mxu0
  %5016 = vdwg.mxu0
  %5017 = vmatprep.subr.bf16.mxu0 %v2471
  %5018 = vmatpush1.bf16.msra.mxu0 %v2470
  %5019 = vmatprep.subr.bf16.mxu0 %v2487
  %5020 = vmatpush1.bf16.msra.mxu0 %v2486
  %5021 = vmatprep.subr.bf16.mxu0 %v2503
  %5022 = vmatpush1.bf16.msra.mxu0 %v2502
  %5023 = vmatprep.subr.bf16.mxu0 %v2519
  %5024 = vmatpush1.bf16.msra.mxu0 %v2518
  %5025 = vmatprep.subr.bf16.mxu0 %v2535
  %5026 = vmatpush1.bf16.msra.mxu0 %v2534
  %5027 = vmatprep.subr.bf16.mxu0 %v2551
  %5028 = vmatpush1.bf16.msra.mxu0 %v2550
  %5029 = vmatprep.subr.bf16.mxu0 %v2567
  %5030 = vmatpush1.bf16.msra.mxu0 %v2566
  %5031 = vmatprep.subr.bf16.mxu0 %v2583
  %5032 = vmatpush1.bf16.msra.mxu0 %v2582
  %5033 = vmatprep.subr.bf16.mxu0 %v2599
  %5034 = vmatpush1.bf16.msra.mxu0 %v2598
  %5035 = vmatprep.subr.bf16.mxu0 %v2615
  %5036 = vmatpush1.bf16.msra.mxu0 %v2614
  %5037 = vmatprep.subr.bf16.mxu0 %v2631
  %5038 = vmatpush1.bf16.msra.mxu0 %v2630
  %5039 = vmatprep.subr.bf16.mxu0 %v2647
  %5040 = vmatpush1.bf16.msra.mxu0 %v2646
  %5041 = vmatprep.subr.bf16.mxu0 %v2663
  %5042 = vmatpush1.bf16.msra.mxu0 %v2662
  %5043 = vmatprep.subr.bf16.mxu0 %v2679
  %5044 = vmatpush1.bf16.msra.mxu0 %v2678
  %5045 = vmatprep.subr.bf16.mxu0 %v2695
  %5046 = vmatpush1.bf16.msra.mxu0 %v2694
  %5047 = vmatprep.subr.bf16.mxu0 %v2711
  %5048 = vmatpush1.bf16.msra.mxu0 %v2710
  %5049 = vmatprep.mubr.bf16.mxu0 %v4811
  %5050 = vmatmul.mubr.bf16.gmra.mrb[0].mxu0 %v4810
  %v5051 = vpop.f32.mrb[0].mxu0
  %v5052 = vadd.f32 %v5011, %v5051
  %v5053 = vpop.f32.mrb[0].mxu0
  %v5054 = vadd.f32 %v5013, %v5053
  %v5055 = vpop.f32.mrb[0].mxu0
  %v5056 = vpop.f32.mrb[0].mxu0
  %5057 = vdwg.mxu0
  %5058 = vmatprep.subr.bf16.mxu0 %v2217
  %5059 = vmatpush1.bf16.msra.mxu0 %v2216
  %5060 = vmatprep.subr.bf16.mxu0 %v2233
  %5061 = vmatpush1.bf16.msra.mxu0 %v2232
  %5062 = vmatprep.subr.bf16.mxu0 %v2249
  %5063 = vmatpush1.bf16.msra.mxu0 %v2248
  %5064 = vmatprep.subr.bf16.mxu0 %v2265
  %5065 = vmatpush1.bf16.msra.mxu0 %v2264
  %5066 = vmatprep.subr.bf16.mxu0 %v2281
  %5067 = vmatpush1.bf16.msra.mxu0 %v2280
  %5068 = vmatprep.subr.bf16.mxu0 %v2297
  %5069 = vmatpush1.bf16.msra.mxu0 %v2296
  %5070 = vmatprep.subr.bf16.mxu0 %v2313
  %5071 = vmatpush1.bf16.msra.mxu0 %v2312
  %5072 = vmatprep.subr.bf16.mxu0 %v2329
  %5073 = vmatpush1.bf16.msra.mxu0 %v2328
  %5074 = vmatprep.subr.bf16.mxu0 %v2345
  %5075 = vmatpush1.bf16.msra.mxu0 %v2344
  %5076 = vmatprep.subr.bf16.mxu0 %v2361
  %5077 = vmatpush1.bf16.msra.mxu0 %v2360
  %5078 = vmatprep.subr.bf16.mxu0 %v2377
  %5079 = vmatpush1.bf16.msra.mxu0 %v2376
  %5080 = vmatprep.subr.bf16.mxu0 %v2393
  %5081 = vmatpush1.bf16.msra.mxu0 %v2392
  %5082 = vmatprep.subr.bf16.mxu0 %v2409
  %5083 = vmatpush1.bf16.msra.mxu0 %v2408
  %5084 = vmatprep.subr.bf16.mxu0 %v2425
  %5085 = vmatpush1.bf16.msra.mxu0 %v2424
  %5086 = vmatprep.subr.bf16.mxu0 %v2441
  %5087 = vmatpush1.bf16.msra.mxu0 %v2440
  %5088 = vmatprep.subr.bf16.mxu0 %v2457
  %5089 = vmatpush1.bf16.msra.mxu0 %v2456
  %5090 = vmatprep.mubr.bf16.mxu0 %v4809
  %5091 = vmatmul.mubr.bf16.gmra.mrb[0].mxu0 %v4808
  %v5092 = vpop.f32.mrb[0].mxu0
  %v5093 = vadd.f32 0.0, %v5092
  %v5094 = vpop.f32.mrb[0].mxu0
  %v5095 = vadd.f32 0.0, %v5094
  %v5096 = vpop.f32.mrb[0].mxu0
  %v5097 = vpop.f32.mrb[0].mxu0
  %5098 = vdwg.mxu0
  %5099 = vmatprep.subr.bf16.mxu0 %v2473
  %5100 = vmatpush1.bf16.msra.mxu0 %v2472
  %5101 = vmatprep.subr.bf16.mxu0 %v2489
  %5102 = vmatpush1.bf16.msra.mxu0 %v2488
  %5103 = vmatprep.subr.bf16.mxu0 %v2505
  %5104 = vmatpush1.bf16.msra.mxu0 %v2504
  %5105 = vmatprep.subr.bf16.mxu0 %v2521
  %5106 = vmatpush1.bf16.msra.mxu0 %v2520
  %5107 = vmatprep.subr.bf16.mxu0 %v2537
  %5108 = vmatpush1.bf16.msra.mxu0 %v2536
  %5109 = vmatprep.subr.bf16.mxu0 %v2553
  %5110 = vmatpush1.bf16.msra.mxu0 %v2552
  %5111 = vmatprep.subr.bf16.mxu0 %v2569
  %5112 = vmatpush1.bf16.msra.mxu0 %v2568
  %5113 = vmatprep.subr.bf16.mxu0 %v2585
  %5114 = vmatpush1.bf16.msra.mxu0 %v2584
  %5115 = vmatprep.subr.bf16.mxu0 %v2601
  %5116 = vmatpush1.bf16.msra.mxu0 %v2600
  %5117 = vmatprep.subr.bf16.mxu0 %v2617
  %5118 = vmatpush1.bf16.msra.mxu0 %v2616
  %5119 = vmatprep.subr.bf16.mxu0 %v2633
  %5120 = vmatpush1.bf16.msra.mxu0 %v2632
  %5121 = vmatprep.subr.bf16.mxu0 %v2649
  %5122 = vmatpush1.bf16.msra.mxu0 %v2648
  %5123 = vmatprep.subr.bf16.mxu0 %v2665
  %5124 = vmatpush1.bf16.msra.mxu0 %v2664
  %5125 = vmatprep.subr.bf16.mxu0 %v2681
  %5126 = vmatpush1.bf16.msra.mxu0 %v2680
  %5127 = vmatprep.subr.bf16.mxu0 %v2697
  %5128 = vmatpush1.bf16.msra.mxu0 %v2696
  %5129 = vmatprep.subr.bf16.mxu0 %v2713
  %5130 = vmatpush1.bf16.msra.mxu0 %v2712
  %5131 = vmatprep.mubr.bf16.mxu0 %v4811
  %5132 = vmatmul.mubr.bf16.gmra.mrb[0].mxu0 %v4810
  %v5133 = vpop.f32.mrb[0].mxu0
  %v5134 = vadd.f32 %v5093, %v5133
  %v5135 = vpop.f32.mrb[0].mxu0
  %v5136 = vadd.f32 %v5095, %v5135
  %v5137 = vpop.f32.mrb[0].mxu0
  %v5138 = vpop.f32.mrb[0].mxu0
  %5139 = vdwg.mxu0
  %5140 = vmatprep.subr.bf16.mxu0 %v2219
  %5141 = vmatpush1.bf16.msra.mxu0 %v2218
  %5142 = vmatprep.subr.bf16.mxu0 %v2235
  %5143 = vmatpush1.bf16.msra.mxu0 %v2234
  %5144 = vmatprep.subr.bf16.mxu0 %v2251
  %5145 = vmatpush1.bf16.msra.mxu0 %v2250
  %5146 = vmatprep.subr.bf16.mxu0 %v2267
  %5147 = vmatpush1.bf16.msra.mxu0 %v2266
  %5148 = vmatprep.subr.bf16.mxu0 %v2283
  %5149 = vmatpush1.bf16.msra.mxu0 %v2282
  %5150 = vmatprep.subr.bf16.mxu0 %v2299
  %5151 = vmatpush1.bf16.msra.mxu0 %v2298
  %5152 = vmatprep.subr.bf16.mxu0 %v2315
  %5153 = vmatpush1.bf16.msra.mxu0 %v2314
  %5154 = vmatprep.subr.bf16.mxu0 %v2331
  %5155 = vmatpush1.bf16.msra.mxu0 %v2330
  %5156 = vmatprep.subr.bf16.mxu0 %v2347
  %5157 = vmatpush1.bf16.msra.mxu0 %v2346
  %5158 = vmatprep.subr.bf16.mxu0 %v2363
  %5159 = vmatpush1.bf16.msra.mxu0 %v2362
  %5160 = vmatprep.subr.bf16.mxu0 %v2379
  %5161 = vmatpush1.bf16.msra.mxu0 %v2378
  %5162 = vmatprep.subr.bf16.mxu0 %v2395
  %5163 = vmatpush1.bf16.msra.mxu0 %v2394
  %5164 = vmatprep.subr.bf16.mxu0 %v2411
  %5165 = vmatpush1.bf16.msra.mxu0 %v2410
  %5166 = vmatprep.subr.bf16.mxu0 %v2427
  %5167 = vmatpush1.bf16.msra.mxu0 %v2426
  %5168 = vmatprep.subr.bf16.mxu0 %v2443
  %5169 = vmatpush1.bf16.msra.mxu0 %v2442
  %5170 = vmatprep.subr.bf16.mxu0 %v2459
  %5171 = vmatpush1.bf16.msra.mxu0 %v2458
  %5172 = vmatprep.mubr.bf16.mxu0 %v4809
  %5173 = vmatmul.mubr.bf16.gmra.mrb[0].mxu0 %v4808
  %v5174 = vpop.f32.mrb[0].mxu0
  %v5175 = vadd.f32 0.0, %v5174
  %v5176 = vpop.f32.mrb[0].mxu0
  %v5177 = vadd.f32 0.0, %v5176
  %v5178 = vpop.f32.mrb[0].mxu0
  %v5179 = vpop.f32.mrb[0].mxu0
  %5180 = vdwg.mxu0
  %5181 = vmatprep.subr.bf16.mxu0 %v2475
  %5182 = vmatpush1.bf16.msra.mxu0 %v2474
  %5183 = vmatprep.subr.bf16.mxu0 %v2491
  %5184 = vmatpush1.bf16.msra.mxu0 %v2490
  %5185 = vmatprep.subr.bf16.mxu0 %v2507
  %5186 = vmatpush1.bf16.msra.mxu0 %v2506
  %5187 = vmatprep.subr.bf16.mxu0 %v2523
  %5188 = vmatpush1.bf16.msra.mxu0 %v2522
  %5189 = vmatprep.subr.bf16.mxu0 %v2539
  %5190 = vmatpush1.bf16.msra.mxu0 %v2538
  %5191 = vmatprep.subr.bf16.mxu0 %v2555
  %5192 = vmatpush1.bf16.msra.mxu0 %v2554
  %5193 = vmatprep.subr.bf16.mxu0 %v2571
  %5194 = vmatpush1.bf16.msra.mxu0 %v2570
  %5195 = vmatprep.subr.bf16.mxu0 %v2587
  %5196 = vmatpush1.bf16.msra.mxu0 %v2586
  %5197 = vmatprep.subr.bf16.mxu0 %v2603
  %5198 = vmatpush1.bf16.msra.mxu0 %v2602
  %5199 = vmatprep.subr.bf16.mxu0 %v2619
  %5200 = vmatpush1.bf16.msra.mxu0 %v2618
  %5201 = vmatprep.subr.bf16.mxu0 %v2635
  %5202 = vmatpush1.bf16.msra.mxu0 %v2634
  %5203 = vmatprep.subr.bf16.mxu0 %v2651
  %5204 = vmatpush1.bf16.msra.mxu0 %v2650
  %5205 = vmatprep.subr.bf16.mxu0 %v2667
  %5206 = vmatpush1.bf16.msra.mxu0 %v2666
  %5207 = vmatprep.subr.bf16.mxu0 %v2683
  %5208 = vmatpush1.bf16.msra.mxu0 %v2682
  %5209 = vmatprep.subr.bf16.mxu0 %v2699
  %5210 = vmatpush1.bf16.msra.mxu0 %v2698
  %5211 = vmatprep.subr.bf16.mxu0 %v2715
  %5212 = vmatpush1.bf16.msra.mxu0 %v2714
  %5213 = vmatprep.mubr.bf16.mxu0 %v4811
  %5214 = vmatmul.mubr.bf16.gmra.mrb[0].mxu0 %v4810
  %v5215 = vpop.f32.mrb[0].mxu0
  %v5216 = vadd.f32 %v5175, %v5215
  %v5217 = vpop.f32.mrb[0].mxu0
  %v5218 = vadd.f32 %v5177, %v5217
  %v5219 = vpop.f32.mrb[0].mxu0
  %v5220 = vpop.f32.mrb[0].mxu0
  %5221 = vdwg.mxu0
  %5222 = vmatprep.subr.bf16.mxu0 %v2221
  %5223 = vmatpush1.bf16.msra.mxu0 %v2220
  %5224 = vmatprep.subr.bf16.mxu0 %v2237
  %5225 = vmatpush1.bf16.msra.mxu0 %v2236
  %5226 = vmatprep.subr.bf16.mxu0 %v2253
  %5227 = vmatpush1.bf16.msra.mxu0 %v2252
  %5228 = vmatprep.subr.bf16.mxu0 %v2269
  %5229 = vmatpush1.bf16.msra.mxu0 %v2268
  %5230 = vmatprep.subr.bf16.mxu0 %v2285
  %5231 = vmatpush1.bf16.msra.mxu0 %v2284
  %5232 = vmatprep.subr.bf16.mxu0 %v2301
  %5233 = vmatpush1.bf16.msra.mxu0 %v2300
  %5234 = vmatprep.subr.bf16.mxu0 %v2317
  %5235 = vmatpush1.bf16.msra.mxu0 %v2316
  %5236 = vmatprep.subr.bf16.mxu0 %v2333
  %5237 = vmatpush1.bf16.msra.mxu0 %v2332
  %5238 = vmatprep.subr.bf16.mxu0 %v2349
  %5239 = vmatpush1.bf16.msra.mxu0 %v2348
  %5240 = vmatprep.subr.bf16.mxu0 %v2365
  %5241 = vmatpush1.bf16.msra.mxu0 %v2364
  %5242 = vmatprep.subr.bf16.mxu0 %v2381
  %5243 = vmatpush1.bf16.msra.mxu0 %v2380
  %5244 = vmatprep.subr.bf16.mxu0 %v2397
  %5245 = vmatpush1.bf16.msra.mxu0 %v2396
  %5246 = vmatprep.subr.bf16.mxu0 %v2413
  %5247 = vmatpush1.bf16.msra.mxu0 %v2412
  %5248 = vmatprep.subr.bf16.mxu0 %v2429
  %5249 = vmatpush1.bf16.msra.mxu0 %v2428
  %5250 = vmatprep.subr.bf16.mxu0 %v2445
  %5251 = vmatpush1.bf16.msra.mxu0 %v2444
  %5252 = vmatprep.subr.bf16.mxu0 %v2461
  %5253 = vmatpush1.bf16.msra.mxu0 %v2460
  %5254 = vmatprep.mubr.bf16.mxu0 %v4809
  %5255 = vmatmul.mubr.bf16.gmra.mrb[0].mxu0 %v4808
  %v5256 = vpop.f32.mrb[0].mxu0
  %v5257 = vadd.f32 0.0, %v5256
  %v5258 = vpop.f32.mrb[0].mxu0
  %v5259 = vadd.f32 0.0, %v5258
  %v5260 = vpop.f32.mrb[0].mxu0
  %v5261 = vpop.f32.mrb[0].mxu0
  %5262 = vdwg.mxu0
  %5263 = vmatprep.subr.bf16.mxu0 %v2477
  %5264 = vmatpush1.bf16.msra.mxu0 %v2476
  %5265 = vmatprep.subr.bf16.mxu0 %v2493
  %5266 = vmatpush1.bf16.msra.mxu0 %v2492
  %5267 = vmatprep.subr.bf16.mxu0 %v2509
  %5268 = vmatpush1.bf16.msra.mxu0 %v2508
  %5269 = vmatprep.subr.bf16.mxu0 %v2525
  %5270 = vmatpush1.bf16.msra.mxu0 %v2524
  %5271 = vmatprep.subr.bf16.mxu0 %v2541
  %5272 = vmatpush1.bf16.msra.mxu0 %v2540
  %5273 = vmatprep.subr.bf16.mxu0 %v2557
  %5274 = vmatpush1.bf16.msra.mxu0 %v2556
  %5275 = vmatprep.subr.bf16.mxu0 %v2573
  %5276 = vmatpush1.bf16.msra.mxu0 %v2572
  %5277 = vmatprep.subr.bf16.mxu0 %v2589
  %5278 = vmatpush1.bf16.msra.mxu0 %v2588
  %5279 = vmatprep.subr.bf16.mxu0 %v2605
  %5280 = vmatpush1.bf16.msra.mxu0 %v2604
  %5281 = vmatprep.subr.bf16.mxu0 %v2621
  %5282 = vmatpush1.bf16.msra.mxu0 %v2620
  %5283 = vmatprep.subr.bf16.mxu0 %v2637
  %5284 = vmatpush1.bf16.msra.mxu0 %v2636
  %5285 = vmatprep.subr.bf16.mxu0 %v2653
  %5286 = vmatpush1.bf16.msra.mxu0 %v2652
  %5287 = vmatprep.subr.bf16.mxu0 %v2669
  %5288 = vmatpush1.bf16.msra.mxu0 %v2668
  %5289 = vmatprep.subr.bf16.mxu0 %v2685
  %5290 = vmatpush1.bf16.msra.mxu0 %v2684
  %5291 = vmatprep.subr.bf16.mxu0 %v2701
  %5292 = vmatpush1.bf16.msra.mxu0 %v2700
  %5293 = vmatprep.subr.bf16.mxu0 %v2717
  %5294 = vmatpush1.bf16.msra.mxu0 %v2716
  %5295 = vmatprep.mubr.bf16.mxu0 %v4811
  %5296 = vmatmul.mubr.bf16.gmra.mrb[0].mxu0 %v4810
  %v5297 = vpop.f32.mrb[0].mxu0
  %v5298 = vadd.f32 %v5257, %v5297
  %v5299 = vpop.f32.mrb[0].mxu0
  %v5300 = vadd.f32 %v5259, %v5299
  %v5301 = vpop.f32.mrb[0].mxu0
  %v5302 = vpop.f32.mrb[0].mxu0
  %5303 = vdwg.mxu0
  %5304 = vmatprep.subr.bf16.mxu0 %v2223
  %5305 = vmatpush1.bf16.msra.mxu0 %v2222
  %5306 = vmatprep.subr.bf16.mxu0 %v2239
  %5307 = vmatpush1.bf16.msra.mxu0 %v2238
  %5308 = vmatprep.subr.bf16.mxu0 %v2255
  %5309 = vmatpush1.bf16.msra.mxu0 %v2254
  %5310 = vmatprep.subr.bf16.mxu0 %v2271
  %5311 = vmatpush1.bf16.msra.mxu0 %v2270
  %5312 = vmatprep.subr.bf16.mxu0 %v2287
  %5313 = vmatpush1.bf16.msra.mxu0 %v2286
  %5314 = vmatprep.subr.bf16.mxu0 %v2303
  %5315 = vmatpush1.bf16.msra.mxu0 %v2302
  %5316 = vmatprep.subr.bf16.mxu0 %v2319
  %5317 = vmatpush1.bf16.msra.mxu0 %v2318
  %5318 = vmatprep.subr.bf16.mxu0 %v2335
  %5319 = vmatpush1.bf16.msra.mxu0 %v2334
  %5320 = vmatprep.subr.bf16.mxu0 %v2351
  %5321 = vmatpush1.bf16.msra.mxu0 %v2350
  %5322 = vmatprep.subr.bf16.mxu0 %v2367
  %5323 = vmatpush1.bf16.msra.mxu0 %v2366
  %5324 = vmatprep.subr.bf16.mxu0 %v2383
  %5325 = vmatpush1.bf16.msra.mxu0 %v2382
  %5326 = vmatprep.subr.bf16.mxu0 %v2399
  %5327 = vmatpush1.bf16.msra.mxu0 %v2398
  %5328 = vmatprep.subr.bf16.mxu0 %v2415
  %5329 = vmatpush1.bf16.msra.mxu0 %v2414
  %5330 = vmatprep.subr.bf16.mxu0 %v2431
  %5331 = vmatpush1.bf16.msra.mxu0 %v2430
  %5332 = vmatprep.subr.bf16.mxu0 %v2447
  %5333 = vmatpush1.bf16.msra.mxu0 %v2446
  %5334 = vmatprep.subr.bf16.mxu0 %v2463
  %5335 = vmatpush1.bf16.msra.mxu0 %v2462
  %5336 = vmatprep.mubr.bf16.mxu0 %v4809
  %5337 = vmatmul.mubr.bf16.gmra.mrb[0].mxu0 %v4808
  %v5338 = vpop.f32.mrb[0].mxu0
  %v5339 = vadd.f32 0.0, %v5338
  %v5340 = vpop.f32.mrb[0].mxu0
  %v5341 = vadd.f32 0.0, %v5340
  %v5342 = vpop.f32.mrb[0].mxu0
  %v5343 = vpop.f32.mrb[0].mxu0
  %5344 = vdwg.mxu0
  %5345 = vmatprep.subr.bf16.mxu0 %v2479
  %5346 = vmatpush1.bf16.msra.mxu0 %v2478
  %5347 = vmatprep.subr.bf16.mxu0 %v2495
  %5348 = vmatpush1.bf16.msra.mxu0 %v2494
  %5349 = vmatprep.subr.bf16.mxu0 %v2511
  %5350 = vmatpush1.bf16.msra.mxu0 %v2510
  %5351 = vmatprep.subr.bf16.mxu0 %v2527
  %5352 = vmatpush1.bf16.msra.mxu0 %v2526
  %5353 = vmatprep.subr.bf16.mxu0 %v2543
  %5354 = vmatpush1.bf16.msra.mxu0 %v2542
  %5355 = vmatprep.subr.bf16.mxu0 %v2559
  %5356 = vmatpush1.bf16.msra.mxu0 %v2558
  %5357 = vmatprep.subr.bf16.mxu0 %v2575
  %5358 = vmatpush1.bf16.msra.mxu0 %v2574
  %5359 = vmatprep.subr.bf16.mxu0 %v2591
  %5360 = vmatpush1.bf16.msra.mxu0 %v2590
  %5361 = vmatprep.subr.bf16.mxu0 %v2607
  %5362 = vmatpush1.bf16.msra.mxu0 %v2606
  %5363 = vmatprep.subr.bf16.mxu0 %v2623
  %5364 = vmatpush1.bf16.msra.mxu0 %v2622
  %5365 = vmatprep.subr.bf16.mxu0 %v2639
  %5366 = vmatpush1.bf16.msra.mxu0 %v2638
  %5367 = vmatprep.subr.bf16.mxu0 %v2655
  %5368 = vmatpush1.bf16.msra.mxu0 %v2654
  %5369 = vmatprep.subr.bf16.mxu0 %v2671
  %5370 = vmatpush1.bf16.msra.mxu0 %v2670
  %5371 = vmatprep.subr.bf16.mxu0 %v2687
  %5372 = vmatpush1.bf16.msra.mxu0 %v2686
  %5373 = vmatprep.subr.bf16.mxu0 %v2703
  %5374 = vmatpush1.bf16.msra.mxu0 %v2702
  %5375 = vmatprep.subr.bf16.mxu0 %v2719
  %5376 = vmatpush1.bf16.msra.mxu0 %v2718
  %5377 = vmatprep.mubr.bf16.mxu0 %v4811
  %5378 = vmatmul.mubr.bf16.gmra.mrb[0].mxu0 %v4810
  %v5379 = vpop.f32.mrb[0].mxu0
  %v5380 = vadd.f32 %v5339, %v5379
  %v5381 = vpop.f32.mrb[0].mxu0
  %v5382 = vadd.f32 %v5341, %v5381
  %v5383 = vpop.f32.mrb[0].mxu0
  %v5384 = vpop.f32.mrb[0].mxu0
  %5385 = vdwg.mxu0
  %5386 = vmatprep.subr.bf16.mxu0 %v2225
  %5387 = vmatpush1.bf16.msra.mxu0 %v2224
  %5388 = vmatprep.subr.bf16.mxu0 %v2241
  %5389 = vmatpush1.bf16.msra.mxu0 %v2240
  %5390 = vmatprep.subr.bf16.mxu0 %v2257
  %5391 = vmatpush1.bf16.msra.mxu0 %v2256
  %5392 = vmatprep.subr.bf16.mxu0 %v2273
  %5393 = vmatpush1.bf16.msra.mxu0 %v2272
  %5394 = vmatprep.subr.bf16.mxu0 %v2289
  %5395 = vmatpush1.bf16.msra.mxu0 %v2288
  %5396 = vmatprep.subr.bf16.mxu0 %v2305
  %5397 = vmatpush1.bf16.msra.mxu0 %v2304
  %5398 = vmatprep.subr.bf16.mxu0 %v2321
  %5399 = vmatpush1.bf16.msra.mxu0 %v2320
  %5400 = vmatprep.subr.bf16.mxu0 %v2337
  %5401 = vmatpush1.bf16.msra.mxu0 %v2336
  %5402 = vmatprep.subr.bf16.mxu0 %v2353
  %5403 = vmatpush1.bf16.msra.mxu0 %v2352
  %5404 = vmatprep.subr.bf16.mxu0 %v2369
  %5405 = vmatpush1.bf16.msra.mxu0 %v2368
  %5406 = vmatprep.subr.bf16.mxu0 %v2385
  %5407 = vmatpush1.bf16.msra.mxu0 %v2384
  %5408 = vmatprep.subr.bf16.mxu0 %v2401
  %5409 = vmatpush1.bf16.msra.mxu0 %v2400
  %5410 = vmatprep.subr.bf16.mxu0 %v2417
  %5411 = vmatpush1.bf16.msra.mxu0 %v2416
  %5412 = vmatprep.subr.bf16.mxu0 %v2433
  %5413 = vmatpush1.bf16.msra.mxu0 %v2432
  %5414 = vmatprep.subr.bf16.mxu0 %v2449
  %5415 = vmatpush1.bf16.msra.mxu0 %v2448
  %5416 = vmatprep.subr.bf16.mxu0 %v2465
  %5417 = vmatpush1.bf16.msra.mxu0 %v2464
  %5418 = vmatprep.mubr.bf16.mxu0 %v4809
  %5419 = vmatmul.mubr.bf16.gmra.mrb[0].mxu0 %v4808
  %v5420 = vpop.f32.mrb[0].mxu0
  %v5421 = vadd.f32 0.0, %v5420
  %v5422 = vpop.f32.mrb[0].mxu0
  %v5423 = vadd.f32 0.0, %v5422
  %v5424 = vpop.f32.mrb[0].mxu0
  %v5425 = vpop.f32.mrb[0].mxu0
  %5426 = vdwg.mxu0
  %5427 = vmatprep.subr.bf16.mxu0 %v2481
  %5428 = vmatpush1.bf16.msra.mxu0 %v2480
  %5429 = vmatprep.subr.bf16.mxu0 %v2497
  %5430 = vmatpush1.bf16.msra.mxu0 %v2496
  %5431 = vmatprep.subr.bf16.mxu0 %v2513
  %5432 = vmatpush1.bf16.msra.mxu0 %v2512
  %5433 = vmatprep.subr.bf16.mxu0 %v2529
  %5434 = vmatpush1.bf16.msra.mxu0 %v2528
  %5435 = vmatprep.subr.bf16.mxu0 %v2545
  %5436 = vmatpush1.bf16.msra.mxu0 %v2544
  %5437 = vmatprep.subr.bf16.mxu0 %v2561
  %5438 = vmatpush1.bf16.msra.mxu0 %v2560
  %5439 = vmatprep.subr.bf16.mxu0 %v2577
  %5440 = vmatpush1.bf16.msra.mxu0 %v2576
  %5441 = vmatprep.subr.bf16.mxu0 %v2593
  %5442 = vmatpush1.bf16.msra.mxu0 %v2592
  %5443 = vmatprep.subr.bf16.mxu0 %v2609
  %5444 = vmatpush1.bf16.msra.mxu0 %v2608
  %5445 = vmatprep.subr.bf16.mxu0 %v2625
  %5446 = vmatpush1.bf16.msra.mxu0 %v2624
  %5447 = vmatprep.subr.bf16.mxu0 %v2641
  %5448 = vmatpush1.bf16.msra.mxu0 %v2640
  %5449 = vmatprep.subr.bf16.mxu0 %v2657
  %5450 = vmatpush1.bf16.msra.mxu0 %v2656
  %5451 = vmatprep.subr.bf16.mxu0 %v2673
  %5452 = vmatpush1.bf16.msra.mxu0 %v2672
  %5453 = vmatprep.subr.bf16.mxu0 %v2689
  %5454 = vmatpush1.bf16.msra.mxu0 %v2688
  %5455 = vmatprep.subr.bf16.mxu0 %v2705
  %5456 = vmatpush1.bf16.msra.mxu0 %v2704
  %5457 = vmatprep.subr.bf16.mxu0 %v2721
  %5458 = vmatpush1.bf16.msra.mxu0 %v2720
  %5459 = vmatprep.mubr.bf16.mxu0 %v4811
  %5460 = vmatmul.mubr.bf16.gmra.mrb[0].mxu0 %v4810
  %v5461 = vpop.f32.mrb[0].mxu0
  %v5462 = vadd.f32 %v5421, %v5461
  %v5463 = vpop.f32.mrb[0].mxu0
  %v5464 = vadd.f32 %v5423, %v5463
  %v5465 = vpop.f32.mrb[0].mxu0
  %v5466 = vpop.f32.mrb[0].mxu0
  %5467 = vdwg.mxu0
  %v5468 = vadd.f32 %v4792, %v4888
  %v5469 = vadd.f32 %v4793, %v4890
  %v5470 = vadd.f32 %v4794, %v4970
  %v5471 = vadd.f32 %v4795, %v4972
  %v5472 = vadd.f32 %v4796, %v5052
  %v5473 = vadd.f32 %v4797, %v5054
  %v5474 = vadd.f32 %v4798, %v5134
  %v5475 = vadd.f32 %v4799, %v5136
  %v5476 = vadd.f32 %v4800, %v5216
  %v5477 = vadd.f32 %v4801, %v5218
  %v5478 = vadd.f32 %v4802, %v5298
  %v5479 = vadd.f32 %v4803, %v5300
  %v5480 = vadd.f32 %v4804, %v5380
  %v5481 = vadd.f32 %v4805, %v5382
  %v5482 = vadd.f32 %v4806, %v5462
  %v5483 = vadd.f32 %v4807, %v5464
  %v5484 = vmul.f32 %v5468, 0.5
  %v5485 = vmul.f32 %v5469, 0.5
  %v5486 = vmul.f32 %v5470, 0.5
  %v5487 = vmul.f32 %v5471, 0.5
  %v5488 = vtanh.pop %v5484
  %v5489 = vtanh.pop %v5485
  %v5490 = vtanh.pop %v5486
  %v5491 = vtanh.pop %v5487
  %v5492 = vadd.f32 %v5488, 1.0
  %v5493 = vadd.f32 %v5489, 1.0
  %v5494 = vadd.f32 %v5490, 1.0
  %v5495 = vadd.f32 %v5491, 1.0
  %v5496 = vmul.f32 %v5492, 0.5
  %v5497 = vmul.f32 %v5493, 0.5
  %v5498 = vmul.f32 %v5494, 0.5
  %v5499 = vmul.f32 %v5495, 0.5
  %v5500 = vmul.f32 %v5472, 0.5
  %v5501 = vmul.f32 %v5473, 0.5
  %v5502 = vmul.f32 %v5474, 0.5
  %v5503 = vmul.f32 %v5475, 0.5
  %v5504 = vtanh.pop %v5500
  %v5505 = vtanh.pop %v5501
  %v5506 = vtanh.pop %v5502
  %v5507 = vtanh.pop %v5503
  %v5508 = vadd.f32 %v5504, 1.0
  %v5509 = vadd.f32 %v5505, 1.0
  %v5510 = vadd.f32 %v5506, 1.0
  %v5511 = vadd.f32 %v5507, 1.0
  %v5512 = vmul.f32 %v5508, 0.5
  %v5513 = vmul.f32 %v5509, 0.5
  %v5514 = vmul.f32 %v5510, 0.5
  %v5515 = vmul.f32 %v5511, 0.5
  %v5516 = vtanh.pop %v5476
  %v5517 = vtanh.pop %v5477
  %v5518 = vtanh.pop %v5478
  %v5519 = vtanh.pop %v5479
  %v5520 = vmul.f32 %v5480, 0.5
  %v5521 = vmul.f32 %v5481, 0.5
  %v5522 = vmul.f32 %v5482, 0.5
  %v5523 = vmul.f32 %v5483, 0.5
  %v5524 = vtanh.pop %v5520
  %v5525 = vtanh.pop %v5521
  %v5526 = vtanh.pop %v5522
  %v5527 = vtanh.pop %v5523
  %v5528 = vadd.f32 %v5524, 1.0
  %v5529 = vadd.f32 %v5525, 1.0
  %v5530 = vadd.f32 %v5526, 1.0
  %v5531 = vadd.f32 %v5527, 1.0
  %v5532 = vmul.f32 %v5528, 0.5
  %v5533 = vmul.f32 %v5529, 0.5
  %v5534 = vmul.f32 %v5530, 0.5
  %v5535 = vmul.f32 %v5531, 0.5
  %v5536 = vmul.f32 %v5512, %v4755
  %v5537 = vmul.f32 %v5513, %v4756
  %v5538 = vmul.f32 %v5514, %v4757
  %v5539 = vmul.f32 %v5515, %v4758
  %v5540 = vmul.f32 %v5496, %v5516
  %v5541 = vmul.f32 %v5497, %v5517
  %v5542 = vmul.f32 %v5498, %v5518
  %v5543 = vmul.f32 %v5499, %v5519
  %v5544 = vadd.f32 %v5536, %v5540
  %v5545 = vadd.f32 %v5537, %v5541
  %v5546 = vadd.f32 %v5538, %v5542
  %v5547 = vadd.f32 %v5539, %v5543
  %v5548 = vtanh.pop %v5544
  %v5549 = vtanh.pop %v5545
  %v5550 = vtanh.pop %v5546
  %v5551 = vtanh.pop %v5547
  %v5552 = vmul.f32 %v5532, %v5548
  %v5553 = vmul.f32 %v5533, %v5549
  %v5554 = vmul.f32 %v5534, %v5550
  %v5555 = vmul.f32 %v5535, %v5551
  %s5556 = scalar_lea.vmem %s0, 192
  %v5557 = vld [vmem:[%s5556] sm:$0xff]
  %v5558 = vld [vmem:[%s5556 + $0x8] sm:$0xff]
  %v5559 = vld [vmem:[%s5556 + $0x10] sm:$0xff]
  %v5560 = vld [vmem:[%s5556 + $0x18] sm:$0xff]
  %v5561 = vld [vmem:[%s5556 + $0x20] sm:$0xff]
  %v5562 = vld [vmem:[%s5556 + $0x28] sm:$0xff]
  %v5563 = vld [vmem:[%s5556 + $0x30] sm:$0xff]
  %v5564 = vld [vmem:[%s5556 + $0x38] sm:$0xff]
  %v5565 = vunpack.c.l.bf16 %v5557
  %v5566 = vunpack.c.h.bf16 %v5557
  %v5567 = vunpack.c.l.bf16 %v5558
  %v5568 = vunpack.c.h.bf16 %v5558
  %v5569 = vunpack.c.l.bf16 %v5559
  %v5570 = vunpack.c.h.bf16 %v5559
  %v5571 = vunpack.c.l.bf16 %v5560
  %v5572 = vunpack.c.h.bf16 %v5560
  %v5573 = vunpack.c.l.bf16 %v5561
  %v5574 = vunpack.c.h.bf16 %v5561
  %v5575 = vunpack.c.l.bf16 %v5562
  %v5576 = vunpack.c.h.bf16 %v5562
  %v5577 = vunpack.c.l.bf16 %v5563
  %v5578 = vunpack.c.h.bf16 %v5563
  %v5579 = vunpack.c.l.bf16 %v5564
  %v5580 = vunpack.c.h.bf16 %v5564
  %v5581 = vadd.f32 %v5565, %v577
  %v5582 = vadd.f32 %v5566, %v581
  %v5583 = vadd.f32 %v5567, %v585
  %v5584 = vadd.f32 %v5568, %v589
  %v5585 = vadd.f32 %v5569, %v593
  %v5586 = vadd.f32 %v5570, %v597
  %v5587 = vadd.f32 %v5571, %v601
  %v5588 = vadd.f32 %v5572, %v605
  %v5589 = vadd.f32 %v5573, %v609
  %v5590 = vadd.f32 %v5574, %v613
  %v5591 = vadd.f32 %v5575, %v617
  %v5592 = vadd.f32 %v5576, %v621
  %v5593 = vadd.f32 %v5577, %v625
  %v5594 = vadd.f32 %v5578, %v629
  %v5595 = vadd.f32 %v5579, %v633
  %v5596 = vadd.f32 %v5580, %v637
  %v5597 = vpack.c.bf16 %v5552, %v5552
  %v5598 = vpack.c.bf16 %v5553, %v5553
  %v5599 = vpack.c.bf16 %v5554, %v5554
  %v5600 = vpack.c.bf16 %v5555, %v5555
  %5601 = vmatprep.subr.bf16.mxu0 %v2211
  %5602 = vmatpush1.bf16.msra.mxu0 %v2210
  %5603 = vmatprep.subr.bf16.mxu0 %v2227
  %5604 = vmatpush1.bf16.msra.mxu0 %v2226
  %5605 = vmatprep.subr.bf16.mxu0 %v2243
  %5606 = vmatpush1.bf16.msra.mxu0 %v2242
  %5607 = vmatprep.subr.bf16.mxu0 %v2259
  %5608 = vmatpush1.bf16.msra.mxu0 %v2258
  %5609 = vmatprep.subr.bf16.mxu0 %v2275
  %5610 = vmatpush1.bf16.msra.mxu0 %v2274
  %5611 = vmatprep.subr.bf16.mxu0 %v2291
  %5612 = vmatpush1.bf16.msra.mxu0 %v2290
  %5613 = vmatprep.subr.bf16.mxu0 %v2307
  %5614 = vmatpush1.bf16.msra.mxu0 %v2306
  %5615 = vmatprep.subr.bf16.mxu0 %v2323
  %5616 = vmatpush1.bf16.msra.mxu0 %v2322
  %5617 = vmatprep.subr.bf16.mxu0 %v2339
  %5618 = vmatpush1.bf16.msra.mxu0 %v2338
  %5619 = vmatprep.subr.bf16.mxu0 %v2355
  %5620 = vmatpush1.bf16.msra.mxu0 %v2354
  %5621 = vmatprep.subr.bf16.mxu0 %v2371
  %5622 = vmatpush1.bf16.msra.mxu0 %v2370
  %5623 = vmatprep.subr.bf16.mxu0 %v2387
  %5624 = vmatpush1.bf16.msra.mxu0 %v2386
  %5625 = vmatprep.subr.bf16.mxu0 %v2403
  %5626 = vmatpush1.bf16.msra.mxu0 %v2402
  %5627 = vmatprep.subr.bf16.mxu0 %v2419
  %5628 = vmatpush1.bf16.msra.mxu0 %v2418
  %5629 = vmatprep.subr.bf16.mxu0 %v2435
  %5630 = vmatpush1.bf16.msra.mxu0 %v2434
  %5631 = vmatprep.subr.bf16.mxu0 %v2451
  %5632 = vmatpush1.bf16.msra.mxu0 %v2450
  %5633 = vmatprep.mubr.bf16.mxu0 %v5598
  %5634 = vmatmul.mubr.bf16.gmra.mrb[0].mxu0 %v5597
  %v5635 = vpop.f32.mrb[0].mxu0
  %v5636 = vadd.f32 0.0, %v5635
  %v5637 = vpop.f32.mrb[0].mxu0
  %v5638 = vadd.f32 0.0, %v5637
  %v5639 = vpop.f32.mrb[0].mxu0
  %v5640 = vpop.f32.mrb[0].mxu0
  %5641 = vdwg.mxu0
  %5642 = vmatprep.subr.bf16.mxu0 %v2467
  %5643 = vmatpush1.bf16.msra.mxu0 %v2466
  %5644 = vmatprep.subr.bf16.mxu0 %v2483
  %5645 = vmatpush1.bf16.msra.mxu0 %v2482
  %5646 = vmatprep.subr.bf16.mxu0 %v2499
  %5647 = vmatpush1.bf16.msra.mxu0 %v2498
  %5648 = vmatprep.subr.bf16.mxu0 %v2515
  %5649 = vmatpush1.bf16.msra.mxu0 %v2514
  %5650 = vmatprep.subr.bf16.mxu0 %v2531
  %5651 = vmatpush1.bf16.msra.mxu0 %v2530
  %5652 = vmatprep.subr.bf16.mxu0 %v2547
  %5653 = vmatpush1.bf16.msra.mxu0 %v2546
  %5654 = vmatprep.subr.bf16.mxu0 %v2563
  %5655 = vmatpush1.bf16.msra.mxu0 %v2562
  %5656 = vmatprep.subr.bf16.mxu0 %v2579
  %5657 = vmatpush1.bf16.msra.mxu0 %v2578
  %5658 = vmatprep.subr.bf16.mxu0 %v2595
  %5659 = vmatpush1.bf16.msra.mxu0 %v2594
  %5660 = vmatprep.subr.bf16.mxu0 %v2611
  %5661 = vmatpush1.bf16.msra.mxu0 %v2610
  %5662 = vmatprep.subr.bf16.mxu0 %v2627
  %5663 = vmatpush1.bf16.msra.mxu0 %v2626
  %5664 = vmatprep.subr.bf16.mxu0 %v2643
  %5665 = vmatpush1.bf16.msra.mxu0 %v2642
  %5666 = vmatprep.subr.bf16.mxu0 %v2659
  %5667 = vmatpush1.bf16.msra.mxu0 %v2658
  %5668 = vmatprep.subr.bf16.mxu0 %v2675
  %5669 = vmatpush1.bf16.msra.mxu0 %v2674
  %5670 = vmatprep.subr.bf16.mxu0 %v2691
  %5671 = vmatpush1.bf16.msra.mxu0 %v2690
  %5672 = vmatprep.subr.bf16.mxu0 %v2707
  %5673 = vmatpush1.bf16.msra.mxu0 %v2706
  %5674 = vmatprep.mubr.bf16.mxu0 %v5600
  %5675 = vmatmul.mubr.bf16.gmra.mrb[0].mxu0 %v5599
  %v5676 = vpop.f32.mrb[0].mxu0
  %v5677 = vadd.f32 %v5636, %v5676
  %v5678 = vpop.f32.mrb[0].mxu0
  %v5679 = vadd.f32 %v5638, %v5678
  %v5680 = vpop.f32.mrb[0].mxu0
  %v5681 = vpop.f32.mrb[0].mxu0
  %5682 = vdwg.mxu0
  %5683 = vmatprep.subr.bf16.mxu0 %v2213
  %5684 = vmatpush1.bf16.msra.mxu0 %v2212
  %5685 = vmatprep.subr.bf16.mxu0 %v2229
  %5686 = vmatpush1.bf16.msra.mxu0 %v2228
  %5687 = vmatprep.subr.bf16.mxu0 %v2245
  %5688 = vmatpush1.bf16.msra.mxu0 %v2244
  %5689 = vmatprep.subr.bf16.mxu0 %v2261
  %5690 = vmatpush1.bf16.msra.mxu0 %v2260
  %5691 = vmatprep.subr.bf16.mxu0 %v2277
  %5692 = vmatpush1.bf16.msra.mxu0 %v2276
  %5693 = vmatprep.subr.bf16.mxu0 %v2293
  %5694 = vmatpush1.bf16.msra.mxu0 %v2292
  %5695 = vmatprep.subr.bf16.mxu0 %v2309
  %5696 = vmatpush1.bf16.msra.mxu0 %v2308
  %5697 = vmatprep.subr.bf16.mxu0 %v2325
  %5698 = vmatpush1.bf16.msra.mxu0 %v2324
  %5699 = vmatprep.subr.bf16.mxu0 %v2341
  %5700 = vmatpush1.bf16.msra.mxu0 %v2340
  %5701 = vmatprep.subr.bf16.mxu0 %v2357
  %5702 = vmatpush1.bf16.msra.mxu0 %v2356
  %5703 = vmatprep.subr.bf16.mxu0 %v2373
  %5704 = vmatpush1.bf16.msra.mxu0 %v2372
  %5705 = vmatprep.subr.bf16.mxu0 %v2389
  %5706 = vmatpush1.bf16.msra.mxu0 %v2388
  %5707 = vmatprep.subr.bf16.mxu0 %v2405
  %5708 = vmatpush1.bf16.msra.mxu0 %v2404
  %5709 = vmatprep.subr.bf16.mxu0 %v2421
  %5710 = vmatpush1.bf16.msra.mxu0 %v2420
  %5711 = vmatprep.subr.bf16.mxu0 %v2437
  %5712 = vmatpush1.bf16.msra.mxu0 %v2436
  %5713 = vmatprep.subr.bf16.mxu0 %v2453
  %5714 = vmatpush1.bf16.msra.mxu0 %v2452
  %5715 = vmatprep.mubr.bf16.mxu0 %v5598
  %5716 = vmatmul.mubr.bf16.gmra.mrb[0].mxu0 %v5597
  %v5717 = vpop.f32.mrb[0].mxu0
  %v5718 = vadd.f32 0.0, %v5717
  %v5719 = vpop.f32.mrb[0].mxu0
  %v5720 = vadd.f32 0.0, %v5719
  %v5721 = vpop.f32.mrb[0].mxu0
  %v5722 = vpop.f32.mrb[0].mxu0
  %5723 = vdwg.mxu0
  %5724 = vmatprep.subr.bf16.mxu0 %v2469
  %5725 = vmatpush1.bf16.msra.mxu0 %v2468
  %5726 = vmatprep.subr.bf16.mxu0 %v2485
  %5727 = vmatpush1.bf16.msra.mxu0 %v2484
  %5728 = vmatprep.subr.bf16.mxu0 %v2501
  %5729 = vmatpush1.bf16.msra.mxu0 %v2500
  %5730 = vmatprep.subr.bf16.mxu0 %v2517
  %5731 = vmatpush1.bf16.msra.mxu0 %v2516
  %5732 = vmatprep.subr.bf16.mxu0 %v2533
  %5733 = vmatpush1.bf16.msra.mxu0 %v2532
  %5734 = vmatprep.subr.bf16.mxu0 %v2549
  %5735 = vmatpush1.bf16.msra.mxu0 %v2548
  %5736 = vmatprep.subr.bf16.mxu0 %v2565
  %5737 = vmatpush1.bf16.msra.mxu0 %v2564
  %5738 = vmatprep.subr.bf16.mxu0 %v2581
  %5739 = vmatpush1.bf16.msra.mxu0 %v2580
  %5740 = vmatprep.subr.bf16.mxu0 %v2597
  %5741 = vmatpush1.bf16.msra.mxu0 %v2596
  %5742 = vmatprep.subr.bf16.mxu0 %v2613
  %5743 = vmatpush1.bf16.msra.mxu0 %v2612
  %5744 = vmatprep.subr.bf16.mxu0 %v2629
  %5745 = vmatpush1.bf16.msra.mxu0 %v2628
  %5746 = vmatprep.subr.bf16.mxu0 %v2645
  %5747 = vmatpush1.bf16.msra.mxu0 %v2644
  %5748 = vmatprep.subr.bf16.mxu0 %v2661
  %5749 = vmatpush1.bf16.msra.mxu0 %v2660
  %5750 = vmatprep.subr.bf16.mxu0 %v2677
  %5751 = vmatpush1.bf16.msra.mxu0 %v2676
  %5752 = vmatprep.subr.bf16.mxu0 %v2693
  %5753 = vmatpush1.bf16.msra.mxu0 %v2692
  %5754 = vmatprep.subr.bf16.mxu0 %v2709
  %5755 = vmatpush1.bf16.msra.mxu0 %v2708
  %5756 = vmatprep.mubr.bf16.mxu0 %v5600
  %5757 = vmatmul.mubr.bf16.gmra.mrb[0].mxu0 %v5599
  %v5758 = vpop.f32.mrb[0].mxu0
  %v5759 = vadd.f32 %v5718, %v5758
  %v5760 = vpop.f32.mrb[0].mxu0
  %v5761 = vadd.f32 %v5720, %v5760
  %v5762 = vpop.f32.mrb[0].mxu0
  %v5763 = vpop.f32.mrb[0].mxu0
  %5764 = vdwg.mxu0
  %5765 = vmatprep.subr.bf16.mxu0 %v2215
  %5766 = vmatpush1.bf16.msra.mxu0 %v2214
  %5767 = vmatprep.subr.bf16.mxu0 %v2231
  %5768 = vmatpush1.bf16.msra.mxu0 %v2230
  %5769 = vmatprep.subr.bf16.mxu0 %v2247
  %5770 = vmatpush1.bf16.msra.mxu0 %v2246
  %5771 = vmatprep.subr.bf16.mxu0 %v2263
  %5772 = vmatpush1.bf16.msra.mxu0 %v2262
  %5773 = vmatprep.subr.bf16.mxu0 %v2279
  %5774 = vmatpush1.bf16.msra.mxu0 %v2278
  %5775 = vmatprep.subr.bf16.mxu0 %v2295
  %5776 = vmatpush1.bf16.msra.mxu0 %v2294
  %5777 = vmatprep.subr.bf16.mxu0 %v2311
  %5778 = vmatpush1.bf16.msra.mxu0 %v2310
  %5779 = vmatprep.subr.bf16.mxu0 %v2327
  %5780 = vmatpush1.bf16.msra.mxu0 %v2326
  %5781 = vmatprep.subr.bf16.mxu0 %v2343
  %5782 = vmatpush1.bf16.msra.mxu0 %v2342
  %5783 = vmatprep.subr.bf16.mxu0 %v2359
  %5784 = vmatpush1.bf16.msra.mxu0 %v2358
  %5785 = vmatprep.subr.bf16.mxu0 %v2375
  %5786 = vmatpush1.bf16.msra.mxu0 %v2374
  %5787 = vmatprep.subr.bf16.mxu0 %v2391
  %5788 = vmatpush1.bf16.msra.mxu0 %v2390
  %5789 = vmatprep.subr.bf16.mxu0 %v2407
  %5790 = vmatpush1.bf16.msra.mxu0 %v2406
  %5791 = vmatprep.subr.bf16.mxu0 %v2423
  %5792 = vmatpush1.bf16.msra.mxu0 %v2422
  %5793 = vmatprep.subr.bf16.mxu0 %v2439
  %5794 = vmatpush1.bf16.msra.mxu0 %v2438
  %5795 = vmatprep.subr.bf16.mxu0 %v2455
  %5796 = vmatpush1.bf16.msra.mxu0 %v2454
  %5797 = vmatprep.mubr.bf16.mxu0 %v5598
  %5798 = vmatmul.mubr.bf16.gmra.mrb[0].mxu0 %v5597
  %v5799 = vpop.f32.mrb[0].mxu0
  %v5800 = vadd.f32 0.0, %v5799
  %v5801 = vpop.f32.mrb[0].mxu0
  %v5802 = vadd.f32 0.0, %v5801
  %v5803 = vpop.f32.mrb[0].mxu0
  %v5804 = vpop.f32.mrb[0].mxu0
  %5805 = vdwg.mxu0
  %5806 = vmatprep.subr.bf16.mxu0 %v2471
  %5807 = vmatpush1.bf16.msra.mxu0 %v2470
  %5808 = vmatprep.subr.bf16.mxu0 %v2487
  %5809 = vmatpush1.bf16.msra.mxu0 %v2486
  %5810 = vmatprep.subr.bf16.mxu0 %v2503
  %5811 = vmatpush1.bf16.msra.mxu0 %v2502
  %5812 = vmatprep.subr.bf16.mxu0 %v2519
  %5813 = vmatpush1.bf16.msra.mxu0 %v2518
  %5814 = vmatprep.subr.bf16.mxu0 %v2535
  %5815 = vmatpush1.bf16.msra.mxu0 %v2534
  %5816 = vmatprep.subr.bf16.mxu0 %v2551
  %5817 = vmatpush1.bf16.msra.mxu0 %v2550
  %5818 = vmatprep.subr.bf16.mxu0 %v2567
  %5819 = vmatpush1.bf16.msra.mxu0 %v2566
  %5820 = vmatprep.subr.bf16.mxu0 %v2583
  %5821 = vmatpush1.bf16.msra.mxu0 %v2582
  %5822 = vmatprep.subr.bf16.mxu0 %v2599
  %5823 = vmatpush1.bf16.msra.mxu0 %v2598
  %5824 = vmatprep.subr.bf16.mxu0 %v2615
  %5825 = vmatpush1.bf16.msra.mxu0 %v2614
  %5826 = vmatprep.subr.bf16.mxu0 %v2631
  %5827 = vmatpush1.bf16.msra.mxu0 %v2630
  %5828 = vmatprep.subr.bf16.mxu0 %v2647
  %5829 = vmatpush1.bf16.msra.mxu0 %v2646
  %5830 = vmatprep.subr.bf16.mxu0 %v2663
  %5831 = vmatpush1.bf16.msra.mxu0 %v2662
  %5832 = vmatprep.subr.bf16.mxu0 %v2679
  %5833 = vmatpush1.bf16.msra.mxu0 %v2678
  %5834 = vmatprep.subr.bf16.mxu0 %v2695
  %5835 = vmatpush1.bf16.msra.mxu0 %v2694
  %5836 = vmatprep.subr.bf16.mxu0 %v2711
  %5837 = vmatpush1.bf16.msra.mxu0 %v2710
  %5838 = vmatprep.mubr.bf16.mxu0 %v5600
  %5839 = vmatmul.mubr.bf16.gmra.mrb[0].mxu0 %v5599
  %v5840 = vpop.f32.mrb[0].mxu0
  %v5841 = vadd.f32 %v5800, %v5840
  %v5842 = vpop.f32.mrb[0].mxu0
  %v5843 = vadd.f32 %v5802, %v5842
  %v5844 = vpop.f32.mrb[0].mxu0
  %v5845 = vpop.f32.mrb[0].mxu0
  %5846 = vdwg.mxu0
  %5847 = vmatprep.subr.bf16.mxu0 %v2217
  %5848 = vmatpush1.bf16.msra.mxu0 %v2216
  %5849 = vmatprep.subr.bf16.mxu0 %v2233
  %5850 = vmatpush1.bf16.msra.mxu0 %v2232
  %5851 = vmatprep.subr.bf16.mxu0 %v2249
  %5852 = vmatpush1.bf16.msra.mxu0 %v2248
  %5853 = vmatprep.subr.bf16.mxu0 %v2265
  %5854 = vmatpush1.bf16.msra.mxu0 %v2264
  %5855 = vmatprep.subr.bf16.mxu0 %v2281
  %5856 = vmatpush1.bf16.msra.mxu0 %v2280
  %5857 = vmatprep.subr.bf16.mxu0 %v2297
  %5858 = vmatpush1.bf16.msra.mxu0 %v2296
  %5859 = vmatprep.subr.bf16.mxu0 %v2313
  %5860 = vmatpush1.bf16.msra.mxu0 %v2312
  %5861 = vmatprep.subr.bf16.mxu0 %v2329
  %5862 = vmatpush1.bf16.msra.mxu0 %v2328
  %5863 = vmatprep.subr.bf16.mxu0 %v2345
  %5864 = vmatpush1.bf16.msra.mxu0 %v2344
  %5865 = vmatprep.subr.bf16.mxu0 %v2361
  %5866 = vmatpush1.bf16.msra.mxu0 %v2360
  %5867 = vmatprep.subr.bf16.mxu0 %v2377
  %5868 = vmatpush1.bf16.msra.mxu0 %v2376
  %5869 = vmatprep.subr.bf16.mxu0 %v2393
  %5870 = vmatpush1.bf16.msra.mxu0 %v2392
  %5871 = vmatprep.subr.bf16.mxu0 %v2409
  %5872 = vmatpush1.bf16.msra.mxu0 %v2408
  %5873 = vmatprep.subr.bf16.mxu0 %v2425
  %5874 = vmatpush1.bf16.msra.mxu0 %v2424
  %5875 = vmatprep.subr.bf16.mxu0 %v2441
  %5876 = vmatpush1.bf16.msra.mxu0 %v2440
  %5877 = vmatprep.subr.bf16.mxu0 %v2457
  %5878 = vmatpush1.bf16.msra.mxu0 %v2456
  %5879 = vmatprep.mubr.bf16.mxu0 %v5598
  %5880 = vmatmul.mubr.bf16.gmra.mrb[0].mxu0 %v5597
  %v5881 = vpop.f32.mrb[0].mxu0
  %v5882 = vadd.f32 0.0, %v5881
  %v5883 = vpop.f32.mrb[0].mxu0
  %v5884 = vadd.f32 0.0, %v5883
  %v5885 = vpop.f32.mrb[0].mxu0
  %v5886 = vpop.f32.mrb[0].mxu0
  %5887 = vdwg.mxu0
  %5888 = vmatprep.subr.bf16.mxu0 %v2473
  %5889 = vmatpush1.bf16.msra.mxu0 %v2472
  %5890 = vmatprep.subr.bf16.mxu0 %v2489
  %5891 = vmatpush1.bf16.msra.mxu0 %v2488
  %5892 = vmatprep.subr.bf16.mxu0 %v2505
  %5893 = vmatpush1.bf16.msra.mxu0 %v2504
  %5894 = vmatprep.subr.bf16.mxu0 %v2521
  %5895 = vmatpush1.bf16.msra.mxu0 %v2520
  %5896 = vmatprep.subr.bf16.mxu0 %v2537
  %5897 = vmatpush1.bf16.msra.mxu0 %v2536
  %5898 = vmatprep.subr.bf16.mxu0 %v2553
  %5899 = vmatpush1.bf16.msra.mxu0 %v2552
  %5900 = vmatprep.subr.bf16.mxu0 %v2569
  %5901 = vmatpush1.bf16.msra.mxu0 %v2568
  %5902 = vmatprep.subr.bf16.mxu0 %v2585
  %5903 = vmatpush1.bf16.msra.mxu0 %v2584
  %5904 = vmatprep.subr.bf16.mxu0 %v2601
  %5905 = vmatpush1.bf16.msra.mxu0 %v2600
  %5906 = vmatprep.subr.bf16.mxu0 %v2617
  %5907 = vmatpush1.bf16.msra.mxu0 %v2616
  %5908 = vmatprep.subr.bf16.mxu0 %v2633
  %5909 = vmatpush1.bf16.msra.mxu0 %v2632
  %5910 = vmatprep.subr.bf16.mxu0 %v2649
  %5911 = vmatpush1.bf16.msra.mxu0 %v2648
  %5912 = vmatprep.subr.bf16.mxu0 %v2665
  %5913 = vmatpush1.bf16.msra.mxu0 %v2664
  %5914 = vmatprep.subr.bf16.mxu0 %v2681
  %5915 = vmatpush1.bf16.msra.mxu0 %v2680
  %5916 = vmatprep.subr.bf16.mxu0 %v2697
  %5917 = vmatpush1.bf16.msra.mxu0 %v2696
  %5918 = vmatprep.subr.bf16.mxu0 %v2713
  %5919 = vmatpush1.bf16.msra.mxu0 %v2712
  %5920 = vmatprep.mubr.bf16.mxu0 %v5600
  %5921 = vmatmul.mubr.bf16.gmra.mrb[0].mxu0 %v5599
  %v5922 = vpop.f32.mrb[0].mxu0
  %v5923 = vadd.f32 %v5882, %v5922
  %v5924 = vpop.f32.mrb[0].mxu0
  %v5925 = vadd.f32 %v5884, %v5924
  %v5926 = vpop.f32.mrb[0].mxu0
  %v5927 = vpop.f32.mrb[0].mxu0
  %5928 = vdwg.mxu0
  %5929 = vmatprep.subr.bf16.mxu0 %v2219
  %5930 = vmatpush1.bf16.msra.mxu0 %v2218
  %5931 = vmatprep.subr.bf16.mxu0 %v2235
  %5932 = vmatpush1.bf16.msra.mxu0 %v2234
  %5933 = vmatprep.subr.bf16.mxu0 %v2251
  %5934 = vmatpush1.bf16.msra.mxu0 %v2250
  %5935 = vmatprep.subr.bf16.mxu0 %v2267
  %5936 = vmatpush1.bf16.msra.mxu0 %v2266
  %5937 = vmatprep.subr.bf16.mxu0 %v2283
  %5938 = vmatpush1.bf16.msra.mxu0 %v2282
  %5939 = vmatprep.subr.bf16.mxu0 %v2299
  %5940 = vmatpush1.bf16.msra.mxu0 %v2298
  %5941 = vmatprep.subr.bf16.mxu0 %v2315
  %5942 = vmatpush1.bf16.msra.mxu0 %v2314
  %5943 = vmatprep.subr.bf16.mxu0 %v2331
  %5944 = vmatpush1.bf16.msra.mxu0 %v2330
  %5945 = vmatprep.subr.bf16.mxu0 %v2347
  %5946 = vmatpush1.bf16.msra.mxu0 %v2346
  %5947 = vmatprep.subr.bf16.mxu0 %v2363
  %5948 = vmatpush1.bf16.msra.mxu0 %v2362
  %5949 = vmatprep.subr.bf16.mxu0 %v2379
  %5950 = vmatpush1.bf16.msra.mxu0 %v2378
  %5951 = vmatprep.subr.bf16.mxu0 %v2395
  %5952 = vmatpush1.bf16.msra.mxu0 %v2394
  %5953 = vmatprep.subr.bf16.mxu0 %v2411
  %5954 = vmatpush1.bf16.msra.mxu0 %v2410
  %5955 = vmatprep.subr.bf16.mxu0 %v2427
  %5956 = vmatpush1.bf16.msra.mxu0 %v2426
  %5957 = vmatprep.subr.bf16.mxu0 %v2443
  %5958 = vmatpush1.bf16.msra.mxu0 %v2442
  %5959 = vmatprep.subr.bf16.mxu0 %v2459
  %5960 = vmatpush1.bf16.msra.mxu0 %v2458
  %5961 = vmatprep.mubr.bf16.mxu0 %v5598
  %5962 = vmatmul.mubr.bf16.gmra.mrb[0].mxu0 %v5597
  %v5963 = vpop.f32.mrb[0].mxu0
  %v5964 = vadd.f32 0.0, %v5963
  %v5965 = vpop.f32.mrb[0].mxu0
  %v5966 = vadd.f32 0.0, %v5965
  %v5967 = vpop.f32.mrb[0].mxu0
  %v5968 = vpop.f32.mrb[0].mxu0
  %5969 = vdwg.mxu0
  %5970 = vmatprep.subr.bf16.mxu0 %v2475
  %5971 = vmatpush1.bf16.msra.mxu0 %v2474
  %5972 = vmatprep.subr.bf16.mxu0 %v2491
  %5973 = vmatpush1.bf16.msra.mxu0 %v2490
  %5974 = vmatprep.subr.bf16.mxu0 %v2507
  %5975 = vmatpush1.bf16.msra.mxu0 %v2506
  %5976 = vmatprep.subr.bf16.mxu0 %v2523
  %5977 = vmatpush1.bf16.msra.mxu0 %v2522
  %5978 = vmatprep.subr.bf16.mxu0 %v2539
  %5979 = vmatpush1.bf16.msra.mxu0 %v2538
  %5980 = vmatprep.subr.bf16.mxu0 %v2555
  %5981 = vmatpush1.bf16.msra.mxu0 %v2554
  %5982 = vmatprep.subr.bf16.mxu0 %v2571
  %5983 = vmatpush1.bf16.msra.mxu0 %v2570
  %5984 = vmatprep.subr.bf16.mxu0 %v2587
  %5985 = vmatpush1.bf16.msra.mxu0 %v2586
  %5986 = vmatprep.subr.bf16.mxu0 %v2603
  %5987 = vmatpush1.bf16.msra.mxu0 %v2602
  %5988 = vmatprep.subr.bf16.mxu0 %v2619
  %5989 = vmatpush1.bf16.msra.mxu0 %v2618
  %5990 = vmatprep.subr.bf16.mxu0 %v2635
  %5991 = vmatpush1.bf16.msra.mxu0 %v2634
  %5992 = vmatprep.subr.bf16.mxu0 %v2651
  %5993 = vmatpush1.bf16.msra.mxu0 %v2650
  %5994 = vmatprep.subr.bf16.mxu0 %v2667
  %5995 = vmatpush1.bf16.msra.mxu0 %v2666
  %5996 = vmatprep.subr.bf16.mxu0 %v2683
  %5997 = vmatpush1.bf16.msra.mxu0 %v2682
  %5998 = vmatprep.subr.bf16.mxu0 %v2699
  %5999 = vmatpush1.bf16.msra.mxu0 %v2698
  %6000 = vmatprep.subr.bf16.mxu0 %v2715
  %6001 = vmatpush1.bf16.msra.mxu0 %v2714
  %6002 = vmatprep.mubr.bf16.mxu0 %v5600
  %6003 = vmatmul.mubr.bf16.gmra.mrb[0].mxu0 %v5599
  %v6004 = vpop.f32.mrb[0].mxu0
  %v6005 = vadd.f32 %v5964, %v6004
  %v6006 = vpop.f32.mrb[0].mxu0
  %v6007 = vadd.f32 %v5966, %v6006
  %v6008 = vpop.f32.mrb[0].mxu0
  %v6009 = vpop.f32.mrb[0].mxu0
  %6010 = vdwg.mxu0
  %6011 = vmatprep.subr.bf16.mxu0 %v2221
  %6012 = vmatpush1.bf16.msra.mxu0 %v2220
  %6013 = vmatprep.subr.bf16.mxu0 %v2237
  %6014 = vmatpush1.bf16.msra.mxu0 %v2236
  %6015 = vmatprep.subr.bf16.mxu0 %v2253
  %6016 = vmatpush1.bf16.msra.mxu0 %v2252
  %6017 = vmatprep.subr.bf16.mxu0 %v2269
  %6018 = vmatpush1.bf16.msra.mxu0 %v2268
  %6019 = vmatprep.subr.bf16.mxu0 %v2285
  %6020 = vmatpush1.bf16.msra.mxu0 %v2284
  %6021 = vmatprep.subr.bf16.mxu0 %v2301
  %6022 = vmatpush1.bf16.msra.mxu0 %v2300
  %6023 = vmatprep.subr.bf16.mxu0 %v2317
  %6024 = vmatpush1.bf16.msra.mxu0 %v2316
  %6025 = vmatprep.subr.bf16.mxu0 %v2333
  %6026 = vmatpush1.bf16.msra.mxu0 %v2332
  %6027 = vmatprep.subr.bf16.mxu0 %v2349
  %6028 = vmatpush1.bf16.msra.mxu0 %v2348
  %6029 = vmatprep.subr.bf16.mxu0 %v2365
  %6030 = vmatpush1.bf16.msra.mxu0 %v2364
  %6031 = vmatprep.subr.bf16.mxu0 %v2381
  %6032 = vmatpush1.bf16.msra.mxu0 %v2380
  %6033 = vmatprep.subr.bf16.mxu0 %v2397
  %6034 = vmatpush1.bf16.msra.mxu0 %v2396
  %6035 = vmatprep.subr.bf16.mxu0 %v2413
  %6036 = vmatpush1.bf16.msra.mxu0 %v2412
  %6037 = vmatprep.subr.bf16.mxu0 %v2429
  %6038 = vmatpush1.bf16.msra.mxu0 %v2428
  %6039 = vmatprep.subr.bf16.mxu0 %v2445
  %6040 = vmatpush1.bf16.msra.mxu0 %v2444
  %6041 = vmatprep.subr.bf16.mxu0 %v2461
  %6042 = vmatpush1.bf16.msra.mxu0 %v2460
  %6043 = vmatprep.mubr.bf16.mxu0 %v5598
  %6044 = vmatmul.mubr.bf16.gmra.mrb[0].mxu0 %v5597
  %v6045 = vpop.f32.mrb[0].mxu0
  %v6046 = vadd.f32 0.0, %v6045
  %v6047 = vpop.f32.mrb[0].mxu0
  %v6048 = vadd.f32 0.0, %v6047
  %v6049 = vpop.f32.mrb[0].mxu0
  %v6050 = vpop.f32.mrb[0].mxu0
  %6051 = vdwg.mxu0
  %6052 = vmatprep.subr.bf16.mxu0 %v2477
  %6053 = vmatpush1.bf16.msra.mxu0 %v2476
  %6054 = vmatprep.subr.bf16.mxu0 %v2493
  %6055 = vmatpush1.bf16.msra.mxu0 %v2492
  %6056 = vmatprep.subr.bf16.mxu0 %v2509
  %6057 = vmatpush1.bf16.msra.mxu0 %v2508
  %6058 = vmatprep.subr.bf16.mxu0 %v2525
  %6059 = vmatpush1.bf16.msra.mxu0 %v2524
  %6060 = vmatprep.subr.bf16.mxu0 %v2541
  %6061 = vmatpush1.bf16.msra.mxu0 %v2540
  %6062 = vmatprep.subr.bf16.mxu0 %v2557
  %6063 = vmatpush1.bf16.msra.mxu0 %v2556
  %6064 = vmatprep.subr.bf16.mxu0 %v2573
  %6065 = vmatpush1.bf16.msra.mxu0 %v2572
  %6066 = vmatprep.subr.bf16.mxu0 %v2589
  %6067 = vmatpush1.bf16.msra.mxu0 %v2588
  %6068 = vmatprep.subr.bf16.mxu0 %v2605
  %6069 = vmatpush1.bf16.msra.mxu0 %v2604
  %6070 = vmatprep.subr.bf16.mxu0 %v2621
  %6071 = vmatpush1.bf16.msra.mxu0 %v2620
  %6072 = vmatprep.subr.bf16.mxu0 %v2637
  %6073 = vmatpush1.bf16.msra.mxu0 %v2636
  %6074 = vmatprep.subr.bf16.mxu0 %v2653
  %6075 = vmatpush1.bf16.msra.mxu0 %v2652
  %6076 = vmatprep.subr.bf16.mxu0 %v2669
  %6077 = vmatpush1.bf16.msra.mxu0 %v2668
  %6078 = vmatprep.subr.bf16.mxu0 %v2685
  %6079 = vmatpush1.bf16.msra.mxu0 %v2684
  %6080 = vmatprep.subr.bf16.mxu0 %v2701
  %6081 = vmatpush1.bf16.msra.mxu0 %v2700
  %6082 = vmatprep.subr.bf16.mxu0 %v2717
  %6083 = vmatpush1.bf16.msra.mxu0 %v2716
  %6084 = vmatprep.mubr.bf16.mxu0 %v5600
  %6085 = vmatmul.mubr.bf16.gmra.mrb[0].mxu0 %v5599
  %v6086 = vpop.f32.mrb[0].mxu0
  %v6087 = vadd.f32 %v6046, %v6086
  %v6088 = vpop.f32.mrb[0].mxu0
  %v6089 = vadd.f32 %v6048, %v6088
  %v6090 = vpop.f32.mrb[0].mxu0
  %v6091 = vpop.f32.mrb[0].mxu0
  %6092 = vdwg.mxu0
  %6093 = vmatprep.subr.bf16.mxu0 %v2223
  %6094 = vmatpush1.bf16.msra.mxu0 %v2222
  %6095 = vmatprep.subr.bf16.mxu0 %v2239
  %6096 = vmatpush1.bf16.msra.mxu0 %v2238
  %6097 = vmatprep.subr.bf16.mxu0 %v2255
  %6098 = vmatpush1.bf16.msra.mxu0 %v2254
  %6099 = vmatprep.subr.bf16.mxu0 %v2271
  %6100 = vmatpush1.bf16.msra.mxu0 %v2270
  %6101 = vmatprep.subr.bf16.mxu0 %v2287
  %6102 = vmatpush1.bf16.msra.mxu0 %v2286
  %6103 = vmatprep.subr.bf16.mxu0 %v2303
  %6104 = vmatpush1.bf16.msra.mxu0 %v2302
  %6105 = vmatprep.subr.bf16.mxu0 %v2319
  %6106 = vmatpush1.bf16.msra.mxu0 %v2318
  %6107 = vmatprep.subr.bf16.mxu0 %v2335
  %6108 = vmatpush1.bf16.msra.mxu0 %v2334
  %6109 = vmatprep.subr.bf16.mxu0 %v2351
  %6110 = vmatpush1.bf16.msra.mxu0 %v2350
  %6111 = vmatprep.subr.bf16.mxu0 %v2367
  %6112 = vmatpush1.bf16.msra.mxu0 %v2366
  %6113 = vmatprep.subr.bf16.mxu0 %v2383
  %6114 = vmatpush1.bf16.msra.mxu0 %v2382
  %6115 = vmatprep.subr.bf16.mxu0 %v2399
  %6116 = vmatpush1.bf16.msra.mxu0 %v2398
  %6117 = vmatprep.subr.bf16.mxu0 %v2415
  %6118 = vmatpush1.bf16.msra.mxu0 %v2414
  %6119 = vmatprep.subr.bf16.mxu0 %v2431
  %6120 = vmatpush1.bf16.msra.mxu0 %v2430
  %6121 = vmatprep.subr.bf16.mxu0 %v2447
  %6122 = vmatpush1.bf16.msra.mxu0 %v2446
  %6123 = vmatprep.subr.bf16.mxu0 %v2463
  %6124 = vmatpush1.bf16.msra.mxu0 %v2462
  %6125 = vmatprep.mubr.bf16.mxu0 %v5598
  %6126 = vmatmul.mubr.bf16.gmra.mrb[0].mxu0 %v5597
  %v6127 = vpop.f32.mrb[0].mxu0
  %v6128 = vadd.f32 0.0, %v6127
  %v6129 = vpop.f32.mrb[0].mxu0
  %v6130 = vadd.f32 0.0, %v6129
  %v6131 = vpop.f32.mrb[0].mxu0
  %v6132 = vpop.f32.mrb[0].mxu0
  %6133 = vdwg.mxu0
  %6134 = vmatprep.subr.bf16.mxu0 %v2479
  %6135 = vmatpush1.bf16.msra.mxu0 %v2478
  %6136 = vmatprep.subr.bf16.mxu0 %v2495
  %6137 = vmatpush1.bf16.msra.mxu0 %v2494
  %6138 = vmatprep.subr.bf16.mxu0 %v2511
  %6139 = vmatpush1.bf16.msra.mxu0 %v2510
  %6140 = vmatprep.subr.bf16.mxu0 %v2527
  %6141 = vmatpush1.bf16.msra.mxu0 %v2526
  %6142 = vmatprep.subr.bf16.mxu0 %v2543
  %6143 = vmatpush1.bf16.msra.mxu0 %v2542
  %6144 = vmatprep.subr.bf16.mxu0 %v2559
  %6145 = vmatpush1.bf16.msra.mxu0 %v2558
  %6146 = vmatprep.subr.bf16.mxu0 %v2575
  %6147 = vmatpush1.bf16.msra.mxu0 %v2574
  %6148 = vmatprep.subr.bf16.mxu0 %v2591
  %6149 = vmatpush1.bf16.msra.mxu0 %v2590
  %6150 = vmatprep.subr.bf16.mxu0 %v2607
  %6151 = vmatpush1.bf16.msra.mxu0 %v2606
  %6152 = vmatprep.subr.bf16.mxu0 %v2623
  %6153 = vmatpush1.bf16.msra.mxu0 %v2622
  %6154 = vmatprep.subr.bf16.mxu0 %v2639
  %6155 = vmatpush1.bf16.msra.mxu0 %v2638
  %6156 = vmatprep.subr.bf16.mxu0 %v2655
  %6157 = vmatpush1.bf16.msra.mxu0 %v2654
  %6158 = vmatprep.subr.bf16.mxu0 %v2671
  %6159 = vmatpush1.bf16.msra.mxu0 %v2670
  %6160 = vmatprep.subr.bf16.mxu0 %v2687
  %6161 = vmatpush1.bf16.msra.mxu0 %v2686
  %6162 = vmatprep.subr.bf16.mxu0 %v2703
  %6163 = vmatpush1.bf16.msra.mxu0 %v2702
  %6164 = vmatprep.subr.bf16.mxu0 %v2719
  %6165 = vmatpush1.bf16.msra.mxu0 %v2718
  %6166 = vmatprep.mubr.bf16.mxu0 %v5600
  %6167 = vmatmul.mubr.bf16.gmra.mrb[0].mxu0 %v5599
  %v6168 = vpop.f32.mrb[0].mxu0
  %v6169 = vadd.f32 %v6128, %v6168
  %v6170 = vpop.f32.mrb[0].mxu0
  %v6171 = vadd.f32 %v6130, %v6170
  %v6172 = vpop.f32.mrb[0].mxu0
  %v6173 = vpop.f32.mrb[0].mxu0
  %6174 = vdwg.mxu0
  %6175 = vmatprep.subr.bf16.mxu0 %v2225
  %6176 = vmatpush1.bf16.msra.mxu0 %v2224
  %6177 = vmatprep.subr.bf16.mxu0 %v2241
  %6178 = vmatpush1.bf16.msra.mxu0 %v2240
  %6179 = vmatprep.subr.bf16.mxu0 %v2257
  %6180 = vmatpush1.bf16.msra.mxu0 %v2256
  %6181 = vmatprep.subr.bf16.mxu0 %v2273
  %6182 = vmatpush1.bf16.msra.mxu0 %v2272
  %6183 = vmatprep.subr.bf16.mxu0 %v2289
  %6184 = vmatpush1.bf16.msra.mxu0 %v2288
  %6185 = vmatprep.subr.bf16.mxu0 %v2305
  %6186 = vmatpush1.bf16.msra.mxu0 %v2304
  %6187 = vmatprep.subr.bf16.mxu0 %v2321
  %6188 = vmatpush1.bf16.msra.mxu0 %v2320
  %6189 = vmatprep.subr.bf16.mxu0 %v2337
  %6190 = vmatpush1.bf16.msra.mxu0 %v2336
  %6191 = vmatprep.subr.bf16.mxu0 %v2353
  %6192 = vmatpush1.bf16.msra.mxu0 %v2352
  %6193 = vmatprep.subr.bf16.mxu0 %v2369
  %6194 = vmatpush1.bf16.msra.mxu0 %v2368
  %6195 = vmatprep.subr.bf16.mxu0 %v2385
  %6196 = vmatpush1.bf16.msra.mxu0 %v2384
  %6197 = vmatprep.subr.bf16.mxu0 %v2401
  %6198 = vmatpush1.bf16.msra.mxu0 %v2400
  %6199 = vmatprep.subr.bf16.mxu0 %v2417
  %6200 = vmatpush1.bf16.msra.mxu0 %v2416
  %6201 = vmatprep.subr.bf16.mxu0 %v2433
  %6202 = vmatpush1.bf16.msra.mxu0 %v2432
  %6203 = vmatprep.subr.bf16.mxu0 %v2449
  %6204 = vmatpush1.bf16.msra.mxu0 %v2448
  %6205 = vmatprep.subr.bf16.mxu0 %v2465
  %6206 = vmatpush1.bf16.msra.mxu0 %v2464
  %6207 = vmatprep.mubr.bf16.mxu0 %v5598
  %6208 = vmatmul.mubr.bf16.gmra.mrb[0].mxu0 %v5597
  %v6209 = vpop.f32.mrb[0].mxu0
  %v6210 = vadd.f32 0.0, %v6209
  %v6211 = vpop.f32.mrb[0].mxu0
  %v6212 = vadd.f32 0.0, %v6211
  %v6213 = vpop.f32.mrb[0].mxu0
  %v6214 = vpop.f32.mrb[0].mxu0
  %6215 = vdwg.mxu0
  %6216 = vmatprep.subr.bf16.mxu0 %v2481
  %6217 = vmatpush1.bf16.msra.mxu0 %v2480
  %6218 = vmatprep.subr.bf16.mxu0 %v2497
  %6219 = vmatpush1.bf16.msra.mxu0 %v2496
  %6220 = vmatprep.subr.bf16.mxu0 %v2513
  %6221 = vmatpush1.bf16.msra.mxu0 %v2512
  %6222 = vmatprep.subr.bf16.mxu0 %v2529
  %6223 = vmatpush1.bf16.msra.mxu0 %v2528
  %6224 = vmatprep.subr.bf16.mxu0 %v2545
  %6225 = vmatpush1.bf16.msra.mxu0 %v2544
  %6226 = vmatprep.subr.bf16.mxu0 %v2561
  %6227 = vmatpush1.bf16.msra.mxu0 %v2560
  %6228 = vmatprep.subr.bf16.mxu0 %v2577
  %6229 = vmatpush1.bf16.msra.mxu0 %v2576
  %6230 = vmatprep.subr.bf16.mxu0 %v2593
  %6231 = vmatpush1.bf16.msra.mxu0 %v2592
  %6232 = vmatprep.subr.bf16.mxu0 %v2609
  %6233 = vmatpush1.bf16.msra.mxu0 %v2608
  %6234 = vmatprep.subr.bf16.mxu0 %v2625
  %6235 = vmatpush1.bf16.msra.mxu0 %v2624
  %6236 = vmatprep.subr.bf16.mxu0 %v2641
  %6237 = vmatpush1.bf16.msra.mxu0 %v2640
  %6238 = vmatprep.subr.bf16.mxu0 %v2657
  %6239 = vmatpush1.bf16.msra.mxu0 %v2656
  %6240 = vmatprep.subr.bf16.mxu0 %v2673
  %6241 = vmatpush1.bf16.msra.mxu0 %v2672
  %6242 = vmatprep.subr.bf16.mxu0 %v2689
  %6243 = vmatpush1.bf16.msra.mxu0 %v2688
  %6244 = vmatprep.subr.bf16.mxu0 %v2705
  %6245 = vmatpush1.bf16.msra.mxu0 %v2704
  %6246 = vmatprep.subr.bf16.mxu0 %v2721
  %6247 = vmatpush1.bf16.msra.mxu0 %v2720
  %6248 = vmatprep.mubr.bf16.mxu0 %v5600
  %6249 = vmatmul.mubr.bf16.gmra.mrb[0].mxu0 %v5599
  %v6250 = vpop.f32.mrb[0].mxu0
  %v6251 = vadd.f32 %v6210, %v6250
  %v6252 = vpop.f32.mrb[0].mxu0
  %v6253 = vadd.f32 %v6212, %v6252
  %v6254 = vpop.f32.mrb[0].mxu0
  %v6255 = vpop.f32.mrb[0].mxu0
  %6256 = vdwg.mxu0
  %v6257 = vadd.f32 %v5581, %v5677
  %v6258 = vadd.f32 %v5582, %v5679
  %v6259 = vadd.f32 %v5583, %v5759
  %v6260 = vadd.f32 %v5584, %v5761
  %v6261 = vadd.f32 %v5585, %v5841
  %v6262 = vadd.f32 %v5586, %v5843
  %v6263 = vadd.f32 %v5587, %v5923
  %v6264 = vadd.f32 %v5588, %v5925
  %v6265 = vadd.f32 %v5589, %v6005
  %v6266 = vadd.f32 %v5590, %v6007
  %v6267 = vadd.f32 %v5591, %v6087
  %v6268 = vadd.f32 %v5592, %v6089
  %v6269 = vadd.f32 %v5593, %v6169
  %v6270 = vadd.f32 %v5594, %v6171
  %v6271 = vadd.f32 %v5595, %v6251
  %v6272 = vadd.f32 %v5596, %v6253
  %v6273 = vmul.f32 %v6257, 0.5
  %v6274 = vmul.f32 %v6258, 0.5
  %v6275 = vmul.f32 %v6259, 0.5
  %v6276 = vmul.f32 %v6260, 0.5
  %v6277 = vtanh.pop %v6273
  %v6278 = vtanh.pop %v6274
  %v6279 = vtanh.pop %v6275
  %v6280 = vtanh.pop %v6276
  %v6281 = vadd.f32 %v6277, 1.0
  %v6282 = vadd.f32 %v6278, 1.0
  %v6283 = vadd.f32 %v6279, 1.0
  %v6284 = vadd.f32 %v6280, 1.0
  %v6285 = vmul.f32 %v6281, 0.5
  %v6286 = vmul.f32 %v6282, 0.5
  %v6287 = vmul.f32 %v6283, 0.5
  %v6288 = vmul.f32 %v6284, 0.5
  %v6289 = vmul.f32 %v6261, 0.5
  %v6290 = vmul.f32 %v6262, 0.5
  %v6291 = vmul.f32 %v6263, 0.5
  %v6292 = vmul.f32 %v6264, 0.5
  %v6293 = vtanh.pop %v6289
  %v6294 = vtanh.pop %v6290
  %v6295 = vtanh.pop %v6291
  %v6296 = vtanh.pop %v6292
  %v6297 = vadd.f32 %v6293, 1.0
  %v6298 = vadd.f32 %v6294, 1.0
  %v6299 = vadd.f32 %v6295, 1.0
  %v6300 = vadd.f32 %v6296, 1.0
  %v6301 = vmul.f32 %v6297, 0.5
  %v6302 = vmul.f32 %v6298, 0.5
  %v6303 = vmul.f32 %v6299, 0.5
  %v6304 = vmul.f32 %v6300, 0.5
  %v6305 = vtanh.pop %v6265
  %v6306 = vtanh.pop %v6266
  %v6307 = vtanh.pop %v6267
  %v6308 = vtanh.pop %v6268
  %v6309 = vmul.f32 %v6269, 0.5
  %v6310 = vmul.f32 %v6270, 0.5
  %v6311 = vmul.f32 %v6271, 0.5
  %v6312 = vmul.f32 %v6272, 0.5
  %v6313 = vtanh.pop %v6309
  %v6314 = vtanh.pop %v6310
  %v6315 = vtanh.pop %v6311
  %v6316 = vtanh.pop %v6312
  %v6317 = vadd.f32 %v6313, 1.0
  %v6318 = vadd.f32 %v6314, 1.0
  %v6319 = vadd.f32 %v6315, 1.0
  %v6320 = vadd.f32 %v6316, 1.0
  %v6321 = vmul.f32 %v6317, 0.5
  %v6322 = vmul.f32 %v6318, 0.5
  %v6323 = vmul.f32 %v6319, 0.5
  %v6324 = vmul.f32 %v6320, 0.5
  %v6325 = vmul.f32 %v6301, %v5544
  %v6326 = vmul.f32 %v6302, %v5545
  %v6327 = vmul.f32 %v6303, %v5546
  %v6328 = vmul.f32 %v6304, %v5547
  %v6329 = vmul.f32 %v6285, %v6305
  %v6330 = vmul.f32 %v6286, %v6306
  %v6331 = vmul.f32 %v6287, %v6307
  %v6332 = vmul.f32 %v6288, %v6308
  %v6333 = vadd.f32 %v6325, %v6329
  %v6334 = vadd.f32 %v6326, %v6330
  %v6335 = vadd.f32 %v6327, %v6331
  %v6336 = vadd.f32 %v6328, %v6332
  %v6337 = vtanh.pop %v6333
  %v6338 = vtanh.pop %v6334
  %v6339 = vtanh.pop %v6335
  %v6340 = vtanh.pop %v6336
  %v6341 = vmul.f32 %v6321, %v6337
  %v6342 = vmul.f32 %v6322, %v6338
  %v6343 = vmul.f32 %v6323, %v6339
  %v6344 = vmul.f32 %v6324, %v6340
  %s6345 = scalar_lea.vmem %s0, 256
  %v6346 = vld [vmem:[%s6345] sm:$0xff]
  %v6347 = vld [vmem:[%s6345 + $0x8] sm:$0xff]
  %v6348 = vld [vmem:[%s6345 + $0x10] sm:$0xff]
  %v6349 = vld [vmem:[%s6345 + $0x18] sm:$0xff]
  %v6350 = vld [vmem:[%s6345 + $0x20] sm:$0xff]
  %v6351 = vld [vmem:[%s6345 + $0x28] sm:$0xff]
  %v6352 = vld [vmem:[%s6345 + $0x30] sm:$0xff]
  %v6353 = vld [vmem:[%s6345 + $0x38] sm:$0xff]
  %v6354 = vunpack.c.l.bf16 %v6346
  %v6355 = vunpack.c.h.bf16 %v6346
  %v6356 = vunpack.c.l.bf16 %v6347
  %v6357 = vunpack.c.h.bf16 %v6347
  %v6358 = vunpack.c.l.bf16 %v6348
  %v6359 = vunpack.c.h.bf16 %v6348
  %v6360 = vunpack.c.l.bf16 %v6349
  %v6361 = vunpack.c.h.bf16 %v6349
  %v6362 = vunpack.c.l.bf16 %v6350
  %v6363 = vunpack.c.h.bf16 %v6350
  %v6364 = vunpack.c.l.bf16 %v6351
  %v6365 = vunpack.c.h.bf16 %v6351
  %v6366 = vunpack.c.l.bf16 %v6352
  %v6367 = vunpack.c.h.bf16 %v6352
  %v6368 = vunpack.c.l.bf16 %v6353
  %v6369 = vunpack.c.h.bf16 %v6353
  %v6370 = vadd.f32 %v6354, %v577
  %v6371 = vadd.f32 %v6355, %v581
  %v6372 = vadd.f32 %v6356, %v585
  %v6373 = vadd.f32 %v6357, %v589
  %v6374 = vadd.f32 %v6358, %v593
  %v6375 = vadd.f32 %v6359, %v597
  %v6376 = vadd.f32 %v6360, %v601
  %v6377 = vadd.f32 %v6361, %v605
  %v6378 = vadd.f32 %v6362, %v609
  %v6379 = vadd.f32 %v6363, %v613
  %v6380 = vadd.f32 %v6364, %v617
  %v6381 = vadd.f32 %v6365, %v621
  %v6382 = vadd.f32 %v6366, %v625
  %v6383 = vadd.f32 %v6367, %v629
  %v6384 = vadd.f32 %v6368, %v633
  %v6385 = vadd.f32 %v6369, %v637
  %v6386 = vpack.c.bf16 %v6341, %v6341
  %v6387 = vpack.c.bf16 %v6342, %v6342
  %v6388 = vpack.c.bf16 %v6343, %v6343
  %v6389 = vpack.c.bf16 %v6344, %v6344
  %6390 = vmatprep.subr.bf16.mxu0 %v2211
  %6391 = vmatpush1.bf16.msra.mxu0 %v2210
  %6392 = vmatprep.subr.bf16.mxu0 %v2227
  %6393 = vmatpush1.bf16.msra.mxu0 %v2226
  %6394 = vmatprep.subr.bf16.mxu0 %v2243
  %6395 = vmatpush1.bf16.msra.mxu0 %v2242
  %6396 = vmatprep.subr.bf16.mxu0 %v2259
  %6397 = vmatpush1.bf16.msra.mxu0 %v2258
  %6398 = vmatprep.subr.bf16.mxu0 %v2275
  %6399 = vmatpush1.bf16.msra.mxu0 %v2274
  %6400 = vmatprep.subr.bf16.mxu0 %v2291
  %6401 = vmatpush1.bf16.msra.mxu0 %v2290
  %6402 = vmatprep.subr.bf16.mxu0 %v2307
  %6403 = vmatpush1.bf16.msra.mxu0 %v2306
  %6404 = vmatprep.subr.bf16.mxu0 %v2323
  %6405 = vmatpush1.bf16.msra.mxu0 %v2322
  %6406 = vmatprep.subr.bf16.mxu0 %v2339
  %6407 = vmatpush1.bf16.msra.mxu0 %v2338
  %6408 = vmatprep.subr.bf16.mxu0 %v2355
  %6409 = vmatpush1.bf16.msra.mxu0 %v2354
  %6410 = vmatprep.subr.bf16.mxu0 %v2371
  %6411 = vmatpush1.bf16.msra.mxu0 %v2370
  %6412 = vmatprep.subr.bf16.mxu0 %v2387
  %6413 = vmatpush1.bf16.msra.mxu0 %v2386
  %6414 = vmatprep.subr.bf16.mxu0 %v2403
  %6415 = vmatpush1.bf16.msra.mxu0 %v2402
  %6416 = vmatprep.subr.bf16.mxu0 %v2419
  %6417 = vmatpush1.bf16.msra.mxu0 %v2418
  %6418 = vmatprep.subr.bf16.mxu0 %v2435
  %6419 = vmatpush1.bf16.msra.mxu0 %v2434
  %6420 = vmatprep.subr.bf16.mxu0 %v2451
  %6421 = vmatpush1.bf16.msra.mxu0 %v2450
  %6422 = vmatprep.mubr.bf16.mxu0 %v6387
  %6423 = vmatmul.mubr.bf16.gmra.mrb[0].mxu0 %v6386
  %v6424 = vpop.f32.mrb[0].mxu0
  %v6425 = vadd.f32 0.0, %v6424
  %v6426 = vpop.f32.mrb[0].mxu0
  %v6427 = vadd.f32 0.0, %v6426
  %v6428 = vpop.f32.mrb[0].mxu0
  %v6429 = vpop.f32.mrb[0].mxu0
  %6430 = vdwg.mxu0
  %6431 = vmatprep.subr.bf16.mxu0 %v2467
  %6432 = vmatpush1.bf16.msra.mxu0 %v2466
  %6433 = vmatprep.subr.bf16.mxu0 %v2483
  %6434 = vmatpush1.bf16.msra.mxu0 %v2482
  %6435 = vmatprep.subr.bf16.mxu0 %v2499
  %6436 = vmatpush1.bf16.msra.mxu0 %v2498
  %6437 = vmatprep.subr.bf16.mxu0 %v2515
  %6438 = vmatpush1.bf16.msra.mxu0 %v2514
  %6439 = vmatprep.subr.bf16.mxu0 %v2531
  %6440 = vmatpush1.bf16.msra.mxu0 %v2530
  %6441 = vmatprep.subr.bf16.mxu0 %v2547
  %6442 = vmatpush1.bf16.msra.mxu0 %v2546
  %6443 = vmatprep.subr.bf16.mxu0 %v2563
  %6444 = vmatpush1.bf16.msra.mxu0 %v2562
  %6445 = vmatprep.subr.bf16.mxu0 %v2579
  %6446 = vmatpush1.bf16.msra.mxu0 %v2578
  %6447 = vmatprep.subr.bf16.mxu0 %v2595
  %6448 = vmatpush1.bf16.msra.mxu0 %v2594
  %6449 = vmatprep.subr.bf16.mxu0 %v2611
  %6450 = vmatpush1.bf16.msra.mxu0 %v2610
  %6451 = vmatprep.subr.bf16.mxu0 %v2627
  %6452 = vmatpush1.bf16.msra.mxu0 %v2626
  %6453 = vmatprep.subr.bf16.mxu0 %v2643
  %6454 = vmatpush1.bf16.msra.mxu0 %v2642
  %6455 = vmatprep.subr.bf16.mxu0 %v2659
  %6456 = vmatpush1.bf16.msra.mxu0 %v2658
  %6457 = vmatprep.subr.bf16.mxu0 %v2675
  %6458 = vmatpush1.bf16.msra.mxu0 %v2674
  %6459 = vmatprep.subr.bf16.mxu0 %v2691
  %6460 = vmatpush1.bf16.msra.mxu0 %v2690
  %6461 = vmatprep.subr.bf16.mxu0 %v2707
  %6462 = vmatpush1.bf16.msra.mxu0 %v2706
  %6463 = vmatprep.mubr.bf16.mxu0 %v6389
  %6464 = vmatmul.mubr.bf16.gmra.mrb[0].mxu0 %v6388
  %v6465 = vpop.f32.mrb[0].mxu0
  %v6466 = vadd.f32 %v6425, %v6465
  %v6467 = vpop.f32.mrb[0].mxu0
  %v6468 = vadd.f32 %v6427, %v6467
  %v6469 = vpop.f32.mrb[0].mxu0
  %v6470 = vpop.f32.mrb[0].mxu0
  %6471 = vdwg.mxu0
  %6472 = vmatprep.subr.bf16.mxu0 %v2213
  %6473 = vmatpush1.bf16.msra.mxu0 %v2212
  %6474 = vmatprep.subr.bf16.mxu0 %v2229
  %6475 = vmatpush1.bf16.msra.mxu0 %v2228
  %6476 = vmatprep.subr.bf16.mxu0 %v2245
  %6477 = vmatpush1.bf16.msra.mxu0 %v2244
  %6478 = vmatprep.subr.bf16.mxu0 %v2261
  %6479 = vmatpush1.bf16.msra.mxu0 %v2260
  %6480 = vmatprep.subr.bf16.mxu0 %v2277
  %6481 = vmatpush1.bf16.msra.mxu0 %v2276
  %6482 = vmatprep.subr.bf16.mxu0 %v2293
  %6483 = vmatpush1.bf16.msra.mxu0 %v2292
  %6484 = vmatprep.subr.bf16.mxu0 %v2309
  %6485 = vmatpush1.bf16.msra.mxu0 %v2308
  %6486 = vmatprep.subr.bf16.mxu0 %v2325
  %6487 = vmatpush1.bf16.msra.mxu0 %v2324
  %6488 = vmatprep.subr.bf16.mxu0 %v2341
  %6489 = vmatpush1.bf16.msra.mxu0 %v2340
  %6490 = vmatprep.subr.bf16.mxu0 %v2357
  %6491 = vmatpush1.bf16.msra.mxu0 %v2356
  %6492 = vmatprep.subr.bf16.mxu0 %v2373
  %6493 = vmatpush1.bf16.msra.mxu0 %v2372
  %6494 = vmatprep.subr.bf16.mxu0 %v2389
  %6495 = vmatpush1.bf16.msra.mxu0 %v2388
  %6496 = vmatprep.subr.bf16.mxu0 %v2405
  %6497 = vmatpush1.bf16.msra.mxu0 %v2404
  %6498 = vmatprep.subr.bf16.mxu0 %v2421
  %6499 = vmatpush1.bf16.msra.mxu0 %v2420
  %6500 = vmatprep.subr.bf16.mxu0 %v2437
  %6501 = vmatpush1.bf16.msra.mxu0 %v2436
  %6502 = vmatprep.subr.bf16.mxu0 %v2453
  %6503 = vmatpush1.bf16.msra.mxu0 %v2452
  %6504 = vmatprep.mubr.bf16.mxu0 %v6387
  %6505 = vmatmul.mubr.bf16.gmra.mrb[0].mxu0 %v6386
  %v6506 = vpop.f32.mrb[0].mxu0
  %v6507 = vadd.f32 0.0, %v6506
  %v6508 = vpop.f32.mrb[0].mxu0
  %v6509 = vadd.f32 0.0, %v6508
  %v6510 = vpop.f32.mrb[0].mxu0
  %v6511 = vpop.f32.mrb[0].mxu0
  %6512 = vdwg.mxu0
  %6513 = vmatprep.subr.bf16.mxu0 %v2469
  %6514 = vmatpush1.bf16.msra.mxu0 %v2468
  %6515 = vmatprep.subr.bf16.mxu0 %v2485
  %6516 = vmatpush1.bf16.msra.mxu0 %v2484
  %6517 = vmatprep.subr.bf16.mxu0 %v2501
  %6518 = vmatpush1.bf16.msra.mxu0 %v2500
  %6519 = vmatprep.subr.bf16.mxu0 %v2517
  %6520 = vmatpush1.bf16.msra.mxu0 %v2516
  %6521 = vmatprep.subr.bf16.mxu0 %v2533
  %6522 = vmatpush1.bf16.msra.mxu0 %v2532
  %6523 = vmatprep.subr.bf16.mxu0 %v2549
  %6524 = vmatpush1.bf16.msra.mxu0 %v2548
  %6525 = vmatprep.subr.bf16.mxu0 %v2565
  %6526 = vmatpush1.bf16.msra.mxu0 %v2564
  %6527 = vmatprep.subr.bf16.mxu0 %v2581
  %6528 = vmatpush1.bf16.msra.mxu0 %v2580
  %6529 = vmatprep.subr.bf16.mxu0 %v2597
  %6530 = vmatpush1.bf16.msra.mxu0 %v2596
  %6531 = vmatprep.subr.bf16.mxu0 %v2613
  %6532 = vmatpush1.bf16.msra.mxu0 %v2612
  %6533 = vmatprep.subr.bf16.mxu0 %v2629
  %6534 = vmatpush1.bf16.msra.mxu0 %v2628
  %6535 = vmatprep.subr.bf16.mxu0 %v2645
  %6536 = vmatpush1.bf16.msra.mxu0 %v2644
  %6537 = vmatprep.subr.bf16.mxu0 %v2661
  %6538 = vmatpush1.bf16.msra.mxu0 %v2660
  %6539 = vmatprep.subr.bf16.mxu0 %v2677
  %6540 = vmatpush1.bf16.msra.mxu0 %v2676
  %6541 = vmatprep.subr.bf16.mxu0 %v2693
  %6542 = vmatpush1.bf16.msra.mxu0 %v2692
  %6543 = vmatprep.subr.bf16.mxu0 %v2709
  %6544 = vmatpush1.bf16.msra.mxu0 %v2708
  %6545 = vmatprep.mubr.bf16.mxu0 %v6389
  %6546 = vmatmul.mubr.bf16.gmra.mrb[0].mxu0 %v6388
  %v6547 = vpop.f32.mrb[0].mxu0
  %v6548 = vadd.f32 %v6507, %v6547
  %v6549 = vpop.f32.mrb[0].mxu0
  %v6550 = vadd.f32 %v6509, %v6549
  %v6551 = vpop.f32.mrb[0].mxu0
  %v6552 = vpop.f32.mrb[0].mxu0
  %6553 = vdwg.mxu0
  %6554 = vmatprep.subr.bf16.mxu0 %v2215
  %6555 = vmatpush1.bf16.msra.mxu0 %v2214
  %6556 = vmatprep.subr.bf16.mxu0 %v2231
  %6557 = vmatpush1.bf16.msra.mxu0 %v2230
  %6558 = vmatprep.subr.bf16.mxu0 %v2247
  %6559 = vmatpush1.bf16.msra.mxu0 %v2246
  %6560 = vmatprep.subr.bf16.mxu0 %v2263
  %6561 = vmatpush1.bf16.msra.mxu0 %v2262
  %6562 = vmatprep.subr.bf16.mxu0 %v2279
  %6563 = vmatpush1.bf16.msra.mxu0 %v2278
  %6564 = vmatprep.subr.bf16.mxu0 %v2295
  %6565 = vmatpush1.bf16.msra.mxu0 %v2294
  %6566 = vmatprep.subr.bf16.mxu0 %v2311
  %6567 = vmatpush1.bf16.msra.mxu0 %v2310
  %6568 = vmatprep.subr.bf16.mxu0 %v2327
  %6569 = vmatpush1.bf16.msra.mxu0 %v2326
  %6570 = vmatprep.subr.bf16.mxu0 %v2343
  %6571 = vmatpush1.bf16.msra.mxu0 %v2342
  %6572 = vmatprep.subr.bf16.mxu0 %v2359
  %6573 = vmatpush1.bf16.msra.mxu0 %v2358
  %6574 = vmatprep.subr.bf16.mxu0 %v2375
  %6575 = vmatpush1.bf16.msra.mxu0 %v2374
  %6576 = vmatprep.subr.bf16.mxu0 %v2391
  %6577 = vmatpush1.bf16.msra.mxu0 %v2390
  %6578 = vmatprep.subr.bf16.mxu0 %v2407
  %6579 = vmatpush1.bf16.msra.mxu0 %v2406
  %6580 = vmatprep.subr.bf16.mxu0 %v2423
  %6581 = vmatpush1.bf16.msra.mxu0 %v2422
  %6582 = vmatprep.subr.bf16.mxu0 %v2439
  %6583 = vmatpush1.bf16.msra.mxu0 %v2438
  %6584 = vmatprep.subr.bf16.mxu0 %v2455
  %6585 = vmatpush1.bf16.msra.mxu0 %v2454
  %6586 = vmatprep.mubr.bf16.mxu0 %v6387
  %6587 = vmatmul.mubr.bf16.gmra.mrb[0].mxu0 %v6386
  %v6588 = vpop.f32.mrb[0].mxu0
  %v6589 = vadd.f32 0.0, %v6588
  %v6590 = vpop.f32.mrb[0].mxu0
  %v6591 = vadd.f32 0.0, %v6590
  %v6592 = vpop.f32.mrb[0].mxu0
  %v6593 = vpop.f32.mrb[0].mxu0
  %6594 = vdwg.mxu0
  %6595 = vmatprep.subr.bf16.mxu0 %v2471
  %6596 = vmatpush1.bf16.msra.mxu0 %v2470
  %6597 = vmatprep.subr.bf16.mxu0 %v2487
  %6598 = vmatpush1.bf16.msra.mxu0 %v2486
  %6599 = vmatprep.subr.bf16.mxu0 %v2503
  %6600 = vmatpush1.bf16.msra.mxu0 %v2502
  %6601 = vmatprep.subr.bf16.mxu0 %v2519
  %6602 = vmatpush1.bf16.msra.mxu0 %v2518
  %6603 = vmatprep.subr.bf16.mxu0 %v2535
  %6604 = vmatpush1.bf16.msra.mxu0 %v2534
  %6605 = vmatprep.subr.bf16.mxu0 %v2551
  %6606 = vmatpush1.bf16.msra.mxu0 %v2550
  %6607 = vmatprep.subr.bf16.mxu0 %v2567
  %6608 = vmatpush1.bf16.msra.mxu0 %v2566
  %6609 = vmatprep.subr.bf16.mxu0 %v2583
  %6610 = vmatpush1.bf16.msra.mxu0 %v2582
  %6611 = vmatprep.subr.bf16.mxu0 %v2599
  %6612 = vmatpush1.bf16.msra.mxu0 %v2598
  %6613 = vmatprep.subr.bf16.mxu0 %v2615
  %6614 = vmatpush1.bf16.msra.mxu0 %v2614
  %6615 = vmatprep.subr.bf16.mxu0 %v2631
  %6616 = vmatpush1.bf16.msra.mxu0 %v2630
  %6617 = vmatprep.subr.bf16.mxu0 %v2647
  %6618 = vmatpush1.bf16.msra.mxu0 %v2646
  %6619 = vmatprep.subr.bf16.mxu0 %v2663
  %6620 = vmatpush1.bf16.msra.mxu0 %v2662
  %6621 = vmatprep.subr.bf16.mxu0 %v2679
  %6622 = vmatpush1.bf16.msra.mxu0 %v2678
  %6623 = vmatprep.subr.bf16.mxu0 %v2695
  %6624 = vmatpush1.bf16.msra.mxu0 %v2694
  %6625 = vmatprep.subr.bf16.mxu0 %v2711
  %6626 = vmatpush1.bf16.msra.mxu0 %v2710
  %6627 = vmatprep.mubr.bf16.mxu0 %v6389
  %6628 = vmatmul.mubr.bf16.gmra.mrb[0].mxu0 %v6388
  %v6629 = vpop.f32.mrb[0].mxu0
  %v6630 = vadd.f32 %v6589, %v6629
  %v6631 = vpop.f32.mrb[0].mxu0
  %v6632 = vadd.f32 %v6591, %v6631
  %v6633 = vpop.f32.mrb[0].mxu0
  %v6634 = vpop.f32.mrb[0].mxu0
  %6635 = vdwg.mxu0
  %6636 = vmatprep.subr.bf16.mxu0 %v2217
  %6637 = vmatpush1.bf16.msra.mxu0 %v2216
  %6638 = vmatprep.subr.bf16.mxu0 %v2233
  %6639 = vmatpush1.bf16.msra.mxu0 %v2232
  %6640 = vmatprep.subr.bf16.mxu0 %v2249
  %6641 = vmatpush1.bf16.msra.mxu0 %v2248
  %6642 = vmatprep.subr.bf16.mxu0 %v2265
  %6643 = vmatpush1.bf16.msra.mxu0 %v2264
  %6644 = vmatprep.subr.bf16.mxu0 %v2281
  %6645 = vmatpush1.bf16.msra.mxu0 %v2280
  %6646 = vmatprep.subr.bf16.mxu0 %v2297
  %6647 = vmatpush1.bf16.msra.mxu0 %v2296
  %6648 = vmatprep.subr.bf16.mxu0 %v2313
  %6649 = vmatpush1.bf16.msra.mxu0 %v2312
  %6650 = vmatprep.subr.bf16.mxu0 %v2329
  %6651 = vmatpush1.bf16.msra.mxu0 %v2328
  %6652 = vmatprep.subr.bf16.mxu0 %v2345
  %6653 = vmatpush1.bf16.msra.mxu0 %v2344
  %6654 = vmatprep.subr.bf16.mxu0 %v2361
  %6655 = vmatpush1.bf16.msra.mxu0 %v2360
  %6656 = vmatprep.subr.bf16.mxu0 %v2377
  %6657 = vmatpush1.bf16.msra.mxu0 %v2376
  %6658 = vmatprep.subr.bf16.mxu0 %v2393
  %6659 = vmatpush1.bf16.msra.mxu0 %v2392
  %6660 = vmatprep.subr.bf16.mxu0 %v2409
  %6661 = vmatpush1.bf16.msra.mxu0 %v2408
  %6662 = vmatprep.subr.bf16.mxu0 %v2425
  %6663 = vmatpush1.bf16.msra.mxu0 %v2424
  %6664 = vmatprep.subr.bf16.mxu0 %v2441
  %6665 = vmatpush1.bf16.msra.mxu0 %v2440
  %6666 = vmatprep.subr.bf16.mxu0 %v2457
  %6667 = vmatpush1.bf16.msra.mxu0 %v2456
  %6668 = vmatprep.mubr.bf16.mxu0 %v6387
  %6669 = vmatmul.mubr.bf16.gmra.mrb[0].mxu0 %v6386
  %v6670 = vpop.f32.mrb[0].mxu0
  %v6671 = vadd.f32 0.0, %v6670
  %v6672 = vpop.f32.mrb[0].mxu0
  %v6673 = vadd.f32 0.0, %v6672
  %v6674 = vpop.f32.mrb[0].mxu0
  %v6675 = vpop.f32.mrb[0].mxu0
  %6676 = vdwg.mxu0
  %6677 = vmatprep.subr.bf16.mxu0 %v2473
  %6678 = vmatpush1.bf16.msra.mxu0 %v2472
  %6679 = vmatprep.subr.bf16.mxu0 %v2489
  %6680 = vmatpush1.bf16.msra.mxu0 %v2488
  %6681 = vmatprep.subr.bf16.mxu0 %v2505
  %6682 = vmatpush1.bf16.msra.mxu0 %v2504
  %6683 = vmatprep.subr.bf16.mxu0 %v2521
  %6684 = vmatpush1.bf16.msra.mxu0 %v2520
  %6685 = vmatprep.subr.bf16.mxu0 %v2537
  %6686 = vmatpush1.bf16.msra.mxu0 %v2536
  %6687 = vmatprep.subr.bf16.mxu0 %v2553
  %6688 = vmatpush1.bf16.msra.mxu0 %v2552
  %6689 = vmatprep.subr.bf16.mxu0 %v2569
  %6690 = vmatpush1.bf16.msra.mxu0 %v2568
  %6691 = vmatprep.subr.bf16.mxu0 %v2585
  %6692 = vmatpush1.bf16.msra.mxu0 %v2584
  %6693 = vmatprep.subr.bf16.mxu0 %v2601
  %6694 = vmatpush1.bf16.msra.mxu0 %v2600
  %6695 = vmatprep.subr.bf16.mxu0 %v2617
  %6696 = vmatpush1.bf16.msra.mxu0 %v2616
  %6697 = vmatprep.subr.bf16.mxu0 %v2633
  %6698 = vmatpush1.bf16.msra.mxu0 %v2632
  %6699 = vmatprep.subr.bf16.mxu0 %v2649
  %6700 = vmatpush1.bf16.msra.mxu0 %v2648
  %6701 = vmatprep.subr.bf16.mxu0 %v2665
  %6702 = vmatpush1.bf16.msra.mxu0 %v2664
  %6703 = vmatprep.subr.bf16.mxu0 %v2681
  %6704 = vmatpush1.bf16.msra.mxu0 %v2680
  %6705 = vmatprep.subr.bf16.mxu0 %v2697
  %6706 = vmatpush1.bf16.msra.mxu0 %v2696
  %6707 = vmatprep.subr.bf16.mxu0 %v2713
  %6708 = vmatpush1.bf16.msra.mxu0 %v2712
  %6709 = vmatprep.mubr.bf16.mxu0 %v6389
  %6710 = vmatmul.mubr.bf16.gmra.mrb[0].mxu0 %v6388
  %v6711 = vpop.f32.mrb[0].mxu0
  %v6712 = vadd.f32 %v6671, %v6711
  %v6713 = vpop.f32.mrb[0].mxu0
  %v6714 = vadd.f32 %v6673, %v6713
  %v6715 = vpop.f32.mrb[0].mxu0
  %v6716 = vpop.f32.mrb[0].mxu0
  %6717 = vdwg.mxu0
  %6718 = vmatprep.subr.bf16.mxu0 %v2219
  %6719 = vmatpush1.bf16.msra.mxu0 %v2218
  %6720 = vmatprep.subr.bf16.mxu0 %v2235
  %6721 = vmatpush1.bf16.msra.mxu0 %v2234
  %6722 = vmatprep.subr.bf16.mxu0 %v2251
  %6723 = vmatpush1.bf16.msra.mxu0 %v2250
  %6724 = vmatprep.subr.bf16.mxu0 %v2267
  %6725 = vmatpush1.bf16.msra.mxu0 %v2266
  %6726 = vmatprep.subr.bf16.mxu0 %v2283
  %6727 = vmatpush1.bf16.msra.mxu0 %v2282
  %6728 = vmatprep.subr.bf16.mxu0 %v2299
  %6729 = vmatpush1.bf16.msra.mxu0 %v2298
  %6730 = vmatprep.subr.bf16.mxu0 %v2315
  %6731 = vmatpush1.bf16.msra.mxu0 %v2314
  %6732 = vmatprep.subr.bf16.mxu0 %v2331
  %6733 = vmatpush1.bf16.msra.mxu0 %v2330
  %6734 = vmatprep.subr.bf16.mxu0 %v2347
  %6735 = vmatpush1.bf16.msra.mxu0 %v2346
  %6736 = vmatprep.subr.bf16.mxu0 %v2363
  %6737 = vmatpush1.bf16.msra.mxu0 %v2362
  %6738 = vmatprep.subr.bf16.mxu0 %v2379
  %6739 = vmatpush1.bf16.msra.mxu0 %v2378
  %6740 = vmatprep.subr.bf16.mxu0 %v2395
  %6741 = vmatpush1.bf16.msra.mxu0 %v2394
  %6742 = vmatprep.subr.bf16.mxu0 %v2411
  %6743 = vmatpush1.bf16.msra.mxu0 %v2410
  %6744 = vmatprep.subr.bf16.mxu0 %v2427
  %6745 = vmatpush1.bf16.msra.mxu0 %v2426
  %6746 = vmatprep.subr.bf16.mxu0 %v2443
  %6747 = vmatpush1.bf16.msra.mxu0 %v2442
  %6748 = vmatprep.subr.bf16.mxu0 %v2459
  %6749 = vmatpush1.bf16.msra.mxu0 %v2458
  %6750 = vmatprep.mubr.bf16.mxu0 %v6387
  %6751 = vmatmul.mubr.bf16.gmra.mrb[0].mxu0 %v6386
  %v6752 = vpop.f32.mrb[0].mxu0
  %v6753 = vadd.f32 0.0, %v6752
  %v6754 = vpop.f32.mrb[0].mxu0
  %v6755 = vadd.f32 0.0, %v6754
  %v6756 = vpop.f32.mrb[0].mxu0
  %v6757 = vpop.f32.mrb[0].mxu0
  %6758 = vdwg.mxu0
  %6759 = vmatprep.subr.bf16.mxu0 %v2475
  %6760 = vmatpush1.bf16.msra.mxu0 %v2474
  %6761 = vmatprep.subr.bf16.mxu0 %v2491
  %6762 = vmatpush1.bf16.msra.mxu0 %v2490
  %6763 = vmatprep.subr.bf16.mxu0 %v2507
  %6764 = vmatpush1.bf16.msra.mxu0 %v2506
  %6765 = vmatprep.subr.bf16.mxu0 %v2523
  %6766 = vmatpush1.bf16.msra.mxu0 %v2522
  %6767 = vmatprep.subr.bf16.mxu0 %v2539
  %6768 = vmatpush1.bf16.msra.mxu0 %v2538
  %6769 = vmatprep.subr.bf16.mxu0 %v2555
  %6770 = vmatpush1.bf16.msra.mxu0 %v2554
  %6771 = vmatprep.subr.bf16.mxu0 %v2571
  %6772 = vmatpush1.bf16.msra.mxu0 %v2570
  %6773 = vmatprep.subr.bf16.mxu0 %v2587
  %6774 = vmatpush1.bf16.msra.mxu0 %v2586
  %6775 = vmatprep.subr.bf16.mxu0 %v2603
  %6776 = vmatpush1.bf16.msra.mxu0 %v2602
  %6777 = vmatprep.subr.bf16.mxu0 %v2619
  %6778 = vmatpush1.bf16.msra.mxu0 %v2618
  %6779 = vmatprep.subr.bf16.mxu0 %v2635
  %6780 = vmatpush1.bf16.msra.mxu0 %v2634
  %6781 = vmatprep.subr.bf16.mxu0 %v2651
  %6782 = vmatpush1.bf16.msra.mxu0 %v2650
  %6783 = vmatprep.subr.bf16.mxu0 %v2667
  %6784 = vmatpush1.bf16.msra.mxu0 %v2666
  %6785 = vmatprep.subr.bf16.mxu0 %v2683
  %6786 = vmatpush1.bf16.msra.mxu0 %v2682
  %6787 = vmatprep.subr.bf16.mxu0 %v2699
  %6788 = vmatpush1.bf16.msra.mxu0 %v2698
  %6789 = vmatprep.subr.bf16.mxu0 %v2715
  %6790 = vmatpush1.bf16.msra.mxu0 %v2714
  %6791 = vmatprep.mubr.bf16.mxu0 %v6389
  %6792 = vmatmul.mubr.bf16.gmra.mrb[0].mxu0 %v6388
  %v6793 = vpop.f32.mrb[0].mxu0
  %v6794 = vadd.f32 %v6753, %v6793
  %v6795 = vpop.f32.mrb[0].mxu0
  %v6796 = vadd.f32 %v6755, %v6795
  %v6797 = vpop.f32.mrb[0].mxu0
  %v6798 = vpop.f32.mrb[0].mxu0
  %6799 = vdwg.mxu0
  %6800 = vmatprep.subr.bf16.mxu0 %v2221
  %6801 = vmatpush1.bf16.msra.mxu0 %v2220
  %6802 = vmatprep.subr.bf16.mxu0 %v2237
  %6803 = vmatpush1.bf16.msra.mxu0 %v2236
  %6804 = vmatprep.subr.bf16.mxu0 %v2253
  %6805 = vmatpush1.bf16.msra.mxu0 %v2252
  %6806 = vmatprep.subr.bf16.mxu0 %v2269
  %6807 = vmatpush1.bf16.msra.mxu0 %v2268
  %6808 = vmatprep.subr.bf16.mxu0 %v2285
  %6809 = vmatpush1.bf16.msra.mxu0 %v2284
  %6810 = vmatprep.subr.bf16.mxu0 %v2301
  %6811 = vmatpush1.bf16.msra.mxu0 %v2300
  %6812 = vmatprep.subr.bf16.mxu0 %v2317
  %6813 = vmatpush1.bf16.msra.mxu0 %v2316
  %6814 = vmatprep.subr.bf16.mxu0 %v2333
  %6815 = vmatpush1.bf16.msra.mxu0 %v2332
  %6816 = vmatprep.subr.bf16.mxu0 %v2349
  %6817 = vmatpush1.bf16.msra.mxu0 %v2348
  %6818 = vmatprep.subr.bf16.mxu0 %v2365
  %6819 = vmatpush1.bf16.msra.mxu0 %v2364
  %6820 = vmatprep.subr.bf16.mxu0 %v2381
  %6821 = vmatpush1.bf16.msra.mxu0 %v2380
  %6822 = vmatprep.subr.bf16.mxu0 %v2397
  %6823 = vmatpush1.bf16.msra.mxu0 %v2396
  %6824 = vmatprep.subr.bf16.mxu0 %v2413
  %6825 = vmatpush1.bf16.msra.mxu0 %v2412
  %6826 = vmatprep.subr.bf16.mxu0 %v2429
  %6827 = vmatpush1.bf16.msra.mxu0 %v2428
  %6828 = vmatprep.subr.bf16.mxu0 %v2445
  %6829 = vmatpush1.bf16.msra.mxu0 %v2444
  %6830 = vmatprep.subr.bf16.mxu0 %v2461
  %6831 = vmatpush1.bf16.msra.mxu0 %v2460
  %6832 = vmatprep.mubr.bf16.mxu0 %v6387
  %6833 = vmatmul.mubr.bf16.gmra.mrb[0].mxu0 %v6386
  %v6834 = vpop.f32.mrb[0].mxu0
  %v6835 = vadd.f32 0.0, %v6834
  %v6836 = vpop.f32.mrb[0].mxu0
  %v6837 = vadd.f32 0.0, %v6836
  %v6838 = vpop.f32.mrb[0].mxu0
  %v6839 = vpop.f32.mrb[0].mxu0
  %6840 = vdwg.mxu0
  %6841 = vmatprep.subr.bf16.mxu0 %v2477
  %6842 = vmatpush1.bf16.msra.mxu0 %v2476
  %6843 = vmatprep.subr.bf16.mxu0 %v2493
  %6844 = vmatpush1.bf16.msra.mxu0 %v2492
  %6845 = vmatprep.subr.bf16.mxu0 %v2509
  %6846 = vmatpush1.bf16.msra.mxu0 %v2508
  %6847 = vmatprep.subr.bf16.mxu0 %v2525
  %6848 = vmatpush1.bf16.msra.mxu0 %v2524
  %6849 = vmatprep.subr.bf16.mxu0 %v2541
  %6850 = vmatpush1.bf16.msra.mxu0 %v2540
  %6851 = vmatprep.subr.bf16.mxu0 %v2557
  %6852 = vmatpush1.bf16.msra.mxu0 %v2556
  %6853 = vmatprep.subr.bf16.mxu0 %v2573
  %6854 = vmatpush1.bf16.msra.mxu0 %v2572
  %6855 = vmatprep.subr.bf16.mxu0 %v2589
  %6856 = vmatpush1.bf16.msra.mxu0 %v2588
  %6857 = vmatprep.subr.bf16.mxu0 %v2605
  %6858 = vmatpush1.bf16.msra.mxu0 %v2604
  %6859 = vmatprep.subr.bf16.mxu0 %v2621
  %6860 = vmatpush1.bf16.msra.mxu0 %v2620
  %6861 = vmatprep.subr.bf16.mxu0 %v2637
  %6862 = vmatpush1.bf16.msra.mxu0 %v2636
  %6863 = vmatprep.subr.bf16.mxu0 %v2653
  %6864 = vmatpush1.bf16.msra.mxu0 %v2652
  %6865 = vmatprep.subr.bf16.mxu0 %v2669
  %6866 = vmatpush1.bf16.msra.mxu0 %v2668
  %6867 = vmatprep.subr.bf16.mxu0 %v2685
  %6868 = vmatpush1.bf16.msra.mxu0 %v2684
  %6869 = vmatprep.subr.bf16.mxu0 %v2701
  %6870 = vmatpush1.bf16.msra.mxu0 %v2700
  %6871 = vmatprep.subr.bf16.mxu0 %v2717
  %6872 = vmatpush1.bf16.msra.mxu0 %v2716
  %6873 = vmatprep.mubr.bf16.mxu0 %v6389
  %6874 = vmatmul.mubr.bf16.gmra.mrb[0].mxu0 %v6388
  %v6875 = vpop.f32.mrb[0].mxu0
  %v6876 = vadd.f32 %v6835, %v6875
  %v6877 = vpop.f32.mrb[0].mxu0
  %v6878 = vadd.f32 %v6837, %v6877
  %v6879 = vpop.f32.mrb[0].mxu0
  %v6880 = vpop.f32.mrb[0].mxu0
  %6881 = vdwg.mxu0
  %6882 = vmatprep.subr.bf16.mxu0 %v2223
  %6883 = vmatpush1.bf16.msra.mxu0 %v2222
  %6884 = vmatprep.subr.bf16.mxu0 %v2239
  %6885 = vmatpush1.bf16.msra.mxu0 %v2238
  %6886 = vmatprep.subr.bf16.mxu0 %v2255
  %6887 = vmatpush1.bf16.msra.mxu0 %v2254
  %6888 = vmatprep.subr.bf16.mxu0 %v2271
  %6889 = vmatpush1.bf16.msra.mxu0 %v2270
  %6890 = vmatprep.subr.bf16.mxu0 %v2287
  %6891 = vmatpush1.bf16.msra.mxu0 %v2286
  %6892 = vmatprep.subr.bf16.mxu0 %v2303
  %6893 = vmatpush1.bf16.msra.mxu0 %v2302
  %6894 = vmatprep.subr.bf16.mxu0 %v2319
  %6895 = vmatpush1.bf16.msra.mxu0 %v2318
  %6896 = vmatprep.subr.bf16.mxu0 %v2335
  %6897 = vmatpush1.bf16.msra.mxu0 %v2334
  %6898 = vmatprep.subr.bf16.mxu0 %v2351
  %6899 = vmatpush1.bf16.msra.mxu0 %v2350
  %6900 = vmatprep.subr.bf16.mxu0 %v2367
  %6901 = vmatpush1.bf16.msra.mxu0 %v2366
  %6902 = vmatprep.subr.bf16.mxu0 %v2383
  %6903 = vmatpush1.bf16.msra.mxu0 %v2382
  %6904 = vmatprep.subr.bf16.mxu0 %v2399
  %6905 = vmatpush1.bf16.msra.mxu0 %v2398
  %6906 = vmatprep.subr.bf16.mxu0 %v2415
  %6907 = vmatpush1.bf16.msra.mxu0 %v2414
  %6908 = vmatprep.subr.bf16.mxu0 %v2431
  %6909 = vmatpush1.bf16.msra.mxu0 %v2430
  %6910 = vmatprep.subr.bf16.mxu0 %v2447
  %6911 = vmatpush1.bf16.msra.mxu0 %v2446
  %6912 = vmatprep.subr.bf16.mxu0 %v2463
  %6913 = vmatpush1.bf16.msra.mxu0 %v2462
  %6914 = vmatprep.mubr.bf16.mxu0 %v6387
  %6915 = vmatmul.mubr.bf16.gmra.mrb[0].mxu0 %v6386
  %v6916 = vpop.f32.mrb[0].mxu0
  %v6917 = vadd.f32 0.0, %v6916
  %v6918 = vpop.f32.mrb[0].mxu0
  %v6919 = vadd.f32 0.0, %v6918
  %v6920 = vpop.f32.mrb[0].mxu0
  %v6921 = vpop.f32.mrb[0].mxu0
  %6922 = vdwg.mxu0
  %6923 = vmatprep.subr.bf16.mxu0 %v2479
  %6924 = vmatpush1.bf16.msra.mxu0 %v2478
  %6925 = vmatprep.subr.bf16.mxu0 %v2495
  %6926 = vmatpush1.bf16.msra.mxu0 %v2494
  %6927 = vmatprep.subr.bf16.mxu0 %v2511
  %6928 = vmatpush1.bf16.msra.mxu0 %v2510
  %6929 = vmatprep.subr.bf16.mxu0 %v2527
  %6930 = vmatpush1.bf16.msra.mxu0 %v2526
  %6931 = vmatprep.subr.bf16.mxu0 %v2543
  %6932 = vmatpush1.bf16.msra.mxu0 %v2542
  %6933 = vmatprep.subr.bf16.mxu0 %v2559
  %6934 = vmatpush1.bf16.msra.mxu0 %v2558
  %6935 = vmatprep.subr.bf16.mxu0 %v2575
  %6936 = vmatpush1.bf16.msra.mxu0 %v2574
  %6937 = vmatprep.subr.bf16.mxu0 %v2591
  %6938 = vmatpush1.bf16.msra.mxu0 %v2590
  %6939 = vmatprep.subr.bf16.mxu0 %v2607
  %6940 = vmatpush1.bf16.msra.mxu0 %v2606
  %6941 = vmatprep.subr.bf16.mxu0 %v2623
  %6942 = vmatpush1.bf16.msra.mxu0 %v2622
  %6943 = vmatprep.subr.bf16.mxu0 %v2639
  %6944 = vmatpush1.bf16.msra.mxu0 %v2638
  %6945 = vmatprep.subr.bf16.mxu0 %v2655
  %6946 = vmatpush1.bf16.msra.mxu0 %v2654
  %6947 = vmatprep.subr.bf16.mxu0 %v2671
  %6948 = vmatpush1.bf16.msra.mxu0 %v2670
  %6949 = vmatprep.subr.bf16.mxu0 %v2687
  %6950 = vmatpush1.bf16.msra.mxu0 %v2686
  %6951 = vmatprep.subr.bf16.mxu0 %v2703
  %6952 = vmatpush1.bf16.msra.mxu0 %v2702
  %6953 = vmatprep.subr.bf16.mxu0 %v2719
  %6954 = vmatpush1.bf16.msra.mxu0 %v2718
  %6955 = vmatprep.mubr.bf16.mxu0 %v6389
  %6956 = vmatmul.mubr.bf16.gmra.mrb[0].mxu0 %v6388
  %v6957 = vpop.f32.mrb[0].mxu0
  %v6958 = vadd.f32 %v6917, %v6957
  %v6959 = vpop.f32.mrb[0].mxu0
  %v6960 = vadd.f32 %v6919, %v6959
  %v6961 = vpop.f32.mrb[0].mxu0
  %v6962 = vpop.f32.mrb[0].mxu0
  %6963 = vdwg.mxu0
  %6964 = vmatprep.subr.bf16.mxu0 %v2225
  %6965 = vmatpush1.bf16.msra.mxu0 %v2224
  %6966 = vmatprep.subr.bf16.mxu0 %v2241
  %6967 = vmatpush1.bf16.msra.mxu0 %v2240
  %6968 = vmatprep.subr.bf16.mxu0 %v2257
  %6969 = vmatpush1.bf16.msra.mxu0 %v2256
  %6970 = vmatprep.subr.bf16.mxu0 %v2273
  %6971 = vmatpush1.bf16.msra.mxu0 %v2272
  %6972 = vmatprep.subr.bf16.mxu0 %v2289
  %6973 = vmatpush1.bf16.msra.mxu0 %v2288
  %6974 = vmatprep.subr.bf16.mxu0 %v2305
  %6975 = vmatpush1.bf16.msra.mxu0 %v2304
  %6976 = vmatprep.subr.bf16.mxu0 %v2321
  %6977 = vmatpush1.bf16.msra.mxu0 %v2320
  %6978 = vmatprep.subr.bf16.mxu0 %v2337
  %6979 = vmatpush1.bf16.msra.mxu0 %v2336
  %6980 = vmatprep.subr.bf16.mxu0 %v2353
  %6981 = vmatpush1.bf16.msra.mxu0 %v2352
  %6982 = vmatprep.subr.bf16.mxu0 %v2369
  %6983 = vmatpush1.bf16.msra.mxu0 %v2368
  %6984 = vmatprep.subr.bf16.mxu0 %v2385
  %6985 = vmatpush1.bf16.msra.mxu0 %v2384
  %6986 = vmatprep.subr.bf16.mxu0 %v2401
  %6987 = vmatpush1.bf16.msra.mxu0 %v2400
  %6988 = vmatprep.subr.bf16.mxu0 %v2417
  %6989 = vmatpush1.bf16.msra.mxu0 %v2416
  %6990 = vmatprep.subr.bf16.mxu0 %v2433
  %6991 = vmatpush1.bf16.msra.mxu0 %v2432
  %6992 = vmatprep.subr.bf16.mxu0 %v2449
  %6993 = vmatpush1.bf16.msra.mxu0 %v2448
  %6994 = vmatprep.subr.bf16.mxu0 %v2465
  %6995 = vmatpush1.bf16.msra.mxu0 %v2464
  %6996 = vmatprep.mubr.bf16.mxu0 %v6387
  %6997 = vmatmul.mubr.bf16.gmra.mrb[0].mxu0 %v6386
  %v6998 = vpop.f32.mrb[0].mxu0
  %v6999 = vadd.f32 0.0, %v6998
  %v7000 = vpop.f32.mrb[0].mxu0
  %v7001 = vadd.f32 0.0, %v7000
  %v7002 = vpop.f32.mrb[0].mxu0
  %v7003 = vpop.f32.mrb[0].mxu0
  %7004 = vdwg.mxu0
  %7005 = vmatprep.subr.bf16.mxu0 %v2481
  %7006 = vmatpush1.bf16.msra.mxu0 %v2480
  %7007 = vmatprep.subr.bf16.mxu0 %v2497
  %7008 = vmatpush1.bf16.msra.mxu0 %v2496
  %7009 = vmatprep.subr.bf16.mxu0 %v2513
  %7010 = vmatpush1.bf16.msra.mxu0 %v2512
  %7011 = vmatprep.subr.bf16.mxu0 %v2529
  %7012 = vmatpush1.bf16.msra.mxu0 %v2528
  %7013 = vmatprep.subr.bf16.mxu0 %v2545
  %7014 = vmatpush1.bf16.msra.mxu0 %v2544
  %7015 = vmatprep.subr.bf16.mxu0 %v2561
  %7016 = vmatpush1.bf16.msra.mxu0 %v2560
  %7017 = vmatprep.subr.bf16.mxu0 %v2577
  %7018 = vmatpush1.bf16.msra.mxu0 %v2576
  %7019 = vmatprep.subr.bf16.mxu0 %v2593
  %7020 = vmatpush1.bf16.msra.mxu0 %v2592
  %7021 = vmatprep.subr.bf16.mxu0 %v2609
  %7022 = vmatpush1.bf16.msra.mxu0 %v2608
  %7023 = vmatprep.subr.bf16.mxu0 %v2625
  %7024 = vmatpush1.bf16.msra.mxu0 %v2624
  %7025 = vmatprep.subr.bf16.mxu0 %v2641
  %7026 = vmatpush1.bf16.msra.mxu0 %v2640
  %7027 = vmatprep.subr.bf16.mxu0 %v2657
  %7028 = vmatpush1.bf16.msra.mxu0 %v2656
  %7029 = vmatprep.subr.bf16.mxu0 %v2673
  %7030 = vmatpush1.bf16.msra.mxu0 %v2672
  %7031 = vmatprep.subr.bf16.mxu0 %v2689
  %7032 = vmatpush1.bf16.msra.mxu0 %v2688
  %7033 = vmatprep.subr.bf16.mxu0 %v2705
  %7034 = vmatpush1.bf16.msra.mxu0 %v2704
  %7035 = vmatprep.subr.bf16.mxu0 %v2721
  %7036 = vmatpush1.bf16.msra.mxu0 %v2720
  %7037 = vmatprep.mubr.bf16.mxu0 %v6389
  %7038 = vmatmul.mubr.bf16.gmra.mrb[0].mxu0 %v6388
  %v7039 = vpop.f32.mrb[0].mxu0
  %v7040 = vadd.f32 %v6999, %v7039
  %v7041 = vpop.f32.mrb[0].mxu0
  %v7042 = vadd.f32 %v7001, %v7041
  %v7043 = vpop.f32.mrb[0].mxu0
  %v7044 = vpop.f32.mrb[0].mxu0
  %7045 = vdwg.mxu0
  %v7046 = vadd.f32 %v6370, %v6466
  %v7047 = vadd.f32 %v6371, %v6468
  %v7048 = vadd.f32 %v6372, %v6548
  %v7049 = vadd.f32 %v6373, %v6550
  %v7050 = vadd.f32 %v6374, %v6630
  %v7051 = vadd.f32 %v6375, %v6632
  %v7052 = vadd.f32 %v6376, %v6712
  %v7053 = vadd.f32 %v6377, %v6714
  %v7054 = vadd.f32 %v6378, %v6794
  %v7055 = vadd.f32 %v6379, %v6796
  %v7056 = vadd.f32 %v6380, %v6876
  %v7057 = vadd.f32 %v6381, %v6878
  %v7058 = vadd.f32 %v6382, %v6958
  %v7059 = vadd.f32 %v6383, %v6960
  %v7060 = vadd.f32 %v6384, %v7040
  %v7061 = vadd.f32 %v6385, %v7042
  %v7062 = vmul.f32 %v7046, 0.5
  %v7063 = vmul.f32 %v7047, 0.5
  %v7064 = vmul.f32 %v7048, 0.5
  %v7065 = vmul.f32 %v7049, 0.5
  %v7066 = vtanh.pop %v7062
  %v7067 = vtanh.pop %v7063
  %v7068 = vtanh.pop %v7064
  %v7069 = vtanh.pop %v7065
  %v7070 = vadd.f32 %v7066, 1.0
  %v7071 = vadd.f32 %v7067, 1.0
  %v7072 = vadd.f32 %v7068, 1.0
  %v7073 = vadd.f32 %v7069, 1.0
  %v7074 = vmul.f32 %v7070, 0.5
  %v7075 = vmul.f32 %v7071, 0.5
  %v7076 = vmul.f32 %v7072, 0.5
  %v7077 = vmul.f32 %v7073, 0.5
  %v7078 = vmul.f32 %v7050, 0.5
  %v7079 = vmul.f32 %v7051, 0.5
  %v7080 = vmul.f32 %v7052, 0.5
  %v7081 = vmul.f32 %v7053, 0.5
  %v7082 = vtanh.pop %v7078
  %v7083 = vtanh.pop %v7079
  %v7084 = vtanh.pop %v7080
  %v7085 = vtanh.pop %v7081
  %v7086 = vadd.f32 %v7082, 1.0
  %v7087 = vadd.f32 %v7083, 1.0
  %v7088 = vadd.f32 %v7084, 1.0
  %v7089 = vadd.f32 %v7085, 1.0
  %v7090 = vmul.f32 %v7086, 0.5
  %v7091 = vmul.f32 %v7087, 0.5
  %v7092 = vmul.f32 %v7088, 0.5
  %v7093 = vmul.f32 %v7089, 0.5
  %v7094 = vtanh.pop %v7054
  %v7095 = vtanh.pop %v7055
  %v7096 = vtanh.pop %v7056
  %v7097 = vtanh.pop %v7057
  %v7098 = vmul.f32 %v7058, 0.5
  %v7099 = vmul.f32 %v7059, 0.5
  %v7100 = vmul.f32 %v7060, 0.5
  %v7101 = vmul.f32 %v7061, 0.5
  %v7102 = vtanh.pop %v7098
  %v7103 = vtanh.pop %v7099
  %v7104 = vtanh.pop %v7100
  %v7105 = vtanh.pop %v7101
  %v7106 = vadd.f32 %v7102, 1.0
  %v7107 = vadd.f32 %v7103, 1.0
  %v7108 = vadd.f32 %v7104, 1.0
  %v7109 = vadd.f32 %v7105, 1.0
  %v7110 = vmul.f32 %v7106, 0.5
  %v7111 = vmul.f32 %v7107, 0.5
  %v7112 = vmul.f32 %v7108, 0.5
  %v7113 = vmul.f32 %v7109, 0.5
  %v7114 = vmul.f32 %v7090, %v6333
  %v7115 = vmul.f32 %v7091, %v6334
  %v7116 = vmul.f32 %v7092, %v6335
  %v7117 = vmul.f32 %v7093, %v6336
  %v7118 = vmul.f32 %v7074, %v7094
  %v7119 = vmul.f32 %v7075, %v7095
  %v7120 = vmul.f32 %v7076, %v7096
  %v7121 = vmul.f32 %v7077, %v7097
  %v7122 = vadd.f32 %v7114, %v7118
  %v7123 = vadd.f32 %v7115, %v7119
  %v7124 = vadd.f32 %v7116, %v7120
  %v7125 = vadd.f32 %v7117, %v7121
  %v7126 = vtanh.pop %v7122
  %v7127 = vtanh.pop %v7123
  %v7128 = vtanh.pop %v7124
  %v7129 = vtanh.pop %v7125
  %v7130 = vmul.f32 %v7110, %v7126
  %v7131 = vmul.f32 %v7111, %v7127
  %v7132 = vmul.f32 %v7112, %v7128
  %v7133 = vmul.f32 %v7113, %v7129
  %s7134 = scalar_lea.vmem %s0, 320
  %v7135 = vld [vmem:[%s7134] sm:$0xff]
  %v7136 = vld [vmem:[%s7134 + $0x8] sm:$0xff]
  %v7137 = vld [vmem:[%s7134 + $0x10] sm:$0xff]
  %v7138 = vld [vmem:[%s7134 + $0x18] sm:$0xff]
  %v7139 = vld [vmem:[%s7134 + $0x20] sm:$0xff]
  %v7140 = vld [vmem:[%s7134 + $0x28] sm:$0xff]
  %v7141 = vld [vmem:[%s7134 + $0x30] sm:$0xff]
  %v7142 = vld [vmem:[%s7134 + $0x38] sm:$0xff]
  %v7143 = vunpack.c.l.bf16 %v7135
  %v7144 = vunpack.c.h.bf16 %v7135
  %v7145 = vunpack.c.l.bf16 %v7136
  %v7146 = vunpack.c.h.bf16 %v7136
  %v7147 = vunpack.c.l.bf16 %v7137
  %v7148 = vunpack.c.h.bf16 %v7137
  %v7149 = vunpack.c.l.bf16 %v7138
  %v7150 = vunpack.c.h.bf16 %v7138
  %v7151 = vunpack.c.l.bf16 %v7139
  %v7152 = vunpack.c.h.bf16 %v7139
  %v7153 = vunpack.c.l.bf16 %v7140
  %v7154 = vunpack.c.h.bf16 %v7140
  %v7155 = vunpack.c.l.bf16 %v7141
  %v7156 = vunpack.c.h.bf16 %v7141
  %v7157 = vunpack.c.l.bf16 %v7142
  %v7158 = vunpack.c.h.bf16 %v7142
  %v7159 = vadd.f32 %v7143, %v577
  %v7160 = vadd.f32 %v7144, %v581
  %v7161 = vadd.f32 %v7145, %v585
  %v7162 = vadd.f32 %v7146, %v589
  %v7163 = vadd.f32 %v7147, %v593
  %v7164 = vadd.f32 %v7148, %v597
  %v7165 = vadd.f32 %v7149, %v601
  %v7166 = vadd.f32 %v7150, %v605
  %v7167 = vadd.f32 %v7151, %v609
  %v7168 = vadd.f32 %v7152, %v613
  %v7169 = vadd.f32 %v7153, %v617
  %v7170 = vadd.f32 %v7154, %v621
  %v7171 = vadd.f32 %v7155, %v625
  %v7172 = vadd.f32 %v7156, %v629
  %v7173 = vadd.f32 %v7157, %v633
  %v7174 = vadd.f32 %v7158, %v637
  %v7175 = vpack.c.bf16 %v7130, %v7130
  %v7176 = vpack.c.bf16 %v7131, %v7131
  %v7177 = vpack.c.bf16 %v7132, %v7132
  %v7178 = vpack.c.bf16 %v7133, %v7133
  %7179 = vmatprep.subr.bf16.mxu0 %v2211
  %7180 = vmatpush1.bf16.msra.mxu0 %v2210
  %7181 = vmatprep.subr.bf16.mxu0 %v2227
  %7182 = vmatpush1.bf16.msra.mxu0 %v2226
  %7183 = vmatprep.subr.bf16.mxu0 %v2243
  %7184 = vmatpush1.bf16.msra.mxu0 %v2242
  %7185 = vmatprep.subr.bf16.mxu0 %v2259
  %7186 = vmatpush1.bf16.msra.mxu0 %v2258
  %7187 = vmatprep.subr.bf16.mxu0 %v2275
  %7188 = vmatpush1.bf16.msra.mxu0 %v2274
  %7189 = vmatprep.subr.bf16.mxu0 %v2291
  %7190 = vmatpush1.bf16.msra.mxu0 %v2290
  %7191 = vmatprep.subr.bf16.mxu0 %v2307
  %7192 = vmatpush1.bf16.msra.mxu0 %v2306
  %7193 = vmatprep.subr.bf16.mxu0 %v2323
  %7194 = vmatpush1.bf16.msra.mxu0 %v2322
  %7195 = vmatprep.subr.bf16.mxu0 %v2339
  %7196 = vmatpush1.bf16.msra.mxu0 %v2338
  %7197 = vmatprep.subr.bf16.mxu0 %v2355
  %7198 = vmatpush1.bf16.msra.mxu0 %v2354
  %7199 = vmatprep.subr.bf16.mxu0 %v2371
  %7200 = vmatpush1.bf16.msra.mxu0 %v2370
  %7201 = vmatprep.subr.bf16.mxu0 %v2387
  %7202 = vmatpush1.bf16.msra.mxu0 %v2386
  %7203 = vmatprep.subr.bf16.mxu0 %v2403
  %7204 = vmatpush1.bf16.msra.mxu0 %v2402
  %7205 = vmatprep.subr.bf16.mxu0 %v2419
  %7206 = vmatpush1.bf16.msra.mxu0 %v2418
  %7207 = vmatprep.subr.bf16.mxu0 %v2435
  %7208 = vmatpush1.bf16.msra.mxu0 %v2434
  %7209 = vmatprep.subr.bf16.mxu0 %v2451
  %7210 = vmatpush1.bf16.msra.mxu0 %v2450
  %7211 = vmatprep.mubr.bf16.mxu0 %v7176
  %7212 = vmatmul.mubr.bf16.gmra.mrb[0].mxu0 %v7175
  %v7213 = vpop.f32.mrb[0].mxu0
  %v7214 = vadd.f32 0.0, %v7213
  %v7215 = vpop.f32.mrb[0].mxu0
  %v7216 = vadd.f32 0.0, %v7215
  %v7217 = vpop.f32.mrb[0].mxu0
  %v7218 = vpop.f32.mrb[0].mxu0
  %7219 = vdwg.mxu0
  %7220 = vmatprep.subr.bf16.mxu0 %v2467
  %7221 = vmatpush1.bf16.msra.mxu0 %v2466
  %7222 = vmatprep.subr.bf16.mxu0 %v2483
  %7223 = vmatpush1.bf16.msra.mxu0 %v2482
  %7224 = vmatprep.subr.bf16.mxu0 %v2499
  %7225 = vmatpush1.bf16.msra.mxu0 %v2498
  %7226 = vmatprep.subr.bf16.mxu0 %v2515
  %7227 = vmatpush1.bf16.msra.mxu0 %v2514
  %7228 = vmatprep.subr.bf16.mxu0 %v2531
  %7229 = vmatpush1.bf16.msra.mxu0 %v2530
  %7230 = vmatprep.subr.bf16.mxu0 %v2547
  %7231 = vmatpush1.bf16.msra.mxu0 %v2546
  %7232 = vmatprep.subr.bf16.mxu0 %v2563
  %7233 = vmatpush1.bf16.msra.mxu0 %v2562
  %7234 = vmatprep.subr.bf16.mxu0 %v2579
  %7235 = vmatpush1.bf16.msra.mxu0 %v2578
  %7236 = vmatprep.subr.bf16.mxu0 %v2595
  %7237 = vmatpush1.bf16.msra.mxu0 %v2594
  %7238 = vmatprep.subr.bf16.mxu0 %v2611
  %7239 = vmatpush1.bf16.msra.mxu0 %v2610
  %7240 = vmatprep.subr.bf16.mxu0 %v2627
  %7241 = vmatpush1.bf16.msra.mxu0 %v2626
  %7242 = vmatprep.subr.bf16.mxu0 %v2643
  %7243 = vmatpush1.bf16.msra.mxu0 %v2642
  %7244 = vmatprep.subr.bf16.mxu0 %v2659
  %7245 = vmatpush1.bf16.msra.mxu0 %v2658
  %7246 = vmatprep.subr.bf16.mxu0 %v2675
  %7247 = vmatpush1.bf16.msra.mxu0 %v2674
  %7248 = vmatprep.subr.bf16.mxu0 %v2691
  %7249 = vmatpush1.bf16.msra.mxu0 %v2690
  %7250 = vmatprep.subr.bf16.mxu0 %v2707
  %7251 = vmatpush1.bf16.msra.mxu0 %v2706
  %7252 = vmatprep.mubr.bf16.mxu0 %v7178
  %7253 = vmatmul.mubr.bf16.gmra.mrb[0].mxu0 %v7177
  %v7254 = vpop.f32.mrb[0].mxu0
  %v7255 = vadd.f32 %v7214, %v7254
  %v7256 = vpop.f32.mrb[0].mxu0
  %v7257 = vadd.f32 %v7216, %v7256
  %v7258 = vpop.f32.mrb[0].mxu0
  %v7259 = vpop.f32.mrb[0].mxu0
  %7260 = vdwg.mxu0
  %7261 = vmatprep.subr.bf16.mxu0 %v2213
  %7262 = vmatpush1.bf16.msra.mxu0 %v2212
  %7263 = vmatprep.subr.bf16.mxu0 %v2229
  %7264 = vmatpush1.bf16.msra.mxu0 %v2228
  %7265 = vmatprep.subr.bf16.mxu0 %v2245
  %7266 = vmatpush1.bf16.msra.mxu0 %v2244
  %7267 = vmatprep.subr.bf16.mxu0 %v2261
  %7268 = vmatpush1.bf16.msra.mxu0 %v2260
  %7269 = vmatprep.subr.bf16.mxu0 %v2277
  %7270 = vmatpush1.bf16.msra.mxu0 %v2276
  %7271 = vmatprep.subr.bf16.mxu0 %v2293
  %7272 = vmatpush1.bf16.msra.mxu0 %v2292
  %7273 = vmatprep.subr.bf16.mxu0 %v2309
  %7274 = vmatpush1.bf16.msra.mxu0 %v2308
  %7275 = vmatprep.subr.bf16.mxu0 %v2325
  %7276 = vmatpush1.bf16.msra.mxu0 %v2324
  %7277 = vmatprep.subr.bf16.mxu0 %v2341
  %7278 = vmatpush1.bf16.msra.mxu0 %v2340
  %7279 = vmatprep.subr.bf16.mxu0 %v2357
  %7280 = vmatpush1.bf16.msra.mxu0 %v2356
  %7281 = vmatprep.subr.bf16.mxu0 %v2373
  %7282 = vmatpush1.bf16.msra.mxu0 %v2372
  %7283 = vmatprep.subr.bf16.mxu0 %v2389
  %7284 = vmatpush1.bf16.msra.mxu0 %v2388
  %7285 = vmatprep.subr.bf16.mxu0 %v2405
  %7286 = vmatpush1.bf16.msra.mxu0 %v2404
  %7287 = vmatprep.subr.bf16.mxu0 %v2421
  %7288 = vmatpush1.bf16.msra.mxu0 %v2420
  %7289 = vmatprep.subr.bf16.mxu0 %v2437
  %7290 = vmatpush1.bf16.msra.mxu0 %v2436
  %7291 = vmatprep.subr.bf16.mxu0 %v2453
  %7292 = vmatpush1.bf16.msra.mxu0 %v2452
  %7293 = vmatprep.mubr.bf16.mxu0 %v7176
  %7294 = vmatmul.mubr.bf16.gmra.mrb[0].mxu0 %v7175
  %v7295 = vpop.f32.mrb[0].mxu0
  %v7296 = vadd.f32 0.0, %v7295
  %v7297 = vpop.f32.mrb[0].mxu0
  %v7298 = vadd.f32 0.0, %v7297
  %v7299 = vpop.f32.mrb[0].mxu0
  %v7300 = vpop.f32.mrb[0].mxu0
  %7301 = vdwg.mxu0
  %7302 = vmatprep.subr.bf16.mxu0 %v2469
  %7303 = vmatpush1.bf16.msra.mxu0 %v2468
  %7304 = vmatprep.subr.bf16.mxu0 %v2485
  %7305 = vmatpush1.bf16.msra.mxu0 %v2484
  %7306 = vmatprep.subr.bf16.mxu0 %v2501
  %7307 = vmatpush1.bf16.msra.mxu0 %v2500
  %7308 = vmatprep.subr.bf16.mxu0 %v2517
  %7309 = vmatpush1.bf16.msra.mxu0 %v2516
  %7310 = vmatprep.subr.bf16.mxu0 %v2533
  %7311 = vmatpush1.bf16.msra.mxu0 %v2532
  %7312 = vmatprep.subr.bf16.mxu0 %v2549
  %7313 = vmatpush1.bf16.msra.mxu0 %v2548
  %7314 = vmatprep.subr.bf16.mxu0 %v2565
  %7315 = vmatpush1.bf16.msra.mxu0 %v2564
  %7316 = vmatprep.subr.bf16.mxu0 %v2581
  %7317 = vmatpush1.bf16.msra.mxu0 %v2580
  %7318 = vmatprep.subr.bf16.mxu0 %v2597
  %7319 = vmatpush1.bf16.msra.mxu0 %v2596
  %7320 = vmatprep.subr.bf16.mxu0 %v2613
  %7321 = vmatpush1.bf16.msra.mxu0 %v2612
  %7322 = vmatprep.subr.bf16.mxu0 %v2629
  %7323 = vmatpush1.bf16.msra.mxu0 %v2628
  %7324 = vmatprep.subr.bf16.mxu0 %v2645
  %7325 = vmatpush1.bf16.msra.mxu0 %v2644
  %7326 = vmatprep.subr.bf16.mxu0 %v2661
  %7327 = vmatpush1.bf16.msra.mxu0 %v2660
  %7328 = vmatprep.subr.bf16.mxu0 %v2677
  %7329 = vmatpush1.bf16.msra.mxu0 %v2676
  %7330 = vmatprep.subr.bf16.mxu0 %v2693
  %7331 = vmatpush1.bf16.msra.mxu0 %v2692
  %7332 = vmatprep.subr.bf16.mxu0 %v2709
  %7333 = vmatpush1.bf16.msra.mxu0 %v2708
  %7334 = vmatprep.mubr.bf16.mxu0 %v7178
  %7335 = vmatmul.mubr.bf16.gmra.mrb[0].mxu0 %v7177
  %v7336 = vpop.f32.mrb[0].mxu0
  %v7337 = vadd.f32 %v7296, %v7336
  %v7338 = vpop.f32.mrb[0].mxu0
  %v7339 = vadd.f32 %v7298, %v7338
  %v7340 = vpop.f32.mrb[0].mxu0
  %v7341 = vpop.f32.mrb[0].mxu0
  %7342 = vdwg.mxu0
  %7343 = vmatprep.subr.bf16.mxu0 %v2215
  %7344 = vmatpush1.bf16.msra.mxu0 %v2214
  %7345 = vmatprep.subr.bf16.mxu0 %v2231
  %7346 = vmatpush1.bf16.msra.mxu0 %v2230
  %7347 = vmatprep.subr.bf16.mxu0 %v2247
  %7348 = vmatpush1.bf16.msra.mxu0 %v2246
  %7349 = vmatprep.subr.bf16.mxu0 %v2263
  %7350 = vmatpush1.bf16.msra.mxu0 %v2262
  %7351 = vmatprep.subr.bf16.mxu0 %v2279
  %7352 = vmatpush1.bf16.msra.mxu0 %v2278
  %7353 = vmatprep.subr.bf16.mxu0 %v2295
  %7354 = vmatpush1.bf16.msra.mxu0 %v2294
  %7355 = vmatprep.subr.bf16.mxu0 %v2311
  %7356 = vmatpush1.bf16.msra.mxu0 %v2310
  %7357 = vmatprep.subr.bf16.mxu0 %v2327
  %7358 = vmatpush1.bf16.msra.mxu0 %v2326
  %7359 = vmatprep.subr.bf16.mxu0 %v2343
  %7360 = vmatpush1.bf16.msra.mxu0 %v2342
  %7361 = vmatprep.subr.bf16.mxu0 %v2359
  %7362 = vmatpush1.bf16.msra.mxu0 %v2358
  %7363 = vmatprep.subr.bf16.mxu0 %v2375
  %7364 = vmatpush1.bf16.msra.mxu0 %v2374
  %7365 = vmatprep.subr.bf16.mxu0 %v2391
  %7366 = vmatpush1.bf16.msra.mxu0 %v2390
  %7367 = vmatprep.subr.bf16.mxu0 %v2407
  %7368 = vmatpush1.bf16.msra.mxu0 %v2406
  %7369 = vmatprep.subr.bf16.mxu0 %v2423
  %7370 = vmatpush1.bf16.msra.mxu0 %v2422
  %7371 = vmatprep.subr.bf16.mxu0 %v2439
  %7372 = vmatpush1.bf16.msra.mxu0 %v2438
  %7373 = vmatprep.subr.bf16.mxu0 %v2455
  %7374 = vmatpush1.bf16.msra.mxu0 %v2454
  %7375 = vmatprep.mubr.bf16.mxu0 %v7176
  %7376 = vmatmul.mubr.bf16.gmra.mrb[0].mxu0 %v7175
  %v7377 = vpop.f32.mrb[0].mxu0
  %v7378 = vadd.f32 0.0, %v7377
  %v7379 = vpop.f32.mrb[0].mxu0
  %v7380 = vadd.f32 0.0, %v7379
  %v7381 = vpop.f32.mrb[0].mxu0
  %v7382 = vpop.f32.mrb[0].mxu0
  %7383 = vdwg.mxu0
  %7384 = vmatprep.subr.bf16.mxu0 %v2471
  %7385 = vmatpush1.bf16.msra.mxu0 %v2470
  %7386 = vmatprep.subr.bf16.mxu0 %v2487
  %7387 = vmatpush1.bf16.msra.mxu0 %v2486
  %7388 = vmatprep.subr.bf16.mxu0 %v2503
  %7389 = vmatpush1.bf16.msra.mxu0 %v2502
  %7390 = vmatprep.subr.bf16.mxu0 %v2519
  %7391 = vmatpush1.bf16.msra.mxu0 %v2518
  %7392 = vmatprep.subr.bf16.mxu0 %v2535
  %7393 = vmatpush1.bf16.msra.mxu0 %v2534
  %7394 = vmatprep.subr.bf16.mxu0 %v2551
  %7395 = vmatpush1.bf16.msra.mxu0 %v2550
  %7396 = vmatprep.subr.bf16.mxu0 %v2567
  %7397 = vmatpush1.bf16.msra.mxu0 %v2566
  %7398 = vmatprep.subr.bf16.mxu0 %v2583
  %7399 = vmatpush1.bf16.msra.mxu0 %v2582
  %7400 = vmatprep.subr.bf16.mxu0 %v2599
  %7401 = vmatpush1.bf16.msra.mxu0 %v2598
  %7402 = vmatprep.subr.bf16.mxu0 %v2615
  %7403 = vmatpush1.bf16.msra.mxu0 %v2614
  %7404 = vmatprep.subr.bf16.mxu0 %v2631
  %7405 = vmatpush1.bf16.msra.mxu0 %v2630
  %7406 = vmatprep.subr.bf16.mxu0 %v2647
  %7407 = vmatpush1.bf16.msra.mxu0 %v2646
  %7408 = vmatprep.subr.bf16.mxu0 %v2663
  %7409 = vmatpush1.bf16.msra.mxu0 %v2662
  %7410 = vmatprep.subr.bf16.mxu0 %v2679
  %7411 = vmatpush1.bf16.msra.mxu0 %v2678
  %7412 = vmatprep.subr.bf16.mxu0 %v2695
  %7413 = vmatpush1.bf16.msra.mxu0 %v2694
  %7414 = vmatprep.subr.bf16.mxu0 %v2711
  %7415 = vmatpush1.bf16.msra.mxu0 %v2710
  %7416 = vmatprep.mubr.bf16.mxu0 %v7178
  %7417 = vmatmul.mubr.bf16.gmra.mrb[0].mxu0 %v7177
  %v7418 = vpop.f32.mrb[0].mxu0
  %v7419 = vadd.f32 %v7378, %v7418
  %v7420 = vpop.f32.mrb[0].mxu0
  %v7421 = vadd.f32 %v7380, %v7420
  %v7422 = vpop.f32.mrb[0].mxu0
  %v7423 = vpop.f32.mrb[0].mxu0
  %7424 = vdwg.mxu0
  %7425 = vmatprep.subr.bf16.mxu0 %v2217
  %7426 = vmatpush1.bf16.msra.mxu0 %v2216
  %7427 = vmatprep.subr.bf16.mxu0 %v2233
  %7428 = vmatpush1.bf16.msra.mxu0 %v2232
  %7429 = vmatprep.subr.bf16.mxu0 %v2249
  %7430 = vmatpush1.bf16.msra.mxu0 %v2248
  %7431 = vmatprep.subr.bf16.mxu0 %v2265
  %7432 = vmatpush1.bf16.msra.mxu0 %v2264
  %7433 = vmatprep.subr.bf16.mxu0 %v2281
  %7434 = vmatpush1.bf16.msra.mxu0 %v2280
  %7435 = vmatprep.subr.bf16.mxu0 %v2297
  %7436 = vmatpush1.bf16.msra.mxu0 %v2296
  %7437 = vmatprep.subr.bf16.mxu0 %v2313
  %7438 = vmatpush1.bf16.msra.mxu0 %v2312
  %7439 = vmatprep.subr.bf16.mxu0 %v2329
  %7440 = vmatpush1.bf16.msra.mxu0 %v2328
  %7441 = vmatprep.subr.bf16.mxu0 %v2345
  %7442 = vmatpush1.bf16.msra.mxu0 %v2344
  %7443 = vmatprep.subr.bf16.mxu0 %v2361
  %7444 = vmatpush1.bf16.msra.mxu0 %v2360
  %7445 = vmatprep.subr.bf16.mxu0 %v2377
  %7446 = vmatpush1.bf16.msra.mxu0 %v2376
  %7447 = vmatprep.subr.bf16.mxu0 %v2393
  %7448 = vmatpush1.bf16.msra.mxu0 %v2392
  %7449 = vmatprep.subr.bf16.mxu0 %v2409
  %7450 = vmatpush1.bf16.msra.mxu0 %v2408
  %7451 = vmatprep.subr.bf16.mxu0 %v2425
  %7452 = vmatpush1.bf16.msra.mxu0 %v2424
  %7453 = vmatprep.subr.bf16.mxu0 %v2441
  %7454 = vmatpush1.bf16.msra.mxu0 %v2440
  %7455 = vmatprep.subr.bf16.mxu0 %v2457
  %7456 = vmatpush1.bf16.msra.mxu0 %v2456
  %7457 = vmatprep.mubr.bf16.mxu0 %v7176
  %7458 = vmatmul.mubr.bf16.gmra.mrb[0].mxu0 %v7175
  %v7459 = vpop.f32.mrb[0].mxu0
  %v7460 = vadd.f32 0.0, %v7459
  %v7461 = vpop.f32.mrb[0].mxu0
  %v7462 = vadd.f32 0.0, %v7461
  %v7463 = vpop.f32.mrb[0].mxu0
  %v7464 = vpop.f32.mrb[0].mxu0
  %7465 = vdwg.mxu0
  %7466 = vmatprep.subr.bf16.mxu0 %v2473
  %7467 = vmatpush1.bf16.msra.mxu0 %v2472
  %7468 = vmatprep.subr.bf16.mxu0 %v2489
  %7469 = vmatpush1.bf16.msra.mxu0 %v2488
  %7470 = vmatprep.subr.bf16.mxu0 %v2505
  %7471 = vmatpush1.bf16.msra.mxu0 %v2504
  %7472 = vmatprep.subr.bf16.mxu0 %v2521
  %7473 = vmatpush1.bf16.msra.mxu0 %v2520
  %7474 = vmatprep.subr.bf16.mxu0 %v2537
  %7475 = vmatpush1.bf16.msra.mxu0 %v2536
  %7476 = vmatprep.subr.bf16.mxu0 %v2553
  %7477 = vmatpush1.bf16.msra.mxu0 %v2552
  %7478 = vmatprep.subr.bf16.mxu0 %v2569
  %7479 = vmatpush1.bf16.msra.mxu0 %v2568
  %7480 = vmatprep.subr.bf16.mxu0 %v2585
  %7481 = vmatpush1.bf16.msra.mxu0 %v2584
  %7482 = vmatprep.subr.bf16.mxu0 %v2601
  %7483 = vmatpush1.bf16.msra.mxu0 %v2600
  %7484 = vmatprep.subr.bf16.mxu0 %v2617
  %7485 = vmatpush1.bf16.msra.mxu0 %v2616
  %7486 = vmatprep.subr.bf16.mxu0 %v2633
  %7487 = vmatpush1.bf16.msra.mxu0 %v2632
  %7488 = vmatprep.subr.bf16.mxu0 %v2649
  %7489 = vmatpush1.bf16.msra.mxu0 %v2648
  %7490 = vmatprep.subr.bf16.mxu0 %v2665
  %7491 = vmatpush1.bf16.msra.mxu0 %v2664
  %7492 = vmatprep.subr.bf16.mxu0 %v2681
  %7493 = vmatpush1.bf16.msra.mxu0 %v2680
  %7494 = vmatprep.subr.bf16.mxu0 %v2697
  %7495 = vmatpush1.bf16.msra.mxu0 %v2696
  %7496 = vmatprep.subr.bf16.mxu0 %v2713
  %7497 = vmatpush1.bf16.msra.mxu0 %v2712
  %7498 = vmatprep.mubr.bf16.mxu0 %v7178
  %7499 = vmatmul.mubr.bf16.gmra.mrb[0].mxu0 %v7177
  %v7500 = vpop.f32.mrb[0].mxu0
  %v7501 = vadd.f32 %v7460, %v7500
  %v7502 = vpop.f32.mrb[0].mxu0
  %v7503 = vadd.f32 %v7462, %v7502
  %v7504 = vpop.f32.mrb[0].mxu0
  %v7505 = vpop.f32.mrb[0].mxu0
  %7506 = vdwg.mxu0
  %7507 = vmatprep.subr.bf16.mxu0 %v2219
  %7508 = vmatpush1.bf16.msra.mxu0 %v2218
  %7509 = vmatprep.subr.bf16.mxu0 %v2235
  %7510 = vmatpush1.bf16.msra.mxu0 %v2234
  %7511 = vmatprep.subr.bf16.mxu0 %v2251
  %7512 = vmatpush1.bf16.msra.mxu0 %v2250
  %7513 = vmatprep.subr.bf16.mxu0 %v2267
  %7514 = vmatpush1.bf16.msra.mxu0 %v2266
  %7515 = vmatprep.subr.bf16.mxu0 %v2283
  %7516 = vmatpush1.bf16.msra.mxu0 %v2282
  %7517 = vmatprep.subr.bf16.mxu0 %v2299
  %7518 = vmatpush1.bf16.msra.mxu0 %v2298
  %7519 = vmatprep.subr.bf16.mxu0 %v2315
  %7520 = vmatpush1.bf16.msra.mxu0 %v2314
  %7521 = vmatprep.subr.bf16.mxu0 %v2331
  %7522 = vmatpush1.bf16.msra.mxu0 %v2330
  %7523 = vmatprep.subr.bf16.mxu0 %v2347
  %7524 = vmatpush1.bf16.msra.mxu0 %v2346
  %7525 = vmatprep.subr.bf16.mxu0 %v2363
  %7526 = vmatpush1.bf16.msra.mxu0 %v2362
  %7527 = vmatprep.subr.bf16.mxu0 %v2379
  %7528 = vmatpush1.bf16.msra.mxu0 %v2378
  %7529 = vmatprep.subr.bf16.mxu0 %v2395
  %7530 = vmatpush1.bf16.msra.mxu0 %v2394
  %7531 = vmatprep.subr.bf16.mxu0 %v2411
  %7532 = vmatpush1.bf16.msra.mxu0 %v2410
  %7533 = vmatprep.subr.bf16.mxu0 %v2427
  %7534 = vmatpush1.bf16.msra.mxu0 %v2426
  %7535 = vmatprep.subr.bf16.mxu0 %v2443
  %7536 = vmatpush1.bf16.msra.mxu0 %v2442
  %7537 = vmatprep.subr.bf16.mxu0 %v2459
  %7538 = vmatpush1.bf16.msra.mxu0 %v2458
  %7539 = vmatprep.mubr.bf16.mxu0 %v7176
  %7540 = vmatmul.mubr.bf16.gmra.mrb[0].mxu0 %v7175
  %v7541 = vpop.f32.mrb[0].mxu0
  %v7542 = vadd.f32 0.0, %v7541
  %v7543 = vpop.f32.mrb[0].mxu0
  %v7544 = vadd.f32 0.0, %v7543
  %v7545 = vpop.f32.mrb[0].mxu0
  %v7546 = vpop.f32.mrb[0].mxu0
  %7547 = vdwg.mxu0
  %7548 = vmatprep.subr.bf16.mxu0 %v2475
  %7549 = vmatpush1.bf16.msra.mxu0 %v2474
  %7550 = vmatprep.subr.bf16.mxu0 %v2491
  %7551 = vmatpush1.bf16.msra.mxu0 %v2490
  %7552 = vmatprep.subr.bf16.mxu0 %v2507
  %7553 = vmatpush1.bf16.msra.mxu0 %v2506
  %7554 = vmatprep.subr.bf16.mxu0 %v2523
  %7555 = vmatpush1.bf16.msra.mxu0 %v2522
  %7556 = vmatprep.subr.bf16.mxu0 %v2539
  %7557 = vmatpush1.bf16.msra.mxu0 %v2538
  %7558 = vmatprep.subr.bf16.mxu0 %v2555
  %7559 = vmatpush1.bf16.msra.mxu0 %v2554
  %7560 = vmatprep.subr.bf16.mxu0 %v2571
  %7561 = vmatpush1.bf16.msra.mxu0 %v2570
  %7562 = vmatprep.subr.bf16.mxu0 %v2587
  %7563 = vmatpush1.bf16.msra.mxu0 %v2586
  %7564 = vmatprep.subr.bf16.mxu0 %v2603
  %7565 = vmatpush1.bf16.msra.mxu0 %v2602
  %7566 = vmatprep.subr.bf16.mxu0 %v2619
  %7567 = vmatpush1.bf16.msra.mxu0 %v2618
  %7568 = vmatprep.subr.bf16.mxu0 %v2635
  %7569 = vmatpush1.bf16.msra.mxu0 %v2634
  %7570 = vmatprep.subr.bf16.mxu0 %v2651
  %7571 = vmatpush1.bf16.msra.mxu0 %v2650
  %7572 = vmatprep.subr.bf16.mxu0 %v2667
  %7573 = vmatpush1.bf16.msra.mxu0 %v2666
  %7574 = vmatprep.subr.bf16.mxu0 %v2683
  %7575 = vmatpush1.bf16.msra.mxu0 %v2682
  %7576 = vmatprep.subr.bf16.mxu0 %v2699
  %7577 = vmatpush1.bf16.msra.mxu0 %v2698
  %7578 = vmatprep.subr.bf16.mxu0 %v2715
  %7579 = vmatpush1.bf16.msra.mxu0 %v2714
  %7580 = vmatprep.mubr.bf16.mxu0 %v7178
  %7581 = vmatmul.mubr.bf16.gmra.mrb[0].mxu0 %v7177
  %v7582 = vpop.f32.mrb[0].mxu0
  %v7583 = vadd.f32 %v7542, %v7582
  %v7584 = vpop.f32.mrb[0].mxu0
  %v7585 = vadd.f32 %v7544, %v7584
  %v7586 = vpop.f32.mrb[0].mxu0
  %v7587 = vpop.f32.mrb[0].mxu0
  %7588 = vdwg.mxu0
  %7589 = vmatprep.subr.bf16.mxu0 %v2221
  %7590 = vmatpush1.bf16.msra.mxu0 %v2220
  %7591 = vmatprep.subr.bf16.mxu0 %v2237
  %7592 = vmatpush1.bf16.msra.mxu0 %v2236
  %7593 = vmatprep.subr.bf16.mxu0 %v2253
  %7594 = vmatpush1.bf16.msra.mxu0 %v2252
  %7595 = vmatprep.subr.bf16.mxu0 %v2269
  %7596 = vmatpush1.bf16.msra.mxu0 %v2268
  %7597 = vmatprep.subr.bf16.mxu0 %v2285
  %7598 = vmatpush1.bf16.msra.mxu0 %v2284
  %7599 = vmatprep.subr.bf16.mxu0 %v2301
  %7600 = vmatpush1.bf16.msra.mxu0 %v2300
  %7601 = vmatprep.subr.bf16.mxu0 %v2317
  %7602 = vmatpush1.bf16.msra.mxu0 %v2316
  %7603 = vmatprep.subr.bf16.mxu0 %v2333
  %7604 = vmatpush1.bf16.msra.mxu0 %v2332
  %7605 = vmatprep.subr.bf16.mxu0 %v2349
  %7606 = vmatpush1.bf16.msra.mxu0 %v2348
  %7607 = vmatprep.subr.bf16.mxu0 %v2365
  %7608 = vmatpush1.bf16.msra.mxu0 %v2364
  %7609 = vmatprep.subr.bf16.mxu0 %v2381
  %7610 = vmatpush1.bf16.msra.mxu0 %v2380
  %7611 = vmatprep.subr.bf16.mxu0 %v2397
  %7612 = vmatpush1.bf16.msra.mxu0 %v2396
  %7613 = vmatprep.subr.bf16.mxu0 %v2413
  %7614 = vmatpush1.bf16.msra.mxu0 %v2412
  %7615 = vmatprep.subr.bf16.mxu0 %v2429
  %7616 = vmatpush1.bf16.msra.mxu0 %v2428
  %7617 = vmatprep.subr.bf16.mxu0 %v2445
  %7618 = vmatpush1.bf16.msra.mxu0 %v2444
  %7619 = vmatprep.subr.bf16.mxu0 %v2461
  %7620 = vmatpush1.bf16.msra.mxu0 %v2460
  %7621 = vmatprep.mubr.bf16.mxu0 %v7176
  %7622 = vmatmul.mubr.bf16.gmra.mrb[0].mxu0 %v7175
  %v7623 = vpop.f32.mrb[0].mxu0
  %v7624 = vadd.f32 0.0, %v7623
  %v7625 = vpop.f32.mrb[0].mxu0
  %v7626 = vadd.f32 0.0, %v7625
  %v7627 = vpop.f32.mrb[0].mxu0
  %v7628 = vpop.f32.mrb[0].mxu0
  %7629 = vdwg.mxu0
  %7630 = vmatprep.subr.bf16.mxu0 %v2477
  %7631 = vmatpush1.bf16.msra.mxu0 %v2476
  %7632 = vmatprep.subr.bf16.mxu0 %v2493
  %7633 = vmatpush1.bf16.msra.mxu0 %v2492
  %7634 = vmatprep.subr.bf16.mxu0 %v2509
  %7635 = vmatpush1.bf16.msra.mxu0 %v2508
  %7636 = vmatprep.subr.bf16.mxu0 %v2525
  %7637 = vmatpush1.bf16.msra.mxu0 %v2524
  %7638 = vmatprep.subr.bf16.mxu0 %v2541
  %7639 = vmatpush1.bf16.msra.mxu0 %v2540
  %7640 = vmatprep.subr.bf16.mxu0 %v2557
  %7641 = vmatpush1.bf16.msra.mxu0 %v2556
  %7642 = vmatprep.subr.bf16.mxu0 %v2573
  %7643 = vmatpush1.bf16.msra.mxu0 %v2572
  %7644 = vmatprep.subr.bf16.mxu0 %v2589
  %7645 = vmatpush1.bf16.msra.mxu0 %v2588
  %7646 = vmatprep.subr.bf16.mxu0 %v2605
  %7647 = vmatpush1.bf16.msra.mxu0 %v2604
  %7648 = vmatprep.subr.bf16.mxu0 %v2621
  %7649 = vmatpush1.bf16.msra.mxu0 %v2620
  %7650 = vmatprep.subr.bf16.mxu0 %v2637
  %7651 = vmatpush1.bf16.msra.mxu0 %v2636
  %7652 = vmatprep.subr.bf16.mxu0 %v2653
  %7653 = vmatpush1.bf16.msra.mxu0 %v2652
  %7654 = vmatprep.subr.bf16.mxu0 %v2669
  %7655 = vmatpush1.bf16.msra.mxu0 %v2668
  %7656 = vmatprep.subr.bf16.mxu0 %v2685
  %7657 = vmatpush1.bf16.msra.mxu0 %v2684
  %7658 = vmatprep.subr.bf16.mxu0 %v2701
  %7659 = vmatpush1.bf16.msra.mxu0 %v2700
  %7660 = vmatprep.subr.bf16.mxu0 %v2717
  %7661 = vmatpush1.bf16.msra.mxu0 %v2716
  %7662 = vmatprep.mubr.bf16.mxu0 %v7178
  %7663 = vmatmul.mubr.bf16.gmra.mrb[0].mxu0 %v7177
  %v7664 = vpop.f32.mrb[0].mxu0
  %v7665 = vadd.f32 %v7624, %v7664
  %v7666 = vpop.f32.mrb[0].mxu0
  %v7667 = vadd.f32 %v7626, %v7666
  %v7668 = vpop.f32.mrb[0].mxu0
  %v7669 = vpop.f32.mrb[0].mxu0
  %7670 = vdwg.mxu0
  %7671 = vmatprep.subr.bf16.mxu0 %v2223
  %7672 = vmatpush1.bf16.msra.mxu0 %v2222
  %7673 = vmatprep.subr.bf16.mxu0 %v2239
  %7674 = vmatpush1.bf16.msra.mxu0 %v2238
  %7675 = vmatprep.subr.bf16.mxu0 %v2255
  %7676 = vmatpush1.bf16.msra.mxu0 %v2254
  %7677 = vmatprep.subr.bf16.mxu0 %v2271
  %7678 = vmatpush1.bf16.msra.mxu0 %v2270
  %7679 = vmatprep.subr.bf16.mxu0 %v2287
  %7680 = vmatpush1.bf16.msra.mxu0 %v2286
  %7681 = vmatprep.subr.bf16.mxu0 %v2303
  %7682 = vmatpush1.bf16.msra.mxu0 %v2302
  %7683 = vmatprep.subr.bf16.mxu0 %v2319
  %7684 = vmatpush1.bf16.msra.mxu0 %v2318
  %7685 = vmatprep.subr.bf16.mxu0 %v2335
  %7686 = vmatpush1.bf16.msra.mxu0 %v2334
  %7687 = vmatprep.subr.bf16.mxu0 %v2351
  %7688 = vmatpush1.bf16.msra.mxu0 %v2350
  %7689 = vmatprep.subr.bf16.mxu0 %v2367
  %7690 = vmatpush1.bf16.msra.mxu0 %v2366
  %7691 = vmatprep.subr.bf16.mxu0 %v2383
  %7692 = vmatpush1.bf16.msra.mxu0 %v2382
  %7693 = vmatprep.subr.bf16.mxu0 %v2399
  %7694 = vmatpush1.bf16.msra.mxu0 %v2398
  %7695 = vmatprep.subr.bf16.mxu0 %v2415
  %7696 = vmatpush1.bf16.msra.mxu0 %v2414
  %7697 = vmatprep.subr.bf16.mxu0 %v2431
  %7698 = vmatpush1.bf16.msra.mxu0 %v2430
  %7699 = vmatprep.subr.bf16.mxu0 %v2447
  %7700 = vmatpush1.bf16.msra.mxu0 %v2446
  %7701 = vmatprep.subr.bf16.mxu0 %v2463
  %7702 = vmatpush1.bf16.msra.mxu0 %v2462
  %7703 = vmatprep.mubr.bf16.mxu0 %v7176
  %7704 = vmatmul.mubr.bf16.gmra.mrb[0].mxu0 %v7175
  %v7705 = vpop.f32.mrb[0].mxu0
  %v7706 = vadd.f32 0.0, %v7705
  %v7707 = vpop.f32.mrb[0].mxu0
  %v7708 = vadd.f32 0.0, %v7707
  %v7709 = vpop.f32.mrb[0].mxu0
  %v7710 = vpop.f32.mrb[0].mxu0
  %7711 = vdwg.mxu0
  %7712 = vmatprep.subr.bf16.mxu0 %v2479
  %7713 = vmatpush1.bf16.msra.mxu0 %v2478
  %7714 = vmatprep.subr.bf16.mxu0 %v2495
  %7715 = vmatpush1.bf16.msra.mxu0 %v2494
  %7716 = vmatprep.subr.bf16.mxu0 %v2511
  %7717 = vmatpush1.bf16.msra.mxu0 %v2510
  %7718 = vmatprep.subr.bf16.mxu0 %v2527
  %7719 = vmatpush1.bf16.msra.mxu0 %v2526
  %7720 = vmatprep.subr.bf16.mxu0 %v2543
  %7721 = vmatpush1.bf16.msra.mxu0 %v2542
  %7722 = vmatprep.subr.bf16.mxu0 %v2559
  %7723 = vmatpush1.bf16.msra.mxu0 %v2558
  %7724 = vmatprep.subr.bf16.mxu0 %v2575
  %7725 = vmatpush1.bf16.msra.mxu0 %v2574
  %7726 = vmatprep.subr.bf16.mxu0 %v2591
  %7727 = vmatpush1.bf16.msra.mxu0 %v2590
  %7728 = vmatprep.subr.bf16.mxu0 %v2607
  %7729 = vmatpush1.bf16.msra.mxu0 %v2606
  %7730 = vmatprep.subr.bf16.mxu0 %v2623
  %7731 = vmatpush1.bf16.msra.mxu0 %v2622
  %7732 = vmatprep.subr.bf16.mxu0 %v2639
  %7733 = vmatpush1.bf16.msra.mxu0 %v2638
  %7734 = vmatprep.subr.bf16.mxu0 %v2655
  %7735 = vmatpush1.bf16.msra.mxu0 %v2654
  %7736 = vmatprep.subr.bf16.mxu0 %v2671
  %7737 = vmatpush1.bf16.msra.mxu0 %v2670
  %7738 = vmatprep.subr.bf16.mxu0 %v2687
  %7739 = vmatpush1.bf16.msra.mxu0 %v2686
  %7740 = vmatprep.subr.bf16.mxu0 %v2703
  %7741 = vmatpush1.bf16.msra.mxu0 %v2702
  %7742 = vmatprep.subr.bf16.mxu0 %v2719
  %7743 = vmatpush1.bf16.msra.mxu0 %v2718
  %7744 = vmatprep.mubr.bf16.mxu0 %v7178
  %7745 = vmatmul.mubr.bf16.gmra.mrb[0].mxu0 %v7177
  %v7746 = vpop.f32.mrb[0].mxu0
  %v7747 = vadd.f32 %v7706, %v7746
  %v7748 = vpop.f32.mrb[0].mxu0
  %v7749 = vadd.f32 %v7708, %v7748
  %v7750 = vpop.f32.mrb[0].mxu0
  %v7751 = vpop.f32.mrb[0].mxu0
  %7752 = vdwg.mxu0
  %7753 = vmatprep.subr.bf16.mxu0 %v2225
  %7754 = vmatpush1.bf16.msra.mxu0 %v2224
  %7755 = vmatprep.subr.bf16.mxu0 %v2241
  %7756 = vmatpush1.bf16.msra.mxu0 %v2240
  %7757 = vmatprep.subr.bf16.mxu0 %v2257
  %7758 = vmatpush1.bf16.msra.mxu0 %v2256
  %7759 = vmatprep.subr.bf16.mxu0 %v2273
  %7760 = vmatpush1.bf16.msra.mxu0 %v2272
  %7761 = vmatprep.subr.bf16.mxu0 %v2289
  %7762 = vmatpush1.bf16.msra.mxu0 %v2288
  %7763 = vmatprep.subr.bf16.mxu0 %v2305
  %7764 = vmatpush1.bf16.msra.mxu0 %v2304
  %7765 = vmatprep.subr.bf16.mxu0 %v2321
  %7766 = vmatpush1.bf16.msra.mxu0 %v2320
  %7767 = vmatprep.subr.bf16.mxu0 %v2337
  %7768 = vmatpush1.bf16.msra.mxu0 %v2336
  %7769 = vmatprep.subr.bf16.mxu0 %v2353
  %7770 = vmatpush1.bf16.msra.mxu0 %v2352
  %7771 = vmatprep.subr.bf16.mxu0 %v2369
  %7772 = vmatpush1.bf16.msra.mxu0 %v2368
  %7773 = vmatprep.subr.bf16.mxu0 %v2385
  %7774 = vmatpush1.bf16.msra.mxu0 %v2384
  %7775 = vmatprep.subr.bf16.mxu0 %v2401
  %7776 = vmatpush1.bf16.msra.mxu0 %v2400
  %7777 = vmatprep.subr.bf16.mxu0 %v2417
  %7778 = vmatpush1.bf16.msra.mxu0 %v2416
  %7779 = vmatprep.subr.bf16.mxu0 %v2433
  %7780 = vmatpush1.bf16.msra.mxu0 %v2432
  %7781 = vmatprep.subr.bf16.mxu0 %v2449
  %7782 = vmatpush1.bf16.msra.mxu0 %v2448
  %7783 = vmatprep.subr.bf16.mxu0 %v2465
  %7784 = vmatpush1.bf16.msra.mxu0 %v2464
  %7785 = vmatprep.mubr.bf16.mxu0 %v7176
  %7786 = vmatmul.mubr.bf16.gmra.mrb[0].mxu0 %v7175
  %v7787 = vpop.f32.mrb[0].mxu0
  %v7788 = vadd.f32 0.0, %v7787
  %v7789 = vpop.f32.mrb[0].mxu0
  %v7790 = vadd.f32 0.0, %v7789
  %v7791 = vpop.f32.mrb[0].mxu0
  %v7792 = vpop.f32.mrb[0].mxu0
  %7793 = vdwg.mxu0
  %7794 = vmatprep.subr.bf16.mxu0 %v2481
  %7795 = vmatpush1.bf16.msra.mxu0 %v2480
  %7796 = vmatprep.subr.bf16.mxu0 %v2497
  %7797 = vmatpush1.bf16.msra.mxu0 %v2496
  %7798 = vmatprep.subr.bf16.mxu0 %v2513
  %7799 = vmatpush1.bf16.msra.mxu0 %v2512
  %7800 = vmatprep.subr.bf16.mxu0 %v2529
  %7801 = vmatpush1.bf16.msra.mxu0 %v2528
  %7802 = vmatprep.subr.bf16.mxu0 %v2545
  %7803 = vmatpush1.bf16.msra.mxu0 %v2544
  %7804 = vmatprep.subr.bf16.mxu0 %v2561
  %7805 = vmatpush1.bf16.msra.mxu0 %v2560
  %7806 = vmatprep.subr.bf16.mxu0 %v2577
  %7807 = vmatpush1.bf16.msra.mxu0 %v2576
  %7808 = vmatprep.subr.bf16.mxu0 %v2593
  %7809 = vmatpush1.bf16.msra.mxu0 %v2592
  %7810 = vmatprep.subr.bf16.mxu0 %v2609
  %7811 = vmatpush1.bf16.msra.mxu0 %v2608
  %7812 = vmatprep.subr.bf16.mxu0 %v2625
  %7813 = vmatpush1.bf16.msra.mxu0 %v2624
  %7814 = vmatprep.subr.bf16.mxu0 %v2641
  %7815 = vmatpush1.bf16.msra.mxu0 %v2640
  %7816 = vmatprep.subr.bf16.mxu0 %v2657
  %7817 = vmatpush1.bf16.msra.mxu0 %v2656
  %7818 = vmatprep.subr.bf16.mxu0 %v2673
  %7819 = vmatpush1.bf16.msra.mxu0 %v2672
  %7820 = vmatprep.subr.bf16.mxu0 %v2689
  %7821 = vmatpush1.bf16.msra.mxu0 %v2688
  %7822 = vmatprep.subr.bf16.mxu0 %v2705
  %7823 = vmatpush1.bf16.msra.mxu0 %v2704
  %7824 = vmatprep.subr.bf16.mxu0 %v2721
  %7825 = vmatpush1.bf16.msra.mxu0 %v2720
  %7826 = vmatprep.mubr.bf16.mxu0 %v7178
  %7827 = vmatmul.mubr.bf16.gmra.mrb[0].mxu0 %v7177
  %v7828 = vpop.f32.mrb[0].mxu0
  %v7829 = vadd.f32 %v7788, %v7828
  %v7830 = vpop.f32.mrb[0].mxu0
  %v7831 = vadd.f32 %v7790, %v7830
  %v7832 = vpop.f32.mrb[0].mxu0
  %v7833 = vpop.f32.mrb[0].mxu0
  %7834 = vdwg.mxu0
  %v7835 = vadd.f32 %v7159, %v7255
  %v7836 = vadd.f32 %v7160, %v7257
  %v7837 = vadd.f32 %v7161, %v7337
  %v7838 = vadd.f32 %v7162, %v7339
  %v7839 = vadd.f32 %v7163, %v7419
  %v7840 = vadd.f32 %v7164, %v7421
  %v7841 = vadd.f32 %v7165, %v7501
  %v7842 = vadd.f32 %v7166, %v7503
  %v7843 = vadd.f32 %v7167, %v7583
  %v7844 = vadd.f32 %v7168, %v7585
  %v7845 = vadd.f32 %v7169, %v7665
  %v7846 = vadd.f32 %v7170, %v7667
  %v7847 = vadd.f32 %v7171, %v7747
  %v7848 = vadd.f32 %v7172, %v7749
  %v7849 = vadd.f32 %v7173, %v7829
  %v7850 = vadd.f32 %v7174, %v7831
  %v7851 = vmul.f32 %v7835, 0.5
  %v7852 = vmul.f32 %v7836, 0.5
  %v7853 = vmul.f32 %v7837, 0.5
  %v7854 = vmul.f32 %v7838, 0.5
  %v7855 = vtanh.pop %v7851
  %v7856 = vtanh.pop %v7852
  %v7857 = vtanh.pop %v7853
  %v7858 = vtanh.pop %v7854
  %v7859 = vadd.f32 %v7855, 1.0
  %v7860 = vadd.f32 %v7856, 1.0
  %v7861 = vadd.f32 %v7857, 1.0
  %v7862 = vadd.f32 %v7858, 1.0
  %v7863 = vmul.f32 %v7859, 0.5
  %v7864 = vmul.f32 %v7860, 0.5
  %v7865 = vmul.f32 %v7861, 0.5
  %v7866 = vmul.f32 %v7862, 0.5
  %v7867 = vmul.f32 %v7839, 0.5
  %v7868 = vmul.f32 %v7840, 0.5
  %v7869 = vmul.f32 %v7841, 0.5
  %v7870 = vmul.f32 %v7842, 0.5
  %v7871 = vtanh.pop %v7867
  %v7872 = vtanh.pop %v7868
  %v7873 = vtanh.pop %v7869
  %v7874 = vtanh.pop %v7870
  %v7875 = vadd.f32 %v7871, 1.0
  %v7876 = vadd.f32 %v7872, 1.0
  %v7877 = vadd.f32 %v7873, 1.0
  %v7878 = vadd.f32 %v7874, 1.0
  %v7879 = vmul.f32 %v7875, 0.5
  %v7880 = vmul.f32 %v7876, 0.5
  %v7881 = vmul.f32 %v7877, 0.5
  %v7882 = vmul.f32 %v7878, 0.5
  %v7883 = vtanh.pop %v7843
  %v7884 = vtanh.pop %v7844
  %v7885 = vtanh.pop %v7845
  %v7886 = vtanh.pop %v7846
  %v7887 = vmul.f32 %v7847, 0.5
  %v7888 = vmul.f32 %v7848, 0.5
  %v7889 = vmul.f32 %v7849, 0.5
  %v7890 = vmul.f32 %v7850, 0.5
  %v7891 = vtanh.pop %v7887
  %v7892 = vtanh.pop %v7888
  %v7893 = vtanh.pop %v7889
  %v7894 = vtanh.pop %v7890
  %v7895 = vadd.f32 %v7891, 1.0
  %v7896 = vadd.f32 %v7892, 1.0
  %v7897 = vadd.f32 %v7893, 1.0
  %v7898 = vadd.f32 %v7894, 1.0
  %v7899 = vmul.f32 %v7895, 0.5
  %v7900 = vmul.f32 %v7896, 0.5
  %v7901 = vmul.f32 %v7897, 0.5
  %v7902 = vmul.f32 %v7898, 0.5
  %v7903 = vmul.f32 %v7879, %v7122
  %v7904 = vmul.f32 %v7880, %v7123
  %v7905 = vmul.f32 %v7881, %v7124
  %v7906 = vmul.f32 %v7882, %v7125
  %v7907 = vmul.f32 %v7863, %v7883
  %v7908 = vmul.f32 %v7864, %v7884
  %v7909 = vmul.f32 %v7865, %v7885
  %v7910 = vmul.f32 %v7866, %v7886
  %v7911 = vadd.f32 %v7903, %v7907
  %v7912 = vadd.f32 %v7904, %v7908
  %v7913 = vadd.f32 %v7905, %v7909
  %v7914 = vadd.f32 %v7906, %v7910
  %v7915 = vtanh.pop %v7911
  %v7916 = vtanh.pop %v7912
  %v7917 = vtanh.pop %v7913
  %v7918 = vtanh.pop %v7914
  %v7919 = vmul.f32 %v7899, %v7915
  %v7920 = vmul.f32 %v7900, %v7916
  %v7921 = vmul.f32 %v7901, %v7917
  %v7922 = vmul.f32 %v7902, %v7918
  %s7923 = scalar_lea.vmem %s0, 384
  %v7924 = vld [vmem:[%s7923] sm:$0xff]
  %v7925 = vld [vmem:[%s7923 + $0x8] sm:$0xff]
  %v7926 = vld [vmem:[%s7923 + $0x10] sm:$0xff]
  %v7927 = vld [vmem:[%s7923 + $0x18] sm:$0xff]
  %v7928 = vld [vmem:[%s7923 + $0x20] sm:$0xff]
  %v7929 = vld [vmem:[%s7923 + $0x28] sm:$0xff]
  %v7930 = vld [vmem:[%s7923 + $0x30] sm:$0xff]
  %v7931 = vld [vmem:[%s7923 + $0x38] sm:$0xff]
  %v7932 = vunpack.c.l.bf16 %v7924
  %v7933 = vunpack.c.h.bf16 %v7924
  %v7934 = vunpack.c.l.bf16 %v7925
  %v7935 = vunpack.c.h.bf16 %v7925
  %v7936 = vunpack.c.l.bf16 %v7926
  %v7937 = vunpack.c.h.bf16 %v7926
  %v7938 = vunpack.c.l.bf16 %v7927
  %v7939 = vunpack.c.h.bf16 %v7927
  %v7940 = vunpack.c.l.bf16 %v7928
  %v7941 = vunpack.c.h.bf16 %v7928
  %v7942 = vunpack.c.l.bf16 %v7929
  %v7943 = vunpack.c.h.bf16 %v7929
  %v7944 = vunpack.c.l.bf16 %v7930
  %v7945 = vunpack.c.h.bf16 %v7930
  %v7946 = vunpack.c.l.bf16 %v7931
  %v7947 = vunpack.c.h.bf16 %v7931
  %v7948 = vadd.f32 %v7932, %v577
  %v7949 = vadd.f32 %v7933, %v581
  %v7950 = vadd.f32 %v7934, %v585
  %v7951 = vadd.f32 %v7935, %v589
  %v7952 = vadd.f32 %v7936, %v593
  %v7953 = vadd.f32 %v7937, %v597
  %v7954 = vadd.f32 %v7938, %v601
  %v7955 = vadd.f32 %v7939, %v605
  %v7956 = vadd.f32 %v7940, %v609
  %v7957 = vadd.f32 %v7941, %v613
  %v7958 = vadd.f32 %v7942, %v617
  %v7959 = vadd.f32 %v7943, %v621
  %v7960 = vadd.f32 %v7944, %v625
  %v7961 = vadd.f32 %v7945, %v629
  %v7962 = vadd.f32 %v7946, %v633
  %v7963 = vadd.f32 %v7947, %v637
  %v7964 = vpack.c.bf16 %v7919, %v7919
  %v7965 = vpack.c.bf16 %v7920, %v7920
  %v7966 = vpack.c.bf16 %v7921, %v7921
  %v7967 = vpack.c.bf16 %v7922, %v7922
  %7968 = vmatprep.subr.bf16.mxu0 %v2211
  %7969 = vmatpush1.bf16.msra.mxu0 %v2210
  %7970 = vmatprep.subr.bf16.mxu0 %v2227
  %7971 = vmatpush1.bf16.msra.mxu0 %v2226
  %7972 = vmatprep.subr.bf16.mxu0 %v2243
  %7973 = vmatpush1.bf16.msra.mxu0 %v2242
  %7974 = vmatprep.subr.bf16.mxu0 %v2259
  %7975 = vmatpush1.bf16.msra.mxu0 %v2258
  %7976 = vmatprep.subr.bf16.mxu0 %v2275
  %7977 = vmatpush1.bf16.msra.mxu0 %v2274
  %7978 = vmatprep.subr.bf16.mxu0 %v2291
  %7979 = vmatpush1.bf16.msra.mxu0 %v2290
  %7980 = vmatprep.subr.bf16.mxu0 %v2307
  %7981 = vmatpush1.bf16.msra.mxu0 %v2306
  %7982 = vmatprep.subr.bf16.mxu0 %v2323
  %7983 = vmatpush1.bf16.msra.mxu0 %v2322
  %7984 = vmatprep.subr.bf16.mxu0 %v2339
  %7985 = vmatpush1.bf16.msra.mxu0 %v2338
  %7986 = vmatprep.subr.bf16.mxu0 %v2355
  %7987 = vmatpush1.bf16.msra.mxu0 %v2354
  %7988 = vmatprep.subr.bf16.mxu0 %v2371
  %7989 = vmatpush1.bf16.msra.mxu0 %v2370
  %7990 = vmatprep.subr.bf16.mxu0 %v2387
  %7991 = vmatpush1.bf16.msra.mxu0 %v2386
  %7992 = vmatprep.subr.bf16.mxu0 %v2403
  %7993 = vmatpush1.bf16.msra.mxu0 %v2402
  %7994 = vmatprep.subr.bf16.mxu0 %v2419
  %7995 = vmatpush1.bf16.msra.mxu0 %v2418
  %7996 = vmatprep.subr.bf16.mxu0 %v2435
  %7997 = vmatpush1.bf16.msra.mxu0 %v2434
  %7998 = vmatprep.subr.bf16.mxu0 %v2451
  %7999 = vmatpush1.bf16.msra.mxu0 %v2450
  %8000 = vmatprep.mubr.bf16.mxu0 %v7965
  %8001 = vmatmul.mubr.bf16.gmra.mrb[0].mxu0 %v7964
  %v8002 = vpop.f32.mrb[0].mxu0
  %v8003 = vadd.f32 0.0, %v8002
  %v8004 = vpop.f32.mrb[0].mxu0
  %v8005 = vadd.f32 0.0, %v8004
  %v8006 = vpop.f32.mrb[0].mxu0
  %v8007 = vpop.f32.mrb[0].mxu0
  %8008 = vdwg.mxu0
  %8009 = vmatprep.subr.bf16.mxu0 %v2467
  %8010 = vmatpush1.bf16.msra.mxu0 %v2466
  %8011 = vmatprep.subr.bf16.mxu0 %v2483
  %8012 = vmatpush1.bf16.msra.mxu0 %v2482
  %8013 = vmatprep.subr.bf16.mxu0 %v2499
  %8014 = vmatpush1.bf16.msra.mxu0 %v2498
  %8015 = vmatprep.subr.bf16.mxu0 %v2515
  %8016 = vmatpush1.bf16.msra.mxu0 %v2514
  %8017 = vmatprep.subr.bf16.mxu0 %v2531
  %8018 = vmatpush1.bf16.msra.mxu0 %v2530
  %8019 = vmatprep.subr.bf16.mxu0 %v2547
  %8020 = vmatpush1.bf16.msra.mxu0 %v2546
  %8021 = vmatprep.subr.bf16.mxu0 %v2563
  %8022 = vmatpush1.bf16.msra.mxu0 %v2562
  %8023 = vmatprep.subr.bf16.mxu0 %v2579
  %8024 = vmatpush1.bf16.msra.mxu0 %v2578
  %8025 = vmatprep.subr.bf16.mxu0 %v2595
  %8026 = vmatpush1.bf16.msra.mxu0 %v2594
  %8027 = vmatprep.subr.bf16.mxu0 %v2611
  %8028 = vmatpush1.bf16.msra.mxu0 %v2610
  %8029 = vmatprep.subr.bf16.mxu0 %v2627
  %8030 = vmatpush1.bf16.msra.mxu0 %v2626
  %8031 = vmatprep.subr.bf16.mxu0 %v2643
  %8032 = vmatpush1.bf16.msra.mxu0 %v2642
  %8033 = vmatprep.subr.bf16.mxu0 %v2659
  %8034 = vmatpush1.bf16.msra.mxu0 %v2658
  %8035 = vmatprep.subr.bf16.mxu0 %v2675
  %8036 = vmatpush1.bf16.msra.mxu0 %v2674
  %8037 = vmatprep.subr.bf16.mxu0 %v2691
  %8038 = vmatpush1.bf16.msra.mxu0 %v2690
  %8039 = vmatprep.subr.bf16.mxu0 %v2707
  %8040 = vmatpush1.bf16.msra.mxu0 %v2706
  %8041 = vmatprep.mubr.bf16.mxu0 %v7967
  %8042 = vmatmul.mubr.bf16.gmra.mrb[0].mxu0 %v7966
  %v8043 = vpop.f32.mrb[0].mxu0
  %v8044 = vadd.f32 %v8003, %v8043
  %v8045 = vpop.f32.mrb[0].mxu0
  %v8046 = vadd.f32 %v8005, %v8045
  %v8047 = vpop.f32.mrb[0].mxu0
  %v8048 = vpop.f32.mrb[0].mxu0
  %8049 = vdwg.mxu0
  %8050 = vmatprep.subr.bf16.mxu0 %v2213
  %8051 = vmatpush1.bf16.msra.mxu0 %v2212
  %8052 = vmatprep.subr.bf16.mxu0 %v2229
  %8053 = vmatpush1.bf16.msra.mxu0 %v2228
  %8054 = vmatprep.subr.bf16.mxu0 %v2245
  %8055 = vmatpush1.bf16.msra.mxu0 %v2244
  %8056 = vmatprep.subr.bf16.mxu0 %v2261
  %8057 = vmatpush1.bf16.msra.mxu0 %v2260
  %8058 = vmatprep.subr.bf16.mxu0 %v2277
  %8059 = vmatpush1.bf16.msra.mxu0 %v2276
  %8060 = vmatprep.subr.bf16.mxu0 %v2293
  %8061 = vmatpush1.bf16.msra.mxu0 %v2292
  %8062 = vmatprep.subr.bf16.mxu0 %v2309
  %8063 = vmatpush1.bf16.msra.mxu0 %v2308
  %8064 = vmatprep.subr.bf16.mxu0 %v2325
  %8065 = vmatpush1.bf16.msra.mxu0 %v2324
  %8066 = vmatprep.subr.bf16.mxu0 %v2341
  %8067 = vmatpush1.bf16.msra.mxu0 %v2340
  %8068 = vmatprep.subr.bf16.mxu0 %v2357
  %8069 = vmatpush1.bf16.msra.mxu0 %v2356
  %8070 = vmatprep.subr.bf16.mxu0 %v2373
  %8071 = vmatpush1.bf16.msra.mxu0 %v2372
  %8072 = vmatprep.subr.bf16.mxu0 %v2389
  %8073 = vmatpush1.bf16.msra.mxu0 %v2388
  %8074 = vmatprep.subr.bf16.mxu0 %v2405
  %8075 = vmatpush1.bf16.msra.mxu0 %v2404
  %8076 = vmatprep.subr.bf16.mxu0 %v2421
  %8077 = vmatpush1.bf16.msra.mxu0 %v2420
  %8078 = vmatprep.subr.bf16.mxu0 %v2437
  %8079 = vmatpush1.bf16.msra.mxu0 %v2436
  %8080 = vmatprep.subr.bf16.mxu0 %v2453
  %8081 = vmatpush1.bf16.msra.mxu0 %v2452
  %8082 = vmatprep.mubr.bf16.mxu0 %v7965
  %8083 = vmatmul.mubr.bf16.gmra.mrb[0].mxu0 %v7964
  %v8084 = vpop.f32.mrb[0].mxu0
  %v8085 = vadd.f32 0.0, %v8084
  %v8086 = vpop.f32.mrb[0].mxu0
  %v8087 = vadd.f32 0.0, %v8086
  %v8088 = vpop.f32.mrb[0].mxu0
  %v8089 = vpop.f32.mrb[0].mxu0
  %8090 = vdwg.mxu0
  %8091 = vmatprep.subr.bf16.mxu0 %v2469
  %8092 = vmatpush1.bf16.msra.mxu0 %v2468
  %8093 = vmatprep.subr.bf16.mxu0 %v2485
  %8094 = vmatpush1.bf16.msra.mxu0 %v2484
  %8095 = vmatprep.subr.bf16.mxu0 %v2501
  %8096 = vmatpush1.bf16.msra.mxu0 %v2500
  %8097 = vmatprep.subr.bf16.mxu0 %v2517
  %8098 = vmatpush1.bf16.msra.mxu0 %v2516
  %8099 = vmatprep.subr.bf16.mxu0 %v2533
  %8100 = vmatpush1.bf16.msra.mxu0 %v2532
  %8101 = vmatprep.subr.bf16.mxu0 %v2549
  %8102 = vmatpush1.bf16.msra.mxu0 %v2548
  %8103 = vmatprep.subr.bf16.mxu0 %v2565
  %8104 = vmatpush1.bf16.msra.mxu0 %v2564
  %8105 = vmatprep.subr.bf16.mxu0 %v2581
  %8106 = vmatpush1.bf16.msra.mxu0 %v2580
  %8107 = vmatprep.subr.bf16.mxu0 %v2597
  %8108 = vmatpush1.bf16.msra.mxu0 %v2596
  %8109 = vmatprep.subr.bf16.mxu0 %v2613
  %8110 = vmatpush1.bf16.msra.mxu0 %v2612
  %8111 = vmatprep.subr.bf16.mxu0 %v2629
  %8112 = vmatpush1.bf16.msra.mxu0 %v2628
  %8113 = vmatprep.subr.bf16.mxu0 %v2645
  %8114 = vmatpush1.bf16.msra.mxu0 %v2644
  %8115 = vmatprep.subr.bf16.mxu0 %v2661
  %8116 = vmatpush1.bf16.msra.mxu0 %v2660
  %8117 = vmatprep.subr.bf16.mxu0 %v2677
  %8118 = vmatpush1.bf16.msra.mxu0 %v2676
  %8119 = vmatprep.subr.bf16.mxu0 %v2693
  %8120 = vmatpush1.bf16.msra.mxu0 %v2692
  %8121 = vmatprep.subr.bf16.mxu0 %v2709
  %8122 = vmatpush1.bf16.msra.mxu0 %v2708
  %8123 = vmatprep.mubr.bf16.mxu0 %v7967
  %8124 = vmatmul.mubr.bf16.gmra.mrb[0].mxu0 %v7966
  %v8125 = vpop.f32.mrb[0].mxu0
  %v8126 = vadd.f32 %v8085, %v8125
  %v8127 = vpop.f32.mrb[0].mxu0
  %v8128 = vadd.f32 %v8087, %v8127
  %v8129 = vpop.f32.mrb[0].mxu0
  %v8130 = vpop.f32.mrb[0].mxu0
  %8131 = vdwg.mxu0
  %8132 = vmatprep.subr.bf16.mxu0 %v2215
  %8133 = vmatpush1.bf16.msra.mxu0 %v2214
  %8134 = vmatprep.subr.bf16.mxu0 %v2231
  %8135 = vmatpush1.bf16.msra.mxu0 %v2230
  %8136 = vmatprep.subr.bf16.mxu0 %v2247
  %8137 = vmatpush1.bf16.msra.mxu0 %v2246
  %8138 = vmatprep.subr.bf16.mxu0 %v2263
  %8139 = vmatpush1.bf16.msra.mxu0 %v2262
  %8140 = vmatprep.subr.bf16.mxu0 %v2279
  %8141 = vmatpush1.bf16.msra.mxu0 %v2278
  %8142 = vmatprep.subr.bf16.mxu0 %v2295
  %8143 = vmatpush1.bf16.msra.mxu0 %v2294
  %8144 = vmatprep.subr.bf16.mxu0 %v2311
  %8145 = vmatpush1.bf16.msra.mxu0 %v2310
  %8146 = vmatprep.subr.bf16.mxu0 %v2327
  %8147 = vmatpush1.bf16.msra.mxu0 %v2326
  %8148 = vmatprep.subr.bf16.mxu0 %v2343
  %8149 = vmatpush1.bf16.msra.mxu0 %v2342
  %8150 = vmatprep.subr.bf16.mxu0 %v2359
  %8151 = vmatpush1.bf16.msra.mxu0 %v2358
  %8152 = vmatprep.subr.bf16.mxu0 %v2375
  %8153 = vmatpush1.bf16.msra.mxu0 %v2374
  %8154 = vmatprep.subr.bf16.mxu0 %v2391
  %8155 = vmatpush1.bf16.msra.mxu0 %v2390
  %8156 = vmatprep.subr.bf16.mxu0 %v2407
  %8157 = vmatpush1.bf16.msra.mxu0 %v2406
  %8158 = vmatprep.subr.bf16.mxu0 %v2423
  %8159 = vmatpush1.bf16.msra.mxu0 %v2422
  %8160 = vmatprep.subr.bf16.mxu0 %v2439
  %8161 = vmatpush1.bf16.msra.mxu0 %v2438
  %8162 = vmatprep.subr.bf16.mxu0 %v2455
  %8163 = vmatpush1.bf16.msra.mxu0 %v2454
  %8164 = vmatprep.mubr.bf16.mxu0 %v7965
  %8165 = vmatmul.mubr.bf16.gmra.mrb[0].mxu0 %v7964
  %v8166 = vpop.f32.mrb[0].mxu0
  %v8167 = vadd.f32 0.0, %v8166
  %v8168 = vpop.f32.mrb[0].mxu0
  %v8169 = vadd.f32 0.0, %v8168
  %v8170 = vpop.f32.mrb[0].mxu0
  %v8171 = vpop.f32.mrb[0].mxu0
  %8172 = vdwg.mxu0
  %8173 = vmatprep.subr.bf16.mxu0 %v2471
  %8174 = vmatpush1.bf16.msra.mxu0 %v2470
  %8175 = vmatprep.subr.bf16.mxu0 %v2487
  %8176 = vmatpush1.bf16.msra.mxu0 %v2486
  %8177 = vmatprep.subr.bf16.mxu0 %v2503
  %8178 = vmatpush1.bf16.msra.mxu0 %v2502
  %8179 = vmatprep.subr.bf16.mxu0 %v2519
  %8180 = vmatpush1.bf16.msra.mxu0 %v2518
  %8181 = vmatprep.subr.bf16.mxu0 %v2535
  %8182 = vmatpush1.bf16.msra.mxu0 %v2534
  %8183 = vmatprep.subr.bf16.mxu0 %v2551
  %8184 = vmatpush1.bf16.msra.mxu0 %v2550
  %8185 = vmatprep.subr.bf16.mxu0 %v2567
  %8186 = vmatpush1.bf16.msra.mxu0 %v2566
  %8187 = vmatprep.subr.bf16.mxu0 %v2583
  %8188 = vmatpush1.bf16.msra.mxu0 %v2582
  %8189 = vmatprep.subr.bf16.mxu0 %v2599
  %8190 = vmatpush1.bf16.msra.mxu0 %v2598
  %8191 = vmatprep.subr.bf16.mxu0 %v2615
  %8192 = vmatpush1.bf16.msra.mxu0 %v2614
  %8193 = vmatprep.subr.bf16.mxu0 %v2631
  %8194 = vmatpush1.bf16.msra.mxu0 %v2630
  %8195 = vmatprep.subr.bf16.mxu0 %v2647
  %8196 = vmatpush1.bf16.msra.mxu0 %v2646
  %8197 = vmatprep.subr.bf16.mxu0 %v2663
  %8198 = vmatpush1.bf16.msra.mxu0 %v2662
  %8199 = vmatprep.subr.bf16.mxu0 %v2679
  %8200 = vmatpush1.bf16.msra.mxu0 %v2678
  %8201 = vmatprep.subr.bf16.mxu0 %v2695
  %8202 = vmatpush1.bf16.msra.mxu0 %v2694
  %8203 = vmatprep.subr.bf16.mxu0 %v2711
  %8204 = vmatpush1.bf16.msra.mxu0 %v2710
  %8205 = vmatprep.mubr.bf16.mxu0 %v7967
  %8206 = vmatmul.mubr.bf16.gmra.mrb[0].mxu0 %v7966
  %v8207 = vpop.f32.mrb[0].mxu0
  %v8208 = vadd.f32 %v8167, %v8207
  %v8209 = vpop.f32.mrb[0].mxu0
  %v8210 = vadd.f32 %v8169, %v8209
  %v8211 = vpop.f32.mrb[0].mxu0
  %v8212 = vpop.f32.mrb[0].mxu0
  %8213 = vdwg.mxu0
  %8214 = vmatprep.subr.bf16.mxu0 %v2217
  %8215 = vmatpush1.bf16.msra.mxu0 %v2216
  %8216 = vmatprep.subr.bf16.mxu0 %v2233
  %8217 = vmatpush1.bf16.msra.mxu0 %v2232
  %8218 = vmatprep.subr.bf16.mxu0 %v2249
  %8219 = vmatpush1.bf16.msra.mxu0 %v2248
  %8220 = vmatprep.subr.bf16.mxu0 %v2265
  %8221 = vmatpush1.bf16.msra.mxu0 %v2264
  %8222 = vmatprep.subr.bf16.mxu0 %v2281
  %8223 = vmatpush1.bf16.msra.mxu0 %v2280
  %8224 = vmatprep.subr.bf16.mxu0 %v2297
  %8225 = vmatpush1.bf16.msra.mxu0 %v2296
  %8226 = vmatprep.subr.bf16.mxu0 %v2313
  %8227 = vmatpush1.bf16.msra.mxu0 %v2312
  %8228 = vmatprep.subr.bf16.mxu0 %v2329
  %8229 = vmatpush1.bf16.msra.mxu0 %v2328
  %8230 = vmatprep.subr.bf16.mxu0 %v2345
  %8231 = vmatpush1.bf16.msra.mxu0 %v2344
  %8232 = vmatprep.subr.bf16.mxu0 %v2361
  %8233 = vmatpush1.bf16.msra.mxu0 %v2360
  %8234 = vmatprep.subr.bf16.mxu0 %v2377
  %8235 = vmatpush1.bf16.msra.mxu0 %v2376
  %8236 = vmatprep.subr.bf16.mxu0 %v2393
  %8237 = vmatpush1.bf16.msra.mxu0 %v2392
  %8238 = vmatprep.subr.bf16.mxu0 %v2409
  %8239 = vmatpush1.bf16.msra.mxu0 %v2408
  %8240 = vmatprep.subr.bf16.mxu0 %v2425
  %8241 = vmatpush1.bf16.msra.mxu0 %v2424
  %8242 = vmatprep.subr.bf16.mxu0 %v2441
  %8243 = vmatpush1.bf16.msra.mxu0 %v2440
  %8244 = vmatprep.subr.bf16.mxu0 %v2457
  %8245 = vmatpush1.bf16.msra.mxu0 %v2456
  %8246 = vmatprep.mubr.bf16.mxu0 %v7965
  %8247 = vmatmul.mubr.bf16.gmra.mrb[0].mxu0 %v7964
  %v8248 = vpop.f32.mrb[0].mxu0
  %v8249 = vadd.f32 0.0, %v8248
  %v8250 = vpop.f32.mrb[0].mxu0
  %v8251 = vadd.f32 0.0, %v8250
  %v8252 = vpop.f32.mrb[0].mxu0
  %v8253 = vpop.f32.mrb[0].mxu0
  %8254 = vdwg.mxu0
  %8255 = vmatprep.subr.bf16.mxu0 %v2473
  %8256 = vmatpush1.bf16.msra.mxu0 %v2472
  %8257 = vmatprep.subr.bf16.mxu0 %v2489
  %8258 = vmatpush1.bf16.msra.mxu0 %v2488
  %8259 = vmatprep.subr.bf16.mxu0 %v2505
  %8260 = vmatpush1.bf16.msra.mxu0 %v2504
  %8261 = vmatprep.subr.bf16.mxu0 %v2521
  %8262 = vmatpush1.bf16.msra.mxu0 %v2520
  %8263 = vmatprep.subr.bf16.mxu0 %v2537
  %8264 = vmatpush1.bf16.msra.mxu0 %v2536
  %8265 = vmatprep.subr.bf16.mxu0 %v2553
  %8266 = vmatpush1.bf16.msra.mxu0 %v2552
  %8267 = vmatprep.subr.bf16.mxu0 %v2569
  %8268 = vmatpush1.bf16.msra.mxu0 %v2568
  %8269 = vmatprep.subr.bf16.mxu0 %v2585
  %8270 = vmatpush1.bf16.msra.mxu0 %v2584
  %8271 = vmatprep.subr.bf16.mxu0 %v2601
  %8272 = vmatpush1.bf16.msra.mxu0 %v2600
  %8273 = vmatprep.subr.bf16.mxu0 %v2617
  %8274 = vmatpush1.bf16.msra.mxu0 %v2616
  %8275 = vmatprep.subr.bf16.mxu0 %v2633
  %8276 = vmatpush1.bf16.msra.mxu0 %v2632
  %8277 = vmatprep.subr.bf16.mxu0 %v2649
  %8278 = vmatpush1.bf16.msra.mxu0 %v2648
  %8279 = vmatprep.subr.bf16.mxu0 %v2665
  %8280 = vmatpush1.bf16.msra.mxu0 %v2664
  %8281 = vmatprep.subr.bf16.mxu0 %v2681
  %8282 = vmatpush1.bf16.msra.mxu0 %v2680
  %8283 = vmatprep.subr.bf16.mxu0 %v2697
  %8284 = vmatpush1.bf16.msra.mxu0 %v2696
  %8285 = vmatprep.subr.bf16.mxu0 %v2713
  %8286 = vmatpush1.bf16.msra.mxu0 %v2712
  %8287 = vmatprep.mubr.bf16.mxu0 %v7967
  %8288 = vmatmul.mubr.bf16.gmra.mrb[0].mxu0 %v7966
  %v8289 = vpop.f32.mrb[0].mxu0
  %v8290 = vadd.f32 %v8249, %v8289
  %v8291 = vpop.f32.mrb[0].mxu0
  %v8292 = vadd.f32 %v8251, %v8291
  %v8293 = vpop.f32.mrb[0].mxu0
  %v8294 = vpop.f32.mrb[0].mxu0
  %8295 = vdwg.mxu0
  %8296 = vmatprep.subr.bf16.mxu0 %v2219
  %8297 = vmatpush1.bf16.msra.mxu0 %v2218
  %8298 = vmatprep.subr.bf16.mxu0 %v2235
  %8299 = vmatpush1.bf16.msra.mxu0 %v2234
  %8300 = vmatprep.subr.bf16.mxu0 %v2251
  %8301 = vmatpush1.bf16.msra.mxu0 %v2250
  %8302 = vmatprep.subr.bf16.mxu0 %v2267
  %8303 = vmatpush1.bf16.msra.mxu0 %v2266
  %8304 = vmatprep.subr.bf16.mxu0 %v2283
  %8305 = vmatpush1.bf16.msra.mxu0 %v2282
  %8306 = vmatprep.subr.bf16.mxu0 %v2299
  %8307 = vmatpush1.bf16.msra.mxu0 %v2298
  %8308 = vmatprep.subr.bf16.mxu0 %v2315
  %8309 = vmatpush1.bf16.msra.mxu0 %v2314
  %8310 = vmatprep.subr.bf16.mxu0 %v2331
  %8311 = vmatpush1.bf16.msra.mxu0 %v2330
  %8312 = vmatprep.subr.bf16.mxu0 %v2347
  %8313 = vmatpush1.bf16.msra.mxu0 %v2346
  %8314 = vmatprep.subr.bf16.mxu0 %v2363
  %8315 = vmatpush1.bf16.msra.mxu0 %v2362
  %8316 = vmatprep.subr.bf16.mxu0 %v2379
  %8317 = vmatpush1.bf16.msra.mxu0 %v2378
  %8318 = vmatprep.subr.bf16.mxu0 %v2395
  %8319 = vmatpush1.bf16.msra.mxu0 %v2394
  %8320 = vmatprep.subr.bf16.mxu0 %v2411
  %8321 = vmatpush1.bf16.msra.mxu0 %v2410
  %8322 = vmatprep.subr.bf16.mxu0 %v2427
  %8323 = vmatpush1.bf16.msra.mxu0 %v2426
  %8324 = vmatprep.subr.bf16.mxu0 %v2443
  %8325 = vmatpush1.bf16.msra.mxu0 %v2442
  %8326 = vmatprep.subr.bf16.mxu0 %v2459
  %8327 = vmatpush1.bf16.msra.mxu0 %v2458
  %8328 = vmatprep.mubr.bf16.mxu0 %v7965
  %8329 = vmatmul.mubr.bf16.gmra.mrb[0].mxu0 %v7964
  %v8330 = vpop.f32.mrb[0].mxu0
  %v8331 = vadd.f32 0.0, %v8330
  %v8332 = vpop.f32.mrb[0].mxu0
  %v8333 = vadd.f32 0.0, %v8332
  %v8334 = vpop.f32.mrb[0].mxu0
  %v8335 = vpop.f32.mrb[0].mxu0
  %8336 = vdwg.mxu0
  %8337 = vmatprep.subr.bf16.mxu0 %v2475
  %8338 = vmatpush1.bf16.msra.mxu0 %v2474
  %8339 = vmatprep.subr.bf16.mxu0 %v2491
  %8340 = vmatpush1.bf16.msra.mxu0 %v2490
  %8341 = vmatprep.subr.bf16.mxu0 %v2507
  %8342 = vmatpush1.bf16.msra.mxu0 %v2506
  %8343 = vmatprep.subr.bf16.mxu0 %v2523
  %8344 = vmatpush1.bf16.msra.mxu0 %v2522
  %8345 = vmatprep.subr.bf16.mxu0 %v2539
  %8346 = vmatpush1.bf16.msra.mxu0 %v2538
  %8347 = vmatprep.subr.bf16.mxu0 %v2555
  %8348 = vmatpush1.bf16.msra.mxu0 %v2554
  %8349 = vmatprep.subr.bf16.mxu0 %v2571
  %8350 = vmatpush1.bf16.msra.mxu0 %v2570
  %8351 = vmatprep.subr.bf16.mxu0 %v2587
  %8352 = vmatpush1.bf16.msra.mxu0 %v2586
  %8353 = vmatprep.subr.bf16.mxu0 %v2603
  %8354 = vmatpush1.bf16.msra.mxu0 %v2602
  %8355 = vmatprep.subr.bf16.mxu0 %v2619
  %8356 = vmatpush1.bf16.msra.mxu0 %v2618
  %8357 = vmatprep.subr.bf16.mxu0 %v2635
  %8358 = vmatpush1.bf16.msra.mxu0 %v2634
  %8359 = vmatprep.subr.bf16.mxu0 %v2651
  %8360 = vmatpush1.bf16.msra.mxu0 %v2650
  %8361 = vmatprep.subr.bf16.mxu0 %v2667
  %8362 = vmatpush1.bf16.msra.mxu0 %v2666
  %8363 = vmatprep.subr.bf16.mxu0 %v2683
  %8364 = vmatpush1.bf16.msra.mxu0 %v2682
  %8365 = vmatprep.subr.bf16.mxu0 %v2699
  %8366 = vmatpush1.bf16.msra.mxu0 %v2698
  %8367 = vmatprep.subr.bf16.mxu0 %v2715
  %8368 = vmatpush1.bf16.msra.mxu0 %v2714
  %8369 = vmatprep.mubr.bf16.mxu0 %v7967
  %8370 = vmatmul.mubr.bf16.gmra.mrb[0].mxu0 %v7966
  %v8371 = vpop.f32.mrb[0].mxu0
  %v8372 = vadd.f32 %v8331, %v8371
  %v8373 = vpop.f32.mrb[0].mxu0
  %v8374 = vadd.f32 %v8333, %v8373
  %v8375 = vpop.f32.mrb[0].mxu0
  %v8376 = vpop.f32.mrb[0].mxu0
  %8377 = vdwg.mxu0
  %8378 = vmatprep.subr.bf16.mxu0 %v2221
  %8379 = vmatpush1.bf16.msra.mxu0 %v2220
  %8380 = vmatprep.subr.bf16.mxu0 %v2237
  %8381 = vmatpush1.bf16.msra.mxu0 %v2236
  %8382 = vmatprep.subr.bf16.mxu0 %v2253
  %8383 = vmatpush1.bf16.msra.mxu0 %v2252
  %8384 = vmatprep.subr.bf16.mxu0 %v2269
  %8385 = vmatpush1.bf16.msra.mxu0 %v2268
  %8386 = vmatprep.subr.bf16.mxu0 %v2285
  %8387 = vmatpush1.bf16.msra.mxu0 %v2284
  %8388 = vmatprep.subr.bf16.mxu0 %v2301
  %8389 = vmatpush1.bf16.msra.mxu0 %v2300
  %8390 = vmatprep.subr.bf16.mxu0 %v2317
  %8391 = vmatpush1.bf16.msra.mxu0 %v2316
  %8392 = vmatprep.subr.bf16.mxu0 %v2333
  %8393 = vmatpush1.bf16.msra.mxu0 %v2332
  %8394 = vmatprep.subr.bf16.mxu0 %v2349
  %8395 = vmatpush1.bf16.msra.mxu0 %v2348
  %8396 = vmatprep.subr.bf16.mxu0 %v2365
  %8397 = vmatpush1.bf16.msra.mxu0 %v2364
  %8398 = vmatprep.subr.bf16.mxu0 %v2381
  %8399 = vmatpush1.bf16.msra.mxu0 %v2380
  %8400 = vmatprep.subr.bf16.mxu0 %v2397
  %8401 = vmatpush1.bf16.msra.mxu0 %v2396
  %8402 = vmatprep.subr.bf16.mxu0 %v2413
  %8403 = vmatpush1.bf16.msra.mxu0 %v2412
  %8404 = vmatprep.subr.bf16.mxu0 %v2429
  %8405 = vmatpush1.bf16.msra.mxu0 %v2428
  %8406 = vmatprep.subr.bf16.mxu0 %v2445
  %8407 = vmatpush1.bf16.msra.mxu0 %v2444
  %8408 = vmatprep.subr.bf16.mxu0 %v2461
  %8409 = vmatpush1.bf16.msra.mxu0 %v2460
  %8410 = vmatprep.mubr.bf16.mxu0 %v7965
  %8411 = vmatmul.mubr.bf16.gmra.mrb[0].mxu0 %v7964
  %v8412 = vpop.f32.mrb[0].mxu0
  %v8413 = vadd.f32 0.0, %v8412
  %v8414 = vpop.f32.mrb[0].mxu0
  %v8415 = vadd.f32 0.0, %v8414
  %v8416 = vpop.f32.mrb[0].mxu0
  %v8417 = vpop.f32.mrb[0].mxu0
  %8418 = vdwg.mxu0
  %8419 = vmatprep.subr.bf16.mxu0 %v2477
  %8420 = vmatpush1.bf16.msra.mxu0 %v2476
  %8421 = vmatprep.subr.bf16.mxu0 %v2493
  %8422 = vmatpush1.bf16.msra.mxu0 %v2492
  %8423 = vmatprep.subr.bf16.mxu0 %v2509
  %8424 = vmatpush1.bf16.msra.mxu0 %v2508
  %8425 = vmatprep.subr.bf16.mxu0 %v2525
  %8426 = vmatpush1.bf16.msra.mxu0 %v2524
  %8427 = vmatprep.subr.bf16.mxu0 %v2541
  %8428 = vmatpush1.bf16.msra.mxu0 %v2540
  %8429 = vmatprep.subr.bf16.mxu0 %v2557
  %8430 = vmatpush1.bf16.msra.mxu0 %v2556
  %8431 = vmatprep.subr.bf16.mxu0 %v2573
  %8432 = vmatpush1.bf16.msra.mxu0 %v2572
  %8433 = vmatprep.subr.bf16.mxu0 %v2589
  %8434 = vmatpush1.bf16.msra.mxu0 %v2588
  %8435 = vmatprep.subr.bf16.mxu0 %v2605
  %8436 = vmatpush1.bf16.msra.mxu0 %v2604
  %8437 = vmatprep.subr.bf16.mxu0 %v2621
  %8438 = vmatpush1.bf16.msra.mxu0 %v2620
  %8439 = vmatprep.subr.bf16.mxu0 %v2637
  %8440 = vmatpush1.bf16.msra.mxu0 %v2636
  %8441 = vmatprep.subr.bf16.mxu0 %v2653
  %8442 = vmatpush1.bf16.msra.mxu0 %v2652
  %8443 = vmatprep.subr.bf16.mxu0 %v2669
  %8444 = vmatpush1.bf16.msra.mxu0 %v2668
  %8445 = vmatprep.subr.bf16.mxu0 %v2685
  %8446 = vmatpush1.bf16.msra.mxu0 %v2684
  %8447 = vmatprep.subr.bf16.mxu0 %v2701
  %8448 = vmatpush1.bf16.msra.mxu0 %v2700
  %8449 = vmatprep.subr.bf16.mxu0 %v2717
  %8450 = vmatpush1.bf16.msra.mxu0 %v2716
  %8451 = vmatprep.mubr.bf16.mxu0 %v7967
  %8452 = vmatmul.mubr.bf16.gmra.mrb[0].mxu0 %v7966
  %v8453 = vpop.f32.mrb[0].mxu0
  %v8454 = vadd.f32 %v8413, %v8453
  %v8455 = vpop.f32.mrb[0].mxu0
  %v8456 = vadd.f32 %v8415, %v8455
  %v8457 = vpop.f32.mrb[0].mxu0
  %v8458 = vpop.f32.mrb[0].mxu0
  %8459 = vdwg.mxu0
  %8460 = vmatprep.subr.bf16.mxu0 %v2223
  %8461 = vmatpush1.bf16.msra.mxu0 %v2222
  %8462 = vmatprep.subr.bf16.mxu0 %v2239
  %8463 = vmatpush1.bf16.msra.mxu0 %v2238
  %8464 = vmatprep.subr.bf16.mxu0 %v2255
  %8465 = vmatpush1.bf16.msra.mxu0 %v2254
  %8466 = vmatprep.subr.bf16.mxu0 %v2271
  %8467 = vmatpush1.bf16.msra.mxu0 %v2270
  %8468 = vmatprep.subr.bf16.mxu0 %v2287
  %8469 = vmatpush1.bf16.msra.mxu0 %v2286
  %8470 = vmatprep.subr.bf16.mxu0 %v2303
  %8471 = vmatpush1.bf16.msra.mxu0 %v2302
  %8472 = vmatprep.subr.bf16.mxu0 %v2319
  %8473 = vmatpush1.bf16.msra.mxu0 %v2318
  %8474 = vmatprep.subr.bf16.mxu0 %v2335
  %8475 = vmatpush1.bf16.msra.mxu0 %v2334
  %8476 = vmatprep.subr.bf16.mxu0 %v2351
  %8477 = vmatpush1.bf16.msra.mxu0 %v2350
  %8478 = vmatprep.subr.bf16.mxu0 %v2367
  %8479 = vmatpush1.bf16.msra.mxu0 %v2366
  %8480 = vmatprep.subr.bf16.mxu0 %v2383
  %8481 = vmatpush1.bf16.msra.mxu0 %v2382
  %8482 = vmatprep.subr.bf16.mxu0 %v2399
  %8483 = vmatpush1.bf16.msra.mxu0 %v2398
  %8484 = vmatprep.subr.bf16.mxu0 %v2415
  %8485 = vmatpush1.bf16.msra.mxu0 %v2414
  %8486 = vmatprep.subr.bf16.mxu0 %v2431
  %8487 = vmatpush1.bf16.msra.mxu0 %v2430
  %8488 = vmatprep.subr.bf16.mxu0 %v2447
  %8489 = vmatpush1.bf16.msra.mxu0 %v2446
  %8490 = vmatprep.subr.bf16.mxu0 %v2463
  %8491 = vmatpush1.bf16.msra.mxu0 %v2462
  %8492 = vmatprep.mubr.bf16.mxu0 %v7965
  %8493 = vmatmul.mubr.bf16.gmra.mrb[0].mxu0 %v7964
  %v8494 = vpop.f32.mrb[0].mxu0
  %v8495 = vadd.f32 0.0, %v8494
  %v8496 = vpop.f32.mrb[0].mxu0
  %v8497 = vadd.f32 0.0, %v8496
  %v8498 = vpop.f32.mrb[0].mxu0
  %v8499 = vpop.f32.mrb[0].mxu0
  %8500 = vdwg.mxu0
  %8501 = vmatprep.subr.bf16.mxu0 %v2479
  %8502 = vmatpush1.bf16.msra.mxu0 %v2478
  %8503 = vmatprep.subr.bf16.mxu0 %v2495
  %8504 = vmatpush1.bf16.msra.mxu0 %v2494
  %8505 = vmatprep.subr.bf16.mxu0 %v2511
  %8506 = vmatpush1.bf16.msra.mxu0 %v2510
  %8507 = vmatprep.subr.bf16.mxu0 %v2527
  %8508 = vmatpush1.bf16.msra.mxu0 %v2526
  %8509 = vmatprep.subr.bf16.mxu0 %v2543
  %8510 = vmatpush1.bf16.msra.mxu0 %v2542
  %8511 = vmatprep.subr.bf16.mxu0 %v2559
  %8512 = vmatpush1.bf16.msra.mxu0 %v2558
  %8513 = vmatprep.subr.bf16.mxu0 %v2575
  %8514 = vmatpush1.bf16.msra.mxu0 %v2574
  %8515 = vmatprep.subr.bf16.mxu0 %v2591
  %8516 = vmatpush1.bf16.msra.mxu0 %v2590
  %8517 = vmatprep.subr.bf16.mxu0 %v2607
  %8518 = vmatpush1.bf16.msra.mxu0 %v2606
  %8519 = vmatprep.subr.bf16.mxu0 %v2623
  %8520 = vmatpush1.bf16.msra.mxu0 %v2622
  %8521 = vmatprep.subr.bf16.mxu0 %v2639
  %8522 = vmatpush1.bf16.msra.mxu0 %v2638
  %8523 = vmatprep.subr.bf16.mxu0 %v2655
  %8524 = vmatpush1.bf16.msra.mxu0 %v2654
  %8525 = vmatprep.subr.bf16.mxu0 %v2671
  %8526 = vmatpush1.bf16.msra.mxu0 %v2670
  %8527 = vmatprep.subr.bf16.mxu0 %v2687
  %8528 = vmatpush1.bf16.msra.mxu0 %v2686
  %8529 = vmatprep.subr.bf16.mxu0 %v2703
  %8530 = vmatpush1.bf16.msra.mxu0 %v2702
  %8531 = vmatprep.subr.bf16.mxu0 %v2719
  %8532 = vmatpush1.bf16.msra.mxu0 %v2718
  %8533 = vmatprep.mubr.bf16.mxu0 %v7967
  %8534 = vmatmul.mubr.bf16.gmra.mrb[0].mxu0 %v7966
  %v8535 = vpop.f32.mrb[0].mxu0
  %v8536 = vadd.f32 %v8495, %v8535
  %v8537 = vpop.f32.mrb[0].mxu0
  %v8538 = vadd.f32 %v8497, %v8537
  %v8539 = vpop.f32.mrb[0].mxu0
  %v8540 = vpop.f32.mrb[0].mxu0
  %8541 = vdwg.mxu0
  %8542 = vmatprep.subr.bf16.mxu0 %v2225
  %8543 = vmatpush1.bf16.msra.mxu0 %v2224
  %8544 = vmatprep.subr.bf16.mxu0 %v2241
  %8545 = vmatpush1.bf16.msra.mxu0 %v2240
  %8546 = vmatprep.subr.bf16.mxu0 %v2257
  %8547 = vmatpush1.bf16.msra.mxu0 %v2256
  %8548 = vmatprep.subr.bf16.mxu0 %v2273
  %8549 = vmatpush1.bf16.msra.mxu0 %v2272
  %8550 = vmatprep.subr.bf16.mxu0 %v2289
  %8551 = vmatpush1.bf16.msra.mxu0 %v2288
  %8552 = vmatprep.subr.bf16.mxu0 %v2305
  %8553 = vmatpush1.bf16.msra.mxu0 %v2304
  %8554 = vmatprep.subr.bf16.mxu0 %v2321
  %8555 = vmatpush1.bf16.msra.mxu0 %v2320
  %8556 = vmatprep.subr.bf16.mxu0 %v2337
  %8557 = vmatpush1.bf16.msra.mxu0 %v2336
  %8558 = vmatprep.subr.bf16.mxu0 %v2353
  %8559 = vmatpush1.bf16.msra.mxu0 %v2352
  %8560 = vmatprep.subr.bf16.mxu0 %v2369
  %8561 = vmatpush1.bf16.msra.mxu0 %v2368
  %8562 = vmatprep.subr.bf16.mxu0 %v2385
  %8563 = vmatpush1.bf16.msra.mxu0 %v2384
  %8564 = vmatprep.subr.bf16.mxu0 %v2401
  %8565 = vmatpush1.bf16.msra.mxu0 %v2400
  %8566 = vmatprep.subr.bf16.mxu0 %v2417
  %8567 = vmatpush1.bf16.msra.mxu0 %v2416
  %8568 = vmatprep.subr.bf16.mxu0 %v2433
  %8569 = vmatpush1.bf16.msra.mxu0 %v2432
  %8570 = vmatprep.subr.bf16.mxu0 %v2449
  %8571 = vmatpush1.bf16.msra.mxu0 %v2448
  %8572 = vmatprep.subr.bf16.mxu0 %v2465
  %8573 = vmatpush1.bf16.msra.mxu0 %v2464
  %8574 = vmatprep.mubr.bf16.mxu0 %v7965
  %8575 = vmatmul.mubr.bf16.gmra.mrb[0].mxu0 %v7964
  %v8576 = vpop.f32.mrb[0].mxu0
  %v8577 = vadd.f32 0.0, %v8576
  %v8578 = vpop.f32.mrb[0].mxu0
  %v8579 = vadd.f32 0.0, %v8578
  %v8580 = vpop.f32.mrb[0].mxu0
  %v8581 = vpop.f32.mrb[0].mxu0
  %8582 = vdwg.mxu0
  %8583 = vmatprep.subr.bf16.mxu0 %v2481
  %8584 = vmatpush1.bf16.msra.mxu0 %v2480
  %8585 = vmatprep.subr.bf16.mxu0 %v2497
  %8586 = vmatpush1.bf16.msra.mxu0 %v2496
  %8587 = vmatprep.subr.bf16.mxu0 %v2513
  %8588 = vmatpush1.bf16.msra.mxu0 %v2512
  %8589 = vmatprep.subr.bf16.mxu0 %v2529
  %8590 = vmatpush1.bf16.msra.mxu0 %v2528
  %8591 = vmatprep.subr.bf16.mxu0 %v2545
  %8592 = vmatpush1.bf16.msra.mxu0 %v2544
  %8593 = vmatprep.subr.bf16.mxu0 %v2561
  %8594 = vmatpush1.bf16.msra.mxu0 %v2560
  %8595 = vmatprep.subr.bf16.mxu0 %v2577
  %8596 = vmatpush1.bf16.msra.mxu0 %v2576
  %8597 = vmatprep.subr.bf16.mxu0 %v2593
  %8598 = vmatpush1.bf16.msra.mxu0 %v2592
  %8599 = vmatprep.subr.bf16.mxu0 %v2609
  %8600 = vmatpush1.bf16.msra.mxu0 %v2608
  %8601 = vmatprep.subr.bf16.mxu0 %v2625
  %8602 = vmatpush1.bf16.msra.mxu0 %v2624
  %8603 = vmatprep.subr.bf16.mxu0 %v2641
  %8604 = vmatpush1.bf16.msra.mxu0 %v2640
  %8605 = vmatprep.subr.bf16.mxu0 %v2657
  %8606 = vmatpush1.bf16.msra.mxu0 %v2656
  %8607 = vmatprep.subr.bf16.mxu0 %v2673
  %8608 = vmatpush1.bf16.msra.mxu0 %v2672
  %8609 = vmatprep.subr.bf16.mxu0 %v2689
  %8610 = vmatpush1.bf16.msra.mxu0 %v2688
  %8611 = vmatprep.subr.bf16.mxu0 %v2705
  %8612 = vmatpush1.bf16.msra.mxu0 %v2704
  %8613 = vmatprep.subr.bf16.mxu0 %v2721
  %8614 = vmatpush1.bf16.msra.mxu0 %v2720
  %8615 = vmatprep.mubr.bf16.mxu0 %v7967
  %8616 = vmatmul.mubr.bf16.gmra.mrb[0].mxu0 %v7966
  %v8617 = vpop.f32.mrb[0].mxu0
  %v8618 = vadd.f32 %v8577, %v8617
  %v8619 = vpop.f32.mrb[0].mxu0
  %v8620 = vadd.f32 %v8579, %v8619
  %v8621 = vpop.f32.mrb[0].mxu0
  %v8622 = vpop.f32.mrb[0].mxu0
  %8623 = vdwg.mxu0
  %v8624 = vadd.f32 %v7948, %v8044
  %v8625 = vadd.f32 %v7949, %v8046
  %v8626 = vadd.f32 %v7950, %v8126
  %v8627 = vadd.f32 %v7951, %v8128
  %v8628 = vadd.f32 %v7952, %v8208
  %v8629 = vadd.f32 %v7953, %v8210
  %v8630 = vadd.f32 %v7954, %v8290
  %v8631 = vadd.f32 %v7955, %v8292
  %v8632 = vadd.f32 %v7956, %v8372
  %v8633 = vadd.f32 %v7957, %v8374
  %v8634 = vadd.f32 %v7958, %v8454
  %v8635 = vadd.f32 %v7959, %v8456
  %v8636 = vadd.f32 %v7960, %v8536
  %v8637 = vadd.f32 %v7961, %v8538
  %v8638 = vadd.f32 %v7962, %v8618
  %v8639 = vadd.f32 %v7963, %v8620
  %v8640 = vmul.f32 %v8624, 0.5
  %v8641 = vmul.f32 %v8625, 0.5
  %v8642 = vmul.f32 %v8626, 0.5
  %v8643 = vmul.f32 %v8627, 0.5
  %v8644 = vtanh.pop %v8640
  %v8645 = vtanh.pop %v8641
  %v8646 = vtanh.pop %v8642
  %v8647 = vtanh.pop %v8643
  %v8648 = vadd.f32 %v8644, 1.0
  %v8649 = vadd.f32 %v8645, 1.0
  %v8650 = vadd.f32 %v8646, 1.0
  %v8651 = vadd.f32 %v8647, 1.0
  %v8652 = vmul.f32 %v8648, 0.5
  %v8653 = vmul.f32 %v8649, 0.5
  %v8654 = vmul.f32 %v8650, 0.5
  %v8655 = vmul.f32 %v8651, 0.5
  %v8656 = vmul.f32 %v8628, 0.5
  %v8657 = vmul.f32 %v8629, 0.5
  %v8658 = vmul.f32 %v8630, 0.5
  %v8659 = vmul.f32 %v8631, 0.5
  %v8660 = vtanh.pop %v8656
  %v8661 = vtanh.pop %v8657
  %v8662 = vtanh.pop %v8658
  %v8663 = vtanh.pop %v8659
  %v8664 = vadd.f32 %v8660, 1.0
  %v8665 = vadd.f32 %v8661, 1.0
  %v8666 = vadd.f32 %v8662, 1.0
  %v8667 = vadd.f32 %v8663, 1.0
  %v8668 = vmul.f32 %v8664, 0.5
  %v8669 = vmul.f32 %v8665, 0.5
  %v8670 = vmul.f32 %v8666, 0.5
  %v8671 = vmul.f32 %v8667, 0.5
  %v8672 = vtanh.pop %v8632
  %v8673 = vtanh.pop %v8633
  %v8674 = vtanh.pop %v8634
  %v8675 = vtanh.pop %v8635
  %v8676 = vmul.f32 %v8636, 0.5
  %v8677 = vmul.f32 %v8637, 0.5
  %v8678 = vmul.f32 %v8638, 0.5
  %v8679 = vmul.f32 %v8639, 0.5
  %v8680 = vtanh.pop %v8676
  %v8681 = vtanh.pop %v8677
  %v8682 = vtanh.pop %v8678
  %v8683 = vtanh.pop %v8679
  %v8684 = vadd.f32 %v8680, 1.0
  %v8685 = vadd.f32 %v8681, 1.0
  %v8686 = vadd.f32 %v8682, 1.0
  %v8687 = vadd.f32 %v8683, 1.0
  %v8688 = vmul.f32 %v8684, 0.5
  %v8689 = vmul.f32 %v8685, 0.5
  %v8690 = vmul.f32 %v8686, 0.5
  %v8691 = vmul.f32 %v8687, 0.5
  %v8692 = vmul.f32 %v8668, %v7911
  %v8693 = vmul.f32 %v8669, %v7912
  %v8694 = vmul.f32 %v8670, %v7913
  %v8695 = vmul.f32 %v8671, %v7914
  %v8696 = vmul.f32 %v8652, %v8672
  %v8697 = vmul.f32 %v8653, %v8673
  %v8698 = vmul.f32 %v8654, %v8674
  %v8699 = vmul.f32 %v8655, %v8675
  %v8700 = vadd.f32 %v8692, %v8696
  %v8701 = vadd.f32 %v8693, %v8697
  %v8702 = vadd.f32 %v8694, %v8698
  %v8703 = vadd.f32 %v8695, %v8699
  %v8704 = vtanh.pop %v8700
  %v8705 = vtanh.pop %v8701
  %v8706 = vtanh.pop %v8702
  %v8707 = vtanh.pop %v8703
  %v8708 = vmul.f32 %v8688, %v8704
  %v8709 = vmul.f32 %v8689, %v8705
  %v8710 = vmul.f32 %v8690, %v8706
  %v8711 = vmul.f32 %v8691, %v8707
  %s8712 = scalar_lea.vmem %s0, 448
  %v8713 = vld [vmem:[%s8712] sm:$0xff]
  %v8714 = vld [vmem:[%s8712 + $0x8] sm:$0xff]
  %v8715 = vld [vmem:[%s8712 + $0x10] sm:$0xff]
  %v8716 = vld [vmem:[%s8712 + $0x18] sm:$0xff]
  %v8717 = vld [vmem:[%s8712 + $0x20] sm:$0xff]
  %v8718 = vld [vmem:[%s8712 + $0x28] sm:$0xff]
  %v8719 = vld [vmem:[%s8712 + $0x30] sm:$0xff]
  %v8720 = vld [vmem:[%s8712 + $0x38] sm:$0xff]
  %v8721 = vunpack.c.l.bf16 %v8713
  %v8722 = vunpack.c.h.bf16 %v8713
  %v8723 = vunpack.c.l.bf16 %v8714
  %v8724 = vunpack.c.h.bf16 %v8714
  %v8725 = vunpack.c.l.bf16 %v8715
  %v8726 = vunpack.c.h.bf16 %v8715
  %v8727 = vunpack.c.l.bf16 %v8716
  %v8728 = vunpack.c.h.bf16 %v8716
  %v8729 = vunpack.c.l.bf16 %v8717
  %v8730 = vunpack.c.h.bf16 %v8717
  %v8731 = vunpack.c.l.bf16 %v8718
  %v8732 = vunpack.c.h.bf16 %v8718
  %v8733 = vunpack.c.l.bf16 %v8719
  %v8734 = vunpack.c.h.bf16 %v8719
  %v8735 = vunpack.c.l.bf16 %v8720
  %v8736 = vunpack.c.h.bf16 %v8720
  %v8737 = vadd.f32 %v8721, %v577
  %v8738 = vadd.f32 %v8722, %v581
  %v8739 = vadd.f32 %v8723, %v585
  %v8740 = vadd.f32 %v8724, %v589
  %v8741 = vadd.f32 %v8725, %v593
  %v8742 = vadd.f32 %v8726, %v597
  %v8743 = vadd.f32 %v8727, %v601
  %v8744 = vadd.f32 %v8728, %v605
  %v8745 = vadd.f32 %v8729, %v609
  %v8746 = vadd.f32 %v8730, %v613
  %v8747 = vadd.f32 %v8731, %v617
  %v8748 = vadd.f32 %v8732, %v621
  %v8749 = vadd.f32 %v8733, %v625
  %v8750 = vadd.f32 %v8734, %v629
  %v8751 = vadd.f32 %v8735, %v633
  %v8752 = vadd.f32 %v8736, %v637
  %v8753 = vpack.c.bf16 %v8708, %v8708
  %v8754 = vpack.c.bf16 %v8709, %v8709
  %v8755 = vpack.c.bf16 %v8710, %v8710
  %v8756 = vpack.c.bf16 %v8711, %v8711
  %8757 = vmatprep.subr.bf16.mxu0 %v2211
  %8758 = vmatpush1.bf16.msra.mxu0 %v2210
  %8759 = vmatprep.subr.bf16.mxu0 %v2227
  %8760 = vmatpush1.bf16.msra.mxu0 %v2226
  %8761 = vmatprep.subr.bf16.mxu0 %v2243
  %8762 = vmatpush1.bf16.msra.mxu0 %v2242
  %8763 = vmatprep.subr.bf16.mxu0 %v2259
  %8764 = vmatpush1.bf16.msra.mxu0 %v2258
  %8765 = vmatprep.subr.bf16.mxu0 %v2275
  %8766 = vmatpush1.bf16.msra.mxu0 %v2274
  %8767 = vmatprep.subr.bf16.mxu0 %v2291
  %8768 = vmatpush1.bf16.msra.mxu0 %v2290
  %8769 = vmatprep.subr.bf16.mxu0 %v2307
  %8770 = vmatpush1.bf16.msra.mxu0 %v2306
  %8771 = vmatprep.subr.bf16.mxu0 %v2323
  %8772 = vmatpush1.bf16.msra.mxu0 %v2322
  %8773 = vmatprep.subr.bf16.mxu0 %v2339
  %8774 = vmatpush1.bf16.msra.mxu0 %v2338
  %8775 = vmatprep.subr.bf16.mxu0 %v2355
  %8776 = vmatpush1.bf16.msra.mxu0 %v2354
  %8777 = vmatprep.subr.bf16.mxu0 %v2371
  %8778 = vmatpush1.bf16.msra.mxu0 %v2370
  %8779 = vmatprep.subr.bf16.mxu0 %v2387
  %8780 = vmatpush1.bf16.msra.mxu0 %v2386
  %8781 = vmatprep.subr.bf16.mxu0 %v2403
  %8782 = vmatpush1.bf16.msra.mxu0 %v2402
  %8783 = vmatprep.subr.bf16.mxu0 %v2419
  %8784 = vmatpush1.bf16.msra.mxu0 %v2418
  %8785 = vmatprep.subr.bf16.mxu0 %v2435
  %8786 = vmatpush1.bf16.msra.mxu0 %v2434
  %8787 = vmatprep.subr.bf16.mxu0 %v2451
  %8788 = vmatpush1.bf16.msra.mxu0 %v2450
  %8789 = vmatprep.mubr.bf16.mxu0 %v8754
  %8790 = vmatmul.mubr.bf16.gmra.mrb[0].mxu0 %v8753
  %v8791 = vpop.f32.mrb[0].mxu0
  %v8792 = vadd.f32 0.0, %v8791
  %v8793 = vpop.f32.mrb[0].mxu0
  %v8794 = vadd.f32 0.0, %v8793
  %v8795 = vpop.f32.mrb[0].mxu0
  %v8796 = vpop.f32.mrb[0].mxu0
  %8797 = vdwg.mxu0
  %8798 = vmatprep.subr.bf16.mxu0 %v2467
  %8799 = vmatpush1.bf16.msra.mxu0 %v2466
  %8800 = vmatprep.subr.bf16.mxu0 %v2483
  %8801 = vmatpush1.bf16.msra.mxu0 %v2482
  %8802 = vmatprep.subr.bf16.mxu0 %v2499
  %8803 = vmatpush1.bf16.msra.mxu0 %v2498
  %8804 = vmatprep.subr.bf16.mxu0 %v2515
  %8805 = vmatpush1.bf16.msra.mxu0 %v2514
  %8806 = vmatprep.subr.bf16.mxu0 %v2531
  %8807 = vmatpush1.bf16.msra.mxu0 %v2530
  %8808 = vmatprep.subr.bf16.mxu0 %v2547
  %8809 = vmatpush1.bf16.msra.mxu0 %v2546
  %8810 = vmatprep.subr.bf16.mxu0 %v2563
  %8811 = vmatpush1.bf16.msra.mxu0 %v2562
  %8812 = vmatprep.subr.bf16.mxu0 %v2579
  %8813 = vmatpush1.bf16.msra.mxu0 %v2578
  %8814 = vmatprep.subr.bf16.mxu0 %v2595
  %8815 = vmatpush1.bf16.msra.mxu0 %v2594
  %8816 = vmatprep.subr.bf16.mxu0 %v2611
  %8817 = vmatpush1.bf16.msra.mxu0 %v2610
  %8818 = vmatprep.subr.bf16.mxu0 %v2627
  %8819 = vmatpush1.bf16.msra.mxu0 %v2626
  %8820 = vmatprep.subr.bf16.mxu0 %v2643
  %8821 = vmatpush1.bf16.msra.mxu0 %v2642
  %8822 = vmatprep.subr.bf16.mxu0 %v2659
  %8823 = vmatpush1.bf16.msra.mxu0 %v2658
  %8824 = vmatprep.subr.bf16.mxu0 %v2675
  %8825 = vmatpush1.bf16.msra.mxu0 %v2674
  %8826 = vmatprep.subr.bf16.mxu0 %v2691
  %8827 = vmatpush1.bf16.msra.mxu0 %v2690
  %8828 = vmatprep.subr.bf16.mxu0 %v2707
  %8829 = vmatpush1.bf16.msra.mxu0 %v2706
  %8830 = vmatprep.mubr.bf16.mxu0 %v8756
  %8831 = vmatmul.mubr.bf16.gmra.mrb[0].mxu0 %v8755
  %v8832 = vpop.f32.mrb[0].mxu0
  %v8833 = vadd.f32 %v8792, %v8832
  %v8834 = vpop.f32.mrb[0].mxu0
  %v8835 = vadd.f32 %v8794, %v8834
  %v8836 = vpop.f32.mrb[0].mxu0
  %v8837 = vpop.f32.mrb[0].mxu0
  %8838 = vdwg.mxu0
  %8839 = vmatprep.subr.bf16.mxu0 %v2213
  %8840 = vmatpush1.bf16.msra.mxu0 %v2212
  %8841 = vmatprep.subr.bf16.mxu0 %v2229
  %8842 = vmatpush1.bf16.msra.mxu0 %v2228
  %8843 = vmatprep.subr.bf16.mxu0 %v2245
  %8844 = vmatpush1.bf16.msra.mxu0 %v2244
  %8845 = vmatprep.subr.bf16.mxu0 %v2261
  %8846 = vmatpush1.bf16.msra.mxu0 %v2260
  %8847 = vmatprep.subr.bf16.mxu0 %v2277
  %8848 = vmatpush1.bf16.msra.mxu0 %v2276
  %8849 = vmatprep.subr.bf16.mxu0 %v2293
  %8850 = vmatpush1.bf16.msra.mxu0 %v2292
  %8851 = vmatprep.subr.bf16.mxu0 %v2309
  %8852 = vmatpush1.bf16.msra.mxu0 %v2308
  %8853 = vmatprep.subr.bf16.mxu0 %v2325
  %8854 = vmatpush1.bf16.msra.mxu0 %v2324
  %8855 = vmatprep.subr.bf16.mxu0 %v2341
  %8856 = vmatpush1.bf16.msra.mxu0 %v2340
  %8857 = vmatprep.subr.bf16.mxu0 %v2357
  %8858 = vmatpush1.bf16.msra.mxu0 %v2356
  %8859 = vmatprep.subr.bf16.mxu0 %v2373
  %8860 = vmatpush1.bf16.msra.mxu0 %v2372
  %8861 = vmatprep.subr.bf16.mxu0 %v2389
  %8862 = vmatpush1.bf16.msra.mxu0 %v2388
  %8863 = vmatprep.subr.bf16.mxu0 %v2405
  %8864 = vmatpush1.bf16.msra.mxu0 %v2404
  %8865 = vmatprep.subr.bf16.mxu0 %v2421
  %8866 = vmatpush1.bf16.msra.mxu0 %v2420
  %8867 = vmatprep.subr.bf16.mxu0 %v2437
  %8868 = vmatpush1.bf16.msra.mxu0 %v2436
  %8869 = vmatprep.subr.bf16.mxu0 %v2453
  %8870 = vmatpush1.bf16.msra.mxu0 %v2452
  %8871 = vmatprep.mubr.bf16.mxu0 %v8754
  %8872 = vmatmul.mubr.bf16.gmra.mrb[0].mxu0 %v8753
  %v8873 = vpop.f32.mrb[0].mxu0
  %v8874 = vadd.f32 0.0, %v8873
  %v8875 = vpop.f32.mrb[0].mxu0
  %v8876 = vadd.f32 0.0, %v8875
  %v8877 = vpop.f32.mrb[0].mxu0
  %v8878 = vpop.f32.mrb[0].mxu0
  %8879 = vdwg.mxu0
  %8880 = vmatprep.subr.bf16.mxu0 %v2469
  %8881 = vmatpush1.bf16.msra.mxu0 %v2468
  %8882 = vmatprep.subr.bf16.mxu0 %v2485
  %8883 = vmatpush1.bf16.msra.mxu0 %v2484
  %8884 = vmatprep.subr.bf16.mxu0 %v2501
  %8885 = vmatpush1.bf16.msra.mxu0 %v2500
  %8886 = vmatprep.subr.bf16.mxu0 %v2517
  %8887 = vmatpush1.bf16.msra.mxu0 %v2516
  %8888 = vmatprep.subr.bf16.mxu0 %v2533
  %8889 = vmatpush1.bf16.msra.mxu0 %v2532
  %8890 = vmatprep.subr.bf16.mxu0 %v2549
  %8891 = vmatpush1.bf16.msra.mxu0 %v2548
  %8892 = vmatprep.subr.bf16.mxu0 %v2565
  %8893 = vmatpush1.bf16.msra.mxu0 %v2564
  %8894 = vmatprep.subr.bf16.mxu0 %v2581
  %8895 = vmatpush1.bf16.msra.mxu0 %v2580
  %8896 = vmatprep.subr.bf16.mxu0 %v2597
  %8897 = vmatpush1.bf16.msra.mxu0 %v2596
  %8898 = vmatprep.subr.bf16.mxu0 %v2613
  %8899 = vmatpush1.bf16.msra.mxu0 %v2612
  %8900 = vmatprep.subr.bf16.mxu0 %v2629
  %8901 = vmatpush1.bf16.msra.mxu0 %v2628
  %8902 = vmatprep.subr.bf16.mxu0 %v2645
  %8903 = vmatpush1.bf16.msra.mxu0 %v2644
  %8904 = vmatprep.subr.bf16.mxu0 %v2661
  %8905 = vmatpush1.bf16.msra.mxu0 %v2660
  %8906 = vmatprep.subr.bf16.mxu0 %v2677
  %8907 = vmatpush1.bf16.msra.mxu0 %v2676
  %8908 = vmatprep.subr.bf16.mxu0 %v2693
  %8909 = vmatpush1.bf16.msra.mxu0 %v2692
  %8910 = vmatprep.subr.bf16.mxu0 %v2709
  %8911 = vmatpush1.bf16.msra.mxu0 %v2708
  %8912 = vmatprep.mubr.bf16.mxu0 %v8756
  %8913 = vmatmul.mubr.bf16.gmra.mrb[0].mxu0 %v8755
  %v8914 = vpop.f32.mrb[0].mxu0
  %v8915 = vadd.f32 %v8874, %v8914
  %v8916 = vpop.f32.mrb[0].mxu0
  %v8917 = vadd.f32 %v8876, %v8916
  %v8918 = vpop.f32.mrb[0].mxu0
  %v8919 = vpop.f32.mrb[0].mxu0
  %8920 = vdwg.mxu0
  %8921 = vmatprep.subr.bf16.mxu0 %v2215
  %8922 = vmatpush1.bf16.msra.mxu0 %v2214
  %8923 = vmatprep.subr.bf16.mxu0 %v2231
  %8924 = vmatpush1.bf16.msra.mxu0 %v2230
  %8925 = vmatprep.subr.bf16.mxu0 %v2247
  %8926 = vmatpush1.bf16.msra.mxu0 %v2246
  %8927 = vmatprep.subr.bf16.mxu0 %v2263
  %8928 = vmatpush1.bf16.msra.mxu0 %v2262
  %8929 = vmatprep.subr.bf16.mxu0 %v2279
  %8930 = vmatpush1.bf16.msra.mxu0 %v2278
  %8931 = vmatprep.subr.bf16.mxu0 %v2295
  %8932 = vmatpush1.bf16.msra.mxu0 %v2294
  %8933 = vmatprep.subr.bf16.mxu0 %v2311
  %8934 = vmatpush1.bf16.msra.mxu0 %v2310
  %8935 = vmatprep.subr.bf16.mxu0 %v2327
  %8936 = vmatpush1.bf16.msra.mxu0 %v2326
  %8937 = vmatprep.subr.bf16.mxu0 %v2343
  %8938 = vmatpush1.bf16.msra.mxu0 %v2342
  %8939 = vmatprep.subr.bf16.mxu0 %v2359
  %8940 = vmatpush1.bf16.msra.mxu0 %v2358
  %8941 = vmatprep.subr.bf16.mxu0 %v2375
  %8942 = vmatpush1.bf16.msra.mxu0 %v2374
  %8943 = vmatprep.subr.bf16.mxu0 %v2391
  %8944 = vmatpush1.bf16.msra.mxu0 %v2390
  %8945 = vmatprep.subr.bf16.mxu0 %v2407
  %8946 = vmatpush1.bf16.msra.mxu0 %v2406
  %8947 = vmatprep.subr.bf16.mxu0 %v2423
  %8948 = vmatpush1.bf16.msra.mxu0 %v2422
  %8949 = vmatprep.subr.bf16.mxu0 %v2439
  %8950 = vmatpush1.bf16.msra.mxu0 %v2438
  %8951 = vmatprep.subr.bf16.mxu0 %v2455
  %8952 = vmatpush1.bf16.msra.mxu0 %v2454
  %8953 = vmatprep.mubr.bf16.mxu0 %v8754
  %8954 = vmatmul.mubr.bf16.gmra.mrb[0].mxu0 %v8753
  %v8955 = vpop.f32.mrb[0].mxu0
  %v8956 = vadd.f32 0.0, %v8955
  %v8957 = vpop.f32.mrb[0].mxu0
  %v8958 = vadd.f32 0.0, %v8957
  %v8959 = vpop.f32.mrb[0].mxu0
  %v8960 = vpop.f32.mrb[0].mxu0
  %8961 = vdwg.mxu0
  %8962 = vmatprep.subr.bf16.mxu0 %v2471
  %8963 = vmatpush1.bf16.msra.mxu0 %v2470
  %8964 = vmatprep.subr.bf16.mxu0 %v2487
  %8965 = vmatpush1.bf16.msra.mxu0 %v2486
  %8966 = vmatprep.subr.bf16.mxu0 %v2503
  %8967 = vmatpush1.bf16.msra.mxu0 %v2502
  %8968 = vmatprep.subr.bf16.mxu0 %v2519
  %8969 = vmatpush1.bf16.msra.mxu0 %v2518
  %8970 = vmatprep.subr.bf16.mxu0 %v2535
  %8971 = vmatpush1.bf16.msra.mxu0 %v2534
  %8972 = vmatprep.subr.bf16.mxu0 %v2551
  %8973 = vmatpush1.bf16.msra.mxu0 %v2550
  %8974 = vmatprep.subr.bf16.mxu0 %v2567
  %8975 = vmatpush1.bf16.msra.mxu0 %v2566
  %8976 = vmatprep.subr.bf16.mxu0 %v2583
  %8977 = vmatpush1.bf16.msra.mxu0 %v2582
  %8978 = vmatprep.subr.bf16.mxu0 %v2599
  %8979 = vmatpush1.bf16.msra.mxu0 %v2598
  %8980 = vmatprep.subr.bf16.mxu0 %v2615
  %8981 = vmatpush1.bf16.msra.mxu0 %v2614
  %8982 = vmatprep.subr.bf16.mxu0 %v2631
  %8983 = vmatpush1.bf16.msra.mxu0 %v2630
  %8984 = vmatprep.subr.bf16.mxu0 %v2647
  %8985 = vmatpush1.bf16.msra.mxu0 %v2646
  %8986 = vmatprep.subr.bf16.mxu0 %v2663
  %8987 = vmatpush1.bf16.msra.mxu0 %v2662
  %8988 = vmatprep.subr.bf16.mxu0 %v2679
  %8989 = vmatpush1.bf16.msra.mxu0 %v2678
  %8990 = vmatprep.subr.bf16.mxu0 %v2695
  %8991 = vmatpush1.bf16.msra.mxu0 %v2694
  %8992 = vmatprep.subr.bf16.mxu0 %v2711
  %8993 = vmatpush1.bf16.msra.mxu0 %v2710
  %8994 = vmatprep.mubr.bf16.mxu0 %v8756
  %8995 = vmatmul.mubr.bf16.gmra.mrb[0].mxu0 %v8755
  %v8996 = vpop.f32.mrb[0].mxu0
  %v8997 = vadd.f32 %v8956, %v8996
  %v8998 = vpop.f32.mrb[0].mxu0
  %v8999 = vadd.f32 %v8958, %v8998
  %v9000 = vpop.f32.mrb[0].mxu0
  %v9001 = vpop.f32.mrb[0].mxu0
  %9002 = vdwg.mxu0
  %9003 = vmatprep.subr.bf16.mxu0 %v2217
  %9004 = vmatpush1.bf16.msra.mxu0 %v2216
  %9005 = vmatprep.subr.bf16.mxu0 %v2233
  %9006 = vmatpush1.bf16.msra.mxu0 %v2232
  %9007 = vmatprep.subr.bf16.mxu0 %v2249
  %9008 = vmatpush1.bf16.msra.mxu0 %v2248
  %9009 = vmatprep.subr.bf16.mxu0 %v2265
  %9010 = vmatpush1.bf16.msra.mxu0 %v2264
  %9011 = vmatprep.subr.bf16.mxu0 %v2281
  %9012 = vmatpush1.bf16.msra.mxu0 %v2280
  %9013 = vmatprep.subr.bf16.mxu0 %v2297
  %9014 = vmatpush1.bf16.msra.mxu0 %v2296
  %9015 = vmatprep.subr.bf16.mxu0 %v2313
  %9016 = vmatpush1.bf16.msra.mxu0 %v2312
  %9017 = vmatprep.subr.bf16.mxu0 %v2329
  %9018 = vmatpush1.bf16.msra.mxu0 %v2328
  %9019 = vmatprep.subr.bf16.mxu0 %v2345
  %9020 = vmatpush1.bf16.msra.mxu0 %v2344
  %9021 = vmatprep.subr.bf16.mxu0 %v2361
  %9022 = vmatpush1.bf16.msra.mxu0 %v2360
  %9023 = vmatprep.subr.bf16.mxu0 %v2377
  %9024 = vmatpush1.bf16.msra.mxu0 %v2376
  %9025 = vmatprep.subr.bf16.mxu0 %v2393
  %9026 = vmatpush1.bf16.msra.mxu0 %v2392
  %9027 = vmatprep.subr.bf16.mxu0 %v2409
  %9028 = vmatpush1.bf16.msra.mxu0 %v2408
  %9029 = vmatprep.subr.bf16.mxu0 %v2425
  %9030 = vmatpush1.bf16.msra.mxu0 %v2424
  %9031 = vmatprep.subr.bf16.mxu0 %v2441
  %9032 = vmatpush1.bf16.msra.mxu0 %v2440
  %9033 = vmatprep.subr.bf16.mxu0 %v2457
  %9034 = vmatpush1.bf16.msra.mxu0 %v2456
  %9035 = vmatprep.mubr.bf16.mxu0 %v8754
  %9036 = vmatmul.mubr.bf16.gmra.mrb[0].mxu0 %v8753
  %v9037 = vpop.f32.mrb[0].mxu0
  %v9038 = vadd.f32 0.0, %v9037
  %v9039 = vpop.f32.mrb[0].mxu0
  %v9040 = vadd.f32 0.0, %v9039
  %v9041 = vpop.f32.mrb[0].mxu0
  %v9042 = vpop.f32.mrb[0].mxu0
  %9043 = vdwg.mxu0
  %9044 = vmatprep.subr.bf16.mxu0 %v2473
  %9045 = vmatpush1.bf16.msra.mxu0 %v2472
  %9046 = vmatprep.subr.bf16.mxu0 %v2489
  %9047 = vmatpush1.bf16.msra.mxu0 %v2488
  %9048 = vmatprep.subr.bf16.mxu0 %v2505
  %9049 = vmatpush1.bf16.msra.mxu0 %v2504
  %9050 = vmatprep.subr.bf16.mxu0 %v2521
  %9051 = vmatpush1.bf16.msra.mxu0 %v2520
  %9052 = vmatprep.subr.bf16.mxu0 %v2537
  %9053 = vmatpush1.bf16.msra.mxu0 %v2536
  %9054 = vmatprep.subr.bf16.mxu0 %v2553
  %9055 = vmatpush1.bf16.msra.mxu0 %v2552
  %9056 = vmatprep.subr.bf16.mxu0 %v2569
  %9057 = vmatpush1.bf16.msra.mxu0 %v2568
  %9058 = vmatprep.subr.bf16.mxu0 %v2585
  %9059 = vmatpush1.bf16.msra.mxu0 %v2584
  %9060 = vmatprep.subr.bf16.mxu0 %v2601
  %9061 = vmatpush1.bf16.msra.mxu0 %v2600
  %9062 = vmatprep.subr.bf16.mxu0 %v2617
  %9063 = vmatpush1.bf16.msra.mxu0 %v2616
  %9064 = vmatprep.subr.bf16.mxu0 %v2633
  %9065 = vmatpush1.bf16.msra.mxu0 %v2632
  %9066 = vmatprep.subr.bf16.mxu0 %v2649
  %9067 = vmatpush1.bf16.msra.mxu0 %v2648
  %9068 = vmatprep.subr.bf16.mxu0 %v2665
  %9069 = vmatpush1.bf16.msra.mxu0 %v2664
  %9070 = vmatprep.subr.bf16.mxu0 %v2681
  %9071 = vmatpush1.bf16.msra.mxu0 %v2680
  %9072 = vmatprep.subr.bf16.mxu0 %v2697
  %9073 = vmatpush1.bf16.msra.mxu0 %v2696
  %9074 = vmatprep.subr.bf16.mxu0 %v2713
  %9075 = vmatpush1.bf16.msra.mxu0 %v2712
  %9076 = vmatprep.mubr.bf16.mxu0 %v8756
  %9077 = vmatmul.mubr.bf16.gmra.mrb[0].mxu0 %v8755
  %v9078 = vpop.f32.mrb[0].mxu0
  %v9079 = vadd.f32 %v9038, %v9078
  %v9080 = vpop.f32.mrb[0].mxu0
  %v9081 = vadd.f32 %v9040, %v9080
  %v9082 = vpop.f32.mrb[0].mxu0
  %v9083 = vpop.f32.mrb[0].mxu0
  %9084 = vdwg.mxu0
  %9085 = vmatprep.subr.bf16.mxu0 %v2219
  %9086 = vmatpush1.bf16.msra.mxu0 %v2218
  %9087 = vmatprep.subr.bf16.mxu0 %v2235
  %9088 = vmatpush1.bf16.msra.mxu0 %v2234
  %9089 = vmatprep.subr.bf16.mxu0 %v2251
  %9090 = vmatpush1.bf16.msra.mxu0 %v2250
  %9091 = vmatprep.subr.bf16.mxu0 %v2267
  %9092 = vmatpush1.bf16.msra.mxu0 %v2266
  %9093 = vmatprep.subr.bf16.mxu0 %v2283
  %9094 = vmatpush1.bf16.msra.mxu0 %v2282
  %9095 = vmatprep.subr.bf16.mxu0 %v2299
  %9096 = vmatpush1.bf16.msra.mxu0 %v2298
  %9097 = vmatprep.subr.bf16.mxu0 %v2315
  %9098 = vmatpush1.bf16.msra.mxu0 %v2314
  %9099 = vmatprep.subr.bf16.mxu0 %v2331
  %9100 = vmatpush1.bf16.msra.mxu0 %v2330
  %9101 = vmatprep.subr.bf16.mxu0 %v2347
  %9102 = vmatpush1.bf16.msra.mxu0 %v2346
  %9103 = vmatprep.subr.bf16.mxu0 %v2363
  %9104 = vmatpush1.bf16.msra.mxu0 %v2362
  %9105 = vmatprep.subr.bf16.mxu0 %v2379
  %9106 = vmatpush1.bf16.msra.mxu0 %v2378
  %9107 = vmatprep.subr.bf16.mxu0 %v2395
  %9108 = vmatpush1.bf16.msra.mxu0 %v2394
  %9109 = vmatprep.subr.bf16.mxu0 %v2411
  %9110 = vmatpush1.bf16.msra.mxu0 %v2410
  %9111 = vmatprep.subr.bf16.mxu0 %v2427
  %9112 = vmatpush1.bf16.msra.mxu0 %v2426
  %9113 = vmatprep.subr.bf16.mxu0 %v2443
  %9114 = vmatpush1.bf16.msra.mxu0 %v2442
  %9115 = vmatprep.subr.bf16.mxu0 %v2459
  %9116 = vmatpush1.bf16.msra.mxu0 %v2458
  %9117 = vmatprep.mubr.bf16.mxu0 %v8754
  %9118 = vmatmul.mubr.bf16.gmra.mrb[0].mxu0 %v8753
  %v9119 = vpop.f32.mrb[0].mxu0
  %v9120 = vadd.f32 0.0, %v9119
  %v9121 = vpop.f32.mrb[0].mxu0
  %v9122 = vadd.f32 0.0, %v9121
  %v9123 = vpop.f32.mrb[0].mxu0
  %v9124 = vpop.f32.mrb[0].mxu0
  %9125 = vdwg.mxu0
  %9126 = vmatprep.subr.bf16.mxu0 %v2475
  %9127 = vmatpush1.bf16.msra.mxu0 %v2474
  %9128 = vmatprep.subr.bf16.mxu0 %v2491
  %9129 = vmatpush1.bf16.msra.mxu0 %v2490
  %9130 = vmatprep.subr.bf16.mxu0 %v2507
  %9131 = vmatpush1.bf16.msra.mxu0 %v2506
  %9132 = vmatprep.subr.bf16.mxu0 %v2523
  %9133 = vmatpush1.bf16.msra.mxu0 %v2522
  %9134 = vmatprep.subr.bf16.mxu0 %v2539
  %9135 = vmatpush1.bf16.msra.mxu0 %v2538
  %9136 = vmatprep.subr.bf16.mxu0 %v2555
  %9137 = vmatpush1.bf16.msra.mxu0 %v2554
  %9138 = vmatprep.subr.bf16.mxu0 %v2571
  %9139 = vmatpush1.bf16.msra.mxu0 %v2570
  %9140 = vmatprep.subr.bf16.mxu0 %v2587
  %9141 = vmatpush1.bf16.msra.mxu0 %v2586
  %9142 = vmatprep.subr.bf16.mxu0 %v2603
  %9143 = vmatpush1.bf16.msra.mxu0 %v2602
  %9144 = vmatprep.subr.bf16.mxu0 %v2619
  %9145 = vmatpush1.bf16.msra.mxu0 %v2618
  %9146 = vmatprep.subr.bf16.mxu0 %v2635
  %9147 = vmatpush1.bf16.msra.mxu0 %v2634
  %9148 = vmatprep.subr.bf16.mxu0 %v2651
  %9149 = vmatpush1.bf16.msra.mxu0 %v2650
  %9150 = vmatprep.subr.bf16.mxu0 %v2667
  %9151 = vmatpush1.bf16.msra.mxu0 %v2666
  %9152 = vmatprep.subr.bf16.mxu0 %v2683
  %9153 = vmatpush1.bf16.msra.mxu0 %v2682
  %9154 = vmatprep.subr.bf16.mxu0 %v2699
  %9155 = vmatpush1.bf16.msra.mxu0 %v2698
  %9156 = vmatprep.subr.bf16.mxu0 %v2715
  %9157 = vmatpush1.bf16.msra.mxu0 %v2714
  %9158 = vmatprep.mubr.bf16.mxu0 %v8756
  %9159 = vmatmul.mubr.bf16.gmra.mrb[0].mxu0 %v8755
  %v9160 = vpop.f32.mrb[0].mxu0
  %v9161 = vadd.f32 %v9120, %v9160
  %v9162 = vpop.f32.mrb[0].mxu0
  %v9163 = vadd.f32 %v9122, %v9162
  %v9164 = vpop.f32.mrb[0].mxu0
  %v9165 = vpop.f32.mrb[0].mxu0
  %9166 = vdwg.mxu0
  %9167 = vmatprep.subr.bf16.mxu0 %v2221
  %9168 = vmatpush1.bf16.msra.mxu0 %v2220
  %9169 = vmatprep.subr.bf16.mxu0 %v2237
  %9170 = vmatpush1.bf16.msra.mxu0 %v2236
  %9171 = vmatprep.subr.bf16.mxu0 %v2253
  %9172 = vmatpush1.bf16.msra.mxu0 %v2252
  %9173 = vmatprep.subr.bf16.mxu0 %v2269
  %9174 = vmatpush1.bf16.msra.mxu0 %v2268
  %9175 = vmatprep.subr.bf16.mxu0 %v2285
  %9176 = vmatpush1.bf16.msra.mxu0 %v2284
  %9177 = vmatprep.subr.bf16.mxu0 %v2301
  %9178 = vmatpush1.bf16.msra.mxu0 %v2300
  %9179 = vmatprep.subr.bf16.mxu0 %v2317
  %9180 = vmatpush1.bf16.msra.mxu0 %v2316
  %9181 = vmatprep.subr.bf16.mxu0 %v2333
  %9182 = vmatpush1.bf16.msra.mxu0 %v2332
  %9183 = vmatprep.subr.bf16.mxu0 %v2349
  %9184 = vmatpush1.bf16.msra.mxu0 %v2348
  %9185 = vmatprep.subr.bf16.mxu0 %v2365
  %9186 = vmatpush1.bf16.msra.mxu0 %v2364
  %9187 = vmatprep.subr.bf16.mxu0 %v2381
  %9188 = vmatpush1.bf16.msra.mxu0 %v2380
  %9189 = vmatprep.subr.bf16.mxu0 %v2397
  %9190 = vmatpush1.bf16.msra.mxu0 %v2396
  %9191 = vmatprep.subr.bf16.mxu0 %v2413
  %9192 = vmatpush1.bf16.msra.mxu0 %v2412
  %9193 = vmatprep.subr.bf16.mxu0 %v2429
  %9194 = vmatpush1.bf16.msra.mxu0 %v2428
  %9195 = vmatprep.subr.bf16.mxu0 %v2445
  %9196 = vmatpush1.bf16.msra.mxu0 %v2444
  %9197 = vmatprep.subr.bf16.mxu0 %v2461
  %9198 = vmatpush1.bf16.msra.mxu0 %v2460
  %9199 = vmatprep.mubr.bf16.mxu0 %v8754
  %9200 = vmatmul.mubr.bf16.gmra.mrb[0].mxu0 %v8753
  %v9201 = vpop.f32.mrb[0].mxu0
  %v9202 = vadd.f32 0.0, %v9201
  %v9203 = vpop.f32.mrb[0].mxu0
  %v9204 = vadd.f32 0.0, %v9203
  %v9205 = vpop.f32.mrb[0].mxu0
  %v9206 = vpop.f32.mrb[0].mxu0
  %9207 = vdwg.mxu0
  %9208 = vmatprep.subr.bf16.mxu0 %v2477
  %9209 = vmatpush1.bf16.msra.mxu0 %v2476
  %9210 = vmatprep.subr.bf16.mxu0 %v2493
  %9211 = vmatpush1.bf16.msra.mxu0 %v2492
  %9212 = vmatprep.subr.bf16.mxu0 %v2509
  %9213 = vmatpush1.bf16.msra.mxu0 %v2508
  %9214 = vmatprep.subr.bf16.mxu0 %v2525
  %9215 = vmatpush1.bf16.msra.mxu0 %v2524
  %9216 = vmatprep.subr.bf16.mxu0 %v2541
  %9217 = vmatpush1.bf16.msra.mxu0 %v2540
  %9218 = vmatprep.subr.bf16.mxu0 %v2557
  %9219 = vmatpush1.bf16.msra.mxu0 %v2556
  %9220 = vmatprep.subr.bf16.mxu0 %v2573
  %9221 = vmatpush1.bf16.msra.mxu0 %v2572
  %9222 = vmatprep.subr.bf16.mxu0 %v2589
  %9223 = vmatpush1.bf16.msra.mxu0 %v2588
  %9224 = vmatprep.subr.bf16.mxu0 %v2605
  %9225 = vmatpush1.bf16.msra.mxu0 %v2604
  %9226 = vmatprep.subr.bf16.mxu0 %v2621
  %9227 = vmatpush1.bf16.msra.mxu0 %v2620
  %9228 = vmatprep.subr.bf16.mxu0 %v2637
  %9229 = vmatpush1.bf16.msra.mxu0 %v2636
  %9230 = vmatprep.subr.bf16.mxu0 %v2653
  %9231 = vmatpush1.bf16.msra.mxu0 %v2652
  %9232 = vmatprep.subr.bf16.mxu0 %v2669
  %9233 = vmatpush1.bf16.msra.mxu0 %v2668
  %9234 = vmatprep.subr.bf16.mxu0 %v2685
  %9235 = vmatpush1.bf16.msra.mxu0 %v2684
  %9236 = vmatprep.subr.bf16.mxu0 %v2701
  %9237 = vmatpush1.bf16.msra.mxu0 %v2700
  %9238 = vmatprep.subr.bf16.mxu0 %v2717
  %9239 = vmatpush1.bf16.msra.mxu0 %v2716
  %9240 = vmatprep.mubr.bf16.mxu0 %v8756
  %9241 = vmatmul.mubr.bf16.gmra.mrb[0].mxu0 %v8755
  %v9242 = vpop.f32.mrb[0].mxu0
  %v9243 = vadd.f32 %v9202, %v9242
  %v9244 = vpop.f32.mrb[0].mxu0
  %v9245 = vadd.f32 %v9204, %v9244
  %v9246 = vpop.f32.mrb[0].mxu0
  %v9247 = vpop.f32.mrb[0].mxu0
  %9248 = vdwg.mxu0
  %9249 = vmatprep.subr.bf16.mxu0 %v2223
  %9250 = vmatpush1.bf16.msra.mxu0 %v2222
  %9251 = vmatprep.subr.bf16.mxu0 %v2239
  %9252 = vmatpush1.bf16.msra.mxu0 %v2238
  %9253 = vmatprep.subr.bf16.mxu0 %v2255
  %9254 = vmatpush1.bf16.msra.mxu0 %v2254
  %9255 = vmatprep.subr.bf16.mxu0 %v2271
  %9256 = vmatpush1.bf16.msra.mxu0 %v2270
  %9257 = vmatprep.subr.bf16.mxu0 %v2287
  %9258 = vmatpush1.bf16.msra.mxu0 %v2286
  %9259 = vmatprep.subr.bf16.mxu0 %v2303
  %9260 = vmatpush1.bf16.msra.mxu0 %v2302
  %9261 = vmatprep.subr.bf16.mxu0 %v2319
  %9262 = vmatpush1.bf16.msra.mxu0 %v2318
  %9263 = vmatprep.subr.bf16.mxu0 %v2335
  %9264 = vmatpush1.bf16.msra.mxu0 %v2334
  %9265 = vmatprep.subr.bf16.mxu0 %v2351
  %9266 = vmatpush1.bf16.msra.mxu0 %v2350
  %9267 = vmatprep.subr.bf16.mxu0 %v2367
  %9268 = vmatpush1.bf16.msra.mxu0 %v2366
  %9269 = vmatprep.subr.bf16.mxu0 %v2383
  %9270 = vmatpush1.bf16.msra.mxu0 %v2382
  %9271 = vmatprep.subr.bf16.mxu0 %v2399
  %9272 = vmatpush1.bf16.msra.mxu0 %v2398
  %9273 = vmatprep.subr.bf16.mxu0 %v2415
  %9274 = vmatpush1.bf16.msra.mxu0 %v2414
  %9275 = vmatprep.subr.bf16.mxu0 %v2431
  %9276 = vmatpush1.bf16.msra.mxu0 %v2430
  %9277 = vmatprep.subr.bf16.mxu0 %v2447
  %9278 = vmatpush1.bf16.msra.mxu0 %v2446
  %9279 = vmatprep.subr.bf16.mxu0 %v2463
  %9280 = vmatpush1.bf16.msra.mxu0 %v2462
  %9281 = vmatprep.mubr.bf16.mxu0 %v8754
  %9282 = vmatmul.mubr.bf16.gmra.mrb[0].mxu0 %v8753
  %v9283 = vpop.f32.mrb[0].mxu0
  %v9284 = vadd.f32 0.0, %v9283
  %v9285 = vpop.f32.mrb[0].mxu0
  %v9286 = vadd.f32 0.0, %v9285
  %v9287 = vpop.f32.mrb[0].mxu0
  %v9288 = vpop.f32.mrb[0].mxu0
  %9289 = vdwg.mxu0
  %9290 = vmatprep.subr.bf16.mxu0 %v2479
  %9291 = vmatpush1.bf16.msra.mxu0 %v2478
  %9292 = vmatprep.subr.bf16.mxu0 %v2495
  %9293 = vmatpush1.bf16.msra.mxu0 %v2494
  %9294 = vmatprep.subr.bf16.mxu0 %v2511
  %9295 = vmatpush1.bf16.msra.mxu0 %v2510
  %9296 = vmatprep.subr.bf16.mxu0 %v2527
  %9297 = vmatpush1.bf16.msra.mxu0 %v2526
  %9298 = vmatprep.subr.bf16.mxu0 %v2543
  %9299 = vmatpush1.bf16.msra.mxu0 %v2542
  %9300 = vmatprep.subr.bf16.mxu0 %v2559
  %9301 = vmatpush1.bf16.msra.mxu0 %v2558
  %9302 = vmatprep.subr.bf16.mxu0 %v2575
  %9303 = vmatpush1.bf16.msra.mxu0 %v2574
  %9304 = vmatprep.subr.bf16.mxu0 %v2591
  %9305 = vmatpush1.bf16.msra.mxu0 %v2590
  %9306 = vmatprep.subr.bf16.mxu0 %v2607
  %9307 = vmatpush1.bf16.msra.mxu0 %v2606
  %9308 = vmatprep.subr.bf16.mxu0 %v2623
  %9309 = vmatpush1.bf16.msra.mxu0 %v2622
  %9310 = vmatprep.subr.bf16.mxu0 %v2639
  %9311 = vmatpush1.bf16.msra.mxu0 %v2638
  %9312 = vmatprep.subr.bf16.mxu0 %v2655
  %9313 = vmatpush1.bf16.msra.mxu0 %v2654
  %9314 = vmatprep.subr.bf16.mxu0 %v2671
  %9315 = vmatpush1.bf16.msra.mxu0 %v2670
  %9316 = vmatprep.subr.bf16.mxu0 %v2687
  %9317 = vmatpush1.bf16.msra.mxu0 %v2686
  %9318 = vmatprep.subr.bf16.mxu0 %v2703
  %9319 = vmatpush1.bf16.msra.mxu0 %v2702
  %9320 = vmatprep.subr.bf16.mxu0 %v2719
  %9321 = vmatpush1.bf16.msra.mxu0 %v2718
  %9322 = vmatprep.mubr.bf16.mxu0 %v8756
  %9323 = vmatmul.mubr.bf16.gmra.mrb[0].mxu0 %v8755
  %v9324 = vpop.f32.mrb[0].mxu0
  %v9325 = vadd.f32 %v9284, %v9324
  %v9326 = vpop.f32.mrb[0].mxu0
  %v9327 = vadd.f32 %v9286, %v9326
  %v9328 = vpop.f32.mrb[0].mxu0
  %v9329 = vpop.f32.mrb[0].mxu0
  %9330 = vdwg.mxu0
  %9331 = vmatprep.subr.bf16.mxu0 %v2225
  %9332 = vmatpush1.bf16.msra.mxu0 %v2224
  %9333 = vmatprep.subr.bf16.mxu0 %v2241
  %9334 = vmatpush1.bf16.msra.mxu0 %v2240
  %9335 = vmatprep.subr.bf16.mxu0 %v2257
  %9336 = vmatpush1.bf16.msra.mxu0 %v2256
  %9337 = vmatprep.subr.bf16.mxu0 %v2273
  %9338 = vmatpush1.bf16.msra.mxu0 %v2272
  %9339 = vmatprep.subr.bf16.mxu0 %v2289
  %9340 = vmatpush1.bf16.msra.mxu0 %v2288
  %9341 = vmatprep.subr.bf16.mxu0 %v2305
  %9342 = vmatpush1.bf16.msra.mxu0 %v2304
  %9343 = vmatprep.subr.bf16.mxu0 %v2321
  %9344 = vmatpush1.bf16.msra.mxu0 %v2320
  %9345 = vmatprep.subr.bf16.mxu0 %v2337
  %9346 = vmatpush1.bf16.msra.mxu0 %v2336
  %9347 = vmatprep.subr.bf16.mxu0 %v2353
  %9348 = vmatpush1.bf16.msra.mxu0 %v2352
  %9349 = vmatprep.subr.bf16.mxu0 %v2369
  %9350 = vmatpush1.bf16.msra.mxu0 %v2368
  %9351 = vmatprep.subr.bf16.mxu0 %v2385
  %9352 = vmatpush1.bf16.msra.mxu0 %v2384
  %9353 = vmatprep.subr.bf16.mxu0 %v2401
  %9354 = vmatpush1.bf16.msra.mxu0 %v2400
  %9355 = vmatprep.subr.bf16.mxu0 %v2417
  %9356 = vmatpush1.bf16.msra.mxu0 %v2416
  %9357 = vmatprep.subr.bf16.mxu0 %v2433
  %9358 = vmatpush1.bf16.msra.mxu0 %v2432
  %9359 = vmatprep.subr.bf16.mxu0 %v2449
  %9360 = vmatpush1.bf16.msra.mxu0 %v2448
  %9361 = vmatprep.subr.bf16.mxu0 %v2465
  %9362 = vmatpush1.bf16.msra.mxu0 %v2464
  %9363 = vmatprep.mubr.bf16.mxu0 %v8754
  %9364 = vmatmul.mubr.bf16.gmra.mrb[0].mxu0 %v8753
  %v9365 = vpop.f32.mrb[0].mxu0
  %v9366 = vadd.f32 0.0, %v9365
  %v9367 = vpop.f32.mrb[0].mxu0
  %v9368 = vadd.f32 0.0, %v9367
  %v9369 = vpop.f32.mrb[0].mxu0
  %v9370 = vpop.f32.mrb[0].mxu0
  %9371 = vdwg.mxu0
  %9372 = vmatprep.subr.bf16.mxu0 %v2481
  %9373 = vmatpush1.bf16.msra.mxu0 %v2480
  %9374 = vmatprep.subr.bf16.mxu0 %v2497
  %9375 = vmatpush1.bf16.msra.mxu0 %v2496
  %9376 = vmatprep.subr.bf16.mxu0 %v2513
  %9377 = vmatpush1.bf16.msra.mxu0 %v2512
  %9378 = vmatprep.subr.bf16.mxu0 %v2529
  %9379 = vmatpush1.bf16.msra.mxu0 %v2528
  %9380 = vmatprep.subr.bf16.mxu0 %v2545
  %9381 = vmatpush1.bf16.msra.mxu0 %v2544
  %9382 = vmatprep.subr.bf16.mxu0 %v2561
  %9383 = vmatpush1.bf16.msra.mxu0 %v2560
  %9384 = vmatprep.subr.bf16.mxu0 %v2577
  %9385 = vmatpush1.bf16.msra.mxu0 %v2576
  %9386 = vmatprep.subr.bf16.mxu0 %v2593
  %9387 = vmatpush1.bf16.msra.mxu0 %v2592
  %9388 = vmatprep.subr.bf16.mxu0 %v2609
  %9389 = vmatpush1.bf16.msra.mxu0 %v2608
  %9390 = vmatprep.subr.bf16.mxu0 %v2625
  %9391 = vmatpush1.bf16.msra.mxu0 %v2624
  %9392 = vmatprep.subr.bf16.mxu0 %v2641
  %9393 = vmatpush1.bf16.msra.mxu0 %v2640
  %9394 = vmatprep.subr.bf16.mxu0 %v2657
  %9395 = vmatpush1.bf16.msra.mxu0 %v2656
  %9396 = vmatprep.subr.bf16.mxu0 %v2673
  %9397 = vmatpush1.bf16.msra.mxu0 %v2672
  %9398 = vmatprep.subr.bf16.mxu0 %v2689
  %9399 = vmatpush1.bf16.msra.mxu0 %v2688
  %9400 = vmatprep.subr.bf16.mxu0 %v2705
  %9401 = vmatpush1.bf16.msra.mxu0 %v2704
  %9402 = vmatprep.subr.bf16.mxu0 %v2721
  %9403 = vmatpush1.bf16.msra.mxu0 %v2720
  %9404 = vmatprep.mubr.bf16.mxu0 %v8756
  %9405 = vmatmul.mubr.bf16.gmra.mrb[0].mxu0 %v8755
  %v9406 = vpop.f32.mrb[0].mxu0
  %v9407 = vadd.f32 %v9366, %v9406
  %v9408 = vpop.f32.mrb[0].mxu0
  %v9409 = vadd.f32 %v9368, %v9408
  %v9410 = vpop.f32.mrb[0].mxu0
  %v9411 = vpop.f32.mrb[0].mxu0
  %9412 = vdwg.mxu0
  %v9413 = vadd.f32 %v8737, %v8833
  %v9414 = vadd.f32 %v8738, %v8835
  %v9415 = vadd.f32 %v8739, %v8915
  %v9416 = vadd.f32 %v8740, %v8917
  %v9417 = vadd.f32 %v8741, %v8997
  %v9418 = vadd.f32 %v8742, %v8999
  %v9419 = vadd.f32 %v8743, %v9079
  %v9420 = vadd.f32 %v8744, %v9081
  %v9421 = vadd.f32 %v8745, %v9161
  %v9422 = vadd.f32 %v8746, %v9163
  %v9423 = vadd.f32 %v8747, %v9243
  %v9424 = vadd.f32 %v8748, %v9245
  %v9425 = vadd.f32 %v8749, %v9325
  %v9426 = vadd.f32 %v8750, %v9327
  %v9427 = vadd.f32 %v8751, %v9407
  %v9428 = vadd.f32 %v8752, %v9409
  %v9429 = vmul.f32 %v9413, 0.5
  %v9430 = vmul.f32 %v9414, 0.5
  %v9431 = vmul.f32 %v9415, 0.5
  %v9432 = vmul.f32 %v9416, 0.5
  %v9433 = vtanh.pop %v9429
  %v9434 = vtanh.pop %v9430
  %v9435 = vtanh.pop %v9431
  %v9436 = vtanh.pop %v9432
  %v9437 = vadd.f32 %v9433, 1.0
  %v9438 = vadd.f32 %v9434, 1.0
  %v9439 = vadd.f32 %v9435, 1.0
  %v9440 = vadd.f32 %v9436, 1.0
  %v9441 = vmul.f32 %v9437, 0.5
  %v9442 = vmul.f32 %v9438, 0.5
  %v9443 = vmul.f32 %v9439, 0.5
  %v9444 = vmul.f32 %v9440, 0.5
  %v9445 = vmul.f32 %v9417, 0.5
  %v9446 = vmul.f32 %v9418, 0.5
  %v9447 = vmul.f32 %v9419, 0.5
  %v9448 = vmul.f32 %v9420, 0.5
  %v9449 = vtanh.pop %v9445
  %v9450 = vtanh.pop %v9446
  %v9451 = vtanh.pop %v9447
  %v9452 = vtanh.pop %v9448
  %v9453 = vadd.f32 %v9449, 1.0
  %v9454 = vadd.f32 %v9450, 1.0
  %v9455 = vadd.f32 %v9451, 1.0
  %v9456 = vadd.f32 %v9452, 1.0
  %v9457 = vmul.f32 %v9453, 0.5
  %v9458 = vmul.f32 %v9454, 0.5
  %v9459 = vmul.f32 %v9455, 0.5
  %v9460 = vmul.f32 %v9456, 0.5
  %v9461 = vtanh.pop %v9421
  %v9462 = vtanh.pop %v9422
  %v9463 = vtanh.pop %v9423
  %v9464 = vtanh.pop %v9424
  %v9465 = vmul.f32 %v9425, 0.5
  %v9466 = vmul.f32 %v9426, 0.5
  %v9467 = vmul.f32 %v9427, 0.5
  %v9468 = vmul.f32 %v9428, 0.5
  %v9469 = vtanh.pop %v9465
  %v9470 = vtanh.pop %v9466
  %v9471 = vtanh.pop %v9467
  %v9472 = vtanh.pop %v9468
  %v9473 = vadd.f32 %v9469, 1.0
  %v9474 = vadd.f32 %v9470, 1.0
  %v9475 = vadd.f32 %v9471, 1.0
  %v9476 = vadd.f32 %v9472, 1.0
  %v9477 = vmul.f32 %v9473, 0.5
  %v9478 = vmul.f32 %v9474, 0.5
  %v9479 = vmul.f32 %v9475, 0.5
  %v9480 = vmul.f32 %v9476, 0.5
  %v9481 = vmul.f32 %v9457, %v8700
  %v9482 = vmul.f32 %v9458, %v8701
  %v9483 = vmul.f32 %v9459, %v8702
  %v9484 = vmul.f32 %v9460, %v8703
  %v9485 = vmul.f32 %v9441, %v9461
  %v9486 = vmul.f32 %v9442, %v9462
  %v9487 = vmul.f32 %v9443, %v9463
  %v9488 = vmul.f32 %v9444, %v9464
  %v9489 = vadd.f32 %v9481, %v9485
  %v9490 = vadd.f32 %v9482, %v9486
  %v9491 = vadd.f32 %v9483, %v9487
  %v9492 = vadd.f32 %v9484, %v9488
  %v9493 = vtanh.pop %v9489
  %v9494 = vtanh.pop %v9490
  %v9495 = vtanh.pop %v9491
  %v9496 = vtanh.pop %v9492
  %v9497 = vmul.f32 %v9477, %v9493
  %v9498 = vmul.f32 %v9478, %v9494
  %v9499 = vmul.f32 %v9479, %v9495
  %v9500 = vmul.f32 %v9480, %v9496
  %9501 = vst [vmem:[%s3] sm:$0xff] %v9497
  %9502 = vst [vmem:[%s3 + $0x8] sm:$0xff] %v9498
  %9503 = vst [vmem:[%s3 + $0x10] sm:$0xff] %v9499
  %9504 = vst [vmem:[%s3 + $0x18] sm:$0xff] %v9500
  %9505 = vst [vmem:[#allocation2] sm:$0xff] %v9489
  %9506 = vst [vmem:[#allocation2 + $0x8] sm:$0xff] %v9490
  %9507 = vst [vmem:[#allocation2 + $0x10] sm:$0xff] %v9491
  %9508 = vst [vmem:[#allocation2 + $0x18] sm:$0xff] %v9492
  // Predicated region
  $region18: #{lstm_classifier_forward.1} parent=0 // pred_check
    _
  $region19: #{lstm_classifier_forward.1} parent=0 // pred_check_branch
    %9510 = sbr.rel (0) target = $region21
  $region20: #{lstm_classifier_forward.1} parent=0 // pred_region
    _
  $region21: #{lstm_classifier_forward.1} parent=0 // pred_fallthru
    _
  // Predicated region
  $region22: #{lstm_classifier_forward.1} parent=0 // pred_check
    _
  $region23: #{lstm_classifier_forward.1} parent=0 // pred_check_branch
    %9512 = sbr.rel (0) target = $region25
  $region24: #{lstm_classifier_forward.1} parent=0 // pred_region
    _
  $region25: #{lstm_classifier_forward.1} parent=0 // pred_fallthru
    _

</llo_original>
